<compile_context>
chip_gen: v6e
topology: v6e:2x2x1
jax: 0.10.0
libtpu: 0.0.40
codegen_flags: <defaults>
</compile_context>

<pallas_src>
import functools

import numpy as np
import jax
import jax.numpy as jnp
from jax.experimental import pallas as pl
from jax.experimental.pallas import tpu as pltpu

MU1 = 0.5
MU2 = 0.5


# ---------------------------------------------------------------------------
# Host-side construction of the spectral difference operators, mirroring the
# PyTorch reference math (float64, cast f32):
#   hold  = diff_dim0_replace_last_row(diff(eye(d)))              (= D^T D)
#   magic = V diag(1/(mu1 + mu2*s)) U^T,  U,s,V = svd(hold)
# Split operators so one iteration needs no concatenates / sublane slices:
#   A1 = mu1*magic        A2 = mu2*magic@D^T
#   B1 = D@A1             B2 = D@A2
#   xx = A1@u_top + A2@u_bot      dv = D@xx = B1@u_top + B2@u_bot
# ---------------------------------------------------------------------------
def _diff0_np(x):
    """utils.diff along dim 0: forward difference, zero-padded last row."""
    y = np.zeros_like(x)
    y[:-1] = np.diff(x, axis=0)
    return y


def _diff0_adj_np(x):
    """utils.diff_dim0_replace_last_row: adjoint (D^T) of the padded forward diff."""
    u0 = -x[:1]
    u1 = -np.diff(x, axis=0)[:-1]
    u2 = x[-2:-1]
    return np.concatenate([u0, u1, u2], axis=0)


def _make_operators_f64(d):
    eye = np.eye(d, dtype=np.float64)
    dmat = _diff0_np(eye)          # D    (d, d)   forward spectral difference
    dtmat = _diff0_adj_np(eye)     # D^T  (d, d)   its adjoint
    hold = _diff0_adj_np(dmat)     # D^T D
    u, s, vt = np.linalg.svd(hold, full_matrices=False)
    v = vt.conj().T
    magic = v @ np.diag(1.0 / (MU1 + MU2 * s)) @ u.conj().T
    return magic, dmat, dtmat


def _make_operators(d):
    """f32 (magic, D, D^T) — used by the pure-JAX reference."""
    magic, dmat, dtmat = _make_operators_f64(d)
    return (magic.astype(np.float32), dmat.astype(np.float32),
            dtmat.astype(np.float32))


def _make_split_operators(d, d_pad):
    """Four (d_pad, d_pad) f32 operators A1, A2, B1, B2 (zero-padded band rows/cols)."""
    magic, dmat, dtmat = _make_operators_f64(d)
    a1 = MU1 * magic
    a2 = MU2 * (magic @ dtmat)
    b1 = dmat @ a1
    b2 = dmat @ a2

    def pad(mat):
        out = np.zeros((d_pad, d_pad), np.float32)
        out[:d, :d] = mat
        return out

    return pad(a1), pad(a2), pad(b1), pad(b2)


def _soft(x, thresh):
    """soft_threshold: sign(x) * max(|x| - t, 0)  (used only by the JAX reference)."""
    return jnp.where(x > thresh, x - thresh,
                     jnp.where(x < -thresh, x + thresh, jnp.zeros_like(x)))


# ---------------------------------------------------------------------------
# Pallas kernel: full ADMM loop for one tile of pixels.
# refs: y (d_pad, tn), A1/A2/B1/B2 (d_pad, d_pad)  ->  out (d_pad, tn)
# ---------------------------------------------------------------------------
def _hyminor_kernel(y_ref, a1_ref, a2_ref, b1_ref, b2_ref, out_ref, *,
                    lam, iterations, precision):
    y = y_ref[...]                 # (d_pad, tn) float32 (conj of real data is a no-op)
    a1 = a1_ref[...]
    a2 = a2_ref[...]
    b1 = b1_ref[...]
    b2 = b2_ref[...]
    thr1 = 1.0 / MU1
    thr2 = float(lam) / MU2
    zero = jnp.zeros_like(y)

    def mm(mat, vec):
        return jnp.dot(mat, vec, preferred_element_type=jnp.float32,
                       precision=precision)

    def body(carry):
        u_top, u_bot, l1, l2 = carry
        xx = mm(a1, u_top) + mm(a2, u_bot)           # primal update
        dv = mm(b1, u_top) + mm(b2, u_bot)           # its forward band difference
        # Fused soft-threshold + dual update:  t - soft(t, thr) = clip(t, -thr, thr)
        t1 = (y - xx) + l1
        t2 = dv + l2
        l1n = jnp.clip(t1, -thr1, thr1)
        l2n = jnp.clip(t2, -thr2, thr2)
        # Next matmul inputs with v1/v2 eliminated from the carry:
        #   u_top' = y + l1' - v1 = xx - l1 + 2*l1'
        #   u_bot' = v2 - l2'     = t2 - 2*l2'
        u_top_n = (xx - l1) + (l1n + l1n)
        u_bot_n = t2 - (l2n + l2n)
        return u_top_n, u_bot_n, l1n, l2n

    # Manual 2x unroll: reduces loop overhead / widens the scheduling window.
    def body2(_, carry):
        return body(body(carry))

    # Initial state (xx = v1 = v2 = l1 = l2 = 0)  =>  u_top = y, u_bot = 0.
    carry = (y, zero, zero, zero)
    n_body = iterations - 1        # the final xx is computed by the epilogue matmul
    carry = jax.lax.fori_loop(0, n_body // 2, body2, carry)
    if n_body % 2:
        carry = body(carry)
    u_top, u_bot, _, _ = carry
    out_ref[...] = mm(a1, u_top) + mm(a2, u_bot)


def _round_up(v, m):
    return -(-v // m) * m


def _cdiv(a, b):
    return -(-a // b)


def _tpu_tuning():
    """(num_cores, tile working-set budget, scoped vmem_limit_bytes) per generation."""
    kind = ""
    try:
        kind = jax.devices()[0].device_kind.lower()
    except Exception:
        pass
    if "v7" in kind:
        # 2 TensorCores / 64 MiB VMEM per TC: conservative limit, feed both cores.
        return 2, 24 << 20, 48 << 20
    if "v5" in kind or "v6" in kind:
        # 1 TensorCore / 128 MiB VMEM: one maximal lane-dense tile.
        return 1, 80 << 20, 96 << 20
    # Unknown chip: conservative defaults.
    return 1, 24 << 20, 48 << 20


def _choose_tile_n(mn, d_pad, num_cores, vmem_budget_bytes, max_tile=16384):
    """Largest 128-multiple pixel tile whose ADMM working set fits the VMEM budget.

    ~14 live f32 (d_pad, tile_n)-sized arrays: double-buffered y & out blocks, the
    4-array ADMM carry, and per-iteration temporaries (xx, dv, t1, t2, l1n, l2n).
    On 2-TensorCore chips (v7x) the step count is rounded up to an even number >= 2
    so both cores get balanced work; single-core chips take one maximal tile.
    """
    per_lane = 14 * d_pad * 4
    cap = max(128, (vmem_budget_bytes // per_lane) // 128 * 128)
    cap = min(cap, max_tile)
    mn_128 = _round_up(mn, 128)
    cap = min(cap, mn_128)
    if num_cores > 1 and mn_128 > 128:
        steps = _round_up(max(2, _cdiv(mn_128, cap)), 2)
        tile = _round_up(_cdiv(mn, steps), 128)
        cap = max(128, min(cap, tile))
    return cap


def hyminor(x, lam=10.0, iterations=50, tile_n=None,
            precision=jax.lax.Precision.HIGHEST, vmem_limit_bytes=None):
    """HyMiNoR forward pass (Pallas TPU)."""
    m, n, d = x.shape
    mn = m * n

    # TODO(synk): HyRes wavelet/low-rank Gaussian-denoise pre-step has no clean Pallas
    # equivalent here; it is treated as an identity pass-through on the normalized cube.
    hyres_result = x

    if iterations <= 0:
        return jnp.zeros((m, n, d), dtype=x.dtype)

    d_pad = _round_up(d, 8)                                       # (8,128)-align bands
    y = jnp.asarray(hyres_result, jnp.float32).reshape(mn, d).T   # (d, mn)
    if d_pad != d:
        y = jnp.pad(y, ((0, d_pad - d), (0, 0)))

    num_cores, vmem_budget, default_limit = _tpu_tuning()
    if vmem_limit_bytes is None:
        vmem_limit_bytes = default_limit
    if tile_n is None:
        tile_n = _choose_tile_n(mn, d_pad, num_cores, vmem_budget)
    tile_n = max(128, _round_up(int(tile_n), 128))

    # Pad the (independent) pixel axis; zero columns stay zero through the ADMM
    # iterations and are sliced off afterwards.
    mn_pad = _round_up(mn, tile_n)
    if mn_pad != mn:
        y = jnp.pad(y, ((0, 0), (0, mn_pad - mn)))

    a1, a2, b1, b2 = (jnp.asarray(a) for a in _make_split_operators(d, d_pad))

    kernel = functools.partial(_hyminor_kernel, lam=float(lam),
                               iterations=int(iterations), precision=precision)
    op_spec = pl.BlockSpec((d_pad, d_pad), lambda i: (0, 0))
    # NOTE: on very store-constrained v5e one could add pipeline_mode=pl.Buffered(1)
    # to the y/out specs (50 ADMM iterations per step dwarf one (d,tile_n) DMA), but
    # the default double-buffering is kept here for robustness across generations.
    xx = pl.pallas_call(
        kernel,
        out_shape=jax.ShapeDtypeStruct((d_pad, mn_pad), jnp.float32),
        grid_spec=pltpu.PrefetchScalarGridSpec(
            num_scalar_prefetch=0,
            grid=(mn_pad // tile_n,),
            in_specs=[
                pl.BlockSpec((d_pad, tile_n), lambda i: (0, i)),
                op_spec, op_spec, op_spec, op_spec,
            ],
            out_specs=pl.BlockSpec((d_pad, tile_n), lambda i: (0, i)),
        ),
        compiler_params=pltpu.CompilerParams(
            dimension_semantics=("parallel",),
            vmem_limit_bytes=int(vmem_limit_bytes)),
    )(y, a1, a2, b1, b2)

    xx = xx[:d, :mn]
    return xx.T.reshape(m, n, d).astype(x.dtype)


# ---------------------------------------------------------------------------
# Pure-JAX reference (original unfused formulation, no Pallas) for validation.
# ---------------------------------------------------------------------------
def _hyminor_reference(x, lam=10.0, iterations=50):
    m, n, d = x.shape
    mn = m * n
    y = jnp.asarray(x, jnp.float32).reshape(mn, d).T
    magic, dmat, dtmat = (jnp.asarray(a) for a in _make_operators(d))
    hp = jax.lax.Precision.HIGHEST
    xx = v1 = v2 = l1 = l2 = jnp.zeros_like(y)
    for _ in range(iterations):
        hold1 = -MU1 * (v1 - y - l1)
        hold2 = MU2 * jnp.dot(dtmat, v2 - l2, precision=hp)
        xx = jnp.dot(magic, hold1 + hold2, precision=hp)
        v1 = _soft(y - xx + l1, 1.0 / MU1)
        dv = jnp.dot(dmat, xx, precision=hp)
        v2 = _soft(dv + l2, lam / MU2)
        l1 = l1 + (y - xx - v1)
        l2 = l2 + (dv - v2)
    return xx.T.reshape(m, n, d)


if __name__ == "__main__":
    key = jax.random.PRNGKey(0)

    # Small hyperspectral cube: 16x16 pixels, 8 spectral bands, data in [0, 1].
    m, n, d = 16, 16, 8
    x = jax.random.uniform(key, (m, n, d), dtype=jnp.float32)
    out = jax.block_until_ready(hyminor(x, lam=10.0, iterations=50))
    assert out.shape == (m, n, d) and out.dtype == jnp.float32
    ref = jax.block_until_ready(jax.jit(_hyminor_reference)(x))
    err = float(jnp.max(jnp.abs(out - ref)))
    assert err < 2e-2, f"kernel/reference mismatch: max abs err = {err}"

    # Ragged pixel count (m*n not a multiple of 128) exercises the pixel-padding path.
    m2, n2 = 10, 12
    x2 = jax.random.uniform(jax.random.PRNGKey(1), (m2, n2, d), dtype=jnp.float32)
    out2 = jax.block_until_ready(hyminor(x2, lam=10.0, iterations=50))
    ref2 = jax.block_until_ready(jax.jit(_hyminor_reference)(x2))
    err2 = float(jnp.max(jnp.abs(out2 - ref2)))
    assert err2 < 2e-2, f"ragged kernel/reference mismatch: max abs err = {err2}"

    # Band count not a multiple of 8 exercises the band-padding path.
    m3, n3, d3 = 8, 8, 5
    x3 = jax.random.uniform(jax.random.PRNGKey(2), (m3, n3, d3), dtype=jnp.float32)
    out3 = jax.block_until_ready(hyminor(x3, lam=10.0, iterations=50))
    ref3 = jax.block_until_ready(jax.jit(_hyminor_reference)(x3))
    err3 = float(jnp.max(jnp.abs(out3 - ref3)))
    assert err3 < 2e-2, f"band-padded kernel/reference mismatch: max abs err = {err3}"

    print("KERNEL_OK")
</pallas_src>

<mosaic_0001>
module attributes {stable_mosaic.version = 11 : i64} {
  func.func @_hyminor_kernel(%arg0: i32, %arg1: memref<8x256xf32, #tpu.memory_space<vmem>>, %arg2: memref<8x8xf32, #tpu.memory_space<vmem>>, %arg3: memref<8x8xf32, #tpu.memory_space<vmem>>, %arg4: memref<8x8xf32, #tpu.memory_space<vmem>>, %arg5: memref<8x8xf32, #tpu.memory_space<vmem>>, %arg6: memref<8x256xf32, #tpu.memory_space<vmem>>) attributes {dimension_semantics = [#tpu.dimension_semantics<parallel>], iteration_bounds = array<i64: 1>, scalar_prefetch = 0 : i64, scratch_operands = 0 : i64, tpu.core_type = #tpu.core_type<tc>, window_params = [{transform_indices = @transform_0, window_bounds = array<i64: 8, 256>}, {pipeline_mode = #tpu.pipeline_mode<synchronous>, transform_indices = @transform_1, window_bounds = array<i64: 8, 8>}, {pipeline_mode = #tpu.pipeline_mode<synchronous>, transform_indices = @transform_2, window_bounds = array<i64: 8, 8>}, {pipeline_mode = #tpu.pipeline_mode<synchronous>, transform_indices = @transform_3, window_bounds = array<i64: 8, 8>}, {pipeline_mode = #tpu.pipeline_mode<synchronous>, transform_indices = @transform_4, window_bounds = array<i64: 8, 8>}, {transform_indices = @transform_5, window_bounds = array<i64: 8, 256>}]} {
    %c0 = arith.constant 0 : index
    %c0_0 = arith.constant 0 : index
    %0 = vector.load %arg1[%c0, %c0_0] : memref<8x256xf32, #tpu.memory_space<vmem>>, vector<8x256xf32>
    %c0_1 = arith.constant 0 : index
    %c0_2 = arith.constant 0 : index
    %1 = vector.load %arg2[%c0_1, %c0_2] : memref<8x8xf32, #tpu.memory_space<vmem>>, vector<8x8xf32>
    %c0_3 = arith.constant 0 : index
    %c0_4 = arith.constant 0 : index
    %2 = vector.load %arg3[%c0_3, %c0_4] : memref<8x8xf32, #tpu.memory_space<vmem>>, vector<8x8xf32>
    %c0_5 = arith.constant 0 : index
    %c0_6 = arith.constant 0 : index
    %3 = vector.load %arg4[%c0_5, %c0_6] : memref<8x8xf32, #tpu.memory_space<vmem>>, vector<8x8xf32>
    %c0_7 = arith.constant 0 : index
    %c0_8 = arith.constant 0 : index
    %4 = vector.load %arg5[%c0_7, %c0_8] : memref<8x8xf32, #tpu.memory_space<vmem>>, vector<8x8xf32>
    %cst = arith.constant 0.000000e+00 : f32
    %5 = vector.broadcast %cst : f32 to vector<8x256xf32>
    %c0_i32 = arith.constant 0 : i32
    %c24_i32 = arith.constant 24 : i32
    %6 = arith.addi %c0_i32, %c24_i32 : i32
    %c1_i32 = arith.constant 1 : i32
    %7:4 = scf.for %arg7 = %c0_i32 to %6 step %c1_i32 iter_args(%arg8 = %0, %arg9 = %5, %arg10 = %5, %arg11 = %5) -> (vector<8x256xf32>, vector<8x256xf32>, vector<8x256xf32>, vector<8x256xf32>)  : i32 {
      %cst_21 = arith.constant dense<0.000000e+00> : vector<8x256xf32>
      %34 = tpu.matmul %1, %arg8, %cst_21 {dimension_numbers = #tpu.dot_dimension_numbers<[1], [0], [0], [1], [0, 0, 1, 1], [], []>, precision = #tpu.contract_precision<fp32>} : vector<8x8xf32>, vector<8x256xf32>, vector<8x256xf32> -> vector<8x256xf32>
      %cst_22 = arith.constant dense<0.000000e+00> : vector<8x256xf32>
      %35 = tpu.matmul %2, %arg9, %cst_22 {dimension_numbers = #tpu.dot_dimension_numbers<[1], [0], [0], [1], [0, 0, 1, 1], [], []>, precision = #tpu.contract_precision<fp32>} : vector<8x8xf32>, vector<8x256xf32>, vector<8x256xf32> -> vector<8x256xf32>
      %36 = arith.addf %34, %35 : vector<8x256xf32>
      %cst_23 = arith.constant dense<0.000000e+00> : vector<8x256xf32>
      %37 = tpu.matmul %3, %arg8, %cst_23 {dimension_numbers = #tpu.dot_dimension_numbers<[1], [0], [0], [1], [0, 0, 1, 1], [], []>, precision = #tpu.contract_precision<fp32>} : vector<8x8xf32>, vector<8x256xf32>, vector<8x256xf32> -> vector<8x256xf32>
      %cst_24 = arith.constant dense<0.000000e+00> : vector<8x256xf32>
      %38 = tpu.matmul %4, %arg9, %cst_24 {dimension_numbers = #tpu.dot_dimension_numbers<[1], [0], [0], [1], [0, 0, 1, 1], [], []>, precision = #tpu.contract_precision<fp32>} : vector<8x8xf32>, vector<8x256xf32>, vector<8x256xf32> -> vector<8x256xf32>
      %39 = arith.addf %37, %38 : vector<8x256xf32>
      %40 = arith.subf %0, %36 : vector<8x256xf32>
      %41 = arith.addf %40, %arg10 : vector<8x256xf32>
      %42 = arith.addf %39, %arg11 : vector<8x256xf32>
      %cst_25 = arith.constant -2.000000e+00 : f32
      %cst_26 = arith.constant 2.000000e+00 : f32
      %43 = vector.broadcast %cst_25 : f32 to vector<8x256xf32>
      %44 = arith.maximumf %43, %41 : vector<8x256xf32>
      %45 = vector.broadcast %cst_26 : f32 to vector<8x256xf32>
      %46 = arith.minimumf %45, %44 : vector<8x256xf32>
      %cst_27 = arith.constant -2.000000e+01 : f32
      %cst_28 = arith.constant 2.000000e+01 : f32
      %47 = vector.broadcast %cst_27 : f32 to vector<8x256xf32>
      %48 = arith.maximumf %47, %42 : vector<8x256xf32>
      %49 = vector.broadcast %cst_28 : f32 to vector<8x256xf32>
      %50 = arith.minimumf %49, %48 : vector<8x256xf32>
      %51 = arith.subf %36, %arg10 : vector<8x256xf32>
      %52 = arith.addf %46, %46 : vector<8x256xf32>
      %53 = arith.addf %51, %52 : vector<8x256xf32>
      %54 = arith.addf %50, %50 : vector<8x256xf32>
      %55 = arith.subf %42, %54 : vector<8x256xf32>
      %cst_29 = arith.constant dense<0.000000e+00> : vector<8x256xf32>
      %56 = tpu.matmul %1, %53, %cst_29 {dimension_numbers = #tpu.dot_dimension_numbers<[1], [0], [0], [1], [0, 0, 1, 1], [], []>, precision = #tpu.contract_precision<fp32>} : vector<8x8xf32>, vector<8x256xf32>, vector<8x256xf32> -> vector<8x256xf32>
      %cst_30 = arith.constant dense<0.000000e+00> : vector<8x256xf32>
      %57 = tpu.matmul %2, %55, %cst_30 {dimension_numbers = #tpu.dot_dimension_numbers<[1], [0], [0], [1], [0, 0, 1, 1], [], []>, precision = #tpu.contract_precision<fp32>} : vector<8x8xf32>, vector<8x256xf32>, vector<8x256xf32> -> vector<8x256xf32>
      %58 = arith.addf %56, %57 : vector<8x256xf32>
      %cst_31 = arith.constant dense<0.000000e+00> : vector<8x256xf32>
      %59 = tpu.matmul %3, %53, %cst_31 {dimension_numbers = #tpu.dot_dimension_numbers<[1], [0], [0], [1], [0, 0, 1, 1], [], []>, precision = #tpu.contract_precision<fp32>} : vector<8x8xf32>, vector<8x256xf32>, vector<8x256xf32> -> vector<8x256xf32>
      %cst_32 = arith.constant dense<0.000000e+00> : vector<8x256xf32>
      %60 = tpu.matmul %4, %55, %cst_32 {dimension_numbers = #tpu.dot_dimension_numbers<[1], [0], [0], [1], [0, 0, 1, 1], [], []>, precision = #tpu.contract_precision<fp32>} : vector<8x8xf32>, vector<8x256xf32>, vector<8x256xf32> -> vector<8x256xf32>
      %61 = arith.addf %59, %60 : vector<8x256xf32>
      %62 = arith.subf %0, %58 : vector<8x256xf32>
      %63 = arith.addf %62, %46 : vector<8x256xf32>
      %64 = arith.addf %61, %50 : vector<8x256xf32>
      %cst_33 = arith.constant -2.000000e+00 : f32
      %cst_34 = arith.constant 2.000000e+00 : f32
      %65 = vector.broadcast %cst_33 : f32 to vector<8x256xf32>
      %66 = arith.maximumf %65, %63 : vector<8x256xf32>
      %67 = vector.broadcast %cst_34 : f32 to vector<8x256xf32>
      %68 = arith.minimumf %67, %66 : vector<8x256xf32>
      %cst_35 = arith.constant -2.000000e+01 : f32
      %cst_36 = arith.constant 2.000000e+01 : f32
      %69 = vector.broadcast %cst_35 : f32 to vector<8x256xf32>
      %70 = arith.maximumf %69, %64 : vector<8x256xf32>
      %71 = vector.broadcast %cst_36 : f32 to vector<8x256xf32>
      %72 = arith.minimumf %71, %70 : vector<8x256xf32>
      %73 = arith.subf %58, %46 : vector<8x256xf32>
      %74 = arith.addf %68, %68 : vector<8x256xf32>
      %75 = arith.addf %73, %74 : vector<8x256xf32>
      %76 = arith.addf %72, %72 : vector<8x256xf32>
      %77 = arith.subf %64, %76 : vector<8x256xf32>
      scf.yield %75, %77, %68, %72 : vector<8x256xf32>, vector<8x256xf32>, vector<8x256xf32>, vector<8x256xf32>
    }
    %cst_9 = arith.constant dense<0.000000e+00> : vector<8x256xf32>
    %8 = tpu.matmul %1, %7#0, %cst_9 {dimension_numbers = #tpu.dot_dimension_numbers<[1], [0], [0], [1], [0, 0, 1, 1], [], []>, precision = #tpu.contract_precision<fp32>} : vector<8x8xf32>, vector<8x256xf32>, vector<8x256xf32> -> vector<8x256xf32>
    %cst_10 = arith.constant dense<0.000000e+00> : vector<8x256xf32>
    %9 = tpu.matmul %2, %7#1, %cst_10 {dimension_numbers = #tpu.dot_dimension_numbers<[1], [0], [0], [1], [0, 0, 1, 1], [], []>, precision = #tpu.contract_precision<fp32>} : vector<8x8xf32>, vector<8x256xf32>, vector<8x256xf32> -> vector<8x256xf32>
    %10 = arith.addf %8, %9 : vector<8x256xf32>
    %cst_11 = arith.constant dense<0.000000e+00> : vector<8x256xf32>
    %11 = tpu.matmul %3, %7#0, %cst_11 {dimension_numbers = #tpu.dot_dimension_numbers<[1], [0], [0], [1], [0, 0, 1, 1], [], []>, precision = #tpu.contract_precision<fp32>} : vector<8x8xf32>, vector<8x256xf32>, vector<8x256xf32> -> vector<8x256xf32>
    %cst_12 = arith.constant dense<0.000000e+00> : vector<8x256xf32>
    %12 = tpu.matmul %4, %7#1, %cst_12 {dimension_numbers = #tpu.dot_dimension_numbers<[1], [0], [0], [1], [0, 0, 1, 1], [], []>, precision = #tpu.contract_precision<fp32>} : vector<8x8xf32>, vector<8x256xf32>, vector<8x256xf32> -> vector<8x256xf32>
    %13 = arith.addf %11, %12 : vector<8x256xf32>
    %14 = arith.subf %0, %10 : vector<8x256xf32>
    %15 = arith.addf %14, %7#2 : vector<8x256xf32>
    %16 = arith.addf %13, %7#3 : vector<8x256xf32>
    %cst_13 = arith.constant -2.000000e+00 : f32
    %cst_14 = arith.constant 2.000000e+00 : f32
    %17 = vector.broadcast %cst_13 : f32 to vector<8x256xf32>
    %18 = arith.maximumf %17, %15 : vector<8x256xf32>
    %19 = vector.broadcast %cst_14 : f32 to vector<8x256xf32>
    %20 = arith.minimumf %19, %18 : vector<8x256xf32>
    %cst_15 = arith.constant -2.000000e+01 : f32
    %cst_16 = arith.constant 2.000000e+01 : f32
    %21 = vector.broadcast %cst_15 : f32 to vector<8x256xf32>
    %22 = arith.maximumf %21, %16 : vector<8x256xf32>
    %23 = vector.broadcast %cst_16 : f32 to vector<8x256xf32>
    %24 = arith.minimumf %23, %22 : vector<8x256xf32>
    %25 = arith.subf %10, %7#2 : vector<8x256xf32>
    %26 = arith.addf %20, %20 : vector<8x256xf32>
    %27 = arith.addf %25, %26 : vector<8x256xf32>
    %28 = arith.addf %24, %24 : vector<8x256xf32>
    %29 = arith.subf %16, %28 : vector<8x256xf32>
    %cst_17 = arith.constant dense<0.000000e+00> : vector<8x256xf32>
    %30 = tpu.matmul %1, %27, %cst_17 {dimension_numbers = #tpu.dot_dimension_numbers<[1], [0], [0], [1], [0, 0, 1, 1], [], []>, precision = #tpu.contract_precision<fp32>} : vector<8x8xf32>, vector<8x256xf32>, vector<8x256xf32> -> vector<8x256xf32>
    %cst_18 = arith.constant dense<0.000000e+00> : vector<8x256xf32>
    %31 = tpu.matmul %2, %29, %cst_18 {dimension_numbers = #tpu.dot_dimension_numbers<[1], [0], [0], [1], [0, 0, 1, 1], [], []>, precision = #tpu.contract_precision<fp32>} : vector<8x8xf32>, vector<8x256xf32>, vector<8x256xf32> -> vector<8x256xf32>
    %32 = arith.addf %30, %31 : vector<8x256xf32>
    %c0_19 = arith.constant 0 : index
    %c0_20 = arith.constant 0 : index
    %33 = vector.load %arg6[%c0_19, %c0_20] : memref<8x256xf32, #tpu.memory_space<vmem>>, vector<8x256xf32>
    tpu.vector_store %arg6[%c0_19, %c0_20], %32 {strides = array<i32>} : memref<8x256xf32, #tpu.memory_space<vmem>>, vector<8x256xf32>,
    return
  }
  func.func @transform_0(%arg0: i32) -> (i32, i32) {
    %c0_i32 = arith.constant 0 : i32
    %c0_i32_0 = arith.constant 0 : i32
    return %c0_i32, %arg0 : i32, i32
  }
  func.func @transform_1(%arg0: i32) -> (i32, i32) {
    %c0_i32 = arith.constant 0 : i32
    %c0_i32_0 = arith.constant 0 : i32
    %c0_i32_1 = arith.constant 0 : i32
    return %c0_i32, %c0_i32_0 : i32, i32
  }
  func.func @transform_2(%arg0: i32) -> (i32, i32) {
    %c0_i32 = arith.constant 0 : i32
    %c0_i32_0 = arith.constant 0 : i32
    %c0_i32_1 = arith.constant 0 : i32
    return %c0_i32, %c0_i32_0 : i32, i32
  }
  func.func @transform_3(%arg0: i32) -> (i32, i32) {
    %c0_i32 = arith.constant 0 : i32
    %c0_i32_0 = arith.constant 0 : i32
    %c0_i32_1 = arith.constant 0 : i32
    return %c0_i32, %c0_i32_0 : i32, i32
  }
  func.func @transform_4(%arg0: i32) -> (i32, i32) {
    %c0_i32 = arith.constant 0 : i32
    %c0_i32_0 = arith.constant 0 : i32
    %c0_i32_1 = arith.constant 0 : i32
    return %c0_i32, %c0_i32_0 : i32, i32
  }
  func.func @transform_5(%arg0: i32) -> (i32, i32) {
    %c0_i32 = arith.constant 0 : i32
    %c0_i32_0 = arith.constant 0 : i32
    return %c0_i32, %arg0 : i32, i32
  }
}

</mosaic_0001>

<llo_original>
// kernel: tpu_custom_call.1
$region0: #{tpu_custom_call.1}
  #allocation0 [shape = 'u32[]', space=smem, size = 0x4, offset = 0x4, fixed_abs, tag = 'smem constant byte address 0x4 - core index']
  #allocation1 [shape = 'u32[144,128]{1,0:T(1,128)}', space=vmem, size = 0x12000, scoped, tag = 'internal scratch']
  %s0 = inlined_call_operand.hbm [shape: f32[8,256], index: 0, kind: input, shape index: {}]
  %s1 = inlined_call_operand.hbm [shape: f32[8,8], index: 1, kind: input, shape index: {}]
  %s2 = inlined_call_operand.hbm [shape: f32[8,8], index: 2, kind: input, shape index: {}]
  %s3 = inlined_call_operand.hbm [shape: f32[8,8], index: 3, kind: input, shape index: {}]
  %s4 = inlined_call_operand.hbm [shape: f32[8,8], index: 4, kind: input, shape index: {}]
  %s5 = inlined_call_operand.hbm [shape: f32[8,256], index: 5, kind: output, shape index: {}]
  %s6 = sld [smem:[#allocation0]]
  $region57: #{tpu_custom_call.1} parent=0
    _
  %s8 = ssub.s32 1, %s6
  %s9 = scalar_select 0, %s8, %s6
  $region1: #{tpu_custom_call.1} parent=0
    #allocation2 [shape = 'u8[8192]{0}', space=vmem, size = 0x2000, scoped, tag = 'input window, operand 0, single buffered']
    #allocation3 [shape = 's32[1]{0}', space=sflag, size = 0x4, scoped, tag = 'scoped memory for tpu_custom_call.1']
    #allocation4 [shape = 's32[1]{0}', space=sflag, size = 0x4, scoped, tag = 'scoped memory for tpu_custom_call.1']
    #allocation5 [shape = 'u8[4096]{0}', space=vmem, size = 0x1000, scoped, tag = 'input window, operand 1, single buffered']
    #allocation6 [shape = 's32[1]{0}', space=sflag, size = 0x4, scoped, tag = 'scoped memory for tpu_custom_call.1']
    #allocation7 [shape = 'u8[4096]{0}', space=vmem, size = 0x1000, scoped, tag = 'input window, operand 2, single buffered']
    #allocation8 [shape = 'u8[4096]{0}', space=vmem, size = 0x1000, scoped, tag = 'input window, operand 3, single buffered']
    #allocation9 [shape = 's32[1]{0}', space=sflag, size = 0x4, scoped, tag = 'scoped memory for tpu_custom_call.1']
    #allocation10 [shape = 'u8[4096]{0}', space=vmem, size = 0x1000, scoped, tag = 'input window, operand 4, single buffered']
    #allocation11 [shape = 'u8[8192]{0}', space=vmem, size = 0x2000, scoped, tag = 'output window, operand 0, single buffered']
    %10 = vsyncpa [#allocation3], 0
    %11 = vsyncpa [#allocation6], 0
    %12 = vsyncpa [#allocation9], 0
    %13 = vsyncpa [#allocation4], 0
    // Predicated region
    $region2: #{tpu_custom_call.1} parent=1 // pred_check
      _
    $region3: #{tpu_custom_call.1} parent=1 // pred_check_branch
      %15 = sbr.rel (0) target = $region5
    $region4: #{tpu_custom_call.1} parent=1 // pred_region
      %s17 = ssub.s32 256, 256
      %18 = vsyncadd [#allocation3], %s17
      %s20 = sshll.u32 [#allocation2], 4
      %s21 = int_to_ptr.vmem [resolvable:$true] %s20
      %23 = dma.hbm_to_vmem [thread:$0]  %s0, 256, %s21, [#allocation3]
    $region5: #{tpu_custom_call.1} parent=1 // pred_fallthru
      _
    // Predicated region
    $region6: #{tpu_custom_call.1} parent=1 // pred_check
      _
    $region7: #{tpu_custom_call.1} parent=1 // pred_check_branch
      %25 = sbr.rel (0) target = $region9
    $region8: #{tpu_custom_call.1} parent=1 // pred_region
      %s27 = ssub.s32 128, 128
      %28 = vsyncadd [#allocation6], %s27
      %s30 = sshll.u32 [#allocation5], 4
      %s31 = int_to_ptr.vmem [resolvable:$true] %s30
      %33 = dma.hbm_to_vmem [thread:$0]  %s1, 128, %s31, [#allocation6]
    $region9: #{tpu_custom_call.1} parent=1 // pred_fallthru
      _
    // Predicated region
    $region10: #{tpu_custom_call.1} parent=1 // pred_check
      _
    $region11: #{tpu_custom_call.1} parent=1 // pred_check_branch
      %35 = sbr.rel (0) target = $region13
    $region12: #{tpu_custom_call.1} parent=1 // pred_region
      %s37 = ssub.s32 128, 128
      %38 = vsyncadd [#allocation6], %s37
      %s40 = sshll.u32 [#allocation7], 4
      %s41 = int_to_ptr.vmem [resolvable:$true] %s40
      %43 = dma.hbm_to_vmem [thread:$0]  %s2, 128, %s41, [#allocation6]
    $region13: #{tpu_custom_call.1} parent=1 // pred_fallthru
      _
    // Predicated region
    $region14: #{tpu_custom_call.1} parent=1 // pred_check
      _
    $region15: #{tpu_custom_call.1} parent=1 // pred_check_branch
      %45 = sbr.rel (0) target = $region17
    $region16: #{tpu_custom_call.1} parent=1 // pred_region
      %s47 = ssub.s32 128, 128
      %48 = vsyncadd [#allocation9], %s47
      %s50 = sshll.u32 [#allocation8], 4
      %s51 = int_to_ptr.vmem [resolvable:$true] %s50
      %53 = dma.hbm_to_vmem [thread:$0]  %s3, 128, %s51, [#allocation9]
    $region17: #{tpu_custom_call.1} parent=1 // pred_fallthru
      _
    // Predicated region
    $region18: #{tpu_custom_call.1} parent=1 // pred_check
      _
    $region19: #{tpu_custom_call.1} parent=1 // pred_check_branch
      %55 = sbr.rel (0) target = $region21
    $region20: #{tpu_custom_call.1} parent=1 // pred_region
      %s57 = ssub.s32 128, 128
      %58 = vsyncadd [#allocation9], %s57
      %s60 = sshll.u32 [#allocation10], 4
      %s61 = int_to_ptr.vmem [resolvable:$true] %s60
      %63 = dma.hbm_to_vmem [thread:$0]  %s4, 128, %s61, [#allocation9]
    $region21: #{tpu_custom_call.1} parent=1 // pred_fallthru
      _
    // Predicated region
    $region22: #{tpu_custom_call.1} parent=1 // pred_check
      _
    $region23: #{tpu_custom_call.1} parent=1 // pred_check_branch
      %65 = sbr.rel (0) target = $region25
    $region24: #{tpu_custom_call.1} parent=1 // pred_region
      %66 = dma.done [#allocation3], 256
    $region25: #{tpu_custom_call.1} parent=1 // pred_fallthru
      _
    // Predicated region
    $region26: #{tpu_custom_call.1} parent=1 // pred_check
      _
    $region27: #{tpu_custom_call.1} parent=1 // pred_check_branch
      %68 = sbr.rel (0) target = $region29
    $region28: #{tpu_custom_call.1} parent=1 // pred_region
      %69 = dma.done [#allocation6], 128
    $region29: #{tpu_custom_call.1} parent=1 // pred_fallthru
      _
    // Predicated region
    $region30: #{tpu_custom_call.1} parent=1 // pred_check
      _
    $region31: #{tpu_custom_call.1} parent=1 // pred_check_branch
      %71 = sbr.rel (0) target = $region33
    $region32: #{tpu_custom_call.1} parent=1 // pred_region
      %72 = dma.done [#allocation6], 128
    $region33: #{tpu_custom_call.1} parent=1 // pred_fallthru
      _
    // Predicated region
    $region34: #{tpu_custom_call.1} parent=1 // pred_check
      _
    $region35: #{tpu_custom_call.1} parent=1 // pred_check_branch
      %74 = sbr.rel (0) target = $region37
    $region36: #{tpu_custom_call.1} parent=1 // pred_region
      %75 = dma.done [#allocation9], 128
    $region37: #{tpu_custom_call.1} parent=1 // pred_fallthru
      _
    // Predicated region
    $region38: #{tpu_custom_call.1} parent=1 // pred_check
      _
    $region39: #{tpu_custom_call.1} parent=1 // pred_check_branch
      %77 = sbr.rel (0) target = $region41
    $region40: #{tpu_custom_call.1} parent=1 // pred_region
      %78 = dma.done [#allocation9], 128
    $region41: #{tpu_custom_call.1} parent=1 // pred_fallthru
      _
    %v79 = vld [vmem:[#allocation2] sm:$0xff]
    %v80 = vld [vmem:[#allocation2 + $0x8] sm:$0xff]
    %v81 = vld [vmem:[#allocation5] sm:$0xff]
    %v82 = vld [vmem:[#allocation7] sm:$0xff]
    %v83 = vld [vmem:[#allocation8] sm:$0xff]
    %v84 = vld [vmem:[#allocation10] sm:$0xff]
    loop: start=0, step=1, limit=24
    $region42: #{tpu_custom_call.1} parent=1 // loop_pre_header
      _
    $region43: #{tpu_custom_call.1} parent=1 // loop_header
      %s86 = sphi 0, %s90
      %p87 = scmp.ge.s32.totalorder %s86, 24
      %v91 = vphi %v79, %v3874
      %v92 = vphi %v80, %v3875
      %v93 = vphi 0.0, %v3878
      %v94 = vphi 0.0, %v3879
      %v95 = vphi 0.0, %v3864
      %v96 = vphi 0.0, %v3865
      %v97 = vphi 0.0, %v3868
      %v98 = vphi 0.0, %v3869
    $region44: #{tpu_custom_call.1} parent=1 // loop_header_branch
      %89 = sbr.rel (%p87) target = $region48
    $region45: #{tpu_custom_call.1} parent=1 // loop_body
      %vm99 = vcmask 64512
      %v101 = vsel %vm99, %v82, 0
      %103 = vmatprep.subr.mxu0 0.0
      %104 = vmatpush1.msra.mxu0 0.0
      %105 = vmatprep.subr.mxu0 0.0
      %106 = vmatpush1.msra.mxu0 0.0
      %107 = vmatprep.subr.mxu0 0.0
      %108 = vmatpush1.msra.mxu0 0.0
      %109 = vmatprep.subr.mxu0 0.0
      %110 = vmatpush1.msra.mxu0 0.0
      %111 = vmatprep.subr.mxu0 0.0
      %112 = vmatpush1.msra.mxu0 0.0
      %113 = vmatprep.subr.mxu0 0.0
      %114 = vmatpush1.msra.mxu0 0.0
      %115 = vmatprep.subr.mxu0 0.0
      %116 = vmatpush1.msra.mxu0 0.0
      %117 = vmatprep.subr.mxu0 0.0
      %118 = vmatpush1.msra.mxu0 0.0
      %119 = vmatprep.subr.mxu0 0.0
      %120 = vmatpush1.msra.mxu0 0.0
      %121 = vmatprep.subr.mxu0 0.0
      %122 = vmatpush1.msra.mxu0 0.0
      %123 = vmatprep.subr.mxu0 0.0
      %124 = vmatpush1.msra.mxu0 0.0
      %125 = vmatprep.subr.mxu0 0.0
      %126 = vmatpush1.msra.mxu0 0.0
      %127 = vmatprep.subr.mxu0 0.0
      %128 = vmatpush1.msra.mxu0 0.0
      %129 = vmatprep.subr.mxu0 0.0
      %130 = vmatpush1.msra.mxu0 0.0
      %131 = vmatprep.subr.mxu0 0.0
      %132 = vmatpush1.msra.mxu0 0.0
      %v133 = vand.u32 %v94, 4294901760
      %134 = vmatprep.subr.mxu0 %v133
      %v135 = vand.u32 %v93, 4294901760
      %136 = vmatpush1.msra.mxu0 %v135
      %137 = vmatprep.subr.mxu0 0.0
      %138 = vmatpush2.msra.mxu0 0.0
      %139 = vmatprep.subr.mxu0 0.0
      %140 = vmatpush2.msra.mxu0 0.0
      %141 = vmatprep.subr.mxu0 0.0
      %142 = vmatpush2.msra.mxu0 0.0
      %143 = vmatprep.subr.mxu0 0.0
      %144 = vmatpush2.msra.mxu0 0.0
      %145 = vmatprep.subr.mxu0 0.0
      %146 = vmatpush2.msra.mxu0 0.0
      %147 = vmatprep.subr.mxu0 0.0
      %148 = vmatpush2.msra.mxu0 0.0
      %149 = vmatprep.subr.mxu0 0.0
      %150 = vmatpush2.msra.mxu0 0.0
      %151 = vmatprep.subr.mxu0 0.0
      %152 = vmatpush2.msra.mxu0 0.0
      %153 = vmatprep.subr.mxu0 0.0
      %154 = vmatpush2.msra.mxu0 0.0
      %155 = vmatprep.subr.mxu0 0.0
      %156 = vmatpush2.msra.mxu0 0.0
      %157 = vmatprep.subr.mxu0 0.0
      %158 = vmatpush2.msra.mxu0 0.0
      %159 = vmatprep.subr.mxu0 0.0
      %160 = vmatpush2.msra.mxu0 0.0
      %161 = vmatprep.subr.mxu0 0.0
      %162 = vmatpush2.msra.mxu0 0.0
      %163 = vmatprep.subr.mxu0 0.0
      %164 = vmatpush2.msra.mxu0 0.0
      %165 = vmatprep.subr.mxu0 0.0
      %166 = vmatpush2.msra.mxu0 0.0
      %167 = vmatprep.subr.mxu0 0.0
      %168 = vmatpush2.msra.mxu0 0.0
      %169 = vmatprep.mubr.f32.mxu0 0.0
      %v170 = vand.u32 %v101, 4294901760
      %v171 = vsub.f32 %v101, %v170
      %v172 = vand.u32 %v171, 4294901760
      %v173 = vsub.f32 %v171, %v172
      %v174 = vand.u32 %v173, 4294901760
      %175 = vmatmul.mubr.f32.gmra.mxu0 %v174
      %v176 = vpop.f32.mrf.mxu0
      %v177 = vadd.f32 0.0, %v176
      %v178 = vpop.f32.mrf.mxu0
      %v179 = vadd.f32 0.0, %v178
      %180 = vdwg.mxu0
      %181 = vmatprep.subr.mxu0 0.0
      %182 = vmatpush1.msra.mxu0 0.0
      %183 = vmatprep.subr.mxu0 0.0
      %184 = vmatpush1.msra.mxu0 0.0
      %185 = vmatprep.subr.mxu0 0.0
      %186 = vmatpush1.msra.mxu0 0.0
      %187 = vmatprep.subr.mxu0 0.0
      %188 = vmatpush1.msra.mxu0 0.0
      %189 = vmatprep.subr.mxu0 0.0
      %190 = vmatpush1.msra.mxu0 0.0
      %191 = vmatprep.subr.mxu0 0.0
      %192 = vmatpush1.msra.mxu0 0.0
      %193 = vmatprep.subr.mxu0 0.0
      %194 = vmatpush1.msra.mxu0 0.0
      %195 = vmatprep.subr.mxu0 0.0
      %196 = vmatpush1.msra.mxu0 0.0
      %197 = vmatprep.subr.mxu0 0.0
      %198 = vmatpush1.msra.mxu0 0.0
      %199 = vmatprep.subr.mxu0 0.0
      %200 = vmatpush1.msra.mxu0 0.0
      %201 = vmatprep.subr.mxu0 0.0
      %202 = vmatpush1.msra.mxu0 0.0
      %203 = vmatprep.subr.mxu0 0.0
      %204 = vmatpush1.msra.mxu0 0.0
      %205 = vmatprep.subr.mxu0 0.0
      %206 = vmatpush1.msra.mxu0 0.0
      %207 = vmatprep.subr.mxu0 0.0
      %208 = vmatpush1.msra.mxu0 0.0
      %209 = vmatprep.subr.mxu0 0.0
      %210 = vmatpush1.msra.mxu0 0.0
      %v211 = vand.u32 %v94, 4294901760
      %v212 = vsub.f32 %v94, %v211
      %v213 = vand.u32 %v212, 4294901760
      %v214 = vsub.f32 %v212, %v213
      %v215 = vand.u32 %v214, 4294901760
      %216 = vmatprep.subr.mxu0 %v215
      %v217 = vand.u32 %v93, 4294901760
      %v218 = vsub.f32 %v93, %v217
      %v219 = vand.u32 %v218, 4294901760
      %v220 = vsub.f32 %v218, %v219
      %v221 = vand.u32 %v220, 4294901760
      %222 = vmatpush1.msra.mxu0 %v221
      %223 = vmatprep.subr.mxu0 0.0
      %224 = vmatpush2.msra.mxu0 0.0
      %225 = vmatprep.subr.mxu0 0.0
      %226 = vmatpush2.msra.mxu0 0.0
      %227 = vmatprep.subr.mxu0 0.0
      %228 = vmatpush2.msra.mxu0 0.0
      %229 = vmatprep.subr.mxu0 0.0
      %230 = vmatpush2.msra.mxu0 0.0
      %231 = vmatprep.subr.mxu0 0.0
      %232 = vmatpush2.msra.mxu0 0.0
      %233 = vmatprep.subr.mxu0 0.0
      %234 = vmatpush2.msra.mxu0 0.0
      %235 = vmatprep.subr.mxu0 0.0
      %236 = vmatpush2.msra.mxu0 0.0
      %237 = vmatprep.subr.mxu0 0.0
      %238 = vmatpush2.msra.mxu0 0.0
      %239 = vmatprep.subr.mxu0 0.0
      %240 = vmatpush2.msra.mxu0 0.0
      %241 = vmatprep.subr.mxu0 0.0
      %242 = vmatpush2.msra.mxu0 0.0
      %243 = vmatprep.subr.mxu0 0.0
      %244 = vmatpush2.msra.mxu0 0.0
      %245 = vmatprep.subr.mxu0 0.0
      %246 = vmatpush2.msra.mxu0 0.0
      %247 = vmatprep.subr.mxu0 0.0
      %248 = vmatpush2.msra.mxu0 0.0
      %249 = vmatprep.subr.mxu0 0.0
      %250 = vmatpush2.msra.mxu0 0.0
      %251 = vmatprep.subr.mxu0 0.0
      %252 = vmatpush2.msra.mxu0 0.0
      %253 = vmatprep.subr.mxu0 0.0
      %254 = vmatpush2.msra.mxu0 0.0
      %255 = vmatprep.mubr.f32.mxu0 0.0
      %v256 = vand.u32 %v101, 4294901760
      %257 = vmatmul.mubr.f32.gmra.mxu0 %v256
      %v258 = vpop.f32.mrf.mxu0
      %v259 = vadd.f32 %v177, %v258
      %v260 = vpop.f32.mrf.mxu0
      %v261 = vadd.f32 %v179, %v260
      %262 = vdwg.mxu0
      %263 = vmatprep.subr.mxu0 0.0
      %264 = vmatpush1.msra.mxu0 0.0
      %265 = vmatprep.subr.mxu0 0.0
      %266 = vmatpush1.msra.mxu0 0.0
      %267 = vmatprep.subr.mxu0 0.0
      %268 = vmatpush1.msra.mxu0 0.0
      %269 = vmatprep.subr.mxu0 0.0
      %270 = vmatpush1.msra.mxu0 0.0
      %271 = vmatprep.subr.mxu0 0.0
      %272 = vmatpush1.msra.mxu0 0.0
      %273 = vmatprep.subr.mxu0 0.0
      %274 = vmatpush1.msra.mxu0 0.0
      %275 = vmatprep.subr.mxu0 0.0
      %276 = vmatpush1.msra.mxu0 0.0
      %277 = vmatprep.subr.mxu0 0.0
      %278 = vmatpush1.msra.mxu0 0.0
      %279 = vmatprep.subr.mxu0 0.0
      %280 = vmatpush1.msra.mxu0 0.0
      %281 = vmatprep.subr.mxu0 0.0
      %282 = vmatpush1.msra.mxu0 0.0
      %283 = vmatprep.subr.mxu0 0.0
      %284 = vmatpush1.msra.mxu0 0.0
      %285 = vmatprep.subr.mxu0 0.0
      %286 = vmatpush1.msra.mxu0 0.0
      %287 = vmatprep.subr.mxu0 0.0
      %288 = vmatpush1.msra.mxu0 0.0
      %289 = vmatprep.subr.mxu0 0.0
      %290 = vmatpush1.msra.mxu0 0.0
      %291 = vmatprep.subr.mxu0 0.0
      %292 = vmatpush1.msra.mxu0 0.0
      %v293 = vand.u32 %v94, 4294901760
      %v294 = vsub.f32 %v94, %v293
      %295 = vmatprep.subr.mxu0 %v294
      %v296 = vand.u32 %v93, 4294901760
      %v297 = vsub.f32 %v93, %v296
      %298 = vmatpush1.msra.mxu0 %v297
      %299 = vmatprep.subr.mxu0 0.0
      %300 = vmatpush2.msra.mxu0 0.0
      %301 = vmatprep.subr.mxu0 0.0
      %302 = vmatpush2.msra.mxu0 0.0
      %303 = vmatprep.subr.mxu0 0.0
      %304 = vmatpush2.msra.mxu0 0.0
      %305 = vmatprep.subr.mxu0 0.0
      %306 = vmatpush2.msra.mxu0 0.0
      %307 = vmatprep.subr.mxu0 0.0
      %308 = vmatpush2.msra.mxu0 0.0
      %309 = vmatprep.subr.mxu0 0.0
      %310 = vmatpush2.msra.mxu0 0.0
      %311 = vmatprep.subr.mxu0 0.0
      %312 = vmatpush2.msra.mxu0 0.0
      %313 = vmatprep.subr.mxu0 0.0
      %314 = vmatpush2.msra.mxu0 0.0
      %315 = vmatprep.subr.mxu0 0.0
      %316 = vmatpush2.msra.mxu0 0.0
      %317 = vmatprep.subr.mxu0 0.0
      %318 = vmatpush2.msra.mxu0 0.0
      %319 = vmatprep.subr.mxu0 0.0
      %320 = vmatpush2.msra.mxu0 0.0
      %321 = vmatprep.subr.mxu0 0.0
      %322 = vmatpush2.msra.mxu0 0.0
      %323 = vmatprep.subr.mxu0 0.0
      %324 = vmatpush2.msra.mxu0 0.0
      %325 = vmatprep.subr.mxu0 0.0
      %326 = vmatpush2.msra.mxu0 0.0
      %327 = vmatprep.subr.mxu0 0.0
      %328 = vmatpush2.msra.mxu0 0.0
      %329 = vmatprep.subr.mxu0 0.0
      %330 = vmatpush2.msra.mxu0 0.0
      %331 = vmatprep.mubr.f32.mxu0 0.0
      %v332 = vand.u32 %v101, 4294901760
      %v333 = vsub.f32 %v101, %v332
      %334 = vmatmul.mubr.f32.gmra.mxu0 %v333
      %v335 = vpop.f32.mrf.mxu0
      %v336 = vadd.f32 %v259, %v335
      %v337 = vpop.f32.mrf.mxu0
      %v338 = vadd.f32 %v261, %v337
      %339 = vdwg.mxu0
      %340 = vmatprep.subr.mxu0 0.0
      %341 = vmatpush1.msra.mxu0 0.0
      %342 = vmatprep.subr.mxu0 0.0
      %343 = vmatpush1.msra.mxu0 0.0
      %344 = vmatprep.subr.mxu0 0.0
      %345 = vmatpush1.msra.mxu0 0.0
      %346 = vmatprep.subr.mxu0 0.0
      %347 = vmatpush1.msra.mxu0 0.0
      %348 = vmatprep.subr.mxu0 0.0
      %349 = vmatpush1.msra.mxu0 0.0
      %350 = vmatprep.subr.mxu0 0.0
      %351 = vmatpush1.msra.mxu0 0.0
      %352 = vmatprep.subr.mxu0 0.0
      %353 = vmatpush1.msra.mxu0 0.0
      %354 = vmatprep.subr.mxu0 0.0
      %355 = vmatpush1.msra.mxu0 0.0
      %356 = vmatprep.subr.mxu0 0.0
      %357 = vmatpush1.msra.mxu0 0.0
      %358 = vmatprep.subr.mxu0 0.0
      %359 = vmatpush1.msra.mxu0 0.0
      %360 = vmatprep.subr.mxu0 0.0
      %361 = vmatpush1.msra.mxu0 0.0
      %362 = vmatprep.subr.mxu0 0.0
      %363 = vmatpush1.msra.mxu0 0.0
      %364 = vmatprep.subr.mxu0 0.0
      %365 = vmatpush1.msra.mxu0 0.0
      %366 = vmatprep.subr.mxu0 0.0
      %367 = vmatpush1.msra.mxu0 0.0
      %368 = vmatprep.subr.mxu0 0.0
      %369 = vmatpush1.msra.mxu0 0.0
      %v370 = vand.u32 %v94, 4294901760
      %371 = vmatprep.subr.mxu0 %v370
      %v372 = vand.u32 %v93, 4294901760
      %373 = vmatpush1.msra.mxu0 %v372
      %374 = vmatprep.subr.mxu0 0.0
      %375 = vmatpush2.msra.mxu0 0.0
      %376 = vmatprep.subr.mxu0 0.0
      %377 = vmatpush2.msra.mxu0 0.0
      %378 = vmatprep.subr.mxu0 0.0
      %379 = vmatpush2.msra.mxu0 0.0
      %380 = vmatprep.subr.mxu0 0.0
      %381 = vmatpush2.msra.mxu0 0.0
      %382 = vmatprep.subr.mxu0 0.0
      %383 = vmatpush2.msra.mxu0 0.0
      %384 = vmatprep.subr.mxu0 0.0
      %385 = vmatpush2.msra.mxu0 0.0
      %386 = vmatprep.subr.mxu0 0.0
      %387 = vmatpush2.msra.mxu0 0.0
      %388 = vmatprep.subr.mxu0 0.0
      %389 = vmatpush2.msra.mxu0 0.0
      %390 = vmatprep.subr.mxu0 0.0
      %391 = vmatpush2.msra.mxu0 0.0
      %392 = vmatprep.subr.mxu0 0.0
      %393 = vmatpush2.msra.mxu0 0.0
      %394 = vmatprep.subr.mxu0 0.0
      %395 = vmatpush2.msra.mxu0 0.0
      %396 = vmatprep.subr.mxu0 0.0
      %397 = vmatpush2.msra.mxu0 0.0
      %398 = vmatprep.subr.mxu0 0.0
      %399 = vmatpush2.msra.mxu0 0.0
      %400 = vmatprep.subr.mxu0 0.0
      %401 = vmatpush2.msra.mxu0 0.0
      %402 = vmatprep.subr.mxu0 0.0
      %403 = vmatpush2.msra.mxu0 0.0
      %404 = vmatprep.subr.mxu0 0.0
      %405 = vmatpush2.msra.mxu0 0.0
      %406 = vmatprep.mubr.f32.mxu0 0.0
      %v407 = vand.u32 %v101, 4294901760
      %v408 = vsub.f32 %v101, %v407
      %v409 = vand.u32 %v408, 4294901760
      %410 = vmatmul.mubr.f32.gmra.mxu0 %v409
      %v411 = vpop.f32.mrf.mxu0
      %v412 = vadd.f32 %v336, %v411
      %v413 = vpop.f32.mrf.mxu0
      %v414 = vadd.f32 %v338, %v413
      %415 = vdwg.mxu0
      %416 = vmatprep.subr.mxu0 0.0
      %417 = vmatpush1.msra.mxu0 0.0
      %418 = vmatprep.subr.mxu0 0.0
      %419 = vmatpush1.msra.mxu0 0.0
      %420 = vmatprep.subr.mxu0 0.0
      %421 = vmatpush1.msra.mxu0 0.0
      %422 = vmatprep.subr.mxu0 0.0
      %423 = vmatpush1.msra.mxu0 0.0
      %424 = vmatprep.subr.mxu0 0.0
      %425 = vmatpush1.msra.mxu0 0.0
      %426 = vmatprep.subr.mxu0 0.0
      %427 = vmatpush1.msra.mxu0 0.0
      %428 = vmatprep.subr.mxu0 0.0
      %429 = vmatpush1.msra.mxu0 0.0
      %430 = vmatprep.subr.mxu0 0.0
      %431 = vmatpush1.msra.mxu0 0.0
      %432 = vmatprep.subr.mxu0 0.0
      %433 = vmatpush1.msra.mxu0 0.0
      %434 = vmatprep.subr.mxu0 0.0
      %435 = vmatpush1.msra.mxu0 0.0
      %436 = vmatprep.subr.mxu0 0.0
      %437 = vmatpush1.msra.mxu0 0.0
      %438 = vmatprep.subr.mxu0 0.0
      %439 = vmatpush1.msra.mxu0 0.0
      %440 = vmatprep.subr.mxu0 0.0
      %441 = vmatpush1.msra.mxu0 0.0
      %442 = vmatprep.subr.mxu0 0.0
      %443 = vmatpush1.msra.mxu0 0.0
      %444 = vmatprep.subr.mxu0 0.0
      %445 = vmatpush1.msra.mxu0 0.0
      %v446 = vand.u32 %v94, 4294901760
      %v447 = vsub.f32 %v94, %v446
      %v448 = vand.u32 %v447, 4294901760
      %449 = vmatprep.subr.mxu0 %v448
      %v450 = vand.u32 %v93, 4294901760
      %v451 = vsub.f32 %v93, %v450
      %v452 = vand.u32 %v451, 4294901760
      %453 = vmatpush1.msra.mxu0 %v452
      %454 = vmatprep.subr.mxu0 0.0
      %455 = vmatpush2.msra.mxu0 0.0
      %456 = vmatprep.subr.mxu0 0.0
      %457 = vmatpush2.msra.mxu0 0.0
      %458 = vmatprep.subr.mxu0 0.0
      %459 = vmatpush2.msra.mxu0 0.0
      %460 = vmatprep.subr.mxu0 0.0
      %461 = vmatpush2.msra.mxu0 0.0
      %462 = vmatprep.subr.mxu0 0.0
      %463 = vmatpush2.msra.mxu0 0.0
      %464 = vmatprep.subr.mxu0 0.0
      %465 = vmatpush2.msra.mxu0 0.0
      %466 = vmatprep.subr.mxu0 0.0
      %467 = vmatpush2.msra.mxu0 0.0
      %468 = vmatprep.subr.mxu0 0.0
      %469 = vmatpush2.msra.mxu0 0.0
      %470 = vmatprep.subr.mxu0 0.0
      %471 = vmatpush2.msra.mxu0 0.0
      %472 = vmatprep.subr.mxu0 0.0
      %473 = vmatpush2.msra.mxu0 0.0
      %474 = vmatprep.subr.mxu0 0.0
      %475 = vmatpush2.msra.mxu0 0.0
      %476 = vmatprep.subr.mxu0 0.0
      %477 = vmatpush2.msra.mxu0 0.0
      %478 = vmatprep.subr.mxu0 0.0
      %479 = vmatpush2.msra.mxu0 0.0
      %480 = vmatprep.subr.mxu0 0.0
      %481 = vmatpush2.msra.mxu0 0.0
      %482 = vmatprep.subr.mxu0 0.0
      %483 = vmatpush2.msra.mxu0 0.0
      %484 = vmatprep.subr.mxu0 0.0
      %485 = vmatpush2.msra.mxu0 0.0
      %486 = vmatprep.mubr.f32.mxu0 0.0
      %v487 = vand.u32 %v101, 4294901760
      %488 = vmatmul.mubr.f32.gmra.mxu0 %v487
      %v489 = vpop.f32.mrf.mxu0
      %v490 = vadd.f32 %v412, %v489
      %v491 = vpop.f32.mrf.mxu0
      %v492 = vadd.f32 %v414, %v491
      %493 = vdwg.mxu0
      %494 = vmatprep.subr.mxu0 0.0
      %495 = vmatpush1.msra.mxu0 0.0
      %496 = vmatprep.subr.mxu0 0.0
      %497 = vmatpush1.msra.mxu0 0.0
      %498 = vmatprep.subr.mxu0 0.0
      %499 = vmatpush1.msra.mxu0 0.0
      %500 = vmatprep.subr.mxu0 0.0
      %501 = vmatpush1.msra.mxu0 0.0
      %502 = vmatprep.subr.mxu0 0.0
      %503 = vmatpush1.msra.mxu0 0.0
      %504 = vmatprep.subr.mxu0 0.0
      %505 = vmatpush1.msra.mxu0 0.0
      %506 = vmatprep.subr.mxu0 0.0
      %507 = vmatpush1.msra.mxu0 0.0
      %508 = vmatprep.subr.mxu0 0.0
      %509 = vmatpush1.msra.mxu0 0.0
      %510 = vmatprep.subr.mxu0 0.0
      %511 = vmatpush1.msra.mxu0 0.0
      %512 = vmatprep.subr.mxu0 0.0
      %513 = vmatpush1.msra.mxu0 0.0
      %514 = vmatprep.subr.mxu0 0.0
      %515 = vmatpush1.msra.mxu0 0.0
      %516 = vmatprep.subr.mxu0 0.0
      %517 = vmatpush1.msra.mxu0 0.0
      %518 = vmatprep.subr.mxu0 0.0
      %519 = vmatpush1.msra.mxu0 0.0
      %520 = vmatprep.subr.mxu0 0.0
      %521 = vmatpush1.msra.mxu0 0.0
      %522 = vmatprep.subr.mxu0 0.0
      %523 = vmatpush1.msra.mxu0 0.0
      %v524 = vand.u32 %v94, 4294901760
      %525 = vmatprep.subr.mxu0 %v524
      %v526 = vand.u32 %v93, 4294901760
      %527 = vmatpush1.msra.mxu0 %v526
      %528 = vmatprep.subr.mxu0 0.0
      %529 = vmatpush2.msra.mxu0 0.0
      %530 = vmatprep.subr.mxu0 0.0
      %531 = vmatpush2.msra.mxu0 0.0
      %532 = vmatprep.subr.mxu0 0.0
      %533 = vmatpush2.msra.mxu0 0.0
      %534 = vmatprep.subr.mxu0 0.0
      %535 = vmatpush2.msra.mxu0 0.0
      %536 = vmatprep.subr.mxu0 0.0
      %537 = vmatpush2.msra.mxu0 0.0
      %538 = vmatprep.subr.mxu0 0.0
      %539 = vmatpush2.msra.mxu0 0.0
      %540 = vmatprep.subr.mxu0 0.0
      %541 = vmatpush2.msra.mxu0 0.0
      %542 = vmatprep.subr.mxu0 0.0
      %543 = vmatpush2.msra.mxu0 0.0
      %544 = vmatprep.subr.mxu0 0.0
      %545 = vmatpush2.msra.mxu0 0.0
      %546 = vmatprep.subr.mxu0 0.0
      %547 = vmatpush2.msra.mxu0 0.0
      %548 = vmatprep.subr.mxu0 0.0
      %549 = vmatpush2.msra.mxu0 0.0
      %550 = vmatprep.subr.mxu0 0.0
      %551 = vmatpush2.msra.mxu0 0.0
      %552 = vmatprep.subr.mxu0 0.0
      %553 = vmatpush2.msra.mxu0 0.0
      %554 = vmatprep.subr.mxu0 0.0
      %555 = vmatpush2.msra.mxu0 0.0
      %556 = vmatprep.subr.mxu0 0.0
      %557 = vmatpush2.msra.mxu0 0.0
      %558 = vmatprep.subr.mxu0 0.0
      %559 = vmatpush2.msra.mxu0 0.0
      %560 = vmatprep.mubr.f32.mxu0 0.0
      %v561 = vand.u32 %v101, 4294901760
      %562 = vmatmul.mubr.f32.gmra.mxu0 %v561
      %v563 = vpop.f32.mrf.mxu0
      %v564 = vadd.f32 %v490, %v563
      %v565 = vpop.f32.mrf.mxu0
      %v566 = vadd.f32 %v492, %v565
      %567 = vdwg.mxu0
      %v569 = vsel %vm99, %v81, 0
      %571 = vmatprep.subr.mxu0 0.0
      %572 = vmatpush1.msra.mxu0 0.0
      %573 = vmatprep.subr.mxu0 0.0
      %574 = vmatpush1.msra.mxu0 0.0
      %575 = vmatprep.subr.mxu0 0.0
      %576 = vmatpush1.msra.mxu0 0.0
      %577 = vmatprep.subr.mxu0 0.0
      %578 = vmatpush1.msra.mxu0 0.0
      %579 = vmatprep.subr.mxu0 0.0
      %580 = vmatpush1.msra.mxu0 0.0
      %581 = vmatprep.subr.mxu0 0.0
      %582 = vmatpush1.msra.mxu0 0.0
      %583 = vmatprep.subr.mxu0 0.0
      %584 = vmatpush1.msra.mxu0 0.0
      %585 = vmatprep.subr.mxu0 0.0
      %586 = vmatpush1.msra.mxu0 0.0
      %587 = vmatprep.subr.mxu0 0.0
      %588 = vmatpush1.msra.mxu0 0.0
      %589 = vmatprep.subr.mxu0 0.0
      %590 = vmatpush1.msra.mxu0 0.0
      %591 = vmatprep.subr.mxu0 0.0
      %592 = vmatpush1.msra.mxu0 0.0
      %593 = vmatprep.subr.mxu0 0.0
      %594 = vmatpush1.msra.mxu0 0.0
      %595 = vmatprep.subr.mxu0 0.0
      %596 = vmatpush1.msra.mxu0 0.0
      %597 = vmatprep.subr.mxu0 0.0
      %598 = vmatpush1.msra.mxu0 0.0
      %599 = vmatprep.subr.mxu0 0.0
      %600 = vmatpush1.msra.mxu0 0.0
      %v601 = vand.u32 %v92, 4294901760
      %602 = vmatprep.subr.mxu0 %v601
      %v603 = vand.u32 %v91, 4294901760
      %604 = vmatpush1.msra.mxu0 %v603
      %605 = vmatprep.subr.mxu0 0.0
      %606 = vmatpush2.msra.mxu0 0.0
      %607 = vmatprep.subr.mxu0 0.0
      %608 = vmatpush2.msra.mxu0 0.0
      %609 = vmatprep.subr.mxu0 0.0
      %610 = vmatpush2.msra.mxu0 0.0
      %611 = vmatprep.subr.mxu0 0.0
      %612 = vmatpush2.msra.mxu0 0.0
      %613 = vmatprep.subr.mxu0 0.0
      %614 = vmatpush2.msra.mxu0 0.0
      %615 = vmatprep.subr.mxu0 0.0
      %616 = vmatpush2.msra.mxu0 0.0
      %617 = vmatprep.subr.mxu0 0.0
      %618 = vmatpush2.msra.mxu0 0.0
      %619 = vmatprep.subr.mxu0 0.0
      %620 = vmatpush2.msra.mxu0 0.0
      %621 = vmatprep.subr.mxu0 0.0
      %622 = vmatpush2.msra.mxu0 0.0
      %623 = vmatprep.subr.mxu0 0.0
      %624 = vmatpush2.msra.mxu0 0.0
      %625 = vmatprep.subr.mxu0 0.0
      %626 = vmatpush2.msra.mxu0 0.0
      %627 = vmatprep.subr.mxu0 0.0
      %628 = vmatpush2.msra.mxu0 0.0
      %629 = vmatprep.subr.mxu0 0.0
      %630 = vmatpush2.msra.mxu0 0.0
      %631 = vmatprep.subr.mxu0 0.0
      %632 = vmatpush2.msra.mxu0 0.0
      %633 = vmatprep.subr.mxu0 0.0
      %634 = vmatpush2.msra.mxu0 0.0
      %635 = vmatprep.subr.mxu0 0.0
      %636 = vmatpush2.msra.mxu0 0.0
      %637 = vmatprep.mubr.f32.mxu0 0.0
      %v638 = vand.u32 %v569, 4294901760
      %v639 = vsub.f32 %v569, %v638
      %v640 = vand.u32 %v639, 4294901760
      %v641 = vsub.f32 %v639, %v640
      %v642 = vand.u32 %v641, 4294901760
      %643 = vmatmul.mubr.f32.gmra.mxu0 %v642
      %v644 = vpop.f32.mrf.mxu0
      %v645 = vadd.f32 %v564, %v644
      %v646 = vpop.f32.mrf.mxu0
      %v647 = vadd.f32 %v566, %v646
      %648 = vdwg.mxu0
      %649 = vmatprep.subr.mxu0 0.0
      %650 = vmatpush1.msra.mxu0 0.0
      %651 = vmatprep.subr.mxu0 0.0
      %652 = vmatpush1.msra.mxu0 0.0
      %653 = vmatprep.subr.mxu0 0.0
      %654 = vmatpush1.msra.mxu0 0.0
      %655 = vmatprep.subr.mxu0 0.0
      %656 = vmatpush1.msra.mxu0 0.0
      %657 = vmatprep.subr.mxu0 0.0
      %658 = vmatpush1.msra.mxu0 0.0
      %659 = vmatprep.subr.mxu0 0.0
      %660 = vmatpush1.msra.mxu0 0.0
      %661 = vmatprep.subr.mxu0 0.0
      %662 = vmatpush1.msra.mxu0 0.0
      %663 = vmatprep.subr.mxu0 0.0
      %664 = vmatpush1.msra.mxu0 0.0
      %665 = vmatprep.subr.mxu0 0.0
      %666 = vmatpush1.msra.mxu0 0.0
      %667 = vmatprep.subr.mxu0 0.0
      %668 = vmatpush1.msra.mxu0 0.0
      %669 = vmatprep.subr.mxu0 0.0
      %670 = vmatpush1.msra.mxu0 0.0
      %671 = vmatprep.subr.mxu0 0.0
      %672 = vmatpush1.msra.mxu0 0.0
      %673 = vmatprep.subr.mxu0 0.0
      %674 = vmatpush1.msra.mxu0 0.0
      %675 = vmatprep.subr.mxu0 0.0
      %676 = vmatpush1.msra.mxu0 0.0
      %677 = vmatprep.subr.mxu0 0.0
      %678 = vmatpush1.msra.mxu0 0.0
      %v679 = vand.u32 %v92, 4294901760
      %v680 = vsub.f32 %v92, %v679
      %v681 = vand.u32 %v680, 4294901760
      %v682 = vsub.f32 %v680, %v681
      %v683 = vand.u32 %v682, 4294901760
      %684 = vmatprep.subr.mxu0 %v683
      %v685 = vand.u32 %v91, 4294901760
      %v686 = vsub.f32 %v91, %v685
      %v687 = vand.u32 %v686, 4294901760
      %v688 = vsub.f32 %v686, %v687
      %v689 = vand.u32 %v688, 4294901760
      %690 = vmatpush1.msra.mxu0 %v689
      %691 = vmatprep.subr.mxu0 0.0
      %692 = vmatpush2.msra.mxu0 0.0
      %693 = vmatprep.subr.mxu0 0.0
      %694 = vmatpush2.msra.mxu0 0.0
      %695 = vmatprep.subr.mxu0 0.0
      %696 = vmatpush2.msra.mxu0 0.0
      %697 = vmatprep.subr.mxu0 0.0
      %698 = vmatpush2.msra.mxu0 0.0
      %699 = vmatprep.subr.mxu0 0.0
      %700 = vmatpush2.msra.mxu0 0.0
      %701 = vmatprep.subr.mxu0 0.0
      %702 = vmatpush2.msra.mxu0 0.0
      %703 = vmatprep.subr.mxu0 0.0
      %704 = vmatpush2.msra.mxu0 0.0
      %705 = vmatprep.subr.mxu0 0.0
      %706 = vmatpush2.msra.mxu0 0.0
      %707 = vmatprep.subr.mxu0 0.0
      %708 = vmatpush2.msra.mxu0 0.0
      %709 = vmatprep.subr.mxu0 0.0
      %710 = vmatpush2.msra.mxu0 0.0
      %711 = vmatprep.subr.mxu0 0.0
      %712 = vmatpush2.msra.mxu0 0.0
      %713 = vmatprep.subr.mxu0 0.0
      %714 = vmatpush2.msra.mxu0 0.0
      %715 = vmatprep.subr.mxu0 0.0
      %716 = vmatpush2.msra.mxu0 0.0
      %717 = vmatprep.subr.mxu0 0.0
      %718 = vmatpush2.msra.mxu0 0.0
      %719 = vmatprep.subr.mxu0 0.0
      %720 = vmatpush2.msra.mxu0 0.0
      %721 = vmatprep.subr.mxu0 0.0
      %722 = vmatpush2.msra.mxu0 0.0
      %723 = vmatprep.mubr.f32.mxu0 0.0
      %v724 = vand.u32 %v569, 4294901760
      %725 = vmatmul.mubr.f32.gmra.mxu0 %v724
      %v726 = vpop.f32.mrf.mxu0
      %v727 = vadd.f32 %v645, %v726
      %v728 = vpop.f32.mrf.mxu0
      %v729 = vadd.f32 %v647, %v728
      %730 = vdwg.mxu0
      %731 = vmatprep.subr.mxu0 0.0
      %732 = vmatpush1.msra.mxu0 0.0
      %733 = vmatprep.subr.mxu0 0.0
      %734 = vmatpush1.msra.mxu0 0.0
      %735 = vmatprep.subr.mxu0 0.0
      %736 = vmatpush1.msra.mxu0 0.0
      %737 = vmatprep.subr.mxu0 0.0
      %738 = vmatpush1.msra.mxu0 0.0
      %739 = vmatprep.subr.mxu0 0.0
      %740 = vmatpush1.msra.mxu0 0.0
      %741 = vmatprep.subr.mxu0 0.0
      %742 = vmatpush1.msra.mxu0 0.0
      %743 = vmatprep.subr.mxu0 0.0
      %744 = vmatpush1.msra.mxu0 0.0
      %745 = vmatprep.subr.mxu0 0.0
      %746 = vmatpush1.msra.mxu0 0.0
      %747 = vmatprep.subr.mxu0 0.0
      %748 = vmatpush1.msra.mxu0 0.0
      %749 = vmatprep.subr.mxu0 0.0
      %750 = vmatpush1.msra.mxu0 0.0
      %751 = vmatprep.subr.mxu0 0.0
      %752 = vmatpush1.msra.mxu0 0.0
      %753 = vmatprep.subr.mxu0 0.0
      %754 = vmatpush1.msra.mxu0 0.0
      %755 = vmatprep.subr.mxu0 0.0
      %756 = vmatpush1.msra.mxu0 0.0
      %757 = vmatprep.subr.mxu0 0.0
      %758 = vmatpush1.msra.mxu0 0.0
      %759 = vmatprep.subr.mxu0 0.0
      %760 = vmatpush1.msra.mxu0 0.0
      %v761 = vand.u32 %v92, 4294901760
      %v762 = vsub.f32 %v92, %v761
      %763 = vmatprep.subr.mxu0 %v762
      %v764 = vand.u32 %v91, 4294901760
      %v765 = vsub.f32 %v91, %v764
      %766 = vmatpush1.msra.mxu0 %v765
      %767 = vmatprep.subr.mxu0 0.0
      %768 = vmatpush2.msra.mxu0 0.0
      %769 = vmatprep.subr.mxu0 0.0
      %770 = vmatpush2.msra.mxu0 0.0
      %771 = vmatprep.subr.mxu0 0.0
      %772 = vmatpush2.msra.mxu0 0.0
      %773 = vmatprep.subr.mxu0 0.0
      %774 = vmatpush2.msra.mxu0 0.0
      %775 = vmatprep.subr.mxu0 0.0
      %776 = vmatpush2.msra.mxu0 0.0
      %777 = vmatprep.subr.mxu0 0.0
      %778 = vmatpush2.msra.mxu0 0.0
      %779 = vmatprep.subr.mxu0 0.0
      %780 = vmatpush2.msra.mxu0 0.0
      %781 = vmatprep.subr.mxu0 0.0
      %782 = vmatpush2.msra.mxu0 0.0
      %783 = vmatprep.subr.mxu0 0.0
      %784 = vmatpush2.msra.mxu0 0.0
      %785 = vmatprep.subr.mxu0 0.0
      %786 = vmatpush2.msra.mxu0 0.0
      %787 = vmatprep.subr.mxu0 0.0
      %788 = vmatpush2.msra.mxu0 0.0
      %789 = vmatprep.subr.mxu0 0.0
      %790 = vmatpush2.msra.mxu0 0.0
      %791 = vmatprep.subr.mxu0 0.0
      %792 = vmatpush2.msra.mxu0 0.0
      %793 = vmatprep.subr.mxu0 0.0
      %794 = vmatpush2.msra.mxu0 0.0
      %795 = vmatprep.subr.mxu0 0.0
      %796 = vmatpush2.msra.mxu0 0.0
      %797 = vmatprep.subr.mxu0 0.0
      %798 = vmatpush2.msra.mxu0 0.0
      %799 = vmatprep.mubr.f32.mxu0 0.0
      %v800 = vand.u32 %v569, 4294901760
      %v801 = vsub.f32 %v569, %v800
      %802 = vmatmul.mubr.f32.gmra.mxu0 %v801
      %v803 = vpop.f32.mrf.mxu0
      %v804 = vadd.f32 %v727, %v803
      %v805 = vpop.f32.mrf.mxu0
      %v806 = vadd.f32 %v729, %v805
      %807 = vdwg.mxu0
      %808 = vmatprep.subr.mxu0 0.0
      %809 = vmatpush1.msra.mxu0 0.0
      %810 = vmatprep.subr.mxu0 0.0
      %811 = vmatpush1.msra.mxu0 0.0
      %812 = vmatprep.subr.mxu0 0.0
      %813 = vmatpush1.msra.mxu0 0.0
      %814 = vmatprep.subr.mxu0 0.0
      %815 = vmatpush1.msra.mxu0 0.0
      %816 = vmatprep.subr.mxu0 0.0
      %817 = vmatpush1.msra.mxu0 0.0
      %818 = vmatprep.subr.mxu0 0.0
      %819 = vmatpush1.msra.mxu0 0.0
      %820 = vmatprep.subr.mxu0 0.0
      %821 = vmatpush1.msra.mxu0 0.0
      %822 = vmatprep.subr.mxu0 0.0
      %823 = vmatpush1.msra.mxu0 0.0
      %824 = vmatprep.subr.mxu0 0.0
      %825 = vmatpush1.msra.mxu0 0.0
      %826 = vmatprep.subr.mxu0 0.0
      %827 = vmatpush1.msra.mxu0 0.0
      %828 = vmatprep.subr.mxu0 0.0
      %829 = vmatpush1.msra.mxu0 0.0
      %830 = vmatprep.subr.mxu0 0.0
      %831 = vmatpush1.msra.mxu0 0.0
      %832 = vmatprep.subr.mxu0 0.0
      %833 = vmatpush1.msra.mxu0 0.0
      %834 = vmatprep.subr.mxu0 0.0
      %835 = vmatpush1.msra.mxu0 0.0
      %836 = vmatprep.subr.mxu0 0.0
      %837 = vmatpush1.msra.mxu0 0.0
      %v838 = vand.u32 %v92, 4294901760
      %839 = vmatprep.subr.mxu0 %v838
      %v840 = vand.u32 %v91, 4294901760
      %841 = vmatpush1.msra.mxu0 %v840
      %842 = vmatprep.subr.mxu0 0.0
      %843 = vmatpush2.msra.mxu0 0.0
      %844 = vmatprep.subr.mxu0 0.0
      %845 = vmatpush2.msra.mxu0 0.0
      %846 = vmatprep.subr.mxu0 0.0
      %847 = vmatpush2.msra.mxu0 0.0
      %848 = vmatprep.subr.mxu0 0.0
      %849 = vmatpush2.msra.mxu0 0.0
      %850 = vmatprep.subr.mxu0 0.0
      %851 = vmatpush2.msra.mxu0 0.0
      %852 = vmatprep.subr.mxu0 0.0
      %853 = vmatpush2.msra.mxu0 0.0
      %854 = vmatprep.subr.mxu0 0.0
      %855 = vmatpush2.msra.mxu0 0.0
      %856 = vmatprep.subr.mxu0 0.0
      %857 = vmatpush2.msra.mxu0 0.0
      %858 = vmatprep.subr.mxu0 0.0
      %859 = vmatpush2.msra.mxu0 0.0
      %860 = vmatprep.subr.mxu0 0.0
      %861 = vmatpush2.msra.mxu0 0.0
      %862 = vmatprep.subr.mxu0 0.0
      %863 = vmatpush2.msra.mxu0 0.0
      %864 = vmatprep.subr.mxu0 0.0
      %865 = vmatpush2.msra.mxu0 0.0
      %866 = vmatprep.subr.mxu0 0.0
      %867 = vmatpush2.msra.mxu0 0.0
      %868 = vmatprep.subr.mxu0 0.0
      %869 = vmatpush2.msra.mxu0 0.0
      %870 = vmatprep.subr.mxu0 0.0
      %871 = vmatpush2.msra.mxu0 0.0
      %872 = vmatprep.subr.mxu0 0.0
      %873 = vmatpush2.msra.mxu0 0.0
      %874 = vmatprep.mubr.f32.mxu0 0.0
      %v875 = vand.u32 %v569, 4294901760
      %v876 = vsub.f32 %v569, %v875
      %v877 = vand.u32 %v876, 4294901760
      %878 = vmatmul.mubr.f32.gmra.mxu0 %v877
      %v879 = vpop.f32.mrf.mxu0
      %v880 = vadd.f32 %v804, %v879
      %v881 = vpop.f32.mrf.mxu0
      %v882 = vadd.f32 %v806, %v881
      %883 = vdwg.mxu0
      %884 = vmatprep.subr.mxu0 0.0
      %885 = vmatpush1.msra.mxu0 0.0
      %886 = vmatprep.subr.mxu0 0.0
      %887 = vmatpush1.msra.mxu0 0.0
      %888 = vmatprep.subr.mxu0 0.0
      %889 = vmatpush1.msra.mxu0 0.0
      %890 = vmatprep.subr.mxu0 0.0
      %891 = vmatpush1.msra.mxu0 0.0
      %892 = vmatprep.subr.mxu0 0.0
      %893 = vmatpush1.msra.mxu0 0.0
      %894 = vmatprep.subr.mxu0 0.0
      %895 = vmatpush1.msra.mxu0 0.0
      %896 = vmatprep.subr.mxu0 0.0
      %897 = vmatpush1.msra.mxu0 0.0
      %898 = vmatprep.subr.mxu0 0.0
      %899 = vmatpush1.msra.mxu0 0.0
      %900 = vmatprep.subr.mxu0 0.0
      %901 = vmatpush1.msra.mxu0 0.0
      %902 = vmatprep.subr.mxu0 0.0
      %903 = vmatpush1.msra.mxu0 0.0
      %904 = vmatprep.subr.mxu0 0.0
      %905 = vmatpush1.msra.mxu0 0.0
      %906 = vmatprep.subr.mxu0 0.0
      %907 = vmatpush1.msra.mxu0 0.0
      %908 = vmatprep.subr.mxu0 0.0
      %909 = vmatpush1.msra.mxu0 0.0
      %910 = vmatprep.subr.mxu0 0.0
      %911 = vmatpush1.msra.mxu0 0.0
      %912 = vmatprep.subr.mxu0 0.0
      %913 = vmatpush1.msra.mxu0 0.0
      %v914 = vand.u32 %v92, 4294901760
      %v915 = vsub.f32 %v92, %v914
      %v916 = vand.u32 %v915, 4294901760
      %917 = vmatprep.subr.mxu0 %v916
      %v918 = vand.u32 %v91, 4294901760
      %v919 = vsub.f32 %v91, %v918
      %v920 = vand.u32 %v919, 4294901760
      %921 = vmatpush1.msra.mxu0 %v920
      %922 = vmatprep.subr.mxu0 0.0
      %923 = vmatpush2.msra.mxu0 0.0
      %924 = vmatprep.subr.mxu0 0.0
      %925 = vmatpush2.msra.mxu0 0.0
      %926 = vmatprep.subr.mxu0 0.0
      %927 = vmatpush2.msra.mxu0 0.0
      %928 = vmatprep.subr.mxu0 0.0
      %929 = vmatpush2.msra.mxu0 0.0
      %930 = vmatprep.subr.mxu0 0.0
      %931 = vmatpush2.msra.mxu0 0.0
      %932 = vmatprep.subr.mxu0 0.0
      %933 = vmatpush2.msra.mxu0 0.0
      %934 = vmatprep.subr.mxu0 0.0
      %935 = vmatpush2.msra.mxu0 0.0
      %936 = vmatprep.subr.mxu0 0.0
      %937 = vmatpush2.msra.mxu0 0.0
      %938 = vmatprep.subr.mxu0 0.0
      %939 = vmatpush2.msra.mxu0 0.0
      %940 = vmatprep.subr.mxu0 0.0
      %941 = vmatpush2.msra.mxu0 0.0
      %942 = vmatprep.subr.mxu0 0.0
      %943 = vmatpush2.msra.mxu0 0.0
      %944 = vmatprep.subr.mxu0 0.0
      %945 = vmatpush2.msra.mxu0 0.0
      %946 = vmatprep.subr.mxu0 0.0
      %947 = vmatpush2.msra.mxu0 0.0
      %948 = vmatprep.subr.mxu0 0.0
      %949 = vmatpush2.msra.mxu0 0.0
      %950 = vmatprep.subr.mxu0 0.0
      %951 = vmatpush2.msra.mxu0 0.0
      %952 = vmatprep.subr.mxu0 0.0
      %953 = vmatpush2.msra.mxu0 0.0
      %954 = vmatprep.mubr.f32.mxu0 0.0
      %v955 = vand.u32 %v569, 4294901760
      %956 = vmatmul.mubr.f32.gmra.mxu0 %v955
      %v957 = vpop.f32.mrf.mxu0
      %v958 = vadd.f32 %v880, %v957
      %v959 = vpop.f32.mrf.mxu0
      %v960 = vadd.f32 %v882, %v959
      %961 = vdwg.mxu0
      %962 = vmatprep.subr.mxu0 0.0
      %963 = vmatpush1.msra.mxu0 0.0
      %964 = vmatprep.subr.mxu0 0.0
      %965 = vmatpush1.msra.mxu0 0.0
      %966 = vmatprep.subr.mxu0 0.0
      %967 = vmatpush1.msra.mxu0 0.0
      %968 = vmatprep.subr.mxu0 0.0
      %969 = vmatpush1.msra.mxu0 0.0
      %970 = vmatprep.subr.mxu0 0.0
      %971 = vmatpush1.msra.mxu0 0.0
      %972 = vmatprep.subr.mxu0 0.0
      %973 = vmatpush1.msra.mxu0 0.0
      %974 = vmatprep.subr.mxu0 0.0
      %975 = vmatpush1.msra.mxu0 0.0
      %976 = vmatprep.subr.mxu0 0.0
      %977 = vmatpush1.msra.mxu0 0.0
      %978 = vmatprep.subr.mxu0 0.0
      %979 = vmatpush1.msra.mxu0 0.0
      %980 = vmatprep.subr.mxu0 0.0
      %981 = vmatpush1.msra.mxu0 0.0
      %982 = vmatprep.subr.mxu0 0.0
      %983 = vmatpush1.msra.mxu0 0.0
      %984 = vmatprep.subr.mxu0 0.0
      %985 = vmatpush1.msra.mxu0 0.0
      %986 = vmatprep.subr.mxu0 0.0
      %987 = vmatpush1.msra.mxu0 0.0
      %988 = vmatprep.subr.mxu0 0.0
      %989 = vmatpush1.msra.mxu0 0.0
      %990 = vmatprep.subr.mxu0 0.0
      %991 = vmatpush1.msra.mxu0 0.0
      %v992 = vand.u32 %v92, 4294901760
      %993 = vmatprep.subr.mxu0 %v992
      %v994 = vand.u32 %v91, 4294901760
      %995 = vmatpush1.msra.mxu0 %v994
      %996 = vmatprep.subr.mxu0 0.0
      %997 = vmatpush2.msra.mxu0 0.0
      %998 = vmatprep.subr.mxu0 0.0
      %999 = vmatpush2.msra.mxu0 0.0
      %1000 = vmatprep.subr.mxu0 0.0
      %1001 = vmatpush2.msra.mxu0 0.0
      %1002 = vmatprep.subr.mxu0 0.0
      %1003 = vmatpush2.msra.mxu0 0.0
      %1004 = vmatprep.subr.mxu0 0.0
      %1005 = vmatpush2.msra.mxu0 0.0
      %1006 = vmatprep.subr.mxu0 0.0
      %1007 = vmatpush2.msra.mxu0 0.0
      %1008 = vmatprep.subr.mxu0 0.0
      %1009 = vmatpush2.msra.mxu0 0.0
      %1010 = vmatprep.subr.mxu0 0.0
      %1011 = vmatpush2.msra.mxu0 0.0
      %1012 = vmatprep.subr.mxu0 0.0
      %1013 = vmatpush2.msra.mxu0 0.0
      %1014 = vmatprep.subr.mxu0 0.0
      %1015 = vmatpush2.msra.mxu0 0.0
      %1016 = vmatprep.subr.mxu0 0.0
      %1017 = vmatpush2.msra.mxu0 0.0
      %1018 = vmatprep.subr.mxu0 0.0
      %1019 = vmatpush2.msra.mxu0 0.0
      %1020 = vmatprep.subr.mxu0 0.0
      %1021 = vmatpush2.msra.mxu0 0.0
      %1022 = vmatprep.subr.mxu0 0.0
      %1023 = vmatpush2.msra.mxu0 0.0
      %1024 = vmatprep.subr.mxu0 0.0
      %1025 = vmatpush2.msra.mxu0 0.0
      %1026 = vmatprep.subr.mxu0 0.0
      %1027 = vmatpush2.msra.mxu0 0.0
      %1028 = vmatprep.mubr.f32.mxu0 0.0
      %v1029 = vand.u32 %v569, 4294901760
      %1030 = vmatmul.mubr.f32.gmra.mxu0 %v1029
      %v1031 = vpop.f32.mrf.mxu0
      %v1032 = vadd.f32 %v958, %v1031
      %v1033 = vpop.f32.mrf.mxu0
      %v1034 = vadd.f32 %v960, %v1033
      %1035 = vdwg.mxu0
      %v1037 = vsel %vm99, %v84, 0
      %1039 = vmatprep.subr.mxu0 0.0
      %1040 = vmatpush1.msra.mxu0 0.0
      %1041 = vmatprep.subr.mxu0 0.0
      %1042 = vmatpush1.msra.mxu0 0.0
      %1043 = vmatprep.subr.mxu0 0.0
      %1044 = vmatpush1.msra.mxu0 0.0
      %1045 = vmatprep.subr.mxu0 0.0
      %1046 = vmatpush1.msra.mxu0 0.0
      %1047 = vmatprep.subr.mxu0 0.0
      %1048 = vmatpush1.msra.mxu0 0.0
      %1049 = vmatprep.subr.mxu0 0.0
      %1050 = vmatpush1.msra.mxu0 0.0
      %1051 = vmatprep.subr.mxu0 0.0
      %1052 = vmatpush1.msra.mxu0 0.0
      %1053 = vmatprep.subr.mxu0 0.0
      %1054 = vmatpush1.msra.mxu0 0.0
      %1055 = vmatprep.subr.mxu0 0.0
      %1056 = vmatpush1.msra.mxu0 0.0
      %1057 = vmatprep.subr.mxu0 0.0
      %1058 = vmatpush1.msra.mxu0 0.0
      %1059 = vmatprep.subr.mxu0 0.0
      %1060 = vmatpush1.msra.mxu0 0.0
      %1061 = vmatprep.subr.mxu0 0.0
      %1062 = vmatpush1.msra.mxu0 0.0
      %1063 = vmatprep.subr.mxu0 0.0
      %1064 = vmatpush1.msra.mxu0 0.0
      %1065 = vmatprep.subr.mxu0 0.0
      %1066 = vmatpush1.msra.mxu0 0.0
      %1067 = vmatprep.subr.mxu0 0.0
      %1068 = vmatpush1.msra.mxu0 0.0
      %v1069 = vand.u32 %v94, 4294901760
      %1070 = vmatprep.subr.mxu0 %v1069
      %v1071 = vand.u32 %v93, 4294901760
      %1072 = vmatpush1.msra.mxu0 %v1071
      %1073 = vmatprep.subr.mxu0 0.0
      %1074 = vmatpush2.msra.mxu0 0.0
      %1075 = vmatprep.subr.mxu0 0.0
      %1076 = vmatpush2.msra.mxu0 0.0
      %1077 = vmatprep.subr.mxu0 0.0
      %1078 = vmatpush2.msra.mxu0 0.0
      %1079 = vmatprep.subr.mxu0 0.0
      %1080 = vmatpush2.msra.mxu0 0.0
      %1081 = vmatprep.subr.mxu0 0.0
      %1082 = vmatpush2.msra.mxu0 0.0
      %1083 = vmatprep.subr.mxu0 0.0
      %1084 = vmatpush2.msra.mxu0 0.0
      %1085 = vmatprep.subr.mxu0 0.0
      %1086 = vmatpush2.msra.mxu0 0.0
      %1087 = vmatprep.subr.mxu0 0.0
      %1088 = vmatpush2.msra.mxu0 0.0
      %1089 = vmatprep.subr.mxu0 0.0
      %1090 = vmatpush2.msra.mxu0 0.0
      %1091 = vmatprep.subr.mxu0 0.0
      %1092 = vmatpush2.msra.mxu0 0.0
      %1093 = vmatprep.subr.mxu0 0.0
      %1094 = vmatpush2.msra.mxu0 0.0
      %1095 = vmatprep.subr.mxu0 0.0
      %1096 = vmatpush2.msra.mxu0 0.0
      %1097 = vmatprep.subr.mxu0 0.0
      %1098 = vmatpush2.msra.mxu0 0.0
      %1099 = vmatprep.subr.mxu0 0.0
      %1100 = vmatpush2.msra.mxu0 0.0
      %1101 = vmatprep.subr.mxu0 0.0
      %1102 = vmatpush2.msra.mxu0 0.0
      %1103 = vmatprep.subr.mxu0 0.0
      %1104 = vmatpush2.msra.mxu0 0.0
      %1105 = vmatprep.mubr.f32.mxu0 0.0
      %v1106 = vand.u32 %v1037, 4294901760
      %v1107 = vsub.f32 %v1037, %v1106
      %v1108 = vand.u32 %v1107, 4294901760
      %v1109 = vsub.f32 %v1107, %v1108
      %v1110 = vand.u32 %v1109, 4294901760
      %1111 = vmatmul.mubr.f32.gmra.mxu0 %v1110
      %v1112 = vpop.f32.mrf.mxu0
      %v1113 = vadd.f32 0.0, %v1112
      %v1114 = vpop.f32.mrf.mxu0
      %v1115 = vadd.f32 0.0, %v1114
      %1116 = vdwg.mxu0
      %1117 = vmatprep.subr.mxu0 0.0
      %1118 = vmatpush1.msra.mxu0 0.0
      %1119 = vmatprep.subr.mxu0 0.0
      %1120 = vmatpush1.msra.mxu0 0.0
      %1121 = vmatprep.subr.mxu0 0.0
      %1122 = vmatpush1.msra.mxu0 0.0
      %1123 = vmatprep.subr.mxu0 0.0
      %1124 = vmatpush1.msra.mxu0 0.0
      %1125 = vmatprep.subr.mxu0 0.0
      %1126 = vmatpush1.msra.mxu0 0.0
      %1127 = vmatprep.subr.mxu0 0.0
      %1128 = vmatpush1.msra.mxu0 0.0
      %1129 = vmatprep.subr.mxu0 0.0
      %1130 = vmatpush1.msra.mxu0 0.0
      %1131 = vmatprep.subr.mxu0 0.0
      %1132 = vmatpush1.msra.mxu0 0.0
      %1133 = vmatprep.subr.mxu0 0.0
      %1134 = vmatpush1.msra.mxu0 0.0
      %1135 = vmatprep.subr.mxu0 0.0
      %1136 = vmatpush1.msra.mxu0 0.0
      %1137 = vmatprep.subr.mxu0 0.0
      %1138 = vmatpush1.msra.mxu0 0.0
      %1139 = vmatprep.subr.mxu0 0.0
      %1140 = vmatpush1.msra.mxu0 0.0
      %1141 = vmatprep.subr.mxu0 0.0
      %1142 = vmatpush1.msra.mxu0 0.0
      %1143 = vmatprep.subr.mxu0 0.0
      %1144 = vmatpush1.msra.mxu0 0.0
      %1145 = vmatprep.subr.mxu0 0.0
      %1146 = vmatpush1.msra.mxu0 0.0
      %v1147 = vand.u32 %v94, 4294901760
      %v1148 = vsub.f32 %v94, %v1147
      %v1149 = vand.u32 %v1148, 4294901760
      %v1150 = vsub.f32 %v1148, %v1149
      %v1151 = vand.u32 %v1150, 4294901760
      %1152 = vmatprep.subr.mxu0 %v1151
      %v1153 = vand.u32 %v93, 4294901760
      %v1154 = vsub.f32 %v93, %v1153
      %v1155 = vand.u32 %v1154, 4294901760
      %v1156 = vsub.f32 %v1154, %v1155
      %v1157 = vand.u32 %v1156, 4294901760
      %1158 = vmatpush1.msra.mxu0 %v1157
      %1159 = vmatprep.subr.mxu0 0.0
      %1160 = vmatpush2.msra.mxu0 0.0
      %1161 = vmatprep.subr.mxu0 0.0
      %1162 = vmatpush2.msra.mxu0 0.0
      %1163 = vmatprep.subr.mxu0 0.0
      %1164 = vmatpush2.msra.mxu0 0.0
      %1165 = vmatprep.subr.mxu0 0.0
      %1166 = vmatpush2.msra.mxu0 0.0
      %1167 = vmatprep.subr.mxu0 0.0
      %1168 = vmatpush2.msra.mxu0 0.0
      %1169 = vmatprep.subr.mxu0 0.0
      %1170 = vmatpush2.msra.mxu0 0.0
      %1171 = vmatprep.subr.mxu0 0.0
      %1172 = vmatpush2.msra.mxu0 0.0
      %1173 = vmatprep.subr.mxu0 0.0
      %1174 = vmatpush2.msra.mxu0 0.0
      %1175 = vmatprep.subr.mxu0 0.0
      %1176 = vmatpush2.msra.mxu0 0.0
      %1177 = vmatprep.subr.mxu0 0.0
      %1178 = vmatpush2.msra.mxu0 0.0
      %1179 = vmatprep.subr.mxu0 0.0
      %1180 = vmatpush2.msra.mxu0 0.0
      %1181 = vmatprep.subr.mxu0 0.0
      %1182 = vmatpush2.msra.mxu0 0.0
      %1183 = vmatprep.subr.mxu0 0.0
      %1184 = vmatpush2.msra.mxu0 0.0
      %1185 = vmatprep.subr.mxu0 0.0
      %1186 = vmatpush2.msra.mxu0 0.0
      %1187 = vmatprep.subr.mxu0 0.0
      %1188 = vmatpush2.msra.mxu0 0.0
      %1189 = vmatprep.subr.mxu0 0.0
      %1190 = vmatpush2.msra.mxu0 0.0
      %1191 = vmatprep.mubr.f32.mxu0 0.0
      %v1192 = vand.u32 %v1037, 4294901760
      %1193 = vmatmul.mubr.f32.gmra.mxu0 %v1192
      %v1194 = vpop.f32.mrf.mxu0
      %v1195 = vadd.f32 %v1113, %v1194
      %v1196 = vpop.f32.mrf.mxu0
      %v1197 = vadd.f32 %v1115, %v1196
      %1198 = vdwg.mxu0
      %1199 = vmatprep.subr.mxu0 0.0
      %1200 = vmatpush1.msra.mxu0 0.0
      %1201 = vmatprep.subr.mxu0 0.0
      %1202 = vmatpush1.msra.mxu0 0.0
      %1203 = vmatprep.subr.mxu0 0.0
      %1204 = vmatpush1.msra.mxu0 0.0
      %1205 = vmatprep.subr.mxu0 0.0
      %1206 = vmatpush1.msra.mxu0 0.0
      %1207 = vmatprep.subr.mxu0 0.0
      %1208 = vmatpush1.msra.mxu0 0.0
      %1209 = vmatprep.subr.mxu0 0.0
      %1210 = vmatpush1.msra.mxu0 0.0
      %1211 = vmatprep.subr.mxu0 0.0
      %1212 = vmatpush1.msra.mxu0 0.0
      %1213 = vmatprep.subr.mxu0 0.0
      %1214 = vmatpush1.msra.mxu0 0.0
      %1215 = vmatprep.subr.mxu0 0.0
      %1216 = vmatpush1.msra.mxu0 0.0
      %1217 = vmatprep.subr.mxu0 0.0
      %1218 = vmatpush1.msra.mxu0 0.0
      %1219 = vmatprep.subr.mxu0 0.0
      %1220 = vmatpush1.msra.mxu0 0.0
      %1221 = vmatprep.subr.mxu0 0.0
      %1222 = vmatpush1.msra.mxu0 0.0
      %1223 = vmatprep.subr.mxu0 0.0
      %1224 = vmatpush1.msra.mxu0 0.0
      %1225 = vmatprep.subr.mxu0 0.0
      %1226 = vmatpush1.msra.mxu0 0.0
      %1227 = vmatprep.subr.mxu0 0.0
      %1228 = vmatpush1.msra.mxu0 0.0
      %v1229 = vand.u32 %v94, 4294901760
      %v1230 = vsub.f32 %v94, %v1229
      %1231 = vmatprep.subr.mxu0 %v1230
      %v1232 = vand.u32 %v93, 4294901760
      %v1233 = vsub.f32 %v93, %v1232
      %1234 = vmatpush1.msra.mxu0 %v1233
      %1235 = vmatprep.subr.mxu0 0.0
      %1236 = vmatpush2.msra.mxu0 0.0
      %1237 = vmatprep.subr.mxu0 0.0
      %1238 = vmatpush2.msra.mxu0 0.0
      %1239 = vmatprep.subr.mxu0 0.0
      %1240 = vmatpush2.msra.mxu0 0.0
      %1241 = vmatprep.subr.mxu0 0.0
      %1242 = vmatpush2.msra.mxu0 0.0
      %1243 = vmatprep.subr.mxu0 0.0
      %1244 = vmatpush2.msra.mxu0 0.0
      %1245 = vmatprep.subr.mxu0 0.0
      %1246 = vmatpush2.msra.mxu0 0.0
      %1247 = vmatprep.subr.mxu0 0.0
      %1248 = vmatpush2.msra.mxu0 0.0
      %1249 = vmatprep.subr.mxu0 0.0
      %1250 = vmatpush2.msra.mxu0 0.0
      %1251 = vmatprep.subr.mxu0 0.0
      %1252 = vmatpush2.msra.mxu0 0.0
      %1253 = vmatprep.subr.mxu0 0.0
      %1254 = vmatpush2.msra.mxu0 0.0
      %1255 = vmatprep.subr.mxu0 0.0
      %1256 = vmatpush2.msra.mxu0 0.0
      %1257 = vmatprep.subr.mxu0 0.0
      %1258 = vmatpush2.msra.mxu0 0.0
      %1259 = vmatprep.subr.mxu0 0.0
      %1260 = vmatpush2.msra.mxu0 0.0
      %1261 = vmatprep.subr.mxu0 0.0
      %1262 = vmatpush2.msra.mxu0 0.0
      %1263 = vmatprep.subr.mxu0 0.0
      %1264 = vmatpush2.msra.mxu0 0.0
      %1265 = vmatprep.subr.mxu0 0.0
      %1266 = vmatpush2.msra.mxu0 0.0
      %1267 = vmatprep.mubr.f32.mxu0 0.0
      %v1268 = vand.u32 %v1037, 4294901760
      %v1269 = vsub.f32 %v1037, %v1268
      %1270 = vmatmul.mubr.f32.gmra.mxu0 %v1269
      %v1271 = vpop.f32.mrf.mxu0
      %v1272 = vadd.f32 %v1195, %v1271
      %v1273 = vpop.f32.mrf.mxu0
      %v1274 = vadd.f32 %v1197, %v1273
      %1275 = vdwg.mxu0
      %1276 = vmatprep.subr.mxu0 0.0
      %1277 = vmatpush1.msra.mxu0 0.0
      %1278 = vmatprep.subr.mxu0 0.0
      %1279 = vmatpush1.msra.mxu0 0.0
      %1280 = vmatprep.subr.mxu0 0.0
      %1281 = vmatpush1.msra.mxu0 0.0
      %1282 = vmatprep.subr.mxu0 0.0
      %1283 = vmatpush1.msra.mxu0 0.0
      %1284 = vmatprep.subr.mxu0 0.0
      %1285 = vmatpush1.msra.mxu0 0.0
      %1286 = vmatprep.subr.mxu0 0.0
      %1287 = vmatpush1.msra.mxu0 0.0
      %1288 = vmatprep.subr.mxu0 0.0
      %1289 = vmatpush1.msra.mxu0 0.0
      %1290 = vmatprep.subr.mxu0 0.0
      %1291 = vmatpush1.msra.mxu0 0.0
      %1292 = vmatprep.subr.mxu0 0.0
      %1293 = vmatpush1.msra.mxu0 0.0
      %1294 = vmatprep.subr.mxu0 0.0
      %1295 = vmatpush1.msra.mxu0 0.0
      %1296 = vmatprep.subr.mxu0 0.0
      %1297 = vmatpush1.msra.mxu0 0.0
      %1298 = vmatprep.subr.mxu0 0.0
      %1299 = vmatpush1.msra.mxu0 0.0
      %1300 = vmatprep.subr.mxu0 0.0
      %1301 = vmatpush1.msra.mxu0 0.0
      %1302 = vmatprep.subr.mxu0 0.0
      %1303 = vmatpush1.msra.mxu0 0.0
      %1304 = vmatprep.subr.mxu0 0.0
      %1305 = vmatpush1.msra.mxu0 0.0
      %v1306 = vand.u32 %v94, 4294901760
      %1307 = vmatprep.subr.mxu0 %v1306
      %v1308 = vand.u32 %v93, 4294901760
      %1309 = vmatpush1.msra.mxu0 %v1308
      %1310 = vmatprep.subr.mxu0 0.0
      %1311 = vmatpush2.msra.mxu0 0.0
      %1312 = vmatprep.subr.mxu0 0.0
      %1313 = vmatpush2.msra.mxu0 0.0
      %1314 = vmatprep.subr.mxu0 0.0
      %1315 = vmatpush2.msra.mxu0 0.0
      %1316 = vmatprep.subr.mxu0 0.0
      %1317 = vmatpush2.msra.mxu0 0.0
      %1318 = vmatprep.subr.mxu0 0.0
      %1319 = vmatpush2.msra.mxu0 0.0
      %1320 = vmatprep.subr.mxu0 0.0
      %1321 = vmatpush2.msra.mxu0 0.0
      %1322 = vmatprep.subr.mxu0 0.0
      %1323 = vmatpush2.msra.mxu0 0.0
      %1324 = vmatprep.subr.mxu0 0.0
      %1325 = vmatpush2.msra.mxu0 0.0
      %1326 = vmatprep.subr.mxu0 0.0
      %1327 = vmatpush2.msra.mxu0 0.0
      %1328 = vmatprep.subr.mxu0 0.0
      %1329 = vmatpush2.msra.mxu0 0.0
      %1330 = vmatprep.subr.mxu0 0.0
      %1331 = vmatpush2.msra.mxu0 0.0
      %1332 = vmatprep.subr.mxu0 0.0
      %1333 = vmatpush2.msra.mxu0 0.0
      %1334 = vmatprep.subr.mxu0 0.0
      %1335 = vmatpush2.msra.mxu0 0.0
      %1336 = vmatprep.subr.mxu0 0.0
      %1337 = vmatpush2.msra.mxu0 0.0
      %1338 = vmatprep.subr.mxu0 0.0
      %1339 = vmatpush2.msra.mxu0 0.0
      %1340 = vmatprep.subr.mxu0 0.0
      %1341 = vmatpush2.msra.mxu0 0.0
      %1342 = vmatprep.mubr.f32.mxu0 0.0
      %v1343 = vand.u32 %v1037, 4294901760
      %v1344 = vsub.f32 %v1037, %v1343
      %v1345 = vand.u32 %v1344, 4294901760
      %1346 = vmatmul.mubr.f32.gmra.mxu0 %v1345
      %v1347 = vpop.f32.mrf.mxu0
      %v1348 = vadd.f32 %v1272, %v1347
      %v1349 = vpop.f32.mrf.mxu0
      %v1350 = vadd.f32 %v1274, %v1349
      %1351 = vdwg.mxu0
      %1352 = vmatprep.subr.mxu0 0.0
      %1353 = vmatpush1.msra.mxu0 0.0
      %1354 = vmatprep.subr.mxu0 0.0
      %1355 = vmatpush1.msra.mxu0 0.0
      %1356 = vmatprep.subr.mxu0 0.0
      %1357 = vmatpush1.msra.mxu0 0.0
      %1358 = vmatprep.subr.mxu0 0.0
      %1359 = vmatpush1.msra.mxu0 0.0
      %1360 = vmatprep.subr.mxu0 0.0
      %1361 = vmatpush1.msra.mxu0 0.0
      %1362 = vmatprep.subr.mxu0 0.0
      %1363 = vmatpush1.msra.mxu0 0.0
      %1364 = vmatprep.subr.mxu0 0.0
      %1365 = vmatpush1.msra.mxu0 0.0
      %1366 = vmatprep.subr.mxu0 0.0
      %1367 = vmatpush1.msra.mxu0 0.0
      %1368 = vmatprep.subr.mxu0 0.0
      %1369 = vmatpush1.msra.mxu0 0.0
      %1370 = vmatprep.subr.mxu0 0.0
      %1371 = vmatpush1.msra.mxu0 0.0
      %1372 = vmatprep.subr.mxu0 0.0
      %1373 = vmatpush1.msra.mxu0 0.0
      %1374 = vmatprep.subr.mxu0 0.0
      %1375 = vmatpush1.msra.mxu0 0.0
      %1376 = vmatprep.subr.mxu0 0.0
      %1377 = vmatpush1.msra.mxu0 0.0
      %1378 = vmatprep.subr.mxu0 0.0
      %1379 = vmatpush1.msra.mxu0 0.0
      %1380 = vmatprep.subr.mxu0 0.0
      %1381 = vmatpush1.msra.mxu0 0.0
      %v1382 = vand.u32 %v94, 4294901760
      %v1383 = vsub.f32 %v94, %v1382
      %v1384 = vand.u32 %v1383, 4294901760
      %1385 = vmatprep.subr.mxu0 %v1384
      %v1386 = vand.u32 %v93, 4294901760
      %v1387 = vsub.f32 %v93, %v1386
      %v1388 = vand.u32 %v1387, 4294901760
      %1389 = vmatpush1.msra.mxu0 %v1388
      %1390 = vmatprep.subr.mxu0 0.0
      %1391 = vmatpush2.msra.mxu0 0.0
      %1392 = vmatprep.subr.mxu0 0.0
      %1393 = vmatpush2.msra.mxu0 0.0
      %1394 = vmatprep.subr.mxu0 0.0
      %1395 = vmatpush2.msra.mxu0 0.0
      %1396 = vmatprep.subr.mxu0 0.0
      %1397 = vmatpush2.msra.mxu0 0.0
      %1398 = vmatprep.subr.mxu0 0.0
      %1399 = vmatpush2.msra.mxu0 0.0
      %1400 = vmatprep.subr.mxu0 0.0
      %1401 = vmatpush2.msra.mxu0 0.0
      %1402 = vmatprep.subr.mxu0 0.0
      %1403 = vmatpush2.msra.mxu0 0.0
      %1404 = vmatprep.subr.mxu0 0.0
      %1405 = vmatpush2.msra.mxu0 0.0
      %1406 = vmatprep.subr.mxu0 0.0
      %1407 = vmatpush2.msra.mxu0 0.0
      %1408 = vmatprep.subr.mxu0 0.0
      %1409 = vmatpush2.msra.mxu0 0.0
      %1410 = vmatprep.subr.mxu0 0.0
      %1411 = vmatpush2.msra.mxu0 0.0
      %1412 = vmatprep.subr.mxu0 0.0
      %1413 = vmatpush2.msra.mxu0 0.0
      %1414 = vmatprep.subr.mxu0 0.0
      %1415 = vmatpush2.msra.mxu0 0.0
      %1416 = vmatprep.subr.mxu0 0.0
      %1417 = vmatpush2.msra.mxu0 0.0
      %1418 = vmatprep.subr.mxu0 0.0
      %1419 = vmatpush2.msra.mxu0 0.0
      %1420 = vmatprep.subr.mxu0 0.0
      %1421 = vmatpush2.msra.mxu0 0.0
      %1422 = vmatprep.mubr.f32.mxu0 0.0
      %v1423 = vand.u32 %v1037, 4294901760
      %1424 = vmatmul.mubr.f32.gmra.mxu0 %v1423
      %v1425 = vpop.f32.mrf.mxu0
      %v1426 = vadd.f32 %v1348, %v1425
      %v1427 = vpop.f32.mrf.mxu0
      %v1428 = vadd.f32 %v1350, %v1427
      %1429 = vdwg.mxu0
      %1430 = vmatprep.subr.mxu0 0.0
      %1431 = vmatpush1.msra.mxu0 0.0
      %1432 = vmatprep.subr.mxu0 0.0
      %1433 = vmatpush1.msra.mxu0 0.0
      %1434 = vmatprep.subr.mxu0 0.0
      %1435 = vmatpush1.msra.mxu0 0.0
      %1436 = vmatprep.subr.mxu0 0.0
      %1437 = vmatpush1.msra.mxu0 0.0
      %1438 = vmatprep.subr.mxu0 0.0
      %1439 = vmatpush1.msra.mxu0 0.0
      %1440 = vmatprep.subr.mxu0 0.0
      %1441 = vmatpush1.msra.mxu0 0.0
      %1442 = vmatprep.subr.mxu0 0.0
      %1443 = vmatpush1.msra.mxu0 0.0
      %1444 = vmatprep.subr.mxu0 0.0
      %1445 = vmatpush1.msra.mxu0 0.0
      %1446 = vmatprep.subr.mxu0 0.0
      %1447 = vmatpush1.msra.mxu0 0.0
      %1448 = vmatprep.subr.mxu0 0.0
      %1449 = vmatpush1.msra.mxu0 0.0
      %1450 = vmatprep.subr.mxu0 0.0
      %1451 = vmatpush1.msra.mxu0 0.0
      %1452 = vmatprep.subr.mxu0 0.0
      %1453 = vmatpush1.msra.mxu0 0.0
      %1454 = vmatprep.subr.mxu0 0.0
      %1455 = vmatpush1.msra.mxu0 0.0
      %1456 = vmatprep.subr.mxu0 0.0
      %1457 = vmatpush1.msra.mxu0 0.0
      %1458 = vmatprep.subr.mxu0 0.0
      %1459 = vmatpush1.msra.mxu0 0.0
      %v1460 = vand.u32 %v94, 4294901760
      %1461 = vmatprep.subr.mxu0 %v1460
      %v1462 = vand.u32 %v93, 4294901760
      %1463 = vmatpush1.msra.mxu0 %v1462
      %1464 = vmatprep.subr.mxu0 0.0
      %1465 = vmatpush2.msra.mxu0 0.0
      %1466 = vmatprep.subr.mxu0 0.0
      %1467 = vmatpush2.msra.mxu0 0.0
      %1468 = vmatprep.subr.mxu0 0.0
      %1469 = vmatpush2.msra.mxu0 0.0
      %1470 = vmatprep.subr.mxu0 0.0
      %1471 = vmatpush2.msra.mxu0 0.0
      %1472 = vmatprep.subr.mxu0 0.0
      %1473 = vmatpush2.msra.mxu0 0.0
      %1474 = vmatprep.subr.mxu0 0.0
      %1475 = vmatpush2.msra.mxu0 0.0
      %1476 = vmatprep.subr.mxu0 0.0
      %1477 = vmatpush2.msra.mxu0 0.0
      %1478 = vmatprep.subr.mxu0 0.0
      %1479 = vmatpush2.msra.mxu0 0.0
      %1480 = vmatprep.subr.mxu0 0.0
      %1481 = vmatpush2.msra.mxu0 0.0
      %1482 = vmatprep.subr.mxu0 0.0
      %1483 = vmatpush2.msra.mxu0 0.0
      %1484 = vmatprep.subr.mxu0 0.0
      %1485 = vmatpush2.msra.mxu0 0.0
      %1486 = vmatprep.subr.mxu0 0.0
      %1487 = vmatpush2.msra.mxu0 0.0
      %1488 = vmatprep.subr.mxu0 0.0
      %1489 = vmatpush2.msra.mxu0 0.0
      %1490 = vmatprep.subr.mxu0 0.0
      %1491 = vmatpush2.msra.mxu0 0.0
      %1492 = vmatprep.subr.mxu0 0.0
      %1493 = vmatpush2.msra.mxu0 0.0
      %1494 = vmatprep.subr.mxu0 0.0
      %1495 = vmatpush2.msra.mxu0 0.0
      %1496 = vmatprep.mubr.f32.mxu0 0.0
      %v1497 = vand.u32 %v1037, 4294901760
      %1498 = vmatmul.mubr.f32.gmra.mxu0 %v1497
      %v1499 = vpop.f32.mrf.mxu0
      %v1500 = vadd.f32 %v1426, %v1499
      %v1501 = vpop.f32.mrf.mxu0
      %v1502 = vadd.f32 %v1428, %v1501
      %1503 = vdwg.mxu0
      %v1505 = vsel %vm99, %v83, 0
      %1507 = vmatprep.subr.mxu0 0.0
      %1508 = vmatpush1.msra.mxu0 0.0
      %1509 = vmatprep.subr.mxu0 0.0
      %1510 = vmatpush1.msra.mxu0 0.0
      %1511 = vmatprep.subr.mxu0 0.0
      %1512 = vmatpush1.msra.mxu0 0.0
      %1513 = vmatprep.subr.mxu0 0.0
      %1514 = vmatpush1.msra.mxu0 0.0
      %1515 = vmatprep.subr.mxu0 0.0
      %1516 = vmatpush1.msra.mxu0 0.0
      %1517 = vmatprep.subr.mxu0 0.0
      %1518 = vmatpush1.msra.mxu0 0.0
      %1519 = vmatprep.subr.mxu0 0.0
      %1520 = vmatpush1.msra.mxu0 0.0
      %1521 = vmatprep.subr.mxu0 0.0
      %1522 = vmatpush1.msra.mxu0 0.0
      %1523 = vmatprep.subr.mxu0 0.0
      %1524 = vmatpush1.msra.mxu0 0.0
      %1525 = vmatprep.subr.mxu0 0.0
      %1526 = vmatpush1.msra.mxu0 0.0
      %1527 = vmatprep.subr.mxu0 0.0
      %1528 = vmatpush1.msra.mxu0 0.0
      %1529 = vmatprep.subr.mxu0 0.0
      %1530 = vmatpush1.msra.mxu0 0.0
      %1531 = vmatprep.subr.mxu0 0.0
      %1532 = vmatpush1.msra.mxu0 0.0
      %1533 = vmatprep.subr.mxu0 0.0
      %1534 = vmatpush1.msra.mxu0 0.0
      %1535 = vmatprep.subr.mxu0 0.0
      %1536 = vmatpush1.msra.mxu0 0.0
      %v1537 = vand.u32 %v92, 4294901760
      %1538 = vmatprep.subr.mxu0 %v1537
      %v1539 = vand.u32 %v91, 4294901760
      %1540 = vmatpush1.msra.mxu0 %v1539
      %1541 = vmatprep.subr.mxu0 0.0
      %1542 = vmatpush2.msra.mxu0 0.0
      %1543 = vmatprep.subr.mxu0 0.0
      %1544 = vmatpush2.msra.mxu0 0.0
      %1545 = vmatprep.subr.mxu0 0.0
      %1546 = vmatpush2.msra.mxu0 0.0
      %1547 = vmatprep.subr.mxu0 0.0
      %1548 = vmatpush2.msra.mxu0 0.0
      %1549 = vmatprep.subr.mxu0 0.0
      %1550 = vmatpush2.msra.mxu0 0.0
      %1551 = vmatprep.subr.mxu0 0.0
      %1552 = vmatpush2.msra.mxu0 0.0
      %1553 = vmatprep.subr.mxu0 0.0
      %1554 = vmatpush2.msra.mxu0 0.0
      %1555 = vmatprep.subr.mxu0 0.0
      %1556 = vmatpush2.msra.mxu0 0.0
      %1557 = vmatprep.subr.mxu0 0.0
      %1558 = vmatpush2.msra.mxu0 0.0
      %1559 = vmatprep.subr.mxu0 0.0
      %1560 = vmatpush2.msra.mxu0 0.0
      %1561 = vmatprep.subr.mxu0 0.0
      %1562 = vmatpush2.msra.mxu0 0.0
      %1563 = vmatprep.subr.mxu0 0.0
      %1564 = vmatpush2.msra.mxu0 0.0
      %1565 = vmatprep.subr.mxu0 0.0
      %1566 = vmatpush2.msra.mxu0 0.0
      %1567 = vmatprep.subr.mxu0 0.0
      %1568 = vmatpush2.msra.mxu0 0.0
      %1569 = vmatprep.subr.mxu0 0.0
      %1570 = vmatpush2.msra.mxu0 0.0
      %1571 = vmatprep.subr.mxu0 0.0
      %1572 = vmatpush2.msra.mxu0 0.0
      %1573 = vmatprep.mubr.f32.mxu0 0.0
      %v1574 = vand.u32 %v1505, 4294901760
      %v1575 = vsub.f32 %v1505, %v1574
      %v1576 = vand.u32 %v1575, 4294901760
      %v1577 = vsub.f32 %v1575, %v1576
      %v1578 = vand.u32 %v1577, 4294901760
      %1579 = vmatmul.mubr.f32.gmra.mxu0 %v1578
      %v1580 = vpop.f32.mrf.mxu0
      %v1581 = vadd.f32 %v1500, %v1580
      %v1582 = vpop.f32.mrf.mxu0
      %v1583 = vadd.f32 %v1502, %v1582
      %1584 = vdwg.mxu0
      %1585 = vmatprep.subr.mxu0 0.0
      %1586 = vmatpush1.msra.mxu0 0.0
      %1587 = vmatprep.subr.mxu0 0.0
      %1588 = vmatpush1.msra.mxu0 0.0
      %1589 = vmatprep.subr.mxu0 0.0
      %1590 = vmatpush1.msra.mxu0 0.0
      %1591 = vmatprep.subr.mxu0 0.0
      %1592 = vmatpush1.msra.mxu0 0.0
      %1593 = vmatprep.subr.mxu0 0.0
      %1594 = vmatpush1.msra.mxu0 0.0
      %1595 = vmatprep.subr.mxu0 0.0
      %1596 = vmatpush1.msra.mxu0 0.0
      %1597 = vmatprep.subr.mxu0 0.0
      %1598 = vmatpush1.msra.mxu0 0.0
      %1599 = vmatprep.subr.mxu0 0.0
      %1600 = vmatpush1.msra.mxu0 0.0
      %1601 = vmatprep.subr.mxu0 0.0
      %1602 = vmatpush1.msra.mxu0 0.0
      %1603 = vmatprep.subr.mxu0 0.0
      %1604 = vmatpush1.msra.mxu0 0.0
      %1605 = vmatprep.subr.mxu0 0.0
      %1606 = vmatpush1.msra.mxu0 0.0
      %1607 = vmatprep.subr.mxu0 0.0
      %1608 = vmatpush1.msra.mxu0 0.0
      %1609 = vmatprep.subr.mxu0 0.0
      %1610 = vmatpush1.msra.mxu0 0.0
      %1611 = vmatprep.subr.mxu0 0.0
      %1612 = vmatpush1.msra.mxu0 0.0
      %1613 = vmatprep.subr.mxu0 0.0
      %1614 = vmatpush1.msra.mxu0 0.0
      %v1615 = vand.u32 %v92, 4294901760
      %v1616 = vsub.f32 %v92, %v1615
      %v1617 = vand.u32 %v1616, 4294901760
      %v1618 = vsub.f32 %v1616, %v1617
      %v1619 = vand.u32 %v1618, 4294901760
      %1620 = vmatprep.subr.mxu0 %v1619
      %v1621 = vand.u32 %v91, 4294901760
      %v1622 = vsub.f32 %v91, %v1621
      %v1623 = vand.u32 %v1622, 4294901760
      %v1624 = vsub.f32 %v1622, %v1623
      %v1625 = vand.u32 %v1624, 4294901760
      %1626 = vmatpush1.msra.mxu0 %v1625
      %1627 = vmatprep.subr.mxu0 0.0
      %1628 = vmatpush2.msra.mxu0 0.0
      %1629 = vmatprep.subr.mxu0 0.0
      %1630 = vmatpush2.msra.mxu0 0.0
      %1631 = vmatprep.subr.mxu0 0.0
      %1632 = vmatpush2.msra.mxu0 0.0
      %1633 = vmatprep.subr.mxu0 0.0
      %1634 = vmatpush2.msra.mxu0 0.0
      %1635 = vmatprep.subr.mxu0 0.0
      %1636 = vmatpush2.msra.mxu0 0.0
      %1637 = vmatprep.subr.mxu0 0.0
      %1638 = vmatpush2.msra.mxu0 0.0
      %1639 = vmatprep.subr.mxu0 0.0
      %1640 = vmatpush2.msra.mxu0 0.0
      %1641 = vmatprep.subr.mxu0 0.0
      %1642 = vmatpush2.msra.mxu0 0.0
      %1643 = vmatprep.subr.mxu0 0.0
      %1644 = vmatpush2.msra.mxu0 0.0
      %1645 = vmatprep.subr.mxu0 0.0
      %1646 = vmatpush2.msra.mxu0 0.0
      %1647 = vmatprep.subr.mxu0 0.0
      %1648 = vmatpush2.msra.mxu0 0.0
      %1649 = vmatprep.subr.mxu0 0.0
      %1650 = vmatpush2.msra.mxu0 0.0
      %1651 = vmatprep.subr.mxu0 0.0
      %1652 = vmatpush2.msra.mxu0 0.0
      %1653 = vmatprep.subr.mxu0 0.0
      %1654 = vmatpush2.msra.mxu0 0.0
      %1655 = vmatprep.subr.mxu0 0.0
      %1656 = vmatpush2.msra.mxu0 0.0
      %1657 = vmatprep.subr.mxu0 0.0
      %1658 = vmatpush2.msra.mxu0 0.0
      %1659 = vmatprep.mubr.f32.mxu0 0.0
      %v1660 = vand.u32 %v1505, 4294901760
      %1661 = vmatmul.mubr.f32.gmra.mxu0 %v1660
      %v1662 = vpop.f32.mrf.mxu0
      %v1663 = vadd.f32 %v1581, %v1662
      %v1664 = vpop.f32.mrf.mxu0
      %v1665 = vadd.f32 %v1583, %v1664
      %1666 = vdwg.mxu0
      %1667 = vmatprep.subr.mxu0 0.0
      %1668 = vmatpush1.msra.mxu0 0.0
      %1669 = vmatprep.subr.mxu0 0.0
      %1670 = vmatpush1.msra.mxu0 0.0
      %1671 = vmatprep.subr.mxu0 0.0
      %1672 = vmatpush1.msra.mxu0 0.0
      %1673 = vmatprep.subr.mxu0 0.0
      %1674 = vmatpush1.msra.mxu0 0.0
      %1675 = vmatprep.subr.mxu0 0.0
      %1676 = vmatpush1.msra.mxu0 0.0
      %1677 = vmatprep.subr.mxu0 0.0
      %1678 = vmatpush1.msra.mxu0 0.0
      %1679 = vmatprep.subr.mxu0 0.0
      %1680 = vmatpush1.msra.mxu0 0.0
      %1681 = vmatprep.subr.mxu0 0.0
      %1682 = vmatpush1.msra.mxu0 0.0
      %1683 = vmatprep.subr.mxu0 0.0
      %1684 = vmatpush1.msra.mxu0 0.0
      %1685 = vmatprep.subr.mxu0 0.0
      %1686 = vmatpush1.msra.mxu0 0.0
      %1687 = vmatprep.subr.mxu0 0.0
      %1688 = vmatpush1.msra.mxu0 0.0
      %1689 = vmatprep.subr.mxu0 0.0
      %1690 = vmatpush1.msra.mxu0 0.0
      %1691 = vmatprep.subr.mxu0 0.0
      %1692 = vmatpush1.msra.mxu0 0.0
      %1693 = vmatprep.subr.mxu0 0.0
      %1694 = vmatpush1.msra.mxu0 0.0
      %1695 = vmatprep.subr.mxu0 0.0
      %1696 = vmatpush1.msra.mxu0 0.0
      %v1697 = vand.u32 %v92, 4294901760
      %v1698 = vsub.f32 %v92, %v1697
      %1699 = vmatprep.subr.mxu0 %v1698
      %v1700 = vand.u32 %v91, 4294901760
      %v1701 = vsub.f32 %v91, %v1700
      %1702 = vmatpush1.msra.mxu0 %v1701
      %1703 = vmatprep.subr.mxu0 0.0
      %1704 = vmatpush2.msra.mxu0 0.0
      %1705 = vmatprep.subr.mxu0 0.0
      %1706 = vmatpush2.msra.mxu0 0.0
      %1707 = vmatprep.subr.mxu0 0.0
      %1708 = vmatpush2.msra.mxu0 0.0
      %1709 = vmatprep.subr.mxu0 0.0
      %1710 = vmatpush2.msra.mxu0 0.0
      %1711 = vmatprep.subr.mxu0 0.0
      %1712 = vmatpush2.msra.mxu0 0.0
      %1713 = vmatprep.subr.mxu0 0.0
      %1714 = vmatpush2.msra.mxu0 0.0
      %1715 = vmatprep.subr.mxu0 0.0
      %1716 = vmatpush2.msra.mxu0 0.0
      %1717 = vmatprep.subr.mxu0 0.0
      %1718 = vmatpush2.msra.mxu0 0.0
      %1719 = vmatprep.subr.mxu0 0.0
      %1720 = vmatpush2.msra.mxu0 0.0
      %1721 = vmatprep.subr.mxu0 0.0
      %1722 = vmatpush2.msra.mxu0 0.0
      %1723 = vmatprep.subr.mxu0 0.0
      %1724 = vmatpush2.msra.mxu0 0.0
      %1725 = vmatprep.subr.mxu0 0.0
      %1726 = vmatpush2.msra.mxu0 0.0
      %1727 = vmatprep.subr.mxu0 0.0
      %1728 = vmatpush2.msra.mxu0 0.0
      %1729 = vmatprep.subr.mxu0 0.0
      %1730 = vmatpush2.msra.mxu0 0.0
      %1731 = vmatprep.subr.mxu0 0.0
      %1732 = vmatpush2.msra.mxu0 0.0
      %1733 = vmatprep.subr.mxu0 0.0
      %1734 = vmatpush2.msra.mxu0 0.0
      %1735 = vmatprep.mubr.f32.mxu0 0.0
      %v1736 = vand.u32 %v1505, 4294901760
      %v1737 = vsub.f32 %v1505, %v1736
      %1738 = vmatmul.mubr.f32.gmra.mxu0 %v1737
      %v1739 = vpop.f32.mrf.mxu0
      %v1740 = vadd.f32 %v1663, %v1739
      %v1741 = vpop.f32.mrf.mxu0
      %v1742 = vadd.f32 %v1665, %v1741
      %1743 = vdwg.mxu0
      %1744 = vmatprep.subr.mxu0 0.0
      %1745 = vmatpush1.msra.mxu0 0.0
      %1746 = vmatprep.subr.mxu0 0.0
      %1747 = vmatpush1.msra.mxu0 0.0
      %1748 = vmatprep.subr.mxu0 0.0
      %1749 = vmatpush1.msra.mxu0 0.0
      %1750 = vmatprep.subr.mxu0 0.0
      %1751 = vmatpush1.msra.mxu0 0.0
      %1752 = vmatprep.subr.mxu0 0.0
      %1753 = vmatpush1.msra.mxu0 0.0
      %1754 = vmatprep.subr.mxu0 0.0
      %1755 = vmatpush1.msra.mxu0 0.0
      %1756 = vmatprep.subr.mxu0 0.0
      %1757 = vmatpush1.msra.mxu0 0.0
      %1758 = vmatprep.subr.mxu0 0.0
      %1759 = vmatpush1.msra.mxu0 0.0
      %1760 = vmatprep.subr.mxu0 0.0
      %1761 = vmatpush1.msra.mxu0 0.0
      %1762 = vmatprep.subr.mxu0 0.0
      %1763 = vmatpush1.msra.mxu0 0.0
      %1764 = vmatprep.subr.mxu0 0.0
      %1765 = vmatpush1.msra.mxu0 0.0
      %1766 = vmatprep.subr.mxu0 0.0
      %1767 = vmatpush1.msra.mxu0 0.0
      %1768 = vmatprep.subr.mxu0 0.0
      %1769 = vmatpush1.msra.mxu0 0.0
      %1770 = vmatprep.subr.mxu0 0.0
      %1771 = vmatpush1.msra.mxu0 0.0
      %1772 = vmatprep.subr.mxu0 0.0
      %1773 = vmatpush1.msra.mxu0 0.0
      %v1774 = vand.u32 %v92, 4294901760
      %1775 = vmatprep.subr.mxu0 %v1774
      %v1776 = vand.u32 %v91, 4294901760
      %1777 = vmatpush1.msra.mxu0 %v1776
      %1778 = vmatprep.subr.mxu0 0.0
      %1779 = vmatpush2.msra.mxu0 0.0
      %1780 = vmatprep.subr.mxu0 0.0
      %1781 = vmatpush2.msra.mxu0 0.0
      %1782 = vmatprep.subr.mxu0 0.0
      %1783 = vmatpush2.msra.mxu0 0.0
      %1784 = vmatprep.subr.mxu0 0.0
      %1785 = vmatpush2.msra.mxu0 0.0
      %1786 = vmatprep.subr.mxu0 0.0
      %1787 = vmatpush2.msra.mxu0 0.0
      %1788 = vmatprep.subr.mxu0 0.0
      %1789 = vmatpush2.msra.mxu0 0.0
      %1790 = vmatprep.subr.mxu0 0.0
      %1791 = vmatpush2.msra.mxu0 0.0
      %1792 = vmatprep.subr.mxu0 0.0
      %1793 = vmatpush2.msra.mxu0 0.0
      %1794 = vmatprep.subr.mxu0 0.0
      %1795 = vmatpush2.msra.mxu0 0.0
      %1796 = vmatprep.subr.mxu0 0.0
      %1797 = vmatpush2.msra.mxu0 0.0
      %1798 = vmatprep.subr.mxu0 0.0
      %1799 = vmatpush2.msra.mxu0 0.0
      %1800 = vmatprep.subr.mxu0 0.0
      %1801 = vmatpush2.msra.mxu0 0.0
      %1802 = vmatprep.subr.mxu0 0.0
      %1803 = vmatpush2.msra.mxu0 0.0
      %1804 = vmatprep.subr.mxu0 0.0
      %1805 = vmatpush2.msra.mxu0 0.0
      %1806 = vmatprep.subr.mxu0 0.0
      %1807 = vmatpush2.msra.mxu0 0.0
      %1808 = vmatprep.subr.mxu0 0.0
      %1809 = vmatpush2.msra.mxu0 0.0
      %1810 = vmatprep.mubr.f32.mxu0 0.0
      %v1811 = vand.u32 %v1505, 4294901760
      %v1812 = vsub.f32 %v1505, %v1811
      %v1813 = vand.u32 %v1812, 4294901760
      %1814 = vmatmul.mubr.f32.gmra.mxu0 %v1813
      %v1815 = vpop.f32.mrf.mxu0
      %v1816 = vadd.f32 %v1740, %v1815
      %v1817 = vpop.f32.mrf.mxu0
      %v1818 = vadd.f32 %v1742, %v1817
      %1819 = vdwg.mxu0
      %1820 = vmatprep.subr.mxu0 0.0
      %1821 = vmatpush1.msra.mxu0 0.0
      %1822 = vmatprep.subr.mxu0 0.0
      %1823 = vmatpush1.msra.mxu0 0.0
      %1824 = vmatprep.subr.mxu0 0.0
      %1825 = vmatpush1.msra.mxu0 0.0
      %1826 = vmatprep.subr.mxu0 0.0
      %1827 = vmatpush1.msra.mxu0 0.0
      %1828 = vmatprep.subr.mxu0 0.0
      %1829 = vmatpush1.msra.mxu0 0.0
      %1830 = vmatprep.subr.mxu0 0.0
      %1831 = vmatpush1.msra.mxu0 0.0
      %1832 = vmatprep.subr.mxu0 0.0
      %1833 = vmatpush1.msra.mxu0 0.0
      %1834 = vmatprep.subr.mxu0 0.0
      %1835 = vmatpush1.msra.mxu0 0.0
      %1836 = vmatprep.subr.mxu0 0.0
      %1837 = vmatpush1.msra.mxu0 0.0
      %1838 = vmatprep.subr.mxu0 0.0
      %1839 = vmatpush1.msra.mxu0 0.0
      %1840 = vmatprep.subr.mxu0 0.0
      %1841 = vmatpush1.msra.mxu0 0.0
      %1842 = vmatprep.subr.mxu0 0.0
      %1843 = vmatpush1.msra.mxu0 0.0
      %1844 = vmatprep.subr.mxu0 0.0
      %1845 = vmatpush1.msra.mxu0 0.0
      %1846 = vmatprep.subr.mxu0 0.0
      %1847 = vmatpush1.msra.mxu0 0.0
      %1848 = vmatprep.subr.mxu0 0.0
      %1849 = vmatpush1.msra.mxu0 0.0
      %v1850 = vand.u32 %v92, 4294901760
      %v1851 = vsub.f32 %v92, %v1850
      %v1852 = vand.u32 %v1851, 4294901760
      %1853 = vmatprep.subr.mxu0 %v1852
      %v1854 = vand.u32 %v91, 4294901760
      %v1855 = vsub.f32 %v91, %v1854
      %v1856 = vand.u32 %v1855, 4294901760
      %1857 = vmatpush1.msra.mxu0 %v1856
      %1858 = vmatprep.subr.mxu0 0.0
      %1859 = vmatpush2.msra.mxu0 0.0
      %1860 = vmatprep.subr.mxu0 0.0
      %1861 = vmatpush2.msra.mxu0 0.0
      %1862 = vmatprep.subr.mxu0 0.0
      %1863 = vmatpush2.msra.mxu0 0.0
      %1864 = vmatprep.subr.mxu0 0.0
      %1865 = vmatpush2.msra.mxu0 0.0
      %1866 = vmatprep.subr.mxu0 0.0
      %1867 = vmatpush2.msra.mxu0 0.0
      %1868 = vmatprep.subr.mxu0 0.0
      %1869 = vmatpush2.msra.mxu0 0.0
      %1870 = vmatprep.subr.mxu0 0.0
      %1871 = vmatpush2.msra.mxu0 0.0
      %1872 = vmatprep.subr.mxu0 0.0
      %1873 = vmatpush2.msra.mxu0 0.0
      %1874 = vmatprep.subr.mxu0 0.0
      %1875 = vmatpush2.msra.mxu0 0.0
      %1876 = vmatprep.subr.mxu0 0.0
      %1877 = vmatpush2.msra.mxu0 0.0
      %1878 = vmatprep.subr.mxu0 0.0
      %1879 = vmatpush2.msra.mxu0 0.0
      %1880 = vmatprep.subr.mxu0 0.0
      %1881 = vmatpush2.msra.mxu0 0.0
      %1882 = vmatprep.subr.mxu0 0.0
      %1883 = vmatpush2.msra.mxu0 0.0
      %1884 = vmatprep.subr.mxu0 0.0
      %1885 = vmatpush2.msra.mxu0 0.0
      %1886 = vmatprep.subr.mxu0 0.0
      %1887 = vmatpush2.msra.mxu0 0.0
      %1888 = vmatprep.subr.mxu0 0.0
      %1889 = vmatpush2.msra.mxu0 0.0
      %1890 = vmatprep.mubr.f32.mxu0 0.0
      %v1891 = vand.u32 %v1505, 4294901760
      %1892 = vmatmul.mubr.f32.gmra.mxu0 %v1891
      %v1893 = vpop.f32.mrf.mxu0
      %v1894 = vadd.f32 %v1816, %v1893
      %v1895 = vpop.f32.mrf.mxu0
      %v1896 = vadd.f32 %v1818, %v1895
      %1897 = vdwg.mxu0
      %1898 = vmatprep.subr.mxu0 0.0
      %1899 = vmatpush1.msra.mxu0 0.0
      %1900 = vmatprep.subr.mxu0 0.0
      %1901 = vmatpush1.msra.mxu0 0.0
      %1902 = vmatprep.subr.mxu0 0.0
      %1903 = vmatpush1.msra.mxu0 0.0
      %1904 = vmatprep.subr.mxu0 0.0
      %1905 = vmatpush1.msra.mxu0 0.0
      %1906 = vmatprep.subr.mxu0 0.0
      %1907 = vmatpush1.msra.mxu0 0.0
      %1908 = vmatprep.subr.mxu0 0.0
      %1909 = vmatpush1.msra.mxu0 0.0
      %1910 = vmatprep.subr.mxu0 0.0
      %1911 = vmatpush1.msra.mxu0 0.0
      %1912 = vmatprep.subr.mxu0 0.0
      %1913 = vmatpush1.msra.mxu0 0.0
      %1914 = vmatprep.subr.mxu0 0.0
      %1915 = vmatpush1.msra.mxu0 0.0
      %1916 = vmatprep.subr.mxu0 0.0
      %1917 = vmatpush1.msra.mxu0 0.0
      %1918 = vmatprep.subr.mxu0 0.0
      %1919 = vmatpush1.msra.mxu0 0.0
      %1920 = vmatprep.subr.mxu0 0.0
      %1921 = vmatpush1.msra.mxu0 0.0
      %1922 = vmatprep.subr.mxu0 0.0
      %1923 = vmatpush1.msra.mxu0 0.0
      %1924 = vmatprep.subr.mxu0 0.0
      %1925 = vmatpush1.msra.mxu0 0.0
      %1926 = vmatprep.subr.mxu0 0.0
      %1927 = vmatpush1.msra.mxu0 0.0
      %v1928 = vand.u32 %v92, 4294901760
      %1929 = vmatprep.subr.mxu0 %v1928
      %v1930 = vand.u32 %v91, 4294901760
      %1931 = vmatpush1.msra.mxu0 %v1930
      %1932 = vmatprep.subr.mxu0 0.0
      %1933 = vmatpush2.msra.mxu0 0.0
      %1934 = vmatprep.subr.mxu0 0.0
      %1935 = vmatpush2.msra.mxu0 0.0
      %1936 = vmatprep.subr.mxu0 0.0
      %1937 = vmatpush2.msra.mxu0 0.0
      %1938 = vmatprep.subr.mxu0 0.0
      %1939 = vmatpush2.msra.mxu0 0.0
      %1940 = vmatprep.subr.mxu0 0.0
      %1941 = vmatpush2.msra.mxu0 0.0
      %1942 = vmatprep.subr.mxu0 0.0
      %1943 = vmatpush2.msra.mxu0 0.0
      %1944 = vmatprep.subr.mxu0 0.0
      %1945 = vmatpush2.msra.mxu0 0.0
      %1946 = vmatprep.subr.mxu0 0.0
      %1947 = vmatpush2.msra.mxu0 0.0
      %1948 = vmatprep.subr.mxu0 0.0
      %1949 = vmatpush2.msra.mxu0 0.0
      %1950 = vmatprep.subr.mxu0 0.0
      %1951 = vmatpush2.msra.mxu0 0.0
      %1952 = vmatprep.subr.mxu0 0.0
      %1953 = vmatpush2.msra.mxu0 0.0
      %1954 = vmatprep.subr.mxu0 0.0
      %1955 = vmatpush2.msra.mxu0 0.0
      %1956 = vmatprep.subr.mxu0 0.0
      %1957 = vmatpush2.msra.mxu0 0.0
      %1958 = vmatprep.subr.mxu0 0.0
      %1959 = vmatpush2.msra.mxu0 0.0
      %1960 = vmatprep.subr.mxu0 0.0
      %1961 = vmatpush2.msra.mxu0 0.0
      %1962 = vmatprep.subr.mxu0 0.0
      %1963 = vmatpush2.msra.mxu0 0.0
      %1964 = vmatprep.mubr.f32.mxu0 0.0
      %v1965 = vand.u32 %v1505, 4294901760
      %1966 = vmatmul.mubr.f32.gmra.mxu0 %v1965
      %v1967 = vpop.f32.mrf.mxu0
      %v1968 = vadd.f32 %v1894, %v1967
      %v1969 = vpop.f32.mrf.mxu0
      %v1970 = vadd.f32 %v1896, %v1969
      %1971 = vdwg.mxu0
      %v1972 = vsub.f32 %v79, %v1032
      %v1973 = vsub.f32 %v80, %v1034
      %v1974 = vadd.f32 %v1972, %v95
      %v1975 = vadd.f32 %v1973, %v96
      %v1976 = vadd.f32 %v1968, %v97
      %v1977 = vadd.f32 %v1970, %v98
      %v1978 = vmax.f32 %v1974, -2.0
      %v1979 = vmax.f32 %v1975, -2.0
      %v1980 = vmin.f32 %v1978, 2.0
      %v1981 = vmin.f32 %v1979, 2.0
      %v1982 = vmax.f32 %v1976, -20.0
      %v1983 = vmax.f32 %v1977, -20.0
      %v1984 = vmin.f32 %v1982, 20.0
      %v1985 = vmin.f32 %v1983, 20.0
      %v1986 = vsub.f32 %v1032, %v95
      %v1987 = vsub.f32 %v1034, %v96
      %v1988 = vadd.f32 %v1980, %v1980
      %v1989 = vadd.f32 %v1981, %v1981
      %v1990 = vadd.f32 %v1986, %v1988
      %v1991 = vadd.f32 %v1987, %v1989
      %v1992 = vadd.f32 %v1984, %v1984
      %v1993 = vadd.f32 %v1985, %v1985
      %v1994 = vsub.f32 %v1976, %v1992
      %v1995 = vsub.f32 %v1977, %v1993
      %1996 = vmatprep.subr.mxu0 0.0
      %1997 = vmatpush1.msra.mxu0 0.0
      %1998 = vmatprep.subr.mxu0 0.0
      %1999 = vmatpush1.msra.mxu0 0.0
      %2000 = vmatprep.subr.mxu0 0.0
      %2001 = vmatpush1.msra.mxu0 0.0
      %2002 = vmatprep.subr.mxu0 0.0
      %2003 = vmatpush1.msra.mxu0 0.0
      %2004 = vmatprep.subr.mxu0 0.0
      %2005 = vmatpush1.msra.mxu0 0.0
      %2006 = vmatprep.subr.mxu0 0.0
      %2007 = vmatpush1.msra.mxu0 0.0
      %2008 = vmatprep.subr.mxu0 0.0
      %2009 = vmatpush1.msra.mxu0 0.0
      %2010 = vmatprep.subr.mxu0 0.0
      %2011 = vmatpush1.msra.mxu0 0.0
      %2012 = vmatprep.subr.mxu0 0.0
      %2013 = vmatpush1.msra.mxu0 0.0
      %2014 = vmatprep.subr.mxu0 0.0
      %2015 = vmatpush1.msra.mxu0 0.0
      %2016 = vmatprep.subr.mxu0 0.0
      %2017 = vmatpush1.msra.mxu0 0.0
      %2018 = vmatprep.subr.mxu0 0.0
      %2019 = vmatpush1.msra.mxu0 0.0
      %2020 = vmatprep.subr.mxu0 0.0
      %2021 = vmatpush1.msra.mxu0 0.0
      %2022 = vmatprep.subr.mxu0 0.0
      %2023 = vmatpush1.msra.mxu0 0.0
      %2024 = vmatprep.subr.mxu0 0.0
      %2025 = vmatpush1.msra.mxu0 0.0
      %v2026 = vand.u32 %v1995, 4294901760
      %2027 = vmatprep.subr.mxu0 %v2026
      %v2028 = vand.u32 %v1994, 4294901760
      %2029 = vmatpush1.msra.mxu0 %v2028
      %2030 = vmatprep.subr.mxu0 0.0
      %2031 = vmatpush2.msra.mxu0 0.0
      %2032 = vmatprep.subr.mxu0 0.0
      %2033 = vmatpush2.msra.mxu0 0.0
      %2034 = vmatprep.subr.mxu0 0.0
      %2035 = vmatpush2.msra.mxu0 0.0
      %2036 = vmatprep.subr.mxu0 0.0
      %2037 = vmatpush2.msra.mxu0 0.0
      %2038 = vmatprep.subr.mxu0 0.0
      %2039 = vmatpush2.msra.mxu0 0.0
      %2040 = vmatprep.subr.mxu0 0.0
      %2041 = vmatpush2.msra.mxu0 0.0
      %2042 = vmatprep.subr.mxu0 0.0
      %2043 = vmatpush2.msra.mxu0 0.0
      %2044 = vmatprep.subr.mxu0 0.0
      %2045 = vmatpush2.msra.mxu0 0.0
      %2046 = vmatprep.subr.mxu0 0.0
      %2047 = vmatpush2.msra.mxu0 0.0
      %2048 = vmatprep.subr.mxu0 0.0
      %2049 = vmatpush2.msra.mxu0 0.0
      %2050 = vmatprep.subr.mxu0 0.0
      %2051 = vmatpush2.msra.mxu0 0.0
      %2052 = vmatprep.subr.mxu0 0.0
      %2053 = vmatpush2.msra.mxu0 0.0
      %2054 = vmatprep.subr.mxu0 0.0
      %2055 = vmatpush2.msra.mxu0 0.0
      %2056 = vmatprep.subr.mxu0 0.0
      %2057 = vmatpush2.msra.mxu0 0.0
      %2058 = vmatprep.subr.mxu0 0.0
      %2059 = vmatpush2.msra.mxu0 0.0
      %2060 = vmatprep.subr.mxu0 0.0
      %2061 = vmatpush2.msra.mxu0 0.0
      %2062 = vmatprep.mubr.f32.mxu0 0.0
      %v2063 = vand.u32 %v101, 4294901760
      %v2064 = vsub.f32 %v101, %v2063
      %v2065 = vand.u32 %v2064, 4294901760
      %v2066 = vsub.f32 %v2064, %v2065
      %v2067 = vand.u32 %v2066, 4294901760
      %2068 = vmatmul.mubr.f32.gmra.mxu0 %v2067
      %v2069 = vpop.f32.mrf.mxu0
      %v2070 = vadd.f32 0.0, %v2069
      %v2071 = vpop.f32.mrf.mxu0
      %v2072 = vadd.f32 0.0, %v2071
      %2073 = vdwg.mxu0
      %2074 = vmatprep.subr.mxu0 0.0
      %2075 = vmatpush1.msra.mxu0 0.0
      %2076 = vmatprep.subr.mxu0 0.0
      %2077 = vmatpush1.msra.mxu0 0.0
      %2078 = vmatprep.subr.mxu0 0.0
      %2079 = vmatpush1.msra.mxu0 0.0
      %2080 = vmatprep.subr.mxu0 0.0
      %2081 = vmatpush1.msra.mxu0 0.0
      %2082 = vmatprep.subr.mxu0 0.0
      %2083 = vmatpush1.msra.mxu0 0.0
      %2084 = vmatprep.subr.mxu0 0.0
      %2085 = vmatpush1.msra.mxu0 0.0
      %2086 = vmatprep.subr.mxu0 0.0
      %2087 = vmatpush1.msra.mxu0 0.0
      %2088 = vmatprep.subr.mxu0 0.0
      %2089 = vmatpush1.msra.mxu0 0.0
      %2090 = vmatprep.subr.mxu0 0.0
      %2091 = vmatpush1.msra.mxu0 0.0
      %2092 = vmatprep.subr.mxu0 0.0
      %2093 = vmatpush1.msra.mxu0 0.0
      %2094 = vmatprep.subr.mxu0 0.0
      %2095 = vmatpush1.msra.mxu0 0.0
      %2096 = vmatprep.subr.mxu0 0.0
      %2097 = vmatpush1.msra.mxu0 0.0
      %2098 = vmatprep.subr.mxu0 0.0
      %2099 = vmatpush1.msra.mxu0 0.0
      %2100 = vmatprep.subr.mxu0 0.0
      %2101 = vmatpush1.msra.mxu0 0.0
      %2102 = vmatprep.subr.mxu0 0.0
      %2103 = vmatpush1.msra.mxu0 0.0
      %v2104 = vand.u32 %v1995, 4294901760
      %v2105 = vsub.f32 %v1995, %v2104
      %v2106 = vand.u32 %v2105, 4294901760
      %v2107 = vsub.f32 %v2105, %v2106
      %v2108 = vand.u32 %v2107, 4294901760
      %2109 = vmatprep.subr.mxu0 %v2108
      %v2110 = vand.u32 %v1994, 4294901760
      %v2111 = vsub.f32 %v1994, %v2110
      %v2112 = vand.u32 %v2111, 4294901760
      %v2113 = vsub.f32 %v2111, %v2112
      %v2114 = vand.u32 %v2113, 4294901760
      %2115 = vmatpush1.msra.mxu0 %v2114
      %2116 = vmatprep.subr.mxu0 0.0
      %2117 = vmatpush2.msra.mxu0 0.0
      %2118 = vmatprep.subr.mxu0 0.0
      %2119 = vmatpush2.msra.mxu0 0.0
      %2120 = vmatprep.subr.mxu0 0.0
      %2121 = vmatpush2.msra.mxu0 0.0
      %2122 = vmatprep.subr.mxu0 0.0
      %2123 = vmatpush2.msra.mxu0 0.0
      %2124 = vmatprep.subr.mxu0 0.0
      %2125 = vmatpush2.msra.mxu0 0.0
      %2126 = vmatprep.subr.mxu0 0.0
      %2127 = vmatpush2.msra.mxu0 0.0
      %2128 = vmatprep.subr.mxu0 0.0
      %2129 = vmatpush2.msra.mxu0 0.0
      %2130 = vmatprep.subr.mxu0 0.0
      %2131 = vmatpush2.msra.mxu0 0.0
      %2132 = vmatprep.subr.mxu0 0.0
      %2133 = vmatpush2.msra.mxu0 0.0
      %2134 = vmatprep.subr.mxu0 0.0
      %2135 = vmatpush2.msra.mxu0 0.0
      %2136 = vmatprep.subr.mxu0 0.0
      %2137 = vmatpush2.msra.mxu0 0.0
      %2138 = vmatprep.subr.mxu0 0.0
      %2139 = vmatpush2.msra.mxu0 0.0
      %2140 = vmatprep.subr.mxu0 0.0
      %2141 = vmatpush2.msra.mxu0 0.0
      %2142 = vmatprep.subr.mxu0 0.0
      %2143 = vmatpush2.msra.mxu0 0.0
      %2144 = vmatprep.subr.mxu0 0.0
      %2145 = vmatpush2.msra.mxu0 0.0
      %2146 = vmatprep.subr.mxu0 0.0
      %2147 = vmatpush2.msra.mxu0 0.0
      %2148 = vmatprep.mubr.f32.mxu0 0.0
      %v2149 = vand.u32 %v101, 4294901760
      %2150 = vmatmul.mubr.f32.gmra.mxu0 %v2149
      %v2151 = vpop.f32.mrf.mxu0
      %v2152 = vadd.f32 %v2070, %v2151
      %v2153 = vpop.f32.mrf.mxu0
      %v2154 = vadd.f32 %v2072, %v2153
      %2155 = vdwg.mxu0
      %2156 = vmatprep.subr.mxu0 0.0
      %2157 = vmatpush1.msra.mxu0 0.0
      %2158 = vmatprep.subr.mxu0 0.0
      %2159 = vmatpush1.msra.mxu0 0.0
      %2160 = vmatprep.subr.mxu0 0.0
      %2161 = vmatpush1.msra.mxu0 0.0
      %2162 = vmatprep.subr.mxu0 0.0
      %2163 = vmatpush1.msra.mxu0 0.0
      %2164 = vmatprep.subr.mxu0 0.0
      %2165 = vmatpush1.msra.mxu0 0.0
      %2166 = vmatprep.subr.mxu0 0.0
      %2167 = vmatpush1.msra.mxu0 0.0
      %2168 = vmatprep.subr.mxu0 0.0
      %2169 = vmatpush1.msra.mxu0 0.0
      %2170 = vmatprep.subr.mxu0 0.0
      %2171 = vmatpush1.msra.mxu0 0.0
      %2172 = vmatprep.subr.mxu0 0.0
      %2173 = vmatpush1.msra.mxu0 0.0
      %2174 = vmatprep.subr.mxu0 0.0
      %2175 = vmatpush1.msra.mxu0 0.0
      %2176 = vmatprep.subr.mxu0 0.0
      %2177 = vmatpush1.msra.mxu0 0.0
      %2178 = vmatprep.subr.mxu0 0.0
      %2179 = vmatpush1.msra.mxu0 0.0
      %2180 = vmatprep.subr.mxu0 0.0
      %2181 = vmatpush1.msra.mxu0 0.0
      %2182 = vmatprep.subr.mxu0 0.0
      %2183 = vmatpush1.msra.mxu0 0.0
      %2184 = vmatprep.subr.mxu0 0.0
      %2185 = vmatpush1.msra.mxu0 0.0
      %v2186 = vand.u32 %v1995, 4294901760
      %v2187 = vsub.f32 %v1995, %v2186
      %2188 = vmatprep.subr.mxu0 %v2187
      %v2189 = vand.u32 %v1994, 4294901760
      %v2190 = vsub.f32 %v1994, %v2189
      %2191 = vmatpush1.msra.mxu0 %v2190
      %2192 = vmatprep.subr.mxu0 0.0
      %2193 = vmatpush2.msra.mxu0 0.0
      %2194 = vmatprep.subr.mxu0 0.0
      %2195 = vmatpush2.msra.mxu0 0.0
      %2196 = vmatprep.subr.mxu0 0.0
      %2197 = vmatpush2.msra.mxu0 0.0
      %2198 = vmatprep.subr.mxu0 0.0
      %2199 = vmatpush2.msra.mxu0 0.0
      %2200 = vmatprep.subr.mxu0 0.0
      %2201 = vmatpush2.msra.mxu0 0.0
      %2202 = vmatprep.subr.mxu0 0.0
      %2203 = vmatpush2.msra.mxu0 0.0
      %2204 = vmatprep.subr.mxu0 0.0
      %2205 = vmatpush2.msra.mxu0 0.0
      %2206 = vmatprep.subr.mxu0 0.0
      %2207 = vmatpush2.msra.mxu0 0.0
      %2208 = vmatprep.subr.mxu0 0.0
      %2209 = vmatpush2.msra.mxu0 0.0
      %2210 = vmatprep.subr.mxu0 0.0
      %2211 = vmatpush2.msra.mxu0 0.0
      %2212 = vmatprep.subr.mxu0 0.0
      %2213 = vmatpush2.msra.mxu0 0.0
      %2214 = vmatprep.subr.mxu0 0.0
      %2215 = vmatpush2.msra.mxu0 0.0
      %2216 = vmatprep.subr.mxu0 0.0
      %2217 = vmatpush2.msra.mxu0 0.0
      %2218 = vmatprep.subr.mxu0 0.0
      %2219 = vmatpush2.msra.mxu0 0.0
      %2220 = vmatprep.subr.mxu0 0.0
      %2221 = vmatpush2.msra.mxu0 0.0
      %2222 = vmatprep.subr.mxu0 0.0
      %2223 = vmatpush2.msra.mxu0 0.0
      %2224 = vmatprep.mubr.f32.mxu0 0.0
      %v2225 = vand.u32 %v101, 4294901760
      %v2226 = vsub.f32 %v101, %v2225
      %2227 = vmatmul.mubr.f32.gmra.mxu0 %v2226
      %v2228 = vpop.f32.mrf.mxu0
      %v2229 = vadd.f32 %v2152, %v2228
      %v2230 = vpop.f32.mrf.mxu0
      %v2231 = vadd.f32 %v2154, %v2230
      %2232 = vdwg.mxu0
      %2233 = vmatprep.subr.mxu0 0.0
      %2234 = vmatpush1.msra.mxu0 0.0
      %2235 = vmatprep.subr.mxu0 0.0
      %2236 = vmatpush1.msra.mxu0 0.0
      %2237 = vmatprep.subr.mxu0 0.0
      %2238 = vmatpush1.msra.mxu0 0.0
      %2239 = vmatprep.subr.mxu0 0.0
      %2240 = vmatpush1.msra.mxu0 0.0
      %2241 = vmatprep.subr.mxu0 0.0
      %2242 = vmatpush1.msra.mxu0 0.0
      %2243 = vmatprep.subr.mxu0 0.0
      %2244 = vmatpush1.msra.mxu0 0.0
      %2245 = vmatprep.subr.mxu0 0.0
      %2246 = vmatpush1.msra.mxu0 0.0
      %2247 = vmatprep.subr.mxu0 0.0
      %2248 = vmatpush1.msra.mxu0 0.0
      %2249 = vmatprep.subr.mxu0 0.0
      %2250 = vmatpush1.msra.mxu0 0.0
      %2251 = vmatprep.subr.mxu0 0.0
      %2252 = vmatpush1.msra.mxu0 0.0
      %2253 = vmatprep.subr.mxu0 0.0
      %2254 = vmatpush1.msra.mxu0 0.0
      %2255 = vmatprep.subr.mxu0 0.0
      %2256 = vmatpush1.msra.mxu0 0.0
      %2257 = vmatprep.subr.mxu0 0.0
      %2258 = vmatpush1.msra.mxu0 0.0
      %2259 = vmatprep.subr.mxu0 0.0
      %2260 = vmatpush1.msra.mxu0 0.0
      %2261 = vmatprep.subr.mxu0 0.0
      %2262 = vmatpush1.msra.mxu0 0.0
      %v2263 = vand.u32 %v1995, 4294901760
      %2264 = vmatprep.subr.mxu0 %v2263
      %v2265 = vand.u32 %v1994, 4294901760
      %2266 = vmatpush1.msra.mxu0 %v2265
      %2267 = vmatprep.subr.mxu0 0.0
      %2268 = vmatpush2.msra.mxu0 0.0
      %2269 = vmatprep.subr.mxu0 0.0
      %2270 = vmatpush2.msra.mxu0 0.0
      %2271 = vmatprep.subr.mxu0 0.0
      %2272 = vmatpush2.msra.mxu0 0.0
      %2273 = vmatprep.subr.mxu0 0.0
      %2274 = vmatpush2.msra.mxu0 0.0
      %2275 = vmatprep.subr.mxu0 0.0
      %2276 = vmatpush2.msra.mxu0 0.0
      %2277 = vmatprep.subr.mxu0 0.0
      %2278 = vmatpush2.msra.mxu0 0.0
      %2279 = vmatprep.subr.mxu0 0.0
      %2280 = vmatpush2.msra.mxu0 0.0
      %2281 = vmatprep.subr.mxu0 0.0
      %2282 = vmatpush2.msra.mxu0 0.0
      %2283 = vmatprep.subr.mxu0 0.0
      %2284 = vmatpush2.msra.mxu0 0.0
      %2285 = vmatprep.subr.mxu0 0.0
      %2286 = vmatpush2.msra.mxu0 0.0
      %2287 = vmatprep.subr.mxu0 0.0
      %2288 = vmatpush2.msra.mxu0 0.0
      %2289 = vmatprep.subr.mxu0 0.0
      %2290 = vmatpush2.msra.mxu0 0.0
      %2291 = vmatprep.subr.mxu0 0.0
      %2292 = vmatpush2.msra.mxu0 0.0
      %2293 = vmatprep.subr.mxu0 0.0
      %2294 = vmatpush2.msra.mxu0 0.0
      %2295 = vmatprep.subr.mxu0 0.0
      %2296 = vmatpush2.msra.mxu0 0.0
      %2297 = vmatprep.subr.mxu0 0.0
      %2298 = vmatpush2.msra.mxu0 0.0
      %2299 = vmatprep.mubr.f32.mxu0 0.0
      %v2300 = vand.u32 %v101, 4294901760
      %v2301 = vsub.f32 %v101, %v2300
      %v2302 = vand.u32 %v2301, 4294901760
      %2303 = vmatmul.mubr.f32.gmra.mxu0 %v2302
      %v2304 = vpop.f32.mrf.mxu0
      %v2305 = vadd.f32 %v2229, %v2304
      %v2306 = vpop.f32.mrf.mxu0
      %v2307 = vadd.f32 %v2231, %v2306
      %2308 = vdwg.mxu0
      %2309 = vmatprep.subr.mxu0 0.0
      %2310 = vmatpush1.msra.mxu0 0.0
      %2311 = vmatprep.subr.mxu0 0.0
      %2312 = vmatpush1.msra.mxu0 0.0
      %2313 = vmatprep.subr.mxu0 0.0
      %2314 = vmatpush1.msra.mxu0 0.0
      %2315 = vmatprep.subr.mxu0 0.0
      %2316 = vmatpush1.msra.mxu0 0.0
      %2317 = vmatprep.subr.mxu0 0.0
      %2318 = vmatpush1.msra.mxu0 0.0
      %2319 = vmatprep.subr.mxu0 0.0
      %2320 = vmatpush1.msra.mxu0 0.0
      %2321 = vmatprep.subr.mxu0 0.0
      %2322 = vmatpush1.msra.mxu0 0.0
      %2323 = vmatprep.subr.mxu0 0.0
      %2324 = vmatpush1.msra.mxu0 0.0
      %2325 = vmatprep.subr.mxu0 0.0
      %2326 = vmatpush1.msra.mxu0 0.0
      %2327 = vmatprep.subr.mxu0 0.0
      %2328 = vmatpush1.msra.mxu0 0.0
      %2329 = vmatprep.subr.mxu0 0.0
      %2330 = vmatpush1.msra.mxu0 0.0
      %2331 = vmatprep.subr.mxu0 0.0
      %2332 = vmatpush1.msra.mxu0 0.0
      %2333 = vmatprep.subr.mxu0 0.0
      %2334 = vmatpush1.msra.mxu0 0.0
      %2335 = vmatprep.subr.mxu0 0.0
      %2336 = vmatpush1.msra.mxu0 0.0
      %2337 = vmatprep.subr.mxu0 0.0
      %2338 = vmatpush1.msra.mxu0 0.0
      %v2339 = vand.u32 %v1995, 4294901760
      %v2340 = vsub.f32 %v1995, %v2339
      %v2341 = vand.u32 %v2340, 4294901760
      %2342 = vmatprep.subr.mxu0 %v2341
      %v2343 = vand.u32 %v1994, 4294901760
      %v2344 = vsub.f32 %v1994, %v2343
      %v2345 = vand.u32 %v2344, 4294901760
      %2346 = vmatpush1.msra.mxu0 %v2345
      %2347 = vmatprep.subr.mxu0 0.0
      %2348 = vmatpush2.msra.mxu0 0.0
      %2349 = vmatprep.subr.mxu0 0.0
      %2350 = vmatpush2.msra.mxu0 0.0
      %2351 = vmatprep.subr.mxu0 0.0
      %2352 = vmatpush2.msra.mxu0 0.0
      %2353 = vmatprep.subr.mxu0 0.0
      %2354 = vmatpush2.msra.mxu0 0.0
      %2355 = vmatprep.subr.mxu0 0.0
      %2356 = vmatpush2.msra.mxu0 0.0
      %2357 = vmatprep.subr.mxu0 0.0
      %2358 = vmatpush2.msra.mxu0 0.0
      %2359 = vmatprep.subr.mxu0 0.0
      %2360 = vmatpush2.msra.mxu0 0.0
      %2361 = vmatprep.subr.mxu0 0.0
      %2362 = vmatpush2.msra.mxu0 0.0
      %2363 = vmatprep.subr.mxu0 0.0
      %2364 = vmatpush2.msra.mxu0 0.0
      %2365 = vmatprep.subr.mxu0 0.0
      %2366 = vmatpush2.msra.mxu0 0.0
      %2367 = vmatprep.subr.mxu0 0.0
      %2368 = vmatpush2.msra.mxu0 0.0
      %2369 = vmatprep.subr.mxu0 0.0
      %2370 = vmatpush2.msra.mxu0 0.0
      %2371 = vmatprep.subr.mxu0 0.0
      %2372 = vmatpush2.msra.mxu0 0.0
      %2373 = vmatprep.subr.mxu0 0.0
      %2374 = vmatpush2.msra.mxu0 0.0
      %2375 = vmatprep.subr.mxu0 0.0
      %2376 = vmatpush2.msra.mxu0 0.0
      %2377 = vmatprep.subr.mxu0 0.0
      %2378 = vmatpush2.msra.mxu0 0.0
      %2379 = vmatprep.mubr.f32.mxu0 0.0
      %v2380 = vand.u32 %v101, 4294901760
      %2381 = vmatmul.mubr.f32.gmra.mxu0 %v2380
      %v2382 = vpop.f32.mrf.mxu0
      %v2383 = vadd.f32 %v2305, %v2382
      %v2384 = vpop.f32.mrf.mxu0
      %v2385 = vadd.f32 %v2307, %v2384
      %2386 = vdwg.mxu0
      %2387 = vmatprep.subr.mxu0 0.0
      %2388 = vmatpush1.msra.mxu0 0.0
      %2389 = vmatprep.subr.mxu0 0.0
      %2390 = vmatpush1.msra.mxu0 0.0
      %2391 = vmatprep.subr.mxu0 0.0
      %2392 = vmatpush1.msra.mxu0 0.0
      %2393 = vmatprep.subr.mxu0 0.0
      %2394 = vmatpush1.msra.mxu0 0.0
      %2395 = vmatprep.subr.mxu0 0.0
      %2396 = vmatpush1.msra.mxu0 0.0
      %2397 = vmatprep.subr.mxu0 0.0
      %2398 = vmatpush1.msra.mxu0 0.0
      %2399 = vmatprep.subr.mxu0 0.0
      %2400 = vmatpush1.msra.mxu0 0.0
      %2401 = vmatprep.subr.mxu0 0.0
      %2402 = vmatpush1.msra.mxu0 0.0
      %2403 = vmatprep.subr.mxu0 0.0
      %2404 = vmatpush1.msra.mxu0 0.0
      %2405 = vmatprep.subr.mxu0 0.0
      %2406 = vmatpush1.msra.mxu0 0.0
      %2407 = vmatprep.subr.mxu0 0.0
      %2408 = vmatpush1.msra.mxu0 0.0
      %2409 = vmatprep.subr.mxu0 0.0
      %2410 = vmatpush1.msra.mxu0 0.0
      %2411 = vmatprep.subr.mxu0 0.0
      %2412 = vmatpush1.msra.mxu0 0.0
      %2413 = vmatprep.subr.mxu0 0.0
      %2414 = vmatpush1.msra.mxu0 0.0
      %2415 = vmatprep.subr.mxu0 0.0
      %2416 = vmatpush1.msra.mxu0 0.0
      %v2417 = vand.u32 %v1995, 4294901760
      %2418 = vmatprep.subr.mxu0 %v2417
      %v2419 = vand.u32 %v1994, 4294901760
      %2420 = vmatpush1.msra.mxu0 %v2419
      %2421 = vmatprep.subr.mxu0 0.0
      %2422 = vmatpush2.msra.mxu0 0.0
      %2423 = vmatprep.subr.mxu0 0.0
      %2424 = vmatpush2.msra.mxu0 0.0
      %2425 = vmatprep.subr.mxu0 0.0
      %2426 = vmatpush2.msra.mxu0 0.0
      %2427 = vmatprep.subr.mxu0 0.0
      %2428 = vmatpush2.msra.mxu0 0.0
      %2429 = vmatprep.subr.mxu0 0.0
      %2430 = vmatpush2.msra.mxu0 0.0
      %2431 = vmatprep.subr.mxu0 0.0
      %2432 = vmatpush2.msra.mxu0 0.0
      %2433 = vmatprep.subr.mxu0 0.0
      %2434 = vmatpush2.msra.mxu0 0.0
      %2435 = vmatprep.subr.mxu0 0.0
      %2436 = vmatpush2.msra.mxu0 0.0
      %2437 = vmatprep.subr.mxu0 0.0
      %2438 = vmatpush2.msra.mxu0 0.0
      %2439 = vmatprep.subr.mxu0 0.0
      %2440 = vmatpush2.msra.mxu0 0.0
      %2441 = vmatprep.subr.mxu0 0.0
      %2442 = vmatpush2.msra.mxu0 0.0
      %2443 = vmatprep.subr.mxu0 0.0
      %2444 = vmatpush2.msra.mxu0 0.0
      %2445 = vmatprep.subr.mxu0 0.0
      %2446 = vmatpush2.msra.mxu0 0.0
      %2447 = vmatprep.subr.mxu0 0.0
      %2448 = vmatpush2.msra.mxu0 0.0
      %2449 = vmatprep.subr.mxu0 0.0
      %2450 = vmatpush2.msra.mxu0 0.0
      %2451 = vmatprep.subr.mxu0 0.0
      %2452 = vmatpush2.msra.mxu0 0.0
      %2453 = vmatprep.mubr.f32.mxu0 0.0
      %v2454 = vand.u32 %v101, 4294901760
      %2455 = vmatmul.mubr.f32.gmra.mxu0 %v2454
      %v2456 = vpop.f32.mrf.mxu0
      %v2457 = vadd.f32 %v2383, %v2456
      %v2458 = vpop.f32.mrf.mxu0
      %v2459 = vadd.f32 %v2385, %v2458
      %2460 = vdwg.mxu0
      %2461 = vmatprep.subr.mxu0 0.0
      %2462 = vmatpush1.msra.mxu0 0.0
      %2463 = vmatprep.subr.mxu0 0.0
      %2464 = vmatpush1.msra.mxu0 0.0
      %2465 = vmatprep.subr.mxu0 0.0
      %2466 = vmatpush1.msra.mxu0 0.0
      %2467 = vmatprep.subr.mxu0 0.0
      %2468 = vmatpush1.msra.mxu0 0.0
      %2469 = vmatprep.subr.mxu0 0.0
      %2470 = vmatpush1.msra.mxu0 0.0
      %2471 = vmatprep.subr.mxu0 0.0
      %2472 = vmatpush1.msra.mxu0 0.0
      %2473 = vmatprep.subr.mxu0 0.0
      %2474 = vmatpush1.msra.mxu0 0.0
      %2475 = vmatprep.subr.mxu0 0.0
      %2476 = vmatpush1.msra.mxu0 0.0
      %2477 = vmatprep.subr.mxu0 0.0
      %2478 = vmatpush1.msra.mxu0 0.0
      %2479 = vmatprep.subr.mxu0 0.0
      %2480 = vmatpush1.msra.mxu0 0.0
      %2481 = vmatprep.subr.mxu0 0.0
      %2482 = vmatpush1.msra.mxu0 0.0
      %2483 = vmatprep.subr.mxu0 0.0
      %2484 = vmatpush1.msra.mxu0 0.0
      %2485 = vmatprep.subr.mxu0 0.0
      %2486 = vmatpush1.msra.mxu0 0.0
      %2487 = vmatprep.subr.mxu0 0.0
      %2488 = vmatpush1.msra.mxu0 0.0
      %2489 = vmatprep.subr.mxu0 0.0
      %2490 = vmatpush1.msra.mxu0 0.0
      %v2491 = vand.u32 %v1991, 4294901760
      %2492 = vmatprep.subr.mxu0 %v2491
      %v2493 = vand.u32 %v1990, 4294901760
      %2494 = vmatpush1.msra.mxu0 %v2493
      %2495 = vmatprep.subr.mxu0 0.0
      %2496 = vmatpush2.msra.mxu0 0.0
      %2497 = vmatprep.subr.mxu0 0.0
      %2498 = vmatpush2.msra.mxu0 0.0
      %2499 = vmatprep.subr.mxu0 0.0
      %2500 = vmatpush2.msra.mxu0 0.0
      %2501 = vmatprep.subr.mxu0 0.0
      %2502 = vmatpush2.msra.mxu0 0.0
      %2503 = vmatprep.subr.mxu0 0.0
      %2504 = vmatpush2.msra.mxu0 0.0
      %2505 = vmatprep.subr.mxu0 0.0
      %2506 = vmatpush2.msra.mxu0 0.0
      %2507 = vmatprep.subr.mxu0 0.0
      %2508 = vmatpush2.msra.mxu0 0.0
      %2509 = vmatprep.subr.mxu0 0.0
      %2510 = vmatpush2.msra.mxu0 0.0
      %2511 = vmatprep.subr.mxu0 0.0
      %2512 = vmatpush2.msra.mxu0 0.0
      %2513 = vmatprep.subr.mxu0 0.0
      %2514 = vmatpush2.msra.mxu0 0.0
      %2515 = vmatprep.subr.mxu0 0.0
      %2516 = vmatpush2.msra.mxu0 0.0
      %2517 = vmatprep.subr.mxu0 0.0
      %2518 = vmatpush2.msra.mxu0 0.0
      %2519 = vmatprep.subr.mxu0 0.0
      %2520 = vmatpush2.msra.mxu0 0.0
      %2521 = vmatprep.subr.mxu0 0.0
      %2522 = vmatpush2.msra.mxu0 0.0
      %2523 = vmatprep.subr.mxu0 0.0
      %2524 = vmatpush2.msra.mxu0 0.0
      %2525 = vmatprep.subr.mxu0 0.0
      %2526 = vmatpush2.msra.mxu0 0.0
      %2527 = vmatprep.mubr.f32.mxu0 0.0
      %v2528 = vand.u32 %v569, 4294901760
      %v2529 = vsub.f32 %v569, %v2528
      %v2530 = vand.u32 %v2529, 4294901760
      %v2531 = vsub.f32 %v2529, %v2530
      %v2532 = vand.u32 %v2531, 4294901760
      %2533 = vmatmul.mubr.f32.gmra.mxu0 %v2532
      %v2534 = vpop.f32.mrf.mxu0
      %v2535 = vadd.f32 %v2457, %v2534
      %v2536 = vpop.f32.mrf.mxu0
      %v2537 = vadd.f32 %v2459, %v2536
      %2538 = vdwg.mxu0
      %2539 = vmatprep.subr.mxu0 0.0
      %2540 = vmatpush1.msra.mxu0 0.0
      %2541 = vmatprep.subr.mxu0 0.0
      %2542 = vmatpush1.msra.mxu0 0.0
      %2543 = vmatprep.subr.mxu0 0.0
      %2544 = vmatpush1.msra.mxu0 0.0
      %2545 = vmatprep.subr.mxu0 0.0
      %2546 = vmatpush1.msra.mxu0 0.0
      %2547 = vmatprep.subr.mxu0 0.0
      %2548 = vmatpush1.msra.mxu0 0.0
      %2549 = vmatprep.subr.mxu0 0.0
      %2550 = vmatpush1.msra.mxu0 0.0
      %2551 = vmatprep.subr.mxu0 0.0
      %2552 = vmatpush1.msra.mxu0 0.0
      %2553 = vmatprep.subr.mxu0 0.0
      %2554 = vmatpush1.msra.mxu0 0.0
      %2555 = vmatprep.subr.mxu0 0.0
      %2556 = vmatpush1.msra.mxu0 0.0
      %2557 = vmatprep.subr.mxu0 0.0
      %2558 = vmatpush1.msra.mxu0 0.0
      %2559 = vmatprep.subr.mxu0 0.0
      %2560 = vmatpush1.msra.mxu0 0.0
      %2561 = vmatprep.subr.mxu0 0.0
      %2562 = vmatpush1.msra.mxu0 0.0
      %2563 = vmatprep.subr.mxu0 0.0
      %2564 = vmatpush1.msra.mxu0 0.0
      %2565 = vmatprep.subr.mxu0 0.0
      %2566 = vmatpush1.msra.mxu0 0.0
      %2567 = vmatprep.subr.mxu0 0.0
      %2568 = vmatpush1.msra.mxu0 0.0
      %v2569 = vand.u32 %v1991, 4294901760
      %v2570 = vsub.f32 %v1991, %v2569
      %v2571 = vand.u32 %v2570, 4294901760
      %v2572 = vsub.f32 %v2570, %v2571
      %v2573 = vand.u32 %v2572, 4294901760
      %2574 = vmatprep.subr.mxu0 %v2573
      %v2575 = vand.u32 %v1990, 4294901760
      %v2576 = vsub.f32 %v1990, %v2575
      %v2577 = vand.u32 %v2576, 4294901760
      %v2578 = vsub.f32 %v2576, %v2577
      %v2579 = vand.u32 %v2578, 4294901760
      %2580 = vmatpush1.msra.mxu0 %v2579
      %2581 = vmatprep.subr.mxu0 0.0
      %2582 = vmatpush2.msra.mxu0 0.0
      %2583 = vmatprep.subr.mxu0 0.0
      %2584 = vmatpush2.msra.mxu0 0.0
      %2585 = vmatprep.subr.mxu0 0.0
      %2586 = vmatpush2.msra.mxu0 0.0
      %2587 = vmatprep.subr.mxu0 0.0
      %2588 = vmatpush2.msra.mxu0 0.0
      %2589 = vmatprep.subr.mxu0 0.0
      %2590 = vmatpush2.msra.mxu0 0.0
      %2591 = vmatprep.subr.mxu0 0.0
      %2592 = vmatpush2.msra.mxu0 0.0
      %2593 = vmatprep.subr.mxu0 0.0
      %2594 = vmatpush2.msra.mxu0 0.0
      %2595 = vmatprep.subr.mxu0 0.0
      %2596 = vmatpush2.msra.mxu0 0.0
      %2597 = vmatprep.subr.mxu0 0.0
      %2598 = vmatpush2.msra.mxu0 0.0
      %2599 = vmatprep.subr.mxu0 0.0
      %2600 = vmatpush2.msra.mxu0 0.0
      %2601 = vmatprep.subr.mxu0 0.0
      %2602 = vmatpush2.msra.mxu0 0.0
      %2603 = vmatprep.subr.mxu0 0.0
      %2604 = vmatpush2.msra.mxu0 0.0
      %2605 = vmatprep.subr.mxu0 0.0
      %2606 = vmatpush2.msra.mxu0 0.0
      %2607 = vmatprep.subr.mxu0 0.0
      %2608 = vmatpush2.msra.mxu0 0.0
      %2609 = vmatprep.subr.mxu0 0.0
      %2610 = vmatpush2.msra.mxu0 0.0
      %2611 = vmatprep.subr.mxu0 0.0
      %2612 = vmatpush2.msra.mxu0 0.0
      %2613 = vmatprep.mubr.f32.mxu0 0.0
      %v2614 = vand.u32 %v569, 4294901760
      %2615 = vmatmul.mubr.f32.gmra.mxu0 %v2614
      %v2616 = vpop.f32.mrf.mxu0
      %v2617 = vadd.f32 %v2535, %v2616
      %v2618 = vpop.f32.mrf.mxu0
      %v2619 = vadd.f32 %v2537, %v2618
      %2620 = vdwg.mxu0
      %2621 = vmatprep.subr.mxu0 0.0
      %2622 = vmatpush1.msra.mxu0 0.0
      %2623 = vmatprep.subr.mxu0 0.0
      %2624 = vmatpush1.msra.mxu0 0.0
      %2625 = vmatprep.subr.mxu0 0.0
      %2626 = vmatpush1.msra.mxu0 0.0
      %2627 = vmatprep.subr.mxu0 0.0
      %2628 = vmatpush1.msra.mxu0 0.0
      %2629 = vmatprep.subr.mxu0 0.0
      %2630 = vmatpush1.msra.mxu0 0.0
      %2631 = vmatprep.subr.mxu0 0.0
      %2632 = vmatpush1.msra.mxu0 0.0
      %2633 = vmatprep.subr.mxu0 0.0
      %2634 = vmatpush1.msra.mxu0 0.0
      %2635 = vmatprep.subr.mxu0 0.0
      %2636 = vmatpush1.msra.mxu0 0.0
      %2637 = vmatprep.subr.mxu0 0.0
      %2638 = vmatpush1.msra.mxu0 0.0
      %2639 = vmatprep.subr.mxu0 0.0
      %2640 = vmatpush1.msra.mxu0 0.0
      %2641 = vmatprep.subr.mxu0 0.0
      %2642 = vmatpush1.msra.mxu0 0.0
      %2643 = vmatprep.subr.mxu0 0.0
      %2644 = vmatpush1.msra.mxu0 0.0
      %2645 = vmatprep.subr.mxu0 0.0
      %2646 = vmatpush1.msra.mxu0 0.0
      %2647 = vmatprep.subr.mxu0 0.0
      %2648 = vmatpush1.msra.mxu0 0.0
      %2649 = vmatprep.subr.mxu0 0.0
      %2650 = vmatpush1.msra.mxu0 0.0
      %v2651 = vand.u32 %v1991, 4294901760
      %v2652 = vsub.f32 %v1991, %v2651
      %2653 = vmatprep.subr.mxu0 %v2652
      %v2654 = vand.u32 %v1990, 4294901760
      %v2655 = vsub.f32 %v1990, %v2654
      %2656 = vmatpush1.msra.mxu0 %v2655
      %2657 = vmatprep.subr.mxu0 0.0
      %2658 = vmatpush2.msra.mxu0 0.0
      %2659 = vmatprep.subr.mxu0 0.0
      %2660 = vmatpush2.msra.mxu0 0.0
      %2661 = vmatprep.subr.mxu0 0.0
      %2662 = vmatpush2.msra.mxu0 0.0
      %2663 = vmatprep.subr.mxu0 0.0
      %2664 = vmatpush2.msra.mxu0 0.0
      %2665 = vmatprep.subr.mxu0 0.0
      %2666 = vmatpush2.msra.mxu0 0.0
      %2667 = vmatprep.subr.mxu0 0.0
      %2668 = vmatpush2.msra.mxu0 0.0
      %2669 = vmatprep.subr.mxu0 0.0
      %2670 = vmatpush2.msra.mxu0 0.0
      %2671 = vmatprep.subr.mxu0 0.0
      %2672 = vmatpush2.msra.mxu0 0.0
      %2673 = vmatprep.subr.mxu0 0.0
      %2674 = vmatpush2.msra.mxu0 0.0
      %2675 = vmatprep.subr.mxu0 0.0
      %2676 = vmatpush2.msra.mxu0 0.0
      %2677 = vmatprep.subr.mxu0 0.0
      %2678 = vmatpush2.msra.mxu0 0.0
      %2679 = vmatprep.subr.mxu0 0.0
      %2680 = vmatpush2.msra.mxu0 0.0
      %2681 = vmatprep.subr.mxu0 0.0
      %2682 = vmatpush2.msra.mxu0 0.0
      %2683 = vmatprep.subr.mxu0 0.0
      %2684 = vmatpush2.msra.mxu0 0.0
      %2685 = vmatprep.subr.mxu0 0.0
      %2686 = vmatpush2.msra.mxu0 0.0
      %2687 = vmatprep.subr.mxu0 0.0
      %2688 = vmatpush2.msra.mxu0 0.0
      %2689 = vmatprep.mubr.f32.mxu0 0.0
      %v2690 = vand.u32 %v569, 4294901760
      %v2691 = vsub.f32 %v569, %v2690
      %2692 = vmatmul.mubr.f32.gmra.mxu0 %v2691
      %v2693 = vpop.f32.mrf.mxu0
      %v2694 = vadd.f32 %v2617, %v2693
      %v2695 = vpop.f32.mrf.mxu0
      %v2696 = vadd.f32 %v2619, %v2695
      %2697 = vdwg.mxu0
      %2698 = vmatprep.subr.mxu0 0.0
      %2699 = vmatpush1.msra.mxu0 0.0
      %2700 = vmatprep.subr.mxu0 0.0
      %2701 = vmatpush1.msra.mxu0 0.0
      %2702 = vmatprep.subr.mxu0 0.0
      %2703 = vmatpush1.msra.mxu0 0.0
      %2704 = vmatprep.subr.mxu0 0.0
      %2705 = vmatpush1.msra.mxu0 0.0
      %2706 = vmatprep.subr.mxu0 0.0
      %2707 = vmatpush1.msra.mxu0 0.0
      %2708 = vmatprep.subr.mxu0 0.0
      %2709 = vmatpush1.msra.mxu0 0.0
      %2710 = vmatprep.subr.mxu0 0.0
      %2711 = vmatpush1.msra.mxu0 0.0
      %2712 = vmatprep.subr.mxu0 0.0
      %2713 = vmatpush1.msra.mxu0 0.0
      %2714 = vmatprep.subr.mxu0 0.0
      %2715 = vmatpush1.msra.mxu0 0.0
      %2716 = vmatprep.subr.mxu0 0.0
      %2717 = vmatpush1.msra.mxu0 0.0
      %2718 = vmatprep.subr.mxu0 0.0
      %2719 = vmatpush1.msra.mxu0 0.0
      %2720 = vmatprep.subr.mxu0 0.0
      %2721 = vmatpush1.msra.mxu0 0.0
      %2722 = vmatprep.subr.mxu0 0.0
      %2723 = vmatpush1.msra.mxu0 0.0
      %2724 = vmatprep.subr.mxu0 0.0
      %2725 = vmatpush1.msra.mxu0 0.0
      %2726 = vmatprep.subr.mxu0 0.0
      %2727 = vmatpush1.msra.mxu0 0.0
      %v2728 = vand.u32 %v1991, 4294901760
      %2729 = vmatprep.subr.mxu0 %v2728
      %v2730 = vand.u32 %v1990, 4294901760
      %2731 = vmatpush1.msra.mxu0 %v2730
      %2732 = vmatprep.subr.mxu0 0.0
      %2733 = vmatpush2.msra.mxu0 0.0
      %2734 = vmatprep.subr.mxu0 0.0
      %2735 = vmatpush2.msra.mxu0 0.0
      %2736 = vmatprep.subr.mxu0 0.0
      %2737 = vmatpush2.msra.mxu0 0.0
      %2738 = vmatprep.subr.mxu0 0.0
      %2739 = vmatpush2.msra.mxu0 0.0
      %2740 = vmatprep.subr.mxu0 0.0
      %2741 = vmatpush2.msra.mxu0 0.0
      %2742 = vmatprep.subr.mxu0 0.0
      %2743 = vmatpush2.msra.mxu0 0.0
      %2744 = vmatprep.subr.mxu0 0.0
      %2745 = vmatpush2.msra.mxu0 0.0
      %2746 = vmatprep.subr.mxu0 0.0
      %2747 = vmatpush2.msra.mxu0 0.0
      %2748 = vmatprep.subr.mxu0 0.0
      %2749 = vmatpush2.msra.mxu0 0.0
      %2750 = vmatprep.subr.mxu0 0.0
      %2751 = vmatpush2.msra.mxu0 0.0
      %2752 = vmatprep.subr.mxu0 0.0
      %2753 = vmatpush2.msra.mxu0 0.0
      %2754 = vmatprep.subr.mxu0 0.0
      %2755 = vmatpush2.msra.mxu0 0.0
      %2756 = vmatprep.subr.mxu0 0.0
      %2757 = vmatpush2.msra.mxu0 0.0
      %2758 = vmatprep.subr.mxu0 0.0
      %2759 = vmatpush2.msra.mxu0 0.0
      %2760 = vmatprep.subr.mxu0 0.0
      %2761 = vmatpush2.msra.mxu0 0.0
      %2762 = vmatprep.subr.mxu0 0.0
      %2763 = vmatpush2.msra.mxu0 0.0
      %2764 = vmatprep.mubr.f32.mxu0 0.0
      %v2765 = vand.u32 %v569, 4294901760
      %v2766 = vsub.f32 %v569, %v2765
      %v2767 = vand.u32 %v2766, 4294901760
      %2768 = vmatmul.mubr.f32.gmra.mxu0 %v2767
      %v2769 = vpop.f32.mrf.mxu0
      %v2770 = vadd.f32 %v2694, %v2769
      %v2771 = vpop.f32.mrf.mxu0
      %v2772 = vadd.f32 %v2696, %v2771
      %2773 = vdwg.mxu0
      %2774 = vmatprep.subr.mxu0 0.0
      %2775 = vmatpush1.msra.mxu0 0.0
      %2776 = vmatprep.subr.mxu0 0.0
      %2777 = vmatpush1.msra.mxu0 0.0
      %2778 = vmatprep.subr.mxu0 0.0
      %2779 = vmatpush1.msra.mxu0 0.0
      %2780 = vmatprep.subr.mxu0 0.0
      %2781 = vmatpush1.msra.mxu0 0.0
      %2782 = vmatprep.subr.mxu0 0.0
      %2783 = vmatpush1.msra.mxu0 0.0
      %2784 = vmatprep.subr.mxu0 0.0
      %2785 = vmatpush1.msra.mxu0 0.0
      %2786 = vmatprep.subr.mxu0 0.0
      %2787 = vmatpush1.msra.mxu0 0.0
      %2788 = vmatprep.subr.mxu0 0.0
      %2789 = vmatpush1.msra.mxu0 0.0
      %2790 = vmatprep.subr.mxu0 0.0
      %2791 = vmatpush1.msra.mxu0 0.0
      %2792 = vmatprep.subr.mxu0 0.0
      %2793 = vmatpush1.msra.mxu0 0.0
      %2794 = vmatprep.subr.mxu0 0.0
      %2795 = vmatpush1.msra.mxu0 0.0
      %2796 = vmatprep.subr.mxu0 0.0
      %2797 = vmatpush1.msra.mxu0 0.0
      %2798 = vmatprep.subr.mxu0 0.0
      %2799 = vmatpush1.msra.mxu0 0.0
      %2800 = vmatprep.subr.mxu0 0.0
      %2801 = vmatpush1.msra.mxu0 0.0
      %2802 = vmatprep.subr.mxu0 0.0
      %2803 = vmatpush1.msra.mxu0 0.0
      %v2804 = vand.u32 %v1991, 4294901760
      %v2805 = vsub.f32 %v1991, %v2804
      %v2806 = vand.u32 %v2805, 4294901760
      %2807 = vmatprep.subr.mxu0 %v2806
      %v2808 = vand.u32 %v1990, 4294901760
      %v2809 = vsub.f32 %v1990, %v2808
      %v2810 = vand.u32 %v2809, 4294901760
      %2811 = vmatpush1.msra.mxu0 %v2810
      %2812 = vmatprep.subr.mxu0 0.0
      %2813 = vmatpush2.msra.mxu0 0.0
      %2814 = vmatprep.subr.mxu0 0.0
      %2815 = vmatpush2.msra.mxu0 0.0
      %2816 = vmatprep.subr.mxu0 0.0
      %2817 = vmatpush2.msra.mxu0 0.0
      %2818 = vmatprep.subr.mxu0 0.0
      %2819 = vmatpush2.msra.mxu0 0.0
      %2820 = vmatprep.subr.mxu0 0.0
      %2821 = vmatpush2.msra.mxu0 0.0
      %2822 = vmatprep.subr.mxu0 0.0
      %2823 = vmatpush2.msra.mxu0 0.0
      %2824 = vmatprep.subr.mxu0 0.0
      %2825 = vmatpush2.msra.mxu0 0.0
      %2826 = vmatprep.subr.mxu0 0.0
      %2827 = vmatpush2.msra.mxu0 0.0
      %2828 = vmatprep.subr.mxu0 0.0
      %2829 = vmatpush2.msra.mxu0 0.0
      %2830 = vmatprep.subr.mxu0 0.0
      %2831 = vmatpush2.msra.mxu0 0.0
      %2832 = vmatprep.subr.mxu0 0.0
      %2833 = vmatpush2.msra.mxu0 0.0
      %2834 = vmatprep.subr.mxu0 0.0
      %2835 = vmatpush2.msra.mxu0 0.0
      %2836 = vmatprep.subr.mxu0 0.0
      %2837 = vmatpush2.msra.mxu0 0.0
      %2838 = vmatprep.subr.mxu0 0.0
      %2839 = vmatpush2.msra.mxu0 0.0
      %2840 = vmatprep.subr.mxu0 0.0
      %2841 = vmatpush2.msra.mxu0 0.0
      %2842 = vmatprep.subr.mxu0 0.0
      %2843 = vmatpush2.msra.mxu0 0.0
      %2844 = vmatprep.mubr.f32.mxu0 0.0
      %v2845 = vand.u32 %v569, 4294901760
      %2846 = vmatmul.mubr.f32.gmra.mxu0 %v2845
      %v2847 = vpop.f32.mrf.mxu0
      %v2848 = vadd.f32 %v2770, %v2847
      %v2849 = vpop.f32.mrf.mxu0
      %v2850 = vadd.f32 %v2772, %v2849
      %2851 = vdwg.mxu0
      %2852 = vmatprep.subr.mxu0 0.0
      %2853 = vmatpush1.msra.mxu0 0.0
      %2854 = vmatprep.subr.mxu0 0.0
      %2855 = vmatpush1.msra.mxu0 0.0
      %2856 = vmatprep.subr.mxu0 0.0
      %2857 = vmatpush1.msra.mxu0 0.0
      %2858 = vmatprep.subr.mxu0 0.0
      %2859 = vmatpush1.msra.mxu0 0.0
      %2860 = vmatprep.subr.mxu0 0.0
      %2861 = vmatpush1.msra.mxu0 0.0
      %2862 = vmatprep.subr.mxu0 0.0
      %2863 = vmatpush1.msra.mxu0 0.0
      %2864 = vmatprep.subr.mxu0 0.0
      %2865 = vmatpush1.msra.mxu0 0.0
      %2866 = vmatprep.subr.mxu0 0.0
      %2867 = vmatpush1.msra.mxu0 0.0
      %2868 = vmatprep.subr.mxu0 0.0
      %2869 = vmatpush1.msra.mxu0 0.0
      %2870 = vmatprep.subr.mxu0 0.0
      %2871 = vmatpush1.msra.mxu0 0.0
      %2872 = vmatprep.subr.mxu0 0.0
      %2873 = vmatpush1.msra.mxu0 0.0
      %2874 = vmatprep.subr.mxu0 0.0
      %2875 = vmatpush1.msra.mxu0 0.0
      %2876 = vmatprep.subr.mxu0 0.0
      %2877 = vmatpush1.msra.mxu0 0.0
      %2878 = vmatprep.subr.mxu0 0.0
      %2879 = vmatpush1.msra.mxu0 0.0
      %2880 = vmatprep.subr.mxu0 0.0
      %2881 = vmatpush1.msra.mxu0 0.0
      %v2882 = vand.u32 %v1991, 4294901760
      %2883 = vmatprep.subr.mxu0 %v2882
      %v2884 = vand.u32 %v1990, 4294901760
      %2885 = vmatpush1.msra.mxu0 %v2884
      %2886 = vmatprep.subr.mxu0 0.0
      %2887 = vmatpush2.msra.mxu0 0.0
      %2888 = vmatprep.subr.mxu0 0.0
      %2889 = vmatpush2.msra.mxu0 0.0
      %2890 = vmatprep.subr.mxu0 0.0
      %2891 = vmatpush2.msra.mxu0 0.0
      %2892 = vmatprep.subr.mxu0 0.0
      %2893 = vmatpush2.msra.mxu0 0.0
      %2894 = vmatprep.subr.mxu0 0.0
      %2895 = vmatpush2.msra.mxu0 0.0
      %2896 = vmatprep.subr.mxu0 0.0
      %2897 = vmatpush2.msra.mxu0 0.0
      %2898 = vmatprep.subr.mxu0 0.0
      %2899 = vmatpush2.msra.mxu0 0.0
      %2900 = vmatprep.subr.mxu0 0.0
      %2901 = vmatpush2.msra.mxu0 0.0
      %2902 = vmatprep.subr.mxu0 0.0
      %2903 = vmatpush2.msra.mxu0 0.0
      %2904 = vmatprep.subr.mxu0 0.0
      %2905 = vmatpush2.msra.mxu0 0.0
      %2906 = vmatprep.subr.mxu0 0.0
      %2907 = vmatpush2.msra.mxu0 0.0
      %2908 = vmatprep.subr.mxu0 0.0
      %2909 = vmatpush2.msra.mxu0 0.0
      %2910 = vmatprep.subr.mxu0 0.0
      %2911 = vmatpush2.msra.mxu0 0.0
      %2912 = vmatprep.subr.mxu0 0.0
      %2913 = vmatpush2.msra.mxu0 0.0
      %2914 = vmatprep.subr.mxu0 0.0
      %2915 = vmatpush2.msra.mxu0 0.0
      %2916 = vmatprep.subr.mxu0 0.0
      %2917 = vmatpush2.msra.mxu0 0.0
      %2918 = vmatprep.mubr.f32.mxu0 0.0
      %v2919 = vand.u32 %v569, 4294901760
      %2920 = vmatmul.mubr.f32.gmra.mxu0 %v2919
      %v2921 = vpop.f32.mrf.mxu0
      %v2922 = vadd.f32 %v2848, %v2921
      %v2923 = vpop.f32.mrf.mxu0
      %v2924 = vadd.f32 %v2850, %v2923
      %2925 = vdwg.mxu0
      %2926 = vmatprep.subr.mxu0 0.0
      %2927 = vmatpush1.msra.mxu0 0.0
      %2928 = vmatprep.subr.mxu0 0.0
      %2929 = vmatpush1.msra.mxu0 0.0
      %2930 = vmatprep.subr.mxu0 0.0
      %2931 = vmatpush1.msra.mxu0 0.0
      %2932 = vmatprep.subr.mxu0 0.0
      %2933 = vmatpush1.msra.mxu0 0.0
      %2934 = vmatprep.subr.mxu0 0.0
      %2935 = vmatpush1.msra.mxu0 0.0
      %2936 = vmatprep.subr.mxu0 0.0
      %2937 = vmatpush1.msra.mxu0 0.0
      %2938 = vmatprep.subr.mxu0 0.0
      %2939 = vmatpush1.msra.mxu0 0.0
      %2940 = vmatprep.subr.mxu0 0.0
      %2941 = vmatpush1.msra.mxu0 0.0
      %2942 = vmatprep.subr.mxu0 0.0
      %2943 = vmatpush1.msra.mxu0 0.0
      %2944 = vmatprep.subr.mxu0 0.0
      %2945 = vmatpush1.msra.mxu0 0.0
      %2946 = vmatprep.subr.mxu0 0.0
      %2947 = vmatpush1.msra.mxu0 0.0
      %2948 = vmatprep.subr.mxu0 0.0
      %2949 = vmatpush1.msra.mxu0 0.0
      %2950 = vmatprep.subr.mxu0 0.0
      %2951 = vmatpush1.msra.mxu0 0.0
      %2952 = vmatprep.subr.mxu0 0.0
      %2953 = vmatpush1.msra.mxu0 0.0
      %2954 = vmatprep.subr.mxu0 0.0
      %2955 = vmatpush1.msra.mxu0 0.0
      %v2956 = vand.u32 %v1995, 4294901760
      %2957 = vmatprep.subr.mxu0 %v2956
      %v2958 = vand.u32 %v1994, 4294901760
      %2959 = vmatpush1.msra.mxu0 %v2958
      %2960 = vmatprep.subr.mxu0 0.0
      %2961 = vmatpush2.msra.mxu0 0.0
      %2962 = vmatprep.subr.mxu0 0.0
      %2963 = vmatpush2.msra.mxu0 0.0
      %2964 = vmatprep.subr.mxu0 0.0
      %2965 = vmatpush2.msra.mxu0 0.0
      %2966 = vmatprep.subr.mxu0 0.0
      %2967 = vmatpush2.msra.mxu0 0.0
      %2968 = vmatprep.subr.mxu0 0.0
      %2969 = vmatpush2.msra.mxu0 0.0
      %2970 = vmatprep.subr.mxu0 0.0
      %2971 = vmatpush2.msra.mxu0 0.0
      %2972 = vmatprep.subr.mxu0 0.0
      %2973 = vmatpush2.msra.mxu0 0.0
      %2974 = vmatprep.subr.mxu0 0.0
      %2975 = vmatpush2.msra.mxu0 0.0
      %2976 = vmatprep.subr.mxu0 0.0
      %2977 = vmatpush2.msra.mxu0 0.0
      %2978 = vmatprep.subr.mxu0 0.0
      %2979 = vmatpush2.msra.mxu0 0.0
      %2980 = vmatprep.subr.mxu0 0.0
      %2981 = vmatpush2.msra.mxu0 0.0
      %2982 = vmatprep.subr.mxu0 0.0
      %2983 = vmatpush2.msra.mxu0 0.0
      %2984 = vmatprep.subr.mxu0 0.0
      %2985 = vmatpush2.msra.mxu0 0.0
      %2986 = vmatprep.subr.mxu0 0.0
      %2987 = vmatpush2.msra.mxu0 0.0
      %2988 = vmatprep.subr.mxu0 0.0
      %2989 = vmatpush2.msra.mxu0 0.0
      %2990 = vmatprep.subr.mxu0 0.0
      %2991 = vmatpush2.msra.mxu0 0.0
      %2992 = vmatprep.mubr.f32.mxu0 0.0
      %v2993 = vand.u32 %v1037, 4294901760
      %v2994 = vsub.f32 %v1037, %v2993
      %v2995 = vand.u32 %v2994, 4294901760
      %v2996 = vsub.f32 %v2994, %v2995
      %v2997 = vand.u32 %v2996, 4294901760
      %2998 = vmatmul.mubr.f32.gmra.mxu0 %v2997
      %v2999 = vpop.f32.mrf.mxu0
      %v3000 = vadd.f32 0.0, %v2999
      %v3001 = vpop.f32.mrf.mxu0
      %v3002 = vadd.f32 0.0, %v3001
      %3003 = vdwg.mxu0
      %3004 = vmatprep.subr.mxu0 0.0
      %3005 = vmatpush1.msra.mxu0 0.0
      %3006 = vmatprep.subr.mxu0 0.0
      %3007 = vmatpush1.msra.mxu0 0.0
      %3008 = vmatprep.subr.mxu0 0.0
      %3009 = vmatpush1.msra.mxu0 0.0
      %3010 = vmatprep.subr.mxu0 0.0
      %3011 = vmatpush1.msra.mxu0 0.0
      %3012 = vmatprep.subr.mxu0 0.0
      %3013 = vmatpush1.msra.mxu0 0.0
      %3014 = vmatprep.subr.mxu0 0.0
      %3015 = vmatpush1.msra.mxu0 0.0
      %3016 = vmatprep.subr.mxu0 0.0
      %3017 = vmatpush1.msra.mxu0 0.0
      %3018 = vmatprep.subr.mxu0 0.0
      %3019 = vmatpush1.msra.mxu0 0.0
      %3020 = vmatprep.subr.mxu0 0.0
      %3021 = vmatpush1.msra.mxu0 0.0
      %3022 = vmatprep.subr.mxu0 0.0
      %3023 = vmatpush1.msra.mxu0 0.0
      %3024 = vmatprep.subr.mxu0 0.0
      %3025 = vmatpush1.msra.mxu0 0.0
      %3026 = vmatprep.subr.mxu0 0.0
      %3027 = vmatpush1.msra.mxu0 0.0
      %3028 = vmatprep.subr.mxu0 0.0
      %3029 = vmatpush1.msra.mxu0 0.0
      %3030 = vmatprep.subr.mxu0 0.0
      %3031 = vmatpush1.msra.mxu0 0.0
      %3032 = vmatprep.subr.mxu0 0.0
      %3033 = vmatpush1.msra.mxu0 0.0
      %v3034 = vand.u32 %v1995, 4294901760
      %v3035 = vsub.f32 %v1995, %v3034
      %v3036 = vand.u32 %v3035, 4294901760
      %v3037 = vsub.f32 %v3035, %v3036
      %v3038 = vand.u32 %v3037, 4294901760
      %3039 = vmatprep.subr.mxu0 %v3038
      %v3040 = vand.u32 %v1994, 4294901760
      %v3041 = vsub.f32 %v1994, %v3040
      %v3042 = vand.u32 %v3041, 4294901760
      %v3043 = vsub.f32 %v3041, %v3042
      %v3044 = vand.u32 %v3043, 4294901760
      %3045 = vmatpush1.msra.mxu0 %v3044
      %3046 = vmatprep.subr.mxu0 0.0
      %3047 = vmatpush2.msra.mxu0 0.0
      %3048 = vmatprep.subr.mxu0 0.0
      %3049 = vmatpush2.msra.mxu0 0.0
      %3050 = vmatprep.subr.mxu0 0.0
      %3051 = vmatpush2.msra.mxu0 0.0
      %3052 = vmatprep.subr.mxu0 0.0
      %3053 = vmatpush2.msra.mxu0 0.0
      %3054 = vmatprep.subr.mxu0 0.0
      %3055 = vmatpush2.msra.mxu0 0.0
      %3056 = vmatprep.subr.mxu0 0.0
      %3057 = vmatpush2.msra.mxu0 0.0
      %3058 = vmatprep.subr.mxu0 0.0
      %3059 = vmatpush2.msra.mxu0 0.0
      %3060 = vmatprep.subr.mxu0 0.0
      %3061 = vmatpush2.msra.mxu0 0.0
      %3062 = vmatprep.subr.mxu0 0.0
      %3063 = vmatpush2.msra.mxu0 0.0
      %3064 = vmatprep.subr.mxu0 0.0
      %3065 = vmatpush2.msra.mxu0 0.0
      %3066 = vmatprep.subr.mxu0 0.0
      %3067 = vmatpush2.msra.mxu0 0.0
      %3068 = vmatprep.subr.mxu0 0.0
      %3069 = vmatpush2.msra.mxu0 0.0
      %3070 = vmatprep.subr.mxu0 0.0
      %3071 = vmatpush2.msra.mxu0 0.0
      %3072 = vmatprep.subr.mxu0 0.0
      %3073 = vmatpush2.msra.mxu0 0.0
      %3074 = vmatprep.subr.mxu0 0.0
      %3075 = vmatpush2.msra.mxu0 0.0
      %3076 = vmatprep.subr.mxu0 0.0
      %3077 = vmatpush2.msra.mxu0 0.0
      %3078 = vmatprep.mubr.f32.mxu0 0.0
      %v3079 = vand.u32 %v1037, 4294901760
      %3080 = vmatmul.mubr.f32.gmra.mxu0 %v3079
      %v3081 = vpop.f32.mrf.mxu0
      %v3082 = vadd.f32 %v3000, %v3081
      %v3083 = vpop.f32.mrf.mxu0
      %v3084 = vadd.f32 %v3002, %v3083
      %3085 = vdwg.mxu0
      %3086 = vmatprep.subr.mxu0 0.0
      %3087 = vmatpush1.msra.mxu0 0.0
      %3088 = vmatprep.subr.mxu0 0.0
      %3089 = vmatpush1.msra.mxu0 0.0
      %3090 = vmatprep.subr.mxu0 0.0
      %3091 = vmatpush1.msra.mxu0 0.0
      %3092 = vmatprep.subr.mxu0 0.0
      %3093 = vmatpush1.msra.mxu0 0.0
      %3094 = vmatprep.subr.mxu0 0.0
      %3095 = vmatpush1.msra.mxu0 0.0
      %3096 = vmatprep.subr.mxu0 0.0
      %3097 = vmatpush1.msra.mxu0 0.0
      %3098 = vmatprep.subr.mxu0 0.0
      %3099 = vmatpush1.msra.mxu0 0.0
      %3100 = vmatprep.subr.mxu0 0.0
      %3101 = vmatpush1.msra.mxu0 0.0
      %3102 = vmatprep.subr.mxu0 0.0
      %3103 = vmatpush1.msra.mxu0 0.0
      %3104 = vmatprep.subr.mxu0 0.0
      %3105 = vmatpush1.msra.mxu0 0.0
      %3106 = vmatprep.subr.mxu0 0.0
      %3107 = vmatpush1.msra.mxu0 0.0
      %3108 = vmatprep.subr.mxu0 0.0
      %3109 = vmatpush1.msra.mxu0 0.0
      %3110 = vmatprep.subr.mxu0 0.0
      %3111 = vmatpush1.msra.mxu0 0.0
      %3112 = vmatprep.subr.mxu0 0.0
      %3113 = vmatpush1.msra.mxu0 0.0
      %3114 = vmatprep.subr.mxu0 0.0
      %3115 = vmatpush1.msra.mxu0 0.0
      %v3116 = vand.u32 %v1995, 4294901760
      %v3117 = vsub.f32 %v1995, %v3116
      %3118 = vmatprep.subr.mxu0 %v3117
      %v3119 = vand.u32 %v1994, 4294901760
      %v3120 = vsub.f32 %v1994, %v3119
      %3121 = vmatpush1.msra.mxu0 %v3120
      %3122 = vmatprep.subr.mxu0 0.0
      %3123 = vmatpush2.msra.mxu0 0.0
      %3124 = vmatprep.subr.mxu0 0.0
      %3125 = vmatpush2.msra.mxu0 0.0
      %3126 = vmatprep.subr.mxu0 0.0
      %3127 = vmatpush2.msra.mxu0 0.0
      %3128 = vmatprep.subr.mxu0 0.0
      %3129 = vmatpush2.msra.mxu0 0.0
      %3130 = vmatprep.subr.mxu0 0.0
      %3131 = vmatpush2.msra.mxu0 0.0
      %3132 = vmatprep.subr.mxu0 0.0
      %3133 = vmatpush2.msra.mxu0 0.0
      %3134 = vmatprep.subr.mxu0 0.0
      %3135 = vmatpush2.msra.mxu0 0.0
      %3136 = vmatprep.subr.mxu0 0.0
      %3137 = vmatpush2.msra.mxu0 0.0
      %3138 = vmatprep.subr.mxu0 0.0
      %3139 = vmatpush2.msra.mxu0 0.0
      %3140 = vmatprep.subr.mxu0 0.0
      %3141 = vmatpush2.msra.mxu0 0.0
      %3142 = vmatprep.subr.mxu0 0.0
      %3143 = vmatpush2.msra.mxu0 0.0
      %3144 = vmatprep.subr.mxu0 0.0
      %3145 = vmatpush2.msra.mxu0 0.0
      %3146 = vmatprep.subr.mxu0 0.0
      %3147 = vmatpush2.msra.mxu0 0.0
      %3148 = vmatprep.subr.mxu0 0.0
      %3149 = vmatpush2.msra.mxu0 0.0
      %3150 = vmatprep.subr.mxu0 0.0
      %3151 = vmatpush2.msra.mxu0 0.0
      %3152 = vmatprep.subr.mxu0 0.0
      %3153 = vmatpush2.msra.mxu0 0.0
      %3154 = vmatprep.mubr.f32.mxu0 0.0
      %v3155 = vand.u32 %v1037, 4294901760
      %v3156 = vsub.f32 %v1037, %v3155
      %3157 = vmatmul.mubr.f32.gmra.mxu0 %v3156
      %v3158 = vpop.f32.mrf.mxu0
      %v3159 = vadd.f32 %v3082, %v3158
      %v3160 = vpop.f32.mrf.mxu0
      %v3161 = vadd.f32 %v3084, %v3160
      %3162 = vdwg.mxu0
      %3163 = vmatprep.subr.mxu0 0.0
      %3164 = vmatpush1.msra.mxu0 0.0
      %3165 = vmatprep.subr.mxu0 0.0
      %3166 = vmatpush1.msra.mxu0 0.0
      %3167 = vmatprep.subr.mxu0 0.0
      %3168 = vmatpush1.msra.mxu0 0.0
      %3169 = vmatprep.subr.mxu0 0.0
      %3170 = vmatpush1.msra.mxu0 0.0
      %3171 = vmatprep.subr.mxu0 0.0
      %3172 = vmatpush1.msra.mxu0 0.0
      %3173 = vmatprep.subr.mxu0 0.0
      %3174 = vmatpush1.msra.mxu0 0.0
      %3175 = vmatprep.subr.mxu0 0.0
      %3176 = vmatpush1.msra.mxu0 0.0
      %3177 = vmatprep.subr.mxu0 0.0
      %3178 = vmatpush1.msra.mxu0 0.0
      %3179 = vmatprep.subr.mxu0 0.0
      %3180 = vmatpush1.msra.mxu0 0.0
      %3181 = vmatprep.subr.mxu0 0.0
      %3182 = vmatpush1.msra.mxu0 0.0
      %3183 = vmatprep.subr.mxu0 0.0
      %3184 = vmatpush1.msra.mxu0 0.0
      %3185 = vmatprep.subr.mxu0 0.0
      %3186 = vmatpush1.msra.mxu0 0.0
      %3187 = vmatprep.subr.mxu0 0.0
      %3188 = vmatpush1.msra.mxu0 0.0
      %3189 = vmatprep.subr.mxu0 0.0
      %3190 = vmatpush1.msra.mxu0 0.0
      %3191 = vmatprep.subr.mxu0 0.0
      %3192 = vmatpush1.msra.mxu0 0.0
      %v3193 = vand.u32 %v1995, 4294901760
      %3194 = vmatprep.subr.mxu0 %v3193
      %v3195 = vand.u32 %v1994, 4294901760
      %3196 = vmatpush1.msra.mxu0 %v3195
      %3197 = vmatprep.subr.mxu0 0.0
      %3198 = vmatpush2.msra.mxu0 0.0
      %3199 = vmatprep.subr.mxu0 0.0
      %3200 = vmatpush2.msra.mxu0 0.0
      %3201 = vmatprep.subr.mxu0 0.0
      %3202 = vmatpush2.msra.mxu0 0.0
      %3203 = vmatprep.subr.mxu0 0.0
      %3204 = vmatpush2.msra.mxu0 0.0
      %3205 = vmatprep.subr.mxu0 0.0
      %3206 = vmatpush2.msra.mxu0 0.0
      %3207 = vmatprep.subr.mxu0 0.0
      %3208 = vmatpush2.msra.mxu0 0.0
      %3209 = vmatprep.subr.mxu0 0.0
      %3210 = vmatpush2.msra.mxu0 0.0
      %3211 = vmatprep.subr.mxu0 0.0
      %3212 = vmatpush2.msra.mxu0 0.0
      %3213 = vmatprep.subr.mxu0 0.0
      %3214 = vmatpush2.msra.mxu0 0.0
      %3215 = vmatprep.subr.mxu0 0.0
      %3216 = vmatpush2.msra.mxu0 0.0
      %3217 = vmatprep.subr.mxu0 0.0
      %3218 = vmatpush2.msra.mxu0 0.0
      %3219 = vmatprep.subr.mxu0 0.0
      %3220 = vmatpush2.msra.mxu0 0.0
      %3221 = vmatprep.subr.mxu0 0.0
      %3222 = vmatpush2.msra.mxu0 0.0
      %3223 = vmatprep.subr.mxu0 0.0
      %3224 = vmatpush2.msra.mxu0 0.0
      %3225 = vmatprep.subr.mxu0 0.0
      %3226 = vmatpush2.msra.mxu0 0.0
      %3227 = vmatprep.subr.mxu0 0.0
      %3228 = vmatpush2.msra.mxu0 0.0
      %3229 = vmatprep.mubr.f32.mxu0 0.0
      %v3230 = vand.u32 %v1037, 4294901760
      %v3231 = vsub.f32 %v1037, %v3230
      %v3232 = vand.u32 %v3231, 4294901760
      %3233 = vmatmul.mubr.f32.gmra.mxu0 %v3232
      %v3234 = vpop.f32.mrf.mxu0
      %v3235 = vadd.f32 %v3159, %v3234
      %v3236 = vpop.f32.mrf.mxu0
      %v3237 = vadd.f32 %v3161, %v3236
      %3238 = vdwg.mxu0
      %3239 = vmatprep.subr.mxu0 0.0
      %3240 = vmatpush1.msra.mxu0 0.0
      %3241 = vmatprep.subr.mxu0 0.0
      %3242 = vmatpush1.msra.mxu0 0.0
      %3243 = vmatprep.subr.mxu0 0.0
      %3244 = vmatpush1.msra.mxu0 0.0
      %3245 = vmatprep.subr.mxu0 0.0
      %3246 = vmatpush1.msra.mxu0 0.0
      %3247 = vmatprep.subr.mxu0 0.0
      %3248 = vmatpush1.msra.mxu0 0.0
      %3249 = vmatprep.subr.mxu0 0.0
      %3250 = vmatpush1.msra.mxu0 0.0
      %3251 = vmatprep.subr.mxu0 0.0
      %3252 = vmatpush1.msra.mxu0 0.0
      %3253 = vmatprep.subr.mxu0 0.0
      %3254 = vmatpush1.msra.mxu0 0.0
      %3255 = vmatprep.subr.mxu0 0.0
      %3256 = vmatpush1.msra.mxu0 0.0
      %3257 = vmatprep.subr.mxu0 0.0
      %3258 = vmatpush1.msra.mxu0 0.0
      %3259 = vmatprep.subr.mxu0 0.0
      %3260 = vmatpush1.msra.mxu0 0.0
      %3261 = vmatprep.subr.mxu0 0.0
      %3262 = vmatpush1.msra.mxu0 0.0
      %3263 = vmatprep.subr.mxu0 0.0
      %3264 = vmatpush1.msra.mxu0 0.0
      %3265 = vmatprep.subr.mxu0 0.0
      %3266 = vmatpush1.msra.mxu0 0.0
      %3267 = vmatprep.subr.mxu0 0.0
      %3268 = vmatpush1.msra.mxu0 0.0
      %v3269 = vand.u32 %v1995, 4294901760
      %v3270 = vsub.f32 %v1995, %v3269
      %v3271 = vand.u32 %v3270, 4294901760
      %3272 = vmatprep.subr.mxu0 %v3271
      %v3273 = vand.u32 %v1994, 4294901760
      %v3274 = vsub.f32 %v1994, %v3273
      %v3275 = vand.u32 %v3274, 4294901760
      %3276 = vmatpush1.msra.mxu0 %v3275
      %3277 = vmatprep.subr.mxu0 0.0
      %3278 = vmatpush2.msra.mxu0 0.0
      %3279 = vmatprep.subr.mxu0 0.0
      %3280 = vmatpush2.msra.mxu0 0.0
      %3281 = vmatprep.subr.mxu0 0.0
      %3282 = vmatpush2.msra.mxu0 0.0
      %3283 = vmatprep.subr.mxu0 0.0
      %3284 = vmatpush2.msra.mxu0 0.0
      %3285 = vmatprep.subr.mxu0 0.0
      %3286 = vmatpush2.msra.mxu0 0.0
      %3287 = vmatprep.subr.mxu0 0.0
      %3288 = vmatpush2.msra.mxu0 0.0
      %3289 = vmatprep.subr.mxu0 0.0
      %3290 = vmatpush2.msra.mxu0 0.0
      %3291 = vmatprep.subr.mxu0 0.0
      %3292 = vmatpush2.msra.mxu0 0.0
      %3293 = vmatprep.subr.mxu0 0.0
      %3294 = vmatpush2.msra.mxu0 0.0
      %3295 = vmatprep.subr.mxu0 0.0
      %3296 = vmatpush2.msra.mxu0 0.0
      %3297 = vmatprep.subr.mxu0 0.0
      %3298 = vmatpush2.msra.mxu0 0.0
      %3299 = vmatprep.subr.mxu0 0.0
      %3300 = vmatpush2.msra.mxu0 0.0
      %3301 = vmatprep.subr.mxu0 0.0
      %3302 = vmatpush2.msra.mxu0 0.0
      %3303 = vmatprep.subr.mxu0 0.0
      %3304 = vmatpush2.msra.mxu0 0.0
      %3305 = vmatprep.subr.mxu0 0.0
      %3306 = vmatpush2.msra.mxu0 0.0
      %3307 = vmatprep.subr.mxu0 0.0
      %3308 = vmatpush2.msra.mxu0 0.0
      %3309 = vmatprep.mubr.f32.mxu0 0.0
      %v3310 = vand.u32 %v1037, 4294901760
      %3311 = vmatmul.mubr.f32.gmra.mxu0 %v3310
      %v3312 = vpop.f32.mrf.mxu0
      %v3313 = vadd.f32 %v3235, %v3312
      %v3314 = vpop.f32.mrf.mxu0
      %v3315 = vadd.f32 %v3237, %v3314
      %3316 = vdwg.mxu0
      %3317 = vmatprep.subr.mxu0 0.0
      %3318 = vmatpush1.msra.mxu0 0.0
      %3319 = vmatprep.subr.mxu0 0.0
      %3320 = vmatpush1.msra.mxu0 0.0
      %3321 = vmatprep.subr.mxu0 0.0
      %3322 = vmatpush1.msra.mxu0 0.0
      %3323 = vmatprep.subr.mxu0 0.0
      %3324 = vmatpush1.msra.mxu0 0.0
      %3325 = vmatprep.subr.mxu0 0.0
      %3326 = vmatpush1.msra.mxu0 0.0
      %3327 = vmatprep.subr.mxu0 0.0
      %3328 = vmatpush1.msra.mxu0 0.0
      %3329 = vmatprep.subr.mxu0 0.0
      %3330 = vmatpush1.msra.mxu0 0.0
      %3331 = vmatprep.subr.mxu0 0.0
      %3332 = vmatpush1.msra.mxu0 0.0
      %3333 = vmatprep.subr.mxu0 0.0
      %3334 = vmatpush1.msra.mxu0 0.0
      %3335 = vmatprep.subr.mxu0 0.0
      %3336 = vmatpush1.msra.mxu0 0.0
      %3337 = vmatprep.subr.mxu0 0.0
      %3338 = vmatpush1.msra.mxu0 0.0
      %3339 = vmatprep.subr.mxu0 0.0
      %3340 = vmatpush1.msra.mxu0 0.0
      %3341 = vmatprep.subr.mxu0 0.0
      %3342 = vmatpush1.msra.mxu0 0.0
      %3343 = vmatprep.subr.mxu0 0.0
      %3344 = vmatpush1.msra.mxu0 0.0
      %3345 = vmatprep.subr.mxu0 0.0
      %3346 = vmatpush1.msra.mxu0 0.0
      %v3347 = vand.u32 %v1995, 4294901760
      %3348 = vmatprep.subr.mxu0 %v3347
      %v3349 = vand.u32 %v1994, 4294901760
      %3350 = vmatpush1.msra.mxu0 %v3349
      %3351 = vmatprep.subr.mxu0 0.0
      %3352 = vmatpush2.msra.mxu0 0.0
      %3353 = vmatprep.subr.mxu0 0.0
      %3354 = vmatpush2.msra.mxu0 0.0
      %3355 = vmatprep.subr.mxu0 0.0
      %3356 = vmatpush2.msra.mxu0 0.0
      %3357 = vmatprep.subr.mxu0 0.0
      %3358 = vmatpush2.msra.mxu0 0.0
      %3359 = vmatprep.subr.mxu0 0.0
      %3360 = vmatpush2.msra.mxu0 0.0
      %3361 = vmatprep.subr.mxu0 0.0
      %3362 = vmatpush2.msra.mxu0 0.0
      %3363 = vmatprep.subr.mxu0 0.0
      %3364 = vmatpush2.msra.mxu0 0.0
      %3365 = vmatprep.subr.mxu0 0.0
      %3366 = vmatpush2.msra.mxu0 0.0
      %3367 = vmatprep.subr.mxu0 0.0
      %3368 = vmatpush2.msra.mxu0 0.0
      %3369 = vmatprep.subr.mxu0 0.0
      %3370 = vmatpush2.msra.mxu0 0.0
      %3371 = vmatprep.subr.mxu0 0.0
      %3372 = vmatpush2.msra.mxu0 0.0
      %3373 = vmatprep.subr.mxu0 0.0
      %3374 = vmatpush2.msra.mxu0 0.0
      %3375 = vmatprep.subr.mxu0 0.0
      %3376 = vmatpush2.msra.mxu0 0.0
      %3377 = vmatprep.subr.mxu0 0.0
      %3378 = vmatpush2.msra.mxu0 0.0
      %3379 = vmatprep.subr.mxu0 0.0
      %3380 = vmatpush2.msra.mxu0 0.0
      %3381 = vmatprep.subr.mxu0 0.0
      %3382 = vmatpush2.msra.mxu0 0.0
      %3383 = vmatprep.mubr.f32.mxu0 0.0
      %v3384 = vand.u32 %v1037, 4294901760
      %3385 = vmatmul.mubr.f32.gmra.mxu0 %v3384
      %v3386 = vpop.f32.mrf.mxu0
      %v3387 = vadd.f32 %v3313, %v3386
      %v3388 = vpop.f32.mrf.mxu0
      %v3389 = vadd.f32 %v3315, %v3388
      %3390 = vdwg.mxu0
      %3391 = vmatprep.subr.mxu0 0.0
      %3392 = vmatpush1.msra.mxu0 0.0
      %3393 = vmatprep.subr.mxu0 0.0
      %3394 = vmatpush1.msra.mxu0 0.0
      %3395 = vmatprep.subr.mxu0 0.0
      %3396 = vmatpush1.msra.mxu0 0.0
      %3397 = vmatprep.subr.mxu0 0.0
      %3398 = vmatpush1.msra.mxu0 0.0
      %3399 = vmatprep.subr.mxu0 0.0
      %3400 = vmatpush1.msra.mxu0 0.0
      %3401 = vmatprep.subr.mxu0 0.0
      %3402 = vmatpush1.msra.mxu0 0.0
      %3403 = vmatprep.subr.mxu0 0.0
      %3404 = vmatpush1.msra.mxu0 0.0
      %3405 = vmatprep.subr.mxu0 0.0
      %3406 = vmatpush1.msra.mxu0 0.0
      %3407 = vmatprep.subr.mxu0 0.0
      %3408 = vmatpush1.msra.mxu0 0.0
      %3409 = vmatprep.subr.mxu0 0.0
      %3410 = vmatpush1.msra.mxu0 0.0
      %3411 = vmatprep.subr.mxu0 0.0
      %3412 = vmatpush1.msra.mxu0 0.0
      %3413 = vmatprep.subr.mxu0 0.0
      %3414 = vmatpush1.msra.mxu0 0.0
      %3415 = vmatprep.subr.mxu0 0.0
      %3416 = vmatpush1.msra.mxu0 0.0
      %3417 = vmatprep.subr.mxu0 0.0
      %3418 = vmatpush1.msra.mxu0 0.0
      %3419 = vmatprep.subr.mxu0 0.0
      %3420 = vmatpush1.msra.mxu0 0.0
      %v3421 = vand.u32 %v1991, 4294901760
      %3422 = vmatprep.subr.mxu0 %v3421
      %v3423 = vand.u32 %v1990, 4294901760
      %3424 = vmatpush1.msra.mxu0 %v3423
      %3425 = vmatprep.subr.mxu0 0.0
      %3426 = vmatpush2.msra.mxu0 0.0
      %3427 = vmatprep.subr.mxu0 0.0
      %3428 = vmatpush2.msra.mxu0 0.0
      %3429 = vmatprep.subr.mxu0 0.0
      %3430 = vmatpush2.msra.mxu0 0.0
      %3431 = vmatprep.subr.mxu0 0.0
      %3432 = vmatpush2.msra.mxu0 0.0
      %3433 = vmatprep.subr.mxu0 0.0
      %3434 = vmatpush2.msra.mxu0 0.0
      %3435 = vmatprep.subr.mxu0 0.0
      %3436 = vmatpush2.msra.mxu0 0.0
      %3437 = vmatprep.subr.mxu0 0.0
      %3438 = vmatpush2.msra.mxu0 0.0
      %3439 = vmatprep.subr.mxu0 0.0
      %3440 = vmatpush2.msra.mxu0 0.0
      %3441 = vmatprep.subr.mxu0 0.0
      %3442 = vmatpush2.msra.mxu0 0.0
      %3443 = vmatprep.subr.mxu0 0.0
      %3444 = vmatpush2.msra.mxu0 0.0
      %3445 = vmatprep.subr.mxu0 0.0
      %3446 = vmatpush2.msra.mxu0 0.0
      %3447 = vmatprep.subr.mxu0 0.0
      %3448 = vmatpush2.msra.mxu0 0.0
      %3449 = vmatprep.subr.mxu0 0.0
      %3450 = vmatpush2.msra.mxu0 0.0
      %3451 = vmatprep.subr.mxu0 0.0
      %3452 = vmatpush2.msra.mxu0 0.0
      %3453 = vmatprep.subr.mxu0 0.0
      %3454 = vmatpush2.msra.mxu0 0.0
      %3455 = vmatprep.subr.mxu0 0.0
      %3456 = vmatpush2.msra.mxu0 0.0
      %3457 = vmatprep.mubr.f32.mxu0 0.0
      %v3458 = vand.u32 %v1505, 4294901760
      %v3459 = vsub.f32 %v1505, %v3458
      %v3460 = vand.u32 %v3459, 4294901760
      %v3461 = vsub.f32 %v3459, %v3460
      %v3462 = vand.u32 %v3461, 4294901760
      %3463 = vmatmul.mubr.f32.gmra.mxu0 %v3462
      %v3464 = vpop.f32.mrf.mxu0
      %v3465 = vadd.f32 %v3387, %v3464
      %v3466 = vpop.f32.mrf.mxu0
      %v3467 = vadd.f32 %v3389, %v3466
      %3468 = vdwg.mxu0
      %3469 = vmatprep.subr.mxu0 0.0
      %3470 = vmatpush1.msra.mxu0 0.0
      %3471 = vmatprep.subr.mxu0 0.0
      %3472 = vmatpush1.msra.mxu0 0.0
      %3473 = vmatprep.subr.mxu0 0.0
      %3474 = vmatpush1.msra.mxu0 0.0
      %3475 = vmatprep.subr.mxu0 0.0
      %3476 = vmatpush1.msra.mxu0 0.0
      %3477 = vmatprep.subr.mxu0 0.0
      %3478 = vmatpush1.msra.mxu0 0.0
      %3479 = vmatprep.subr.mxu0 0.0
      %3480 = vmatpush1.msra.mxu0 0.0
      %3481 = vmatprep.subr.mxu0 0.0
      %3482 = vmatpush1.msra.mxu0 0.0
      %3483 = vmatprep.subr.mxu0 0.0
      %3484 = vmatpush1.msra.mxu0 0.0
      %3485 = vmatprep.subr.mxu0 0.0
      %3486 = vmatpush1.msra.mxu0 0.0
      %3487 = vmatprep.subr.mxu0 0.0
      %3488 = vmatpush1.msra.mxu0 0.0
      %3489 = vmatprep.subr.mxu0 0.0
      %3490 = vmatpush1.msra.mxu0 0.0
      %3491 = vmatprep.subr.mxu0 0.0
      %3492 = vmatpush1.msra.mxu0 0.0
      %3493 = vmatprep.subr.mxu0 0.0
      %3494 = vmatpush1.msra.mxu0 0.0
      %3495 = vmatprep.subr.mxu0 0.0
      %3496 = vmatpush1.msra.mxu0 0.0
      %3497 = vmatprep.subr.mxu0 0.0
      %3498 = vmatpush1.msra.mxu0 0.0
      %v3499 = vand.u32 %v1991, 4294901760
      %v3500 = vsub.f32 %v1991, %v3499
      %v3501 = vand.u32 %v3500, 4294901760
      %v3502 = vsub.f32 %v3500, %v3501
      %v3503 = vand.u32 %v3502, 4294901760
      %3504 = vmatprep.subr.mxu0 %v3503
      %v3505 = vand.u32 %v1990, 4294901760
      %v3506 = vsub.f32 %v1990, %v3505
      %v3507 = vand.u32 %v3506, 4294901760
      %v3508 = vsub.f32 %v3506, %v3507
      %v3509 = vand.u32 %v3508, 4294901760
      %3510 = vmatpush1.msra.mxu0 %v3509
      %3511 = vmatprep.subr.mxu0 0.0
      %3512 = vmatpush2.msra.mxu0 0.0
      %3513 = vmatprep.subr.mxu0 0.0
      %3514 = vmatpush2.msra.mxu0 0.0
      %3515 = vmatprep.subr.mxu0 0.0
      %3516 = vmatpush2.msra.mxu0 0.0
      %3517 = vmatprep.subr.mxu0 0.0
      %3518 = vmatpush2.msra.mxu0 0.0
      %3519 = vmatprep.subr.mxu0 0.0
      %3520 = vmatpush2.msra.mxu0 0.0
      %3521 = vmatprep.subr.mxu0 0.0
      %3522 = vmatpush2.msra.mxu0 0.0
      %3523 = vmatprep.subr.mxu0 0.0
      %3524 = vmatpush2.msra.mxu0 0.0
      %3525 = vmatprep.subr.mxu0 0.0
      %3526 = vmatpush2.msra.mxu0 0.0
      %3527 = vmatprep.subr.mxu0 0.0
      %3528 = vmatpush2.msra.mxu0 0.0
      %3529 = vmatprep.subr.mxu0 0.0
      %3530 = vmatpush2.msra.mxu0 0.0
      %3531 = vmatprep.subr.mxu0 0.0
      %3532 = vmatpush2.msra.mxu0 0.0
      %3533 = vmatprep.subr.mxu0 0.0
      %3534 = vmatpush2.msra.mxu0 0.0
      %3535 = vmatprep.subr.mxu0 0.0
      %3536 = vmatpush2.msra.mxu0 0.0
      %3537 = vmatprep.subr.mxu0 0.0
      %3538 = vmatpush2.msra.mxu0 0.0
      %3539 = vmatprep.subr.mxu0 0.0
      %3540 = vmatpush2.msra.mxu0 0.0
      %3541 = vmatprep.subr.mxu0 0.0
      %3542 = vmatpush2.msra.mxu0 0.0
      %3543 = vmatprep.mubr.f32.mxu0 0.0
      %v3544 = vand.u32 %v1505, 4294901760
      %3545 = vmatmul.mubr.f32.gmra.mxu0 %v3544
      %v3546 = vpop.f32.mrf.mxu0
      %v3547 = vadd.f32 %v3465, %v3546
      %v3548 = vpop.f32.mrf.mxu0
      %v3549 = vadd.f32 %v3467, %v3548
      %3550 = vdwg.mxu0
      %3551 = vmatprep.subr.mxu0 0.0
      %3552 = vmatpush1.msra.mxu0 0.0
      %3553 = vmatprep.subr.mxu0 0.0
      %3554 = vmatpush1.msra.mxu0 0.0
      %3555 = vmatprep.subr.mxu0 0.0
      %3556 = vmatpush1.msra.mxu0 0.0
      %3557 = vmatprep.subr.mxu0 0.0
      %3558 = vmatpush1.msra.mxu0 0.0
      %3559 = vmatprep.subr.mxu0 0.0
      %3560 = vmatpush1.msra.mxu0 0.0
      %3561 = vmatprep.subr.mxu0 0.0
      %3562 = vmatpush1.msra.mxu0 0.0
      %3563 = vmatprep.subr.mxu0 0.0
      %3564 = vmatpush1.msra.mxu0 0.0
      %3565 = vmatprep.subr.mxu0 0.0
      %3566 = vmatpush1.msra.mxu0 0.0
      %3567 = vmatprep.subr.mxu0 0.0
      %3568 = vmatpush1.msra.mxu0 0.0
      %3569 = vmatprep.subr.mxu0 0.0
      %3570 = vmatpush1.msra.mxu0 0.0
      %3571 = vmatprep.subr.mxu0 0.0
      %3572 = vmatpush1.msra.mxu0 0.0
      %3573 = vmatprep.subr.mxu0 0.0
      %3574 = vmatpush1.msra.mxu0 0.0
      %3575 = vmatprep.subr.mxu0 0.0
      %3576 = vmatpush1.msra.mxu0 0.0
      %3577 = vmatprep.subr.mxu0 0.0
      %3578 = vmatpush1.msra.mxu0 0.0
      %3579 = vmatprep.subr.mxu0 0.0
      %3580 = vmatpush1.msra.mxu0 0.0
      %v3581 = vand.u32 %v1991, 4294901760
      %v3582 = vsub.f32 %v1991, %v3581
      %3583 = vmatprep.subr.mxu0 %v3582
      %v3584 = vand.u32 %v1990, 4294901760
      %v3585 = vsub.f32 %v1990, %v3584
      %3586 = vmatpush1.msra.mxu0 %v3585
      %3587 = vmatprep.subr.mxu0 0.0
      %3588 = vmatpush2.msra.mxu0 0.0
      %3589 = vmatprep.subr.mxu0 0.0
      %3590 = vmatpush2.msra.mxu0 0.0
      %3591 = vmatprep.subr.mxu0 0.0
      %3592 = vmatpush2.msra.mxu0 0.0
      %3593 = vmatprep.subr.mxu0 0.0
      %3594 = vmatpush2.msra.mxu0 0.0
      %3595 = vmatprep.subr.mxu0 0.0
      %3596 = vmatpush2.msra.mxu0 0.0
      %3597 = vmatprep.subr.mxu0 0.0
      %3598 = vmatpush2.msra.mxu0 0.0
      %3599 = vmatprep.subr.mxu0 0.0
      %3600 = vmatpush2.msra.mxu0 0.0
      %3601 = vmatprep.subr.mxu0 0.0
      %3602 = vmatpush2.msra.mxu0 0.0
      %3603 = vmatprep.subr.mxu0 0.0
      %3604 = vmatpush2.msra.mxu0 0.0
      %3605 = vmatprep.subr.mxu0 0.0
      %3606 = vmatpush2.msra.mxu0 0.0
      %3607 = vmatprep.subr.mxu0 0.0
      %3608 = vmatpush2.msra.mxu0 0.0
      %3609 = vmatprep.subr.mxu0 0.0
      %3610 = vmatpush2.msra.mxu0 0.0
      %3611 = vmatprep.subr.mxu0 0.0
      %3612 = vmatpush2.msra.mxu0 0.0
      %3613 = vmatprep.subr.mxu0 0.0
      %3614 = vmatpush2.msra.mxu0 0.0
      %3615 = vmatprep.subr.mxu0 0.0
      %3616 = vmatpush2.msra.mxu0 0.0
      %3617 = vmatprep.subr.mxu0 0.0
      %3618 = vmatpush2.msra.mxu0 0.0
      %3619 = vmatprep.mubr.f32.mxu0 0.0
      %v3620 = vand.u32 %v1505, 4294901760
      %v3621 = vsub.f32 %v1505, %v3620
      %3622 = vmatmul.mubr.f32.gmra.mxu0 %v3621
      %v3623 = vpop.f32.mrf.mxu0
      %v3624 = vadd.f32 %v3547, %v3623
      %v3625 = vpop.f32.mrf.mxu0
      %v3626 = vadd.f32 %v3549, %v3625
      %3627 = vdwg.mxu0
      %3628 = vmatprep.subr.mxu0 0.0
      %3629 = vmatpush1.msra.mxu0 0.0
      %3630 = vmatprep.subr.mxu0 0.0
      %3631 = vmatpush1.msra.mxu0 0.0
      %3632 = vmatprep.subr.mxu0 0.0
      %3633 = vmatpush1.msra.mxu0 0.0
      %3634 = vmatprep.subr.mxu0 0.0
      %3635 = vmatpush1.msra.mxu0 0.0
      %3636 = vmatprep.subr.mxu0 0.0
      %3637 = vmatpush1.msra.mxu0 0.0
      %3638 = vmatprep.subr.mxu0 0.0
      %3639 = vmatpush1.msra.mxu0 0.0
      %3640 = vmatprep.subr.mxu0 0.0
      %3641 = vmatpush1.msra.mxu0 0.0
      %3642 = vmatprep.subr.mxu0 0.0
      %3643 = vmatpush1.msra.mxu0 0.0
      %3644 = vmatprep.subr.mxu0 0.0
      %3645 = vmatpush1.msra.mxu0 0.0
      %3646 = vmatprep.subr.mxu0 0.0
      %3647 = vmatpush1.msra.mxu0 0.0
      %3648 = vmatprep.subr.mxu0 0.0
      %3649 = vmatpush1.msra.mxu0 0.0
      %3650 = vmatprep.subr.mxu0 0.0
      %3651 = vmatpush1.msra.mxu0 0.0
      %3652 = vmatprep.subr.mxu0 0.0
      %3653 = vmatpush1.msra.mxu0 0.0
      %3654 = vmatprep.subr.mxu0 0.0
      %3655 = vmatpush1.msra.mxu0 0.0
      %3656 = vmatprep.subr.mxu0 0.0
      %3657 = vmatpush1.msra.mxu0 0.0
      %v3658 = vand.u32 %v1991, 4294901760
      %3659 = vmatprep.subr.mxu0 %v3658
      %v3660 = vand.u32 %v1990, 4294901760
      %3661 = vmatpush1.msra.mxu0 %v3660
      %3662 = vmatprep.subr.mxu0 0.0
      %3663 = vmatpush2.msra.mxu0 0.0
      %3664 = vmatprep.subr.mxu0 0.0
      %3665 = vmatpush2.msra.mxu0 0.0
      %3666 = vmatprep.subr.mxu0 0.0
      %3667 = vmatpush2.msra.mxu0 0.0
      %3668 = vmatprep.subr.mxu0 0.0
      %3669 = vmatpush2.msra.mxu0 0.0
      %3670 = vmatprep.subr.mxu0 0.0
      %3671 = vmatpush2.msra.mxu0 0.0
      %3672 = vmatprep.subr.mxu0 0.0
      %3673 = vmatpush2.msra.mxu0 0.0
      %3674 = vmatprep.subr.mxu0 0.0
      %3675 = vmatpush2.msra.mxu0 0.0
      %3676 = vmatprep.subr.mxu0 0.0
      %3677 = vmatpush2.msra.mxu0 0.0
      %3678 = vmatprep.subr.mxu0 0.0
      %3679 = vmatpush2.msra.mxu0 0.0
      %3680 = vmatprep.subr.mxu0 0.0
      %3681 = vmatpush2.msra.mxu0 0.0
      %3682 = vmatprep.subr.mxu0 0.0
      %3683 = vmatpush2.msra.mxu0 0.0
      %3684 = vmatprep.subr.mxu0 0.0
      %3685 = vmatpush2.msra.mxu0 0.0
      %3686 = vmatprep.subr.mxu0 0.0
      %3687 = vmatpush2.msra.mxu0 0.0
      %3688 = vmatprep.subr.mxu0 0.0
      %3689 = vmatpush2.msra.mxu0 0.0
      %3690 = vmatprep.subr.mxu0 0.0
      %3691 = vmatpush2.msra.mxu0 0.0
      %3692 = vmatprep.subr.mxu0 0.0
      %3693 = vmatpush2.msra.mxu0 0.0
      %3694 = vmatprep.mubr.f32.mxu0 0.0
      %v3695 = vand.u32 %v1505, 4294901760
      %v3696 = vsub.f32 %v1505, %v3695
      %v3697 = vand.u32 %v3696, 4294901760
      %3698 = vmatmul.mubr.f32.gmra.mxu0 %v3697
      %v3699 = vpop.f32.mrf.mxu0
      %v3700 = vadd.f32 %v3624, %v3699
      %v3701 = vpop.f32.mrf.mxu0
      %v3702 = vadd.f32 %v3626, %v3701
      %3703 = vdwg.mxu0
      %3704 = vmatprep.subr.mxu0 0.0
      %3705 = vmatpush1.msra.mxu0 0.0
      %3706 = vmatprep.subr.mxu0 0.0
      %3707 = vmatpush1.msra.mxu0 0.0
      %3708 = vmatprep.subr.mxu0 0.0
      %3709 = vmatpush1.msra.mxu0 0.0
      %3710 = vmatprep.subr.mxu0 0.0
      %3711 = vmatpush1.msra.mxu0 0.0
      %3712 = vmatprep.subr.mxu0 0.0
      %3713 = vmatpush1.msra.mxu0 0.0
      %3714 = vmatprep.subr.mxu0 0.0
      %3715 = vmatpush1.msra.mxu0 0.0
      %3716 = vmatprep.subr.mxu0 0.0
      %3717 = vmatpush1.msra.mxu0 0.0
      %3718 = vmatprep.subr.mxu0 0.0
      %3719 = vmatpush1.msra.mxu0 0.0
      %3720 = vmatprep.subr.mxu0 0.0
      %3721 = vmatpush1.msra.mxu0 0.0
      %3722 = vmatprep.subr.mxu0 0.0
      %3723 = vmatpush1.msra.mxu0 0.0
      %3724 = vmatprep.subr.mxu0 0.0
      %3725 = vmatpush1.msra.mxu0 0.0
      %3726 = vmatprep.subr.mxu0 0.0
      %3727 = vmatpush1.msra.mxu0 0.0
      %3728 = vmatprep.subr.mxu0 0.0
      %3729 = vmatpush1.msra.mxu0 0.0
      %3730 = vmatprep.subr.mxu0 0.0
      %3731 = vmatpush1.msra.mxu0 0.0
      %3732 = vmatprep.subr.mxu0 0.0
      %3733 = vmatpush1.msra.mxu0 0.0
      %v3734 = vand.u32 %v1991, 4294901760
      %v3735 = vsub.f32 %v1991, %v3734
      %v3736 = vand.u32 %v3735, 4294901760
      %3737 = vmatprep.subr.mxu0 %v3736
      %v3738 = vand.u32 %v1990, 4294901760
      %v3739 = vsub.f32 %v1990, %v3738
      %v3740 = vand.u32 %v3739, 4294901760
      %3741 = vmatpush1.msra.mxu0 %v3740
      %3742 = vmatprep.subr.mxu0 0.0
      %3743 = vmatpush2.msra.mxu0 0.0
      %3744 = vmatprep.subr.mxu0 0.0
      %3745 = vmatpush2.msra.mxu0 0.0
      %3746 = vmatprep.subr.mxu0 0.0
      %3747 = vmatpush2.msra.mxu0 0.0
      %3748 = vmatprep.subr.mxu0 0.0
      %3749 = vmatpush2.msra.mxu0 0.0
      %3750 = vmatprep.subr.mxu0 0.0
      %3751 = vmatpush2.msra.mxu0 0.0
      %3752 = vmatprep.subr.mxu0 0.0
      %3753 = vmatpush2.msra.mxu0 0.0
      %3754 = vmatprep.subr.mxu0 0.0
      %3755 = vmatpush2.msra.mxu0 0.0
      %3756 = vmatprep.subr.mxu0 0.0
      %3757 = vmatpush2.msra.mxu0 0.0
      %3758 = vmatprep.subr.mxu0 0.0
      %3759 = vmatpush2.msra.mxu0 0.0
      %3760 = vmatprep.subr.mxu0 0.0
      %3761 = vmatpush2.msra.mxu0 0.0
      %3762 = vmatprep.subr.mxu0 0.0
      %3763 = vmatpush2.msra.mxu0 0.0
      %3764 = vmatprep.subr.mxu0 0.0
      %3765 = vmatpush2.msra.mxu0 0.0
      %3766 = vmatprep.subr.mxu0 0.0
      %3767 = vmatpush2.msra.mxu0 0.0
      %3768 = vmatprep.subr.mxu0 0.0
      %3769 = vmatpush2.msra.mxu0 0.0
      %3770 = vmatprep.subr.mxu0 0.0
      %3771 = vmatpush2.msra.mxu0 0.0
      %3772 = vmatprep.subr.mxu0 0.0
      %3773 = vmatpush2.msra.mxu0 0.0
      %3774 = vmatprep.mubr.f32.mxu0 0.0
      %v3775 = vand.u32 %v1505, 4294901760
      %3776 = vmatmul.mubr.f32.gmra.mxu0 %v3775
      %v3777 = vpop.f32.mrf.mxu0
      %v3778 = vadd.f32 %v3700, %v3777
      %v3779 = vpop.f32.mrf.mxu0
      %v3780 = vadd.f32 %v3702, %v3779
      %3781 = vdwg.mxu0
      %3782 = vmatprep.subr.mxu0 0.0
      %3783 = vmatpush1.msra.mxu0 0.0
      %3784 = vmatprep.subr.mxu0 0.0
      %3785 = vmatpush1.msra.mxu0 0.0
      %3786 = vmatprep.subr.mxu0 0.0
      %3787 = vmatpush1.msra.mxu0 0.0
      %3788 = vmatprep.subr.mxu0 0.0
      %3789 = vmatpush1.msra.mxu0 0.0
      %3790 = vmatprep.subr.mxu0 0.0
      %3791 = vmatpush1.msra.mxu0 0.0
      %3792 = vmatprep.subr.mxu0 0.0
      %3793 = vmatpush1.msra.mxu0 0.0
      %3794 = vmatprep.subr.mxu0 0.0
      %3795 = vmatpush1.msra.mxu0 0.0
      %3796 = vmatprep.subr.mxu0 0.0
      %3797 = vmatpush1.msra.mxu0 0.0
      %3798 = vmatprep.subr.mxu0 0.0
      %3799 = vmatpush1.msra.mxu0 0.0
      %3800 = vmatprep.subr.mxu0 0.0
      %3801 = vmatpush1.msra.mxu0 0.0
      %3802 = vmatprep.subr.mxu0 0.0
      %3803 = vmatpush1.msra.mxu0 0.0
      %3804 = vmatprep.subr.mxu0 0.0
      %3805 = vmatpush1.msra.mxu0 0.0
      %3806 = vmatprep.subr.mxu0 0.0
      %3807 = vmatpush1.msra.mxu0 0.0
      %3808 = vmatprep.subr.mxu0 0.0
      %3809 = vmatpush1.msra.mxu0 0.0
      %3810 = vmatprep.subr.mxu0 0.0
      %3811 = vmatpush1.msra.mxu0 0.0
      %v3812 = vand.u32 %v1991, 4294901760
      %3813 = vmatprep.subr.mxu0 %v3812
      %v3814 = vand.u32 %v1990, 4294901760
      %3815 = vmatpush1.msra.mxu0 %v3814
      %3816 = vmatprep.subr.mxu0 0.0
      %3817 = vmatpush2.msra.mxu0 0.0
      %3818 = vmatprep.subr.mxu0 0.0
      %3819 = vmatpush2.msra.mxu0 0.0
      %3820 = vmatprep.subr.mxu0 0.0
      %3821 = vmatpush2.msra.mxu0 0.0
      %3822 = vmatprep.subr.mxu0 0.0
      %3823 = vmatpush2.msra.mxu0 0.0
      %3824 = vmatprep.subr.mxu0 0.0
      %3825 = vmatpush2.msra.mxu0 0.0
      %3826 = vmatprep.subr.mxu0 0.0
      %3827 = vmatpush2.msra.mxu0 0.0
      %3828 = vmatprep.subr.mxu0 0.0
      %3829 = vmatpush2.msra.mxu0 0.0
      %3830 = vmatprep.subr.mxu0 0.0
      %3831 = vmatpush2.msra.mxu0 0.0
      %3832 = vmatprep.subr.mxu0 0.0
      %3833 = vmatpush2.msra.mxu0 0.0
      %3834 = vmatprep.subr.mxu0 0.0
      %3835 = vmatpush2.msra.mxu0 0.0
      %3836 = vmatprep.subr.mxu0 0.0
      %3837 = vmatpush2.msra.mxu0 0.0
      %3838 = vmatprep.subr.mxu0 0.0
      %3839 = vmatpush2.msra.mxu0 0.0
      %3840 = vmatprep.subr.mxu0 0.0
      %3841 = vmatpush2.msra.mxu0 0.0
      %3842 = vmatprep.subr.mxu0 0.0
      %3843 = vmatpush2.msra.mxu0 0.0
      %3844 = vmatprep.subr.mxu0 0.0
      %3845 = vmatpush2.msra.mxu0 0.0
      %3846 = vmatprep.subr.mxu0 0.0
      %3847 = vmatpush2.msra.mxu0 0.0
      %3848 = vmatprep.mubr.f32.mxu0 0.0
      %v3849 = vand.u32 %v1505, 4294901760
      %3850 = vmatmul.mubr.f32.gmra.mxu0 %v3849
      %v3851 = vpop.f32.mrf.mxu0
      %v3852 = vadd.f32 %v3778, %v3851
      %v3853 = vpop.f32.mrf.mxu0
      %v3854 = vadd.f32 %v3780, %v3853
      %3855 = vdwg.mxu0
      %v3856 = vsub.f32 %v79, %v2922
      %v3857 = vsub.f32 %v80, %v2924
      %v3858 = vadd.f32 %v3856, %v1980
      %v3859 = vadd.f32 %v3857, %v1981
      %v3860 = vadd.f32 %v3852, %v1984
      %v3861 = vadd.f32 %v3854, %v1985
      %v3862 = vmax.f32 %v3858, -2.0
      %v3863 = vmax.f32 %v3859, -2.0
      %v3864 = vmin.f32 %v3862, 2.0
      %v3865 = vmin.f32 %v3863, 2.0
      %v3866 = vmax.f32 %v3860, -20.0
      %v3867 = vmax.f32 %v3861, -20.0
      %v3868 = vmin.f32 %v3866, 20.0
      %v3869 = vmin.f32 %v3867, 20.0
      %v3870 = vsub.f32 %v2922, %v1980
      %v3871 = vsub.f32 %v2924, %v1981
      %v3872 = vadd.f32 %v3864, %v3864
      %v3873 = vadd.f32 %v3865, %v3865
      %v3874 = vadd.f32 %v3870, %v3872
      %v3875 = vadd.f32 %v3871, %v3873
      %v3876 = vadd.f32 %v3868, %v3868
      %v3877 = vadd.f32 %v3869, %v3869
      %v3878 = vsub.f32 %v3860, %v3876
      %v3879 = vsub.f32 %v3861, %v3877
    $region46: #{tpu_custom_call.1} parent=1 // loop_footer
      %s90 = sadd.s32 1, %s86
    $region47: #{tpu_custom_call.1} parent=1 // loop_footer_branch
      %85 = sbr.rel target = $region43
    $region48: #{tpu_custom_call.1} parent=1 // loop_exit
      _
    %vm3880 = vcmask 64512
    %v3882 = vsel %vm3880, %v82, 0
    %3884 = vmatprep.subr.mxu0 0.0
    %3885 = vmatpush1.msra.mxu0 0.0
    %3886 = vmatprep.subr.mxu0 0.0
    %3887 = vmatpush1.msra.mxu0 0.0
    %3888 = vmatprep.subr.mxu0 0.0
    %3889 = vmatpush1.msra.mxu0 0.0
    %3890 = vmatprep.subr.mxu0 0.0
    %3891 = vmatpush1.msra.mxu0 0.0
    %3892 = vmatprep.subr.mxu0 0.0
    %3893 = vmatpush1.msra.mxu0 0.0
    %3894 = vmatprep.subr.mxu0 0.0
    %3895 = vmatpush1.msra.mxu0 0.0
    %3896 = vmatprep.subr.mxu0 0.0
    %3897 = vmatpush1.msra.mxu0 0.0
    %3898 = vmatprep.subr.mxu0 0.0
    %3899 = vmatpush1.msra.mxu0 0.0
    %3900 = vmatprep.subr.mxu0 0.0
    %3901 = vmatpush1.msra.mxu0 0.0
    %3902 = vmatprep.subr.mxu0 0.0
    %3903 = vmatpush1.msra.mxu0 0.0
    %3904 = vmatprep.subr.mxu0 0.0
    %3905 = vmatpush1.msra.mxu0 0.0
    %3906 = vmatprep.subr.mxu0 0.0
    %3907 = vmatpush1.msra.mxu0 0.0
    %3908 = vmatprep.subr.mxu0 0.0
    %3909 = vmatpush1.msra.mxu0 0.0
    %3910 = vmatprep.subr.mxu0 0.0
    %3911 = vmatpush1.msra.mxu0 0.0
    %3912 = vmatprep.subr.mxu0 0.0
    %3913 = vmatpush1.msra.mxu0 0.0
    %v3914 = vand.u32 %v94, 4294901760
    %3915 = vmatprep.subr.mxu0 %v3914
    %v3916 = vand.u32 %v93, 4294901760
    %3917 = vmatpush1.msra.mxu0 %v3916
    %3918 = vmatprep.subr.mxu0 0.0
    %3919 = vmatpush2.msra.mxu0 0.0
    %3920 = vmatprep.subr.mxu0 0.0
    %3921 = vmatpush2.msra.mxu0 0.0
    %3922 = vmatprep.subr.mxu0 0.0
    %3923 = vmatpush2.msra.mxu0 0.0
    %3924 = vmatprep.subr.mxu0 0.0
    %3925 = vmatpush2.msra.mxu0 0.0
    %3926 = vmatprep.subr.mxu0 0.0
    %3927 = vmatpush2.msra.mxu0 0.0
    %3928 = vmatprep.subr.mxu0 0.0
    %3929 = vmatpush2.msra.mxu0 0.0
    %3930 = vmatprep.subr.mxu0 0.0
    %3931 = vmatpush2.msra.mxu0 0.0
    %3932 = vmatprep.subr.mxu0 0.0
    %3933 = vmatpush2.msra.mxu0 0.0
    %3934 = vmatprep.subr.mxu0 0.0
    %3935 = vmatpush2.msra.mxu0 0.0
    %3936 = vmatprep.subr.mxu0 0.0
    %3937 = vmatpush2.msra.mxu0 0.0
    %3938 = vmatprep.subr.mxu0 0.0
    %3939 = vmatpush2.msra.mxu0 0.0
    %3940 = vmatprep.subr.mxu0 0.0
    %3941 = vmatpush2.msra.mxu0 0.0
    %3942 = vmatprep.subr.mxu0 0.0
    %3943 = vmatpush2.msra.mxu0 0.0
    %3944 = vmatprep.subr.mxu0 0.0
    %3945 = vmatpush2.msra.mxu0 0.0
    %3946 = vmatprep.subr.mxu0 0.0
    %3947 = vmatpush2.msra.mxu0 0.0
    %3948 = vmatprep.subr.mxu0 0.0
    %3949 = vmatpush2.msra.mxu0 0.0
    %3950 = vmatprep.mubr.f32.mxu0 0.0
    %v3951 = vand.u32 %v3882, 4294901760
    %v3952 = vsub.f32 %v3882, %v3951
    %v3953 = vand.u32 %v3952, 4294901760
    %v3954 = vsub.f32 %v3952, %v3953
    %v3955 = vand.u32 %v3954, 4294901760
    %3956 = vmatmul.mubr.f32.gmra.mxu0 %v3955
    %v3957 = vpop.f32.mrf.mxu0
    %v3958 = vadd.f32 0.0, %v3957
    %v3959 = vpop.f32.mrf.mxu0
    %v3960 = vadd.f32 0.0, %v3959
    %3961 = vdwg.mxu0
    %3962 = vmatprep.subr.mxu0 0.0
    %3963 = vmatpush1.msra.mxu0 0.0
    %3964 = vmatprep.subr.mxu0 0.0
    %3965 = vmatpush1.msra.mxu0 0.0
    %3966 = vmatprep.subr.mxu0 0.0
    %3967 = vmatpush1.msra.mxu0 0.0
    %3968 = vmatprep.subr.mxu0 0.0
    %3969 = vmatpush1.msra.mxu0 0.0
    %3970 = vmatprep.subr.mxu0 0.0
    %3971 = vmatpush1.msra.mxu0 0.0
    %3972 = vmatprep.subr.mxu0 0.0
    %3973 = vmatpush1.msra.mxu0 0.0
    %3974 = vmatprep.subr.mxu0 0.0
    %3975 = vmatpush1.msra.mxu0 0.0
    %3976 = vmatprep.subr.mxu0 0.0
    %3977 = vmatpush1.msra.mxu0 0.0
    %3978 = vmatprep.subr.mxu0 0.0
    %3979 = vmatpush1.msra.mxu0 0.0
    %3980 = vmatprep.subr.mxu0 0.0
    %3981 = vmatpush1.msra.mxu0 0.0
    %3982 = vmatprep.subr.mxu0 0.0
    %3983 = vmatpush1.msra.mxu0 0.0
    %3984 = vmatprep.subr.mxu0 0.0
    %3985 = vmatpush1.msra.mxu0 0.0
    %3986 = vmatprep.subr.mxu0 0.0
    %3987 = vmatpush1.msra.mxu0 0.0
    %3988 = vmatprep.subr.mxu0 0.0
    %3989 = vmatpush1.msra.mxu0 0.0
    %3990 = vmatprep.subr.mxu0 0.0
    %3991 = vmatpush1.msra.mxu0 0.0
    %v3992 = vand.u32 %v94, 4294901760
    %v3993 = vsub.f32 %v94, %v3992
    %v3994 = vand.u32 %v3993, 4294901760
    %v3995 = vsub.f32 %v3993, %v3994
    %v3996 = vand.u32 %v3995, 4294901760
    %3997 = vmatprep.subr.mxu0 %v3996
    %v3998 = vand.u32 %v93, 4294901760
    %v3999 = vsub.f32 %v93, %v3998
    %v4000 = vand.u32 %v3999, 4294901760
    %v4001 = vsub.f32 %v3999, %v4000
    %v4002 = vand.u32 %v4001, 4294901760
    %4003 = vmatpush1.msra.mxu0 %v4002
    %4004 = vmatprep.subr.mxu0 0.0
    %4005 = vmatpush2.msra.mxu0 0.0
    %4006 = vmatprep.subr.mxu0 0.0
    %4007 = vmatpush2.msra.mxu0 0.0
    %4008 = vmatprep.subr.mxu0 0.0
    %4009 = vmatpush2.msra.mxu0 0.0
    %4010 = vmatprep.subr.mxu0 0.0
    %4011 = vmatpush2.msra.mxu0 0.0
    %4012 = vmatprep.subr.mxu0 0.0
    %4013 = vmatpush2.msra.mxu0 0.0
    %4014 = vmatprep.subr.mxu0 0.0
    %4015 = vmatpush2.msra.mxu0 0.0
    %4016 = vmatprep.subr.mxu0 0.0
    %4017 = vmatpush2.msra.mxu0 0.0
    %4018 = vmatprep.subr.mxu0 0.0
    %4019 = vmatpush2.msra.mxu0 0.0
    %4020 = vmatprep.subr.mxu0 0.0
    %4021 = vmatpush2.msra.mxu0 0.0
    %4022 = vmatprep.subr.mxu0 0.0
    %4023 = vmatpush2.msra.mxu0 0.0
    %4024 = vmatprep.subr.mxu0 0.0
    %4025 = vmatpush2.msra.mxu0 0.0
    %4026 = vmatprep.subr.mxu0 0.0
    %4027 = vmatpush2.msra.mxu0 0.0
    %4028 = vmatprep.subr.mxu0 0.0
    %4029 = vmatpush2.msra.mxu0 0.0
    %4030 = vmatprep.subr.mxu0 0.0
    %4031 = vmatpush2.msra.mxu0 0.0
    %4032 = vmatprep.subr.mxu0 0.0
    %4033 = vmatpush2.msra.mxu0 0.0
    %4034 = vmatprep.subr.mxu0 0.0
    %4035 = vmatpush2.msra.mxu0 0.0
    %4036 = vmatprep.mubr.f32.mxu0 0.0
    %v4037 = vand.u32 %v3882, 4294901760
    %4038 = vmatmul.mubr.f32.gmra.mxu0 %v4037
    %v4039 = vpop.f32.mrf.mxu0
    %v4040 = vadd.f32 %v3958, %v4039
    %v4041 = vpop.f32.mrf.mxu0
    %v4042 = vadd.f32 %v3960, %v4041
    %4043 = vdwg.mxu0
    %4044 = vmatprep.subr.mxu0 0.0
    %4045 = vmatpush1.msra.mxu0 0.0
    %4046 = vmatprep.subr.mxu0 0.0
    %4047 = vmatpush1.msra.mxu0 0.0
    %4048 = vmatprep.subr.mxu0 0.0
    %4049 = vmatpush1.msra.mxu0 0.0
    %4050 = vmatprep.subr.mxu0 0.0
    %4051 = vmatpush1.msra.mxu0 0.0
    %4052 = vmatprep.subr.mxu0 0.0
    %4053 = vmatpush1.msra.mxu0 0.0
    %4054 = vmatprep.subr.mxu0 0.0
    %4055 = vmatpush1.msra.mxu0 0.0
    %4056 = vmatprep.subr.mxu0 0.0
    %4057 = vmatpush1.msra.mxu0 0.0
    %4058 = vmatprep.subr.mxu0 0.0
    %4059 = vmatpush1.msra.mxu0 0.0
    %4060 = vmatprep.subr.mxu0 0.0
    %4061 = vmatpush1.msra.mxu0 0.0
    %4062 = vmatprep.subr.mxu0 0.0
    %4063 = vmatpush1.msra.mxu0 0.0
    %4064 = vmatprep.subr.mxu0 0.0
    %4065 = vmatpush1.msra.mxu0 0.0
    %4066 = vmatprep.subr.mxu0 0.0
    %4067 = vmatpush1.msra.mxu0 0.0
    %4068 = vmatprep.subr.mxu0 0.0
    %4069 = vmatpush1.msra.mxu0 0.0
    %4070 = vmatprep.subr.mxu0 0.0
    %4071 = vmatpush1.msra.mxu0 0.0
    %4072 = vmatprep.subr.mxu0 0.0
    %4073 = vmatpush1.msra.mxu0 0.0
    %v4074 = vand.u32 %v94, 4294901760
    %v4075 = vsub.f32 %v94, %v4074
    %4076 = vmatprep.subr.mxu0 %v4075
    %v4077 = vand.u32 %v93, 4294901760
    %v4078 = vsub.f32 %v93, %v4077
    %4079 = vmatpush1.msra.mxu0 %v4078
    %4080 = vmatprep.subr.mxu0 0.0
    %4081 = vmatpush2.msra.mxu0 0.0
    %4082 = vmatprep.subr.mxu0 0.0
    %4083 = vmatpush2.msra.mxu0 0.0
    %4084 = vmatprep.subr.mxu0 0.0
    %4085 = vmatpush2.msra.mxu0 0.0
    %4086 = vmatprep.subr.mxu0 0.0
    %4087 = vmatpush2.msra.mxu0 0.0
    %4088 = vmatprep.subr.mxu0 0.0
    %4089 = vmatpush2.msra.mxu0 0.0
    %4090 = vmatprep.subr.mxu0 0.0
    %4091 = vmatpush2.msra.mxu0 0.0
    %4092 = vmatprep.subr.mxu0 0.0
    %4093 = vmatpush2.msra.mxu0 0.0
    %4094 = vmatprep.subr.mxu0 0.0
    %4095 = vmatpush2.msra.mxu0 0.0
    %4096 = vmatprep.subr.mxu0 0.0
    %4097 = vmatpush2.msra.mxu0 0.0
    %4098 = vmatprep.subr.mxu0 0.0
    %4099 = vmatpush2.msra.mxu0 0.0
    %4100 = vmatprep.subr.mxu0 0.0
    %4101 = vmatpush2.msra.mxu0 0.0
    %4102 = vmatprep.subr.mxu0 0.0
    %4103 = vmatpush2.msra.mxu0 0.0
    %4104 = vmatprep.subr.mxu0 0.0
    %4105 = vmatpush2.msra.mxu0 0.0
    %4106 = vmatprep.subr.mxu0 0.0
    %4107 = vmatpush2.msra.mxu0 0.0
    %4108 = vmatprep.subr.mxu0 0.0
    %4109 = vmatpush2.msra.mxu0 0.0
    %4110 = vmatprep.subr.mxu0 0.0
    %4111 = vmatpush2.msra.mxu0 0.0
    %4112 = vmatprep.mubr.f32.mxu0 0.0
    %v4113 = vand.u32 %v3882, 4294901760
    %v4114 = vsub.f32 %v3882, %v4113
    %4115 = vmatmul.mubr.f32.gmra.mxu0 %v4114
    %v4116 = vpop.f32.mrf.mxu0
    %v4117 = vadd.f32 %v4040, %v4116
    %v4118 = vpop.f32.mrf.mxu0
    %v4119 = vadd.f32 %v4042, %v4118
    %4120 = vdwg.mxu0
    %4121 = vmatprep.subr.mxu0 0.0
    %4122 = vmatpush1.msra.mxu0 0.0
    %4123 = vmatprep.subr.mxu0 0.0
    %4124 = vmatpush1.msra.mxu0 0.0
    %4125 = vmatprep.subr.mxu0 0.0
    %4126 = vmatpush1.msra.mxu0 0.0
    %4127 = vmatprep.subr.mxu0 0.0
    %4128 = vmatpush1.msra.mxu0 0.0
    %4129 = vmatprep.subr.mxu0 0.0
    %4130 = vmatpush1.msra.mxu0 0.0
    %4131 = vmatprep.subr.mxu0 0.0
    %4132 = vmatpush1.msra.mxu0 0.0
    %4133 = vmatprep.subr.mxu0 0.0
    %4134 = vmatpush1.msra.mxu0 0.0
    %4135 = vmatprep.subr.mxu0 0.0
    %4136 = vmatpush1.msra.mxu0 0.0
    %4137 = vmatprep.subr.mxu0 0.0
    %4138 = vmatpush1.msra.mxu0 0.0
    %4139 = vmatprep.subr.mxu0 0.0
    %4140 = vmatpush1.msra.mxu0 0.0
    %4141 = vmatprep.subr.mxu0 0.0
    %4142 = vmatpush1.msra.mxu0 0.0
    %4143 = vmatprep.subr.mxu0 0.0
    %4144 = vmatpush1.msra.mxu0 0.0
    %4145 = vmatprep.subr.mxu0 0.0
    %4146 = vmatpush1.msra.mxu0 0.0
    %4147 = vmatprep.subr.mxu0 0.0
    %4148 = vmatpush1.msra.mxu0 0.0
    %4149 = vmatprep.subr.mxu0 0.0
    %4150 = vmatpush1.msra.mxu0 0.0
    %v4151 = vand.u32 %v94, 4294901760
    %4152 = vmatprep.subr.mxu0 %v4151
    %v4153 = vand.u32 %v93, 4294901760
    %4154 = vmatpush1.msra.mxu0 %v4153
    %4155 = vmatprep.subr.mxu0 0.0
    %4156 = vmatpush2.msra.mxu0 0.0
    %4157 = vmatprep.subr.mxu0 0.0
    %4158 = vmatpush2.msra.mxu0 0.0
    %4159 = vmatprep.subr.mxu0 0.0
    %4160 = vmatpush2.msra.mxu0 0.0
    %4161 = vmatprep.subr.mxu0 0.0
    %4162 = vmatpush2.msra.mxu0 0.0
    %4163 = vmatprep.subr.mxu0 0.0
    %4164 = vmatpush2.msra.mxu0 0.0
    %4165 = vmatprep.subr.mxu0 0.0
    %4166 = vmatpush2.msra.mxu0 0.0
    %4167 = vmatprep.subr.mxu0 0.0
    %4168 = vmatpush2.msra.mxu0 0.0
    %4169 = vmatprep.subr.mxu0 0.0
    %4170 = vmatpush2.msra.mxu0 0.0
    %4171 = vmatprep.subr.mxu0 0.0
    %4172 = vmatpush2.msra.mxu0 0.0
    %4173 = vmatprep.subr.mxu0 0.0
    %4174 = vmatpush2.msra.mxu0 0.0
    %4175 = vmatprep.subr.mxu0 0.0
    %4176 = vmatpush2.msra.mxu0 0.0
    %4177 = vmatprep.subr.mxu0 0.0
    %4178 = vmatpush2.msra.mxu0 0.0
    %4179 = vmatprep.subr.mxu0 0.0
    %4180 = vmatpush2.msra.mxu0 0.0
    %4181 = vmatprep.subr.mxu0 0.0
    %4182 = vmatpush2.msra.mxu0 0.0
    %4183 = vmatprep.subr.mxu0 0.0
    %4184 = vmatpush2.msra.mxu0 0.0
    %4185 = vmatprep.subr.mxu0 0.0
    %4186 = vmatpush2.msra.mxu0 0.0
    %4187 = vmatprep.mubr.f32.mxu0 0.0
    %v4188 = vand.u32 %v3882, 4294901760
    %v4189 = vsub.f32 %v3882, %v4188
    %v4190 = vand.u32 %v4189, 4294901760
    %4191 = vmatmul.mubr.f32.gmra.mxu0 %v4190
    %v4192 = vpop.f32.mrf.mxu0
    %v4193 = vadd.f32 %v4117, %v4192
    %v4194 = vpop.f32.mrf.mxu0
    %v4195 = vadd.f32 %v4119, %v4194
    %4196 = vdwg.mxu0
    %4197 = vmatprep.subr.mxu0 0.0
    %4198 = vmatpush1.msra.mxu0 0.0
    %4199 = vmatprep.subr.mxu0 0.0
    %4200 = vmatpush1.msra.mxu0 0.0
    %4201 = vmatprep.subr.mxu0 0.0
    %4202 = vmatpush1.msra.mxu0 0.0
    %4203 = vmatprep.subr.mxu0 0.0
    %4204 = vmatpush1.msra.mxu0 0.0
    %4205 = vmatprep.subr.mxu0 0.0
    %4206 = vmatpush1.msra.mxu0 0.0
    %4207 = vmatprep.subr.mxu0 0.0
    %4208 = vmatpush1.msra.mxu0 0.0
    %4209 = vmatprep.subr.mxu0 0.0
    %4210 = vmatpush1.msra.mxu0 0.0
    %4211 = vmatprep.subr.mxu0 0.0
    %4212 = vmatpush1.msra.mxu0 0.0
    %4213 = vmatprep.subr.mxu0 0.0
    %4214 = vmatpush1.msra.mxu0 0.0
    %4215 = vmatprep.subr.mxu0 0.0
    %4216 = vmatpush1.msra.mxu0 0.0
    %4217 = vmatprep.subr.mxu0 0.0
    %4218 = vmatpush1.msra.mxu0 0.0
    %4219 = vmatprep.subr.mxu0 0.0
    %4220 = vmatpush1.msra.mxu0 0.0
    %4221 = vmatprep.subr.mxu0 0.0
    %4222 = vmatpush1.msra.mxu0 0.0
    %4223 = vmatprep.subr.mxu0 0.0
    %4224 = vmatpush1.msra.mxu0 0.0
    %4225 = vmatprep.subr.mxu0 0.0
    %4226 = vmatpush1.msra.mxu0 0.0
    %v4227 = vand.u32 %v94, 4294901760
    %v4228 = vsub.f32 %v94, %v4227
    %v4229 = vand.u32 %v4228, 4294901760
    %4230 = vmatprep.subr.mxu0 %v4229
    %v4231 = vand.u32 %v93, 4294901760
    %v4232 = vsub.f32 %v93, %v4231
    %v4233 = vand.u32 %v4232, 4294901760
    %4234 = vmatpush1.msra.mxu0 %v4233
    %4235 = vmatprep.subr.mxu0 0.0
    %4236 = vmatpush2.msra.mxu0 0.0
    %4237 = vmatprep.subr.mxu0 0.0
    %4238 = vmatpush2.msra.mxu0 0.0
    %4239 = vmatprep.subr.mxu0 0.0
    %4240 = vmatpush2.msra.mxu0 0.0
    %4241 = vmatprep.subr.mxu0 0.0
    %4242 = vmatpush2.msra.mxu0 0.0
    %4243 = vmatprep.subr.mxu0 0.0
    %4244 = vmatpush2.msra.mxu0 0.0
    %4245 = vmatprep.subr.mxu0 0.0
    %4246 = vmatpush2.msra.mxu0 0.0
    %4247 = vmatprep.subr.mxu0 0.0
    %4248 = vmatpush2.msra.mxu0 0.0
    %4249 = vmatprep.subr.mxu0 0.0
    %4250 = vmatpush2.msra.mxu0 0.0
    %4251 = vmatprep.subr.mxu0 0.0
    %4252 = vmatpush2.msra.mxu0 0.0
    %4253 = vmatprep.subr.mxu0 0.0
    %4254 = vmatpush2.msra.mxu0 0.0
    %4255 = vmatprep.subr.mxu0 0.0
    %4256 = vmatpush2.msra.mxu0 0.0
    %4257 = vmatprep.subr.mxu0 0.0
    %4258 = vmatpush2.msra.mxu0 0.0
    %4259 = vmatprep.subr.mxu0 0.0
    %4260 = vmatpush2.msra.mxu0 0.0
    %4261 = vmatprep.subr.mxu0 0.0
    %4262 = vmatpush2.msra.mxu0 0.0
    %4263 = vmatprep.subr.mxu0 0.0
    %4264 = vmatpush2.msra.mxu0 0.0
    %4265 = vmatprep.subr.mxu0 0.0
    %4266 = vmatpush2.msra.mxu0 0.0
    %4267 = vmatprep.mubr.f32.mxu0 0.0
    %v4268 = vand.u32 %v3882, 4294901760
    %4269 = vmatmul.mubr.f32.gmra.mxu0 %v4268
    %v4270 = vpop.f32.mrf.mxu0
    %v4271 = vadd.f32 %v4193, %v4270
    %v4272 = vpop.f32.mrf.mxu0
    %v4273 = vadd.f32 %v4195, %v4272
    %4274 = vdwg.mxu0
    %4275 = vmatprep.subr.mxu0 0.0
    %4276 = vmatpush1.msra.mxu0 0.0
    %4277 = vmatprep.subr.mxu0 0.0
    %4278 = vmatpush1.msra.mxu0 0.0
    %4279 = vmatprep.subr.mxu0 0.0
    %4280 = vmatpush1.msra.mxu0 0.0
    %4281 = vmatprep.subr.mxu0 0.0
    %4282 = vmatpush1.msra.mxu0 0.0
    %4283 = vmatprep.subr.mxu0 0.0
    %4284 = vmatpush1.msra.mxu0 0.0
    %4285 = vmatprep.subr.mxu0 0.0
    %4286 = vmatpush1.msra.mxu0 0.0
    %4287 = vmatprep.subr.mxu0 0.0
    %4288 = vmatpush1.msra.mxu0 0.0
    %4289 = vmatprep.subr.mxu0 0.0
    %4290 = vmatpush1.msra.mxu0 0.0
    %4291 = vmatprep.subr.mxu0 0.0
    %4292 = vmatpush1.msra.mxu0 0.0
    %4293 = vmatprep.subr.mxu0 0.0
    %4294 = vmatpush1.msra.mxu0 0.0
    %4295 = vmatprep.subr.mxu0 0.0
    %4296 = vmatpush1.msra.mxu0 0.0
    %4297 = vmatprep.subr.mxu0 0.0
    %4298 = vmatpush1.msra.mxu0 0.0
    %4299 = vmatprep.subr.mxu0 0.0
    %4300 = vmatpush1.msra.mxu0 0.0
    %4301 = vmatprep.subr.mxu0 0.0
    %4302 = vmatpush1.msra.mxu0 0.0
    %4303 = vmatprep.subr.mxu0 0.0
    %4304 = vmatpush1.msra.mxu0 0.0
    %v4305 = vand.u32 %v94, 4294901760
    %4306 = vmatprep.subr.mxu0 %v4305
    %v4307 = vand.u32 %v93, 4294901760
    %4308 = vmatpush1.msra.mxu0 %v4307
    %4309 = vmatprep.subr.mxu0 0.0
    %4310 = vmatpush2.msra.mxu0 0.0
    %4311 = vmatprep.subr.mxu0 0.0
    %4312 = vmatpush2.msra.mxu0 0.0
    %4313 = vmatprep.subr.mxu0 0.0
    %4314 = vmatpush2.msra.mxu0 0.0
    %4315 = vmatprep.subr.mxu0 0.0
    %4316 = vmatpush2.msra.mxu0 0.0
    %4317 = vmatprep.subr.mxu0 0.0
    %4318 = vmatpush2.msra.mxu0 0.0
    %4319 = vmatprep.subr.mxu0 0.0
    %4320 = vmatpush2.msra.mxu0 0.0
    %4321 = vmatprep.subr.mxu0 0.0
    %4322 = vmatpush2.msra.mxu0 0.0
    %4323 = vmatprep.subr.mxu0 0.0
    %4324 = vmatpush2.msra.mxu0 0.0
    %4325 = vmatprep.subr.mxu0 0.0
    %4326 = vmatpush2.msra.mxu0 0.0
    %4327 = vmatprep.subr.mxu0 0.0
    %4328 = vmatpush2.msra.mxu0 0.0
    %4329 = vmatprep.subr.mxu0 0.0
    %4330 = vmatpush2.msra.mxu0 0.0
    %4331 = vmatprep.subr.mxu0 0.0
    %4332 = vmatpush2.msra.mxu0 0.0
    %4333 = vmatprep.subr.mxu0 0.0
    %4334 = vmatpush2.msra.mxu0 0.0
    %4335 = vmatprep.subr.mxu0 0.0
    %4336 = vmatpush2.msra.mxu0 0.0
    %4337 = vmatprep.subr.mxu0 0.0
    %4338 = vmatpush2.msra.mxu0 0.0
    %4339 = vmatprep.subr.mxu0 0.0
    %4340 = vmatpush2.msra.mxu0 0.0
    %4341 = vmatprep.mubr.f32.mxu0 0.0
    %v4342 = vand.u32 %v3882, 4294901760
    %4343 = vmatmul.mubr.f32.gmra.mxu0 %v4342
    %v4344 = vpop.f32.mrf.mxu0
    %v4345 = vadd.f32 %v4271, %v4344
    %v4346 = vpop.f32.mrf.mxu0
    %v4347 = vadd.f32 %v4273, %v4346
    %4348 = vdwg.mxu0
    %v4350 = vsel %vm3880, %v81, 0
    %4352 = vmatprep.subr.mxu0 0.0
    %4353 = vmatpush1.msra.mxu0 0.0
    %4354 = vmatprep.subr.mxu0 0.0
    %4355 = vmatpush1.msra.mxu0 0.0
    %4356 = vmatprep.subr.mxu0 0.0
    %4357 = vmatpush1.msra.mxu0 0.0
    %4358 = vmatprep.subr.mxu0 0.0
    %4359 = vmatpush1.msra.mxu0 0.0
    %4360 = vmatprep.subr.mxu0 0.0
    %4361 = vmatpush1.msra.mxu0 0.0
    %4362 = vmatprep.subr.mxu0 0.0
    %4363 = vmatpush1.msra.mxu0 0.0
    %4364 = vmatprep.subr.mxu0 0.0
    %4365 = vmatpush1.msra.mxu0 0.0
    %4366 = vmatprep.subr.mxu0 0.0
    %4367 = vmatpush1.msra.mxu0 0.0
    %4368 = vmatprep.subr.mxu0 0.0
    %4369 = vmatpush1.msra.mxu0 0.0
    %4370 = vmatprep.subr.mxu0 0.0
    %4371 = vmatpush1.msra.mxu0 0.0
    %4372 = vmatprep.subr.mxu0 0.0
    %4373 = vmatpush1.msra.mxu0 0.0
    %4374 = vmatprep.subr.mxu0 0.0
    %4375 = vmatpush1.msra.mxu0 0.0
    %4376 = vmatprep.subr.mxu0 0.0
    %4377 = vmatpush1.msra.mxu0 0.0
    %4378 = vmatprep.subr.mxu0 0.0
    %4379 = vmatpush1.msra.mxu0 0.0
    %4380 = vmatprep.subr.mxu0 0.0
    %4381 = vmatpush1.msra.mxu0 0.0
    %v4382 = vand.u32 %v92, 4294901760
    %4383 = vmatprep.subr.mxu0 %v4382
    %v4384 = vand.u32 %v91, 4294901760
    %4385 = vmatpush1.msra.mxu0 %v4384
    %4386 = vmatprep.subr.mxu0 0.0
    %4387 = vmatpush2.msra.mxu0 0.0
    %4388 = vmatprep.subr.mxu0 0.0
    %4389 = vmatpush2.msra.mxu0 0.0
    %4390 = vmatprep.subr.mxu0 0.0
    %4391 = vmatpush2.msra.mxu0 0.0
    %4392 = vmatprep.subr.mxu0 0.0
    %4393 = vmatpush2.msra.mxu0 0.0
    %4394 = vmatprep.subr.mxu0 0.0
    %4395 = vmatpush2.msra.mxu0 0.0
    %4396 = vmatprep.subr.mxu0 0.0
    %4397 = vmatpush2.msra.mxu0 0.0
    %4398 = vmatprep.subr.mxu0 0.0
    %4399 = vmatpush2.msra.mxu0 0.0
    %4400 = vmatprep.subr.mxu0 0.0
    %4401 = vmatpush2.msra.mxu0 0.0
    %4402 = vmatprep.subr.mxu0 0.0
    %4403 = vmatpush2.msra.mxu0 0.0
    %4404 = vmatprep.subr.mxu0 0.0
    %4405 = vmatpush2.msra.mxu0 0.0
    %4406 = vmatprep.subr.mxu0 0.0
    %4407 = vmatpush2.msra.mxu0 0.0
    %4408 = vmatprep.subr.mxu0 0.0
    %4409 = vmatpush2.msra.mxu0 0.0
    %4410 = vmatprep.subr.mxu0 0.0
    %4411 = vmatpush2.msra.mxu0 0.0
    %4412 = vmatprep.subr.mxu0 0.0
    %4413 = vmatpush2.msra.mxu0 0.0
    %4414 = vmatprep.subr.mxu0 0.0
    %4415 = vmatpush2.msra.mxu0 0.0
    %4416 = vmatprep.subr.mxu0 0.0
    %4417 = vmatpush2.msra.mxu0 0.0
    %4418 = vmatprep.mubr.f32.mxu0 0.0
    %v4419 = vand.u32 %v4350, 4294901760
    %v4420 = vsub.f32 %v4350, %v4419
    %v4421 = vand.u32 %v4420, 4294901760
    %v4422 = vsub.f32 %v4420, %v4421
    %v4423 = vand.u32 %v4422, 4294901760
    %4424 = vmatmul.mubr.f32.gmra.mxu0 %v4423
    %v4425 = vpop.f32.mrf.mxu0
    %v4426 = vadd.f32 %v4345, %v4425
    %v4427 = vpop.f32.mrf.mxu0
    %v4428 = vadd.f32 %v4347, %v4427
    %4429 = vdwg.mxu0
    %4430 = vmatprep.subr.mxu0 0.0
    %4431 = vmatpush1.msra.mxu0 0.0
    %4432 = vmatprep.subr.mxu0 0.0
    %4433 = vmatpush1.msra.mxu0 0.0
    %4434 = vmatprep.subr.mxu0 0.0
    %4435 = vmatpush1.msra.mxu0 0.0
    %4436 = vmatprep.subr.mxu0 0.0
    %4437 = vmatpush1.msra.mxu0 0.0
    %4438 = vmatprep.subr.mxu0 0.0
    %4439 = vmatpush1.msra.mxu0 0.0
    %4440 = vmatprep.subr.mxu0 0.0
    %4441 = vmatpush1.msra.mxu0 0.0
    %4442 = vmatprep.subr.mxu0 0.0
    %4443 = vmatpush1.msra.mxu0 0.0
    %4444 = vmatprep.subr.mxu0 0.0
    %4445 = vmatpush1.msra.mxu0 0.0
    %4446 = vmatprep.subr.mxu0 0.0
    %4447 = vmatpush1.msra.mxu0 0.0
    %4448 = vmatprep.subr.mxu0 0.0
    %4449 = vmatpush1.msra.mxu0 0.0
    %4450 = vmatprep.subr.mxu0 0.0
    %4451 = vmatpush1.msra.mxu0 0.0
    %4452 = vmatprep.subr.mxu0 0.0
    %4453 = vmatpush1.msra.mxu0 0.0
    %4454 = vmatprep.subr.mxu0 0.0
    %4455 = vmatpush1.msra.mxu0 0.0
    %4456 = vmatprep.subr.mxu0 0.0
    %4457 = vmatpush1.msra.mxu0 0.0
    %4458 = vmatprep.subr.mxu0 0.0
    %4459 = vmatpush1.msra.mxu0 0.0
    %v4460 = vand.u32 %v92, 4294901760
    %v4461 = vsub.f32 %v92, %v4460
    %v4462 = vand.u32 %v4461, 4294901760
    %v4463 = vsub.f32 %v4461, %v4462
    %v4464 = vand.u32 %v4463, 4294901760
    %4465 = vmatprep.subr.mxu0 %v4464
    %v4466 = vand.u32 %v91, 4294901760
    %v4467 = vsub.f32 %v91, %v4466
    %v4468 = vand.u32 %v4467, 4294901760
    %v4469 = vsub.f32 %v4467, %v4468
    %v4470 = vand.u32 %v4469, 4294901760
    %4471 = vmatpush1.msra.mxu0 %v4470
    %4472 = vmatprep.subr.mxu0 0.0
    %4473 = vmatpush2.msra.mxu0 0.0
    %4474 = vmatprep.subr.mxu0 0.0
    %4475 = vmatpush2.msra.mxu0 0.0
    %4476 = vmatprep.subr.mxu0 0.0
    %4477 = vmatpush2.msra.mxu0 0.0
    %4478 = vmatprep.subr.mxu0 0.0
    %4479 = vmatpush2.msra.mxu0 0.0
    %4480 = vmatprep.subr.mxu0 0.0
    %4481 = vmatpush2.msra.mxu0 0.0
    %4482 = vmatprep.subr.mxu0 0.0
    %4483 = vmatpush2.msra.mxu0 0.0
    %4484 = vmatprep.subr.mxu0 0.0
    %4485 = vmatpush2.msra.mxu0 0.0
    %4486 = vmatprep.subr.mxu0 0.0
    %4487 = vmatpush2.msra.mxu0 0.0
    %4488 = vmatprep.subr.mxu0 0.0
    %4489 = vmatpush2.msra.mxu0 0.0
    %4490 = vmatprep.subr.mxu0 0.0
    %4491 = vmatpush2.msra.mxu0 0.0
    %4492 = vmatprep.subr.mxu0 0.0
    %4493 = vmatpush2.msra.mxu0 0.0
    %4494 = vmatprep.subr.mxu0 0.0
    %4495 = vmatpush2.msra.mxu0 0.0
    %4496 = vmatprep.subr.mxu0 0.0
    %4497 = vmatpush2.msra.mxu0 0.0
    %4498 = vmatprep.subr.mxu0 0.0
    %4499 = vmatpush2.msra.mxu0 0.0
    %4500 = vmatprep.subr.mxu0 0.0
    %4501 = vmatpush2.msra.mxu0 0.0
    %4502 = vmatprep.subr.mxu0 0.0
    %4503 = vmatpush2.msra.mxu0 0.0
    %4504 = vmatprep.mubr.f32.mxu0 0.0
    %v4505 = vand.u32 %v4350, 4294901760
    %4506 = vmatmul.mubr.f32.gmra.mxu0 %v4505
    %v4507 = vpop.f32.mrf.mxu0
    %v4508 = vadd.f32 %v4426, %v4507
    %v4509 = vpop.f32.mrf.mxu0
    %v4510 = vadd.f32 %v4428, %v4509
    %4511 = vdwg.mxu0
    %4512 = vmatprep.subr.mxu0 0.0
    %4513 = vmatpush1.msra.mxu0 0.0
    %4514 = vmatprep.subr.mxu0 0.0
    %4515 = vmatpush1.msra.mxu0 0.0
    %4516 = vmatprep.subr.mxu0 0.0
    %4517 = vmatpush1.msra.mxu0 0.0
    %4518 = vmatprep.subr.mxu0 0.0
    %4519 = vmatpush1.msra.mxu0 0.0
    %4520 = vmatprep.subr.mxu0 0.0
    %4521 = vmatpush1.msra.mxu0 0.0
    %4522 = vmatprep.subr.mxu0 0.0
    %4523 = vmatpush1.msra.mxu0 0.0
    %4524 = vmatprep.subr.mxu0 0.0
    %4525 = vmatpush1.msra.mxu0 0.0
    %4526 = vmatprep.subr.mxu0 0.0
    %4527 = vmatpush1.msra.mxu0 0.0
    %4528 = vmatprep.subr.mxu0 0.0
    %4529 = vmatpush1.msra.mxu0 0.0
    %4530 = vmatprep.subr.mxu0 0.0
    %4531 = vmatpush1.msra.mxu0 0.0
    %4532 = vmatprep.subr.mxu0 0.0
    %4533 = vmatpush1.msra.mxu0 0.0
    %4534 = vmatprep.subr.mxu0 0.0
    %4535 = vmatpush1.msra.mxu0 0.0
    %4536 = vmatprep.subr.mxu0 0.0
    %4537 = vmatpush1.msra.mxu0 0.0
    %4538 = vmatprep.subr.mxu0 0.0
    %4539 = vmatpush1.msra.mxu0 0.0
    %4540 = vmatprep.subr.mxu0 0.0
    %4541 = vmatpush1.msra.mxu0 0.0
    %v4542 = vand.u32 %v92, 4294901760
    %v4543 = vsub.f32 %v92, %v4542
    %4544 = vmatprep.subr.mxu0 %v4543
    %v4545 = vand.u32 %v91, 4294901760
    %v4546 = vsub.f32 %v91, %v4545
    %4547 = vmatpush1.msra.mxu0 %v4546
    %4548 = vmatprep.subr.mxu0 0.0
    %4549 = vmatpush2.msra.mxu0 0.0
    %4550 = vmatprep.subr.mxu0 0.0
    %4551 = vmatpush2.msra.mxu0 0.0
    %4552 = vmatprep.subr.mxu0 0.0
    %4553 = vmatpush2.msra.mxu0 0.0
    %4554 = vmatprep.subr.mxu0 0.0
    %4555 = vmatpush2.msra.mxu0 0.0
    %4556 = vmatprep.subr.mxu0 0.0
    %4557 = vmatpush2.msra.mxu0 0.0
    %4558 = vmatprep.subr.mxu0 0.0
    %4559 = vmatpush2.msra.mxu0 0.0
    %4560 = vmatprep.subr.mxu0 0.0
    %4561 = vmatpush2.msra.mxu0 0.0
    %4562 = vmatprep.subr.mxu0 0.0
    %4563 = vmatpush2.msra.mxu0 0.0
    %4564 = vmatprep.subr.mxu0 0.0
    %4565 = vmatpush2.msra.mxu0 0.0
    %4566 = vmatprep.subr.mxu0 0.0
    %4567 = vmatpush2.msra.mxu0 0.0
    %4568 = vmatprep.subr.mxu0 0.0
    %4569 = vmatpush2.msra.mxu0 0.0
    %4570 = vmatprep.subr.mxu0 0.0
    %4571 = vmatpush2.msra.mxu0 0.0
    %4572 = vmatprep.subr.mxu0 0.0
    %4573 = vmatpush2.msra.mxu0 0.0
    %4574 = vmatprep.subr.mxu0 0.0
    %4575 = vmatpush2.msra.mxu0 0.0
    %4576 = vmatprep.subr.mxu0 0.0
    %4577 = vmatpush2.msra.mxu0 0.0
    %4578 = vmatprep.subr.mxu0 0.0
    %4579 = vmatpush2.msra.mxu0 0.0
    %4580 = vmatprep.mubr.f32.mxu0 0.0
    %v4581 = vand.u32 %v4350, 4294901760
    %v4582 = vsub.f32 %v4350, %v4581
    %4583 = vmatmul.mubr.f32.gmra.mxu0 %v4582
    %v4584 = vpop.f32.mrf.mxu0
    %v4585 = vadd.f32 %v4508, %v4584
    %v4586 = vpop.f32.mrf.mxu0
    %v4587 = vadd.f32 %v4510, %v4586
    %4588 = vdwg.mxu0
    %4589 = vmatprep.subr.mxu0 0.0
    %4590 = vmatpush1.msra.mxu0 0.0
    %4591 = vmatprep.subr.mxu0 0.0
    %4592 = vmatpush1.msra.mxu0 0.0
    %4593 = vmatprep.subr.mxu0 0.0
    %4594 = vmatpush1.msra.mxu0 0.0
    %4595 = vmatprep.subr.mxu0 0.0
    %4596 = vmatpush1.msra.mxu0 0.0
    %4597 = vmatprep.subr.mxu0 0.0
    %4598 = vmatpush1.msra.mxu0 0.0
    %4599 = vmatprep.subr.mxu0 0.0
    %4600 = vmatpush1.msra.mxu0 0.0
    %4601 = vmatprep.subr.mxu0 0.0
    %4602 = vmatpush1.msra.mxu0 0.0
    %4603 = vmatprep.subr.mxu0 0.0
    %4604 = vmatpush1.msra.mxu0 0.0
    %4605 = vmatprep.subr.mxu0 0.0
    %4606 = vmatpush1.msra.mxu0 0.0
    %4607 = vmatprep.subr.mxu0 0.0
    %4608 = vmatpush1.msra.mxu0 0.0
    %4609 = vmatprep.subr.mxu0 0.0
    %4610 = vmatpush1.msra.mxu0 0.0
    %4611 = vmatprep.subr.mxu0 0.0
    %4612 = vmatpush1.msra.mxu0 0.0
    %4613 = vmatprep.subr.mxu0 0.0
    %4614 = vmatpush1.msra.mxu0 0.0
    %4615 = vmatprep.subr.mxu0 0.0
    %4616 = vmatpush1.msra.mxu0 0.0
    %4617 = vmatprep.subr.mxu0 0.0
    %4618 = vmatpush1.msra.mxu0 0.0
    %v4619 = vand.u32 %v92, 4294901760
    %4620 = vmatprep.subr.mxu0 %v4619
    %v4621 = vand.u32 %v91, 4294901760
    %4622 = vmatpush1.msra.mxu0 %v4621
    %4623 = vmatprep.subr.mxu0 0.0
    %4624 = vmatpush2.msra.mxu0 0.0
    %4625 = vmatprep.subr.mxu0 0.0
    %4626 = vmatpush2.msra.mxu0 0.0
    %4627 = vmatprep.subr.mxu0 0.0
    %4628 = vmatpush2.msra.mxu0 0.0
    %4629 = vmatprep.subr.mxu0 0.0
    %4630 = vmatpush2.msra.mxu0 0.0
    %4631 = vmatprep.subr.mxu0 0.0
    %4632 = vmatpush2.msra.mxu0 0.0
    %4633 = vmatprep.subr.mxu0 0.0
    %4634 = vmatpush2.msra.mxu0 0.0
    %4635 = vmatprep.subr.mxu0 0.0
    %4636 = vmatpush2.msra.mxu0 0.0
    %4637 = vmatprep.subr.mxu0 0.0
    %4638 = vmatpush2.msra.mxu0 0.0
    %4639 = vmatprep.subr.mxu0 0.0
    %4640 = vmatpush2.msra.mxu0 0.0
    %4641 = vmatprep.subr.mxu0 0.0
    %4642 = vmatpush2.msra.mxu0 0.0
    %4643 = vmatprep.subr.mxu0 0.0
    %4644 = vmatpush2.msra.mxu0 0.0
    %4645 = vmatprep.subr.mxu0 0.0
    %4646 = vmatpush2.msra.mxu0 0.0
    %4647 = vmatprep.subr.mxu0 0.0
    %4648 = vmatpush2.msra.mxu0 0.0
    %4649 = vmatprep.subr.mxu0 0.0
    %4650 = vmatpush2.msra.mxu0 0.0
    %4651 = vmatprep.subr.mxu0 0.0
    %4652 = vmatpush2.msra.mxu0 0.0
    %4653 = vmatprep.subr.mxu0 0.0
    %4654 = vmatpush2.msra.mxu0 0.0
    %4655 = vmatprep.mubr.f32.mxu0 0.0
    %v4656 = vand.u32 %v4350, 4294901760
    %v4657 = vsub.f32 %v4350, %v4656
    %v4658 = vand.u32 %v4657, 4294901760
    %4659 = vmatmul.mubr.f32.gmra.mxu0 %v4658
    %v4660 = vpop.f32.mrf.mxu0
    %v4661 = vadd.f32 %v4585, %v4660
    %v4662 = vpop.f32.mrf.mxu0
    %v4663 = vadd.f32 %v4587, %v4662
    %4664 = vdwg.mxu0
    %4665 = vmatprep.subr.mxu0 0.0
    %4666 = vmatpush1.msra.mxu0 0.0
    %4667 = vmatprep.subr.mxu0 0.0
    %4668 = vmatpush1.msra.mxu0 0.0
    %4669 = vmatprep.subr.mxu0 0.0
    %4670 = vmatpush1.msra.mxu0 0.0
    %4671 = vmatprep.subr.mxu0 0.0
    %4672 = vmatpush1.msra.mxu0 0.0
    %4673 = vmatprep.subr.mxu0 0.0
    %4674 = vmatpush1.msra.mxu0 0.0
    %4675 = vmatprep.subr.mxu0 0.0
    %4676 = vmatpush1.msra.mxu0 0.0
    %4677 = vmatprep.subr.mxu0 0.0
    %4678 = vmatpush1.msra.mxu0 0.0
    %4679 = vmatprep.subr.mxu0 0.0
    %4680 = vmatpush1.msra.mxu0 0.0
    %4681 = vmatprep.subr.mxu0 0.0
    %4682 = vmatpush1.msra.mxu0 0.0
    %4683 = vmatprep.subr.mxu0 0.0
    %4684 = vmatpush1.msra.mxu0 0.0
    %4685 = vmatprep.subr.mxu0 0.0
    %4686 = vmatpush1.msra.mxu0 0.0
    %4687 = vmatprep.subr.mxu0 0.0
    %4688 = vmatpush1.msra.mxu0 0.0
    %4689 = vmatprep.subr.mxu0 0.0
    %4690 = vmatpush1.msra.mxu0 0.0
    %4691 = vmatprep.subr.mxu0 0.0
    %4692 = vmatpush1.msra.mxu0 0.0
    %4693 = vmatprep.subr.mxu0 0.0
    %4694 = vmatpush1.msra.mxu0 0.0
    %v4695 = vand.u32 %v92, 4294901760
    %v4696 = vsub.f32 %v92, %v4695
    %v4697 = vand.u32 %v4696, 4294901760
    %4698 = vmatprep.subr.mxu0 %v4697
    %v4699 = vand.u32 %v91, 4294901760
    %v4700 = vsub.f32 %v91, %v4699
    %v4701 = vand.u32 %v4700, 4294901760
    %4702 = vmatpush1.msra.mxu0 %v4701
    %4703 = vmatprep.subr.mxu0 0.0
    %4704 = vmatpush2.msra.mxu0 0.0
    %4705 = vmatprep.subr.mxu0 0.0
    %4706 = vmatpush2.msra.mxu0 0.0
    %4707 = vmatprep.subr.mxu0 0.0
    %4708 = vmatpush2.msra.mxu0 0.0
    %4709 = vmatprep.subr.mxu0 0.0
    %4710 = vmatpush2.msra.mxu0 0.0
    %4711 = vmatprep.subr.mxu0 0.0
    %4712 = vmatpush2.msra.mxu0 0.0
    %4713 = vmatprep.subr.mxu0 0.0
    %4714 = vmatpush2.msra.mxu0 0.0
    %4715 = vmatprep.subr.mxu0 0.0
    %4716 = vmatpush2.msra.mxu0 0.0
    %4717 = vmatprep.subr.mxu0 0.0
    %4718 = vmatpush2.msra.mxu0 0.0
    %4719 = vmatprep.subr.mxu0 0.0
    %4720 = vmatpush2.msra.mxu0 0.0
    %4721 = vmatprep.subr.mxu0 0.0
    %4722 = vmatpush2.msra.mxu0 0.0
    %4723 = vmatprep.subr.mxu0 0.0
    %4724 = vmatpush2.msra.mxu0 0.0
    %4725 = vmatprep.subr.mxu0 0.0
    %4726 = vmatpush2.msra.mxu0 0.0
    %4727 = vmatprep.subr.mxu0 0.0
    %4728 = vmatpush2.msra.mxu0 0.0
    %4729 = vmatprep.subr.mxu0 0.0
    %4730 = vmatpush2.msra.mxu0 0.0
    %4731 = vmatprep.subr.mxu0 0.0
    %4732 = vmatpush2.msra.mxu0 0.0
    %4733 = vmatprep.subr.mxu0 0.0
    %4734 = vmatpush2.msra.mxu0 0.0
    %4735 = vmatprep.mubr.f32.mxu0 0.0
    %v4736 = vand.u32 %v4350, 4294901760
    %4737 = vmatmul.mubr.f32.gmra.mxu0 %v4736
    %v4738 = vpop.f32.mrf.mxu0
    %v4739 = vadd.f32 %v4661, %v4738
    %v4740 = vpop.f32.mrf.mxu0
    %v4741 = vadd.f32 %v4663, %v4740
    %4742 = vdwg.mxu0
    %4743 = vmatprep.subr.mxu0 0.0
    %4744 = vmatpush1.msra.mxu0 0.0
    %4745 = vmatprep.subr.mxu0 0.0
    %4746 = vmatpush1.msra.mxu0 0.0
    %4747 = vmatprep.subr.mxu0 0.0
    %4748 = vmatpush1.msra.mxu0 0.0
    %4749 = vmatprep.subr.mxu0 0.0
    %4750 = vmatpush1.msra.mxu0 0.0
    %4751 = vmatprep.subr.mxu0 0.0
    %4752 = vmatpush1.msra.mxu0 0.0
    %4753 = vmatprep.subr.mxu0 0.0
    %4754 = vmatpush1.msra.mxu0 0.0
    %4755 = vmatprep.subr.mxu0 0.0
    %4756 = vmatpush1.msra.mxu0 0.0
    %4757 = vmatprep.subr.mxu0 0.0
    %4758 = vmatpush1.msra.mxu0 0.0
    %4759 = vmatprep.subr.mxu0 0.0
    %4760 = vmatpush1.msra.mxu0 0.0
    %4761 = vmatprep.subr.mxu0 0.0
    %4762 = vmatpush1.msra.mxu0 0.0
    %4763 = vmatprep.subr.mxu0 0.0
    %4764 = vmatpush1.msra.mxu0 0.0
    %4765 = vmatprep.subr.mxu0 0.0
    %4766 = vmatpush1.msra.mxu0 0.0
    %4767 = vmatprep.subr.mxu0 0.0
    %4768 = vmatpush1.msra.mxu0 0.0
    %4769 = vmatprep.subr.mxu0 0.0
    %4770 = vmatpush1.msra.mxu0 0.0
    %4771 = vmatprep.subr.mxu0 0.0
    %4772 = vmatpush1.msra.mxu0 0.0
    %v4773 = vand.u32 %v92, 4294901760
    %4774 = vmatprep.subr.mxu0 %v4773
    %v4775 = vand.u32 %v91, 4294901760
    %4776 = vmatpush1.msra.mxu0 %v4775
    %4777 = vmatprep.subr.mxu0 0.0
    %4778 = vmatpush2.msra.mxu0 0.0
    %4779 = vmatprep.subr.mxu0 0.0
    %4780 = vmatpush2.msra.mxu0 0.0
    %4781 = vmatprep.subr.mxu0 0.0
    %4782 = vmatpush2.msra.mxu0 0.0
    %4783 = vmatprep.subr.mxu0 0.0
    %4784 = vmatpush2.msra.mxu0 0.0
    %4785 = vmatprep.subr.mxu0 0.0
    %4786 = vmatpush2.msra.mxu0 0.0
    %4787 = vmatprep.subr.mxu0 0.0
    %4788 = vmatpush2.msra.mxu0 0.0
    %4789 = vmatprep.subr.mxu0 0.0
    %4790 = vmatpush2.msra.mxu0 0.0
    %4791 = vmatprep.subr.mxu0 0.0
    %4792 = vmatpush2.msra.mxu0 0.0
    %4793 = vmatprep.subr.mxu0 0.0
    %4794 = vmatpush2.msra.mxu0 0.0
    %4795 = vmatprep.subr.mxu0 0.0
    %4796 = vmatpush2.msra.mxu0 0.0
    %4797 = vmatprep.subr.mxu0 0.0
    %4798 = vmatpush2.msra.mxu0 0.0
    %4799 = vmatprep.subr.mxu0 0.0
    %4800 = vmatpush2.msra.mxu0 0.0
    %4801 = vmatprep.subr.mxu0 0.0
    %4802 = vmatpush2.msra.mxu0 0.0
    %4803 = vmatprep.subr.mxu0 0.0
    %4804 = vmatpush2.msra.mxu0 0.0
    %4805 = vmatprep.subr.mxu0 0.0
    %4806 = vmatpush2.msra.mxu0 0.0
    %4807 = vmatprep.subr.mxu0 0.0
    %4808 = vmatpush2.msra.mxu0 0.0
    %4809 = vmatprep.mubr.f32.mxu0 0.0
    %v4810 = vand.u32 %v4350, 4294901760
    %4811 = vmatmul.mubr.f32.gmra.mxu0 %v4810
    %v4812 = vpop.f32.mrf.mxu0
    %v4813 = vadd.f32 %v4739, %v4812
    %v4814 = vpop.f32.mrf.mxu0
    %v4815 = vadd.f32 %v4741, %v4814
    %4816 = vdwg.mxu0
    %v4818 = vsel %vm3880, %v84, 0
    %4820 = vmatprep.subr.mxu0 0.0
    %4821 = vmatpush1.msra.mxu0 0.0
    %4822 = vmatprep.subr.mxu0 0.0
    %4823 = vmatpush1.msra.mxu0 0.0
    %4824 = vmatprep.subr.mxu0 0.0
    %4825 = vmatpush1.msra.mxu0 0.0
    %4826 = vmatprep.subr.mxu0 0.0
    %4827 = vmatpush1.msra.mxu0 0.0
    %4828 = vmatprep.subr.mxu0 0.0
    %4829 = vmatpush1.msra.mxu0 0.0
    %4830 = vmatprep.subr.mxu0 0.0
    %4831 = vmatpush1.msra.mxu0 0.0
    %4832 = vmatprep.subr.mxu0 0.0
    %4833 = vmatpush1.msra.mxu0 0.0
    %4834 = vmatprep.subr.mxu0 0.0
    %4835 = vmatpush1.msra.mxu0 0.0
    %4836 = vmatprep.subr.mxu0 0.0
    %4837 = vmatpush1.msra.mxu0 0.0
    %4838 = vmatprep.subr.mxu0 0.0
    %4839 = vmatpush1.msra.mxu0 0.0
    %4840 = vmatprep.subr.mxu0 0.0
    %4841 = vmatpush1.msra.mxu0 0.0
    %4842 = vmatprep.subr.mxu0 0.0
    %4843 = vmatpush1.msra.mxu0 0.0
    %4844 = vmatprep.subr.mxu0 0.0
    %4845 = vmatpush1.msra.mxu0 0.0
    %4846 = vmatprep.subr.mxu0 0.0
    %4847 = vmatpush1.msra.mxu0 0.0
    %4848 = vmatprep.subr.mxu0 0.0
    %4849 = vmatpush1.msra.mxu0 0.0
    %v4850 = vand.u32 %v94, 4294901760
    %4851 = vmatprep.subr.mxu0 %v4850
    %v4852 = vand.u32 %v93, 4294901760
    %4853 = vmatpush1.msra.mxu0 %v4852
    %4854 = vmatprep.subr.mxu0 0.0
    %4855 = vmatpush2.msra.mxu0 0.0
    %4856 = vmatprep.subr.mxu0 0.0
    %4857 = vmatpush2.msra.mxu0 0.0
    %4858 = vmatprep.subr.mxu0 0.0
    %4859 = vmatpush2.msra.mxu0 0.0
    %4860 = vmatprep.subr.mxu0 0.0
    %4861 = vmatpush2.msra.mxu0 0.0
    %4862 = vmatprep.subr.mxu0 0.0
    %4863 = vmatpush2.msra.mxu0 0.0
    %4864 = vmatprep.subr.mxu0 0.0
    %4865 = vmatpush2.msra.mxu0 0.0
    %4866 = vmatprep.subr.mxu0 0.0
    %4867 = vmatpush2.msra.mxu0 0.0
    %4868 = vmatprep.subr.mxu0 0.0
    %4869 = vmatpush2.msra.mxu0 0.0
    %4870 = vmatprep.subr.mxu0 0.0
    %4871 = vmatpush2.msra.mxu0 0.0
    %4872 = vmatprep.subr.mxu0 0.0
    %4873 = vmatpush2.msra.mxu0 0.0
    %4874 = vmatprep.subr.mxu0 0.0
    %4875 = vmatpush2.msra.mxu0 0.0
    %4876 = vmatprep.subr.mxu0 0.0
    %4877 = vmatpush2.msra.mxu0 0.0
    %4878 = vmatprep.subr.mxu0 0.0
    %4879 = vmatpush2.msra.mxu0 0.0
    %4880 = vmatprep.subr.mxu0 0.0
    %4881 = vmatpush2.msra.mxu0 0.0
    %4882 = vmatprep.subr.mxu0 0.0
    %4883 = vmatpush2.msra.mxu0 0.0
    %4884 = vmatprep.subr.mxu0 0.0
    %4885 = vmatpush2.msra.mxu0 0.0
    %4886 = vmatprep.mubr.f32.mxu0 0.0
    %v4887 = vand.u32 %v4818, 4294901760
    %v4888 = vsub.f32 %v4818, %v4887
    %v4889 = vand.u32 %v4888, 4294901760
    %v4890 = vsub.f32 %v4888, %v4889
    %v4891 = vand.u32 %v4890, 4294901760
    %4892 = vmatmul.mubr.f32.gmra.mxu0 %v4891
    %v4893 = vpop.f32.mrf.mxu0
    %v4894 = vadd.f32 0.0, %v4893
    %v4895 = vpop.f32.mrf.mxu0
    %v4896 = vadd.f32 0.0, %v4895
    %4897 = vdwg.mxu0
    %4898 = vmatprep.subr.mxu0 0.0
    %4899 = vmatpush1.msra.mxu0 0.0
    %4900 = vmatprep.subr.mxu0 0.0
    %4901 = vmatpush1.msra.mxu0 0.0
    %4902 = vmatprep.subr.mxu0 0.0
    %4903 = vmatpush1.msra.mxu0 0.0
    %4904 = vmatprep.subr.mxu0 0.0
    %4905 = vmatpush1.msra.mxu0 0.0
    %4906 = vmatprep.subr.mxu0 0.0
    %4907 = vmatpush1.msra.mxu0 0.0
    %4908 = vmatprep.subr.mxu0 0.0
    %4909 = vmatpush1.msra.mxu0 0.0
    %4910 = vmatprep.subr.mxu0 0.0
    %4911 = vmatpush1.msra.mxu0 0.0
    %4912 = vmatprep.subr.mxu0 0.0
    %4913 = vmatpush1.msra.mxu0 0.0
    %4914 = vmatprep.subr.mxu0 0.0
    %4915 = vmatpush1.msra.mxu0 0.0
    %4916 = vmatprep.subr.mxu0 0.0
    %4917 = vmatpush1.msra.mxu0 0.0
    %4918 = vmatprep.subr.mxu0 0.0
    %4919 = vmatpush1.msra.mxu0 0.0
    %4920 = vmatprep.subr.mxu0 0.0
    %4921 = vmatpush1.msra.mxu0 0.0
    %4922 = vmatprep.subr.mxu0 0.0
    %4923 = vmatpush1.msra.mxu0 0.0
    %4924 = vmatprep.subr.mxu0 0.0
    %4925 = vmatpush1.msra.mxu0 0.0
    %4926 = vmatprep.subr.mxu0 0.0
    %4927 = vmatpush1.msra.mxu0 0.0
    %v4928 = vand.u32 %v94, 4294901760
    %v4929 = vsub.f32 %v94, %v4928
    %v4930 = vand.u32 %v4929, 4294901760
    %v4931 = vsub.f32 %v4929, %v4930
    %v4932 = vand.u32 %v4931, 4294901760
    %4933 = vmatprep.subr.mxu0 %v4932
    %v4934 = vand.u32 %v93, 4294901760
    %v4935 = vsub.f32 %v93, %v4934
    %v4936 = vand.u32 %v4935, 4294901760
    %v4937 = vsub.f32 %v4935, %v4936
    %v4938 = vand.u32 %v4937, 4294901760
    %4939 = vmatpush1.msra.mxu0 %v4938
    %4940 = vmatprep.subr.mxu0 0.0
    %4941 = vmatpush2.msra.mxu0 0.0
    %4942 = vmatprep.subr.mxu0 0.0
    %4943 = vmatpush2.msra.mxu0 0.0
    %4944 = vmatprep.subr.mxu0 0.0
    %4945 = vmatpush2.msra.mxu0 0.0
    %4946 = vmatprep.subr.mxu0 0.0
    %4947 = vmatpush2.msra.mxu0 0.0
    %4948 = vmatprep.subr.mxu0 0.0
    %4949 = vmatpush2.msra.mxu0 0.0
    %4950 = vmatprep.subr.mxu0 0.0
    %4951 = vmatpush2.msra.mxu0 0.0
    %4952 = vmatprep.subr.mxu0 0.0
    %4953 = vmatpush2.msra.mxu0 0.0
    %4954 = vmatprep.subr.mxu0 0.0
    %4955 = vmatpush2.msra.mxu0 0.0
    %4956 = vmatprep.subr.mxu0 0.0
    %4957 = vmatpush2.msra.mxu0 0.0
    %4958 = vmatprep.subr.mxu0 0.0
    %4959 = vmatpush2.msra.mxu0 0.0
    %4960 = vmatprep.subr.mxu0 0.0
    %4961 = vmatpush2.msra.mxu0 0.0
    %4962 = vmatprep.subr.mxu0 0.0
    %4963 = vmatpush2.msra.mxu0 0.0
    %4964 = vmatprep.subr.mxu0 0.0
    %4965 = vmatpush2.msra.mxu0 0.0
    %4966 = vmatprep.subr.mxu0 0.0
    %4967 = vmatpush2.msra.mxu0 0.0
    %4968 = vmatprep.subr.mxu0 0.0
    %4969 = vmatpush2.msra.mxu0 0.0
    %4970 = vmatprep.subr.mxu0 0.0
    %4971 = vmatpush2.msra.mxu0 0.0
    %4972 = vmatprep.mubr.f32.mxu0 0.0
    %v4973 = vand.u32 %v4818, 4294901760
    %4974 = vmatmul.mubr.f32.gmra.mxu0 %v4973
    %v4975 = vpop.f32.mrf.mxu0
    %v4976 = vadd.f32 %v4894, %v4975
    %v4977 = vpop.f32.mrf.mxu0
    %v4978 = vadd.f32 %v4896, %v4977
    %4979 = vdwg.mxu0
    %4980 = vmatprep.subr.mxu0 0.0
    %4981 = vmatpush1.msra.mxu0 0.0
    %4982 = vmatprep.subr.mxu0 0.0
    %4983 = vmatpush1.msra.mxu0 0.0
    %4984 = vmatprep.subr.mxu0 0.0
    %4985 = vmatpush1.msra.mxu0 0.0
    %4986 = vmatprep.subr.mxu0 0.0
    %4987 = vmatpush1.msra.mxu0 0.0
    %4988 = vmatprep.subr.mxu0 0.0
    %4989 = vmatpush1.msra.mxu0 0.0
    %4990 = vmatprep.subr.mxu0 0.0
    %4991 = vmatpush1.msra.mxu0 0.0
    %4992 = vmatprep.subr.mxu0 0.0
    %4993 = vmatpush1.msra.mxu0 0.0
    %4994 = vmatprep.subr.mxu0 0.0
    %4995 = vmatpush1.msra.mxu0 0.0
    %4996 = vmatprep.subr.mxu0 0.0
    %4997 = vmatpush1.msra.mxu0 0.0
    %4998 = vmatprep.subr.mxu0 0.0
    %4999 = vmatpush1.msra.mxu0 0.0
    %5000 = vmatprep.subr.mxu0 0.0
    %5001 = vmatpush1.msra.mxu0 0.0
    %5002 = vmatprep.subr.mxu0 0.0
    %5003 = vmatpush1.msra.mxu0 0.0
    %5004 = vmatprep.subr.mxu0 0.0
    %5005 = vmatpush1.msra.mxu0 0.0
    %5006 = vmatprep.subr.mxu0 0.0
    %5007 = vmatpush1.msra.mxu0 0.0
    %5008 = vmatprep.subr.mxu0 0.0
    %5009 = vmatpush1.msra.mxu0 0.0
    %v5010 = vand.u32 %v94, 4294901760
    %v5011 = vsub.f32 %v94, %v5010
    %5012 = vmatprep.subr.mxu0 %v5011
    %v5013 = vand.u32 %v93, 4294901760
    %v5014 = vsub.f32 %v93, %v5013
    %5015 = vmatpush1.msra.mxu0 %v5014
    %5016 = vmatprep.subr.mxu0 0.0
    %5017 = vmatpush2.msra.mxu0 0.0
    %5018 = vmatprep.subr.mxu0 0.0
    %5019 = vmatpush2.msra.mxu0 0.0
    %5020 = vmatprep.subr.mxu0 0.0
    %5021 = vmatpush2.msra.mxu0 0.0
    %5022 = vmatprep.subr.mxu0 0.0
    %5023 = vmatpush2.msra.mxu0 0.0
    %5024 = vmatprep.subr.mxu0 0.0
    %5025 = vmatpush2.msra.mxu0 0.0
    %5026 = vmatprep.subr.mxu0 0.0
    %5027 = vmatpush2.msra.mxu0 0.0
    %5028 = vmatprep.subr.mxu0 0.0
    %5029 = vmatpush2.msra.mxu0 0.0
    %5030 = vmatprep.subr.mxu0 0.0
    %5031 = vmatpush2.msra.mxu0 0.0
    %5032 = vmatprep.subr.mxu0 0.0
    %5033 = vmatpush2.msra.mxu0 0.0
    %5034 = vmatprep.subr.mxu0 0.0
    %5035 = vmatpush2.msra.mxu0 0.0
    %5036 = vmatprep.subr.mxu0 0.0
    %5037 = vmatpush2.msra.mxu0 0.0
    %5038 = vmatprep.subr.mxu0 0.0
    %5039 = vmatpush2.msra.mxu0 0.0
    %5040 = vmatprep.subr.mxu0 0.0
    %5041 = vmatpush2.msra.mxu0 0.0
    %5042 = vmatprep.subr.mxu0 0.0
    %5043 = vmatpush2.msra.mxu0 0.0
    %5044 = vmatprep.subr.mxu0 0.0
    %5045 = vmatpush2.msra.mxu0 0.0
    %5046 = vmatprep.subr.mxu0 0.0
    %5047 = vmatpush2.msra.mxu0 0.0
    %5048 = vmatprep.mubr.f32.mxu0 0.0
    %v5049 = vand.u32 %v4818, 4294901760
    %v5050 = vsub.f32 %v4818, %v5049
    %5051 = vmatmul.mubr.f32.gmra.mxu0 %v5050
    %v5052 = vpop.f32.mrf.mxu0
    %v5053 = vadd.f32 %v4976, %v5052
    %v5054 = vpop.f32.mrf.mxu0
    %v5055 = vadd.f32 %v4978, %v5054
    %5056 = vdwg.mxu0
    %5057 = vmatprep.subr.mxu0 0.0
    %5058 = vmatpush1.msra.mxu0 0.0
    %5059 = vmatprep.subr.mxu0 0.0
    %5060 = vmatpush1.msra.mxu0 0.0
    %5061 = vmatprep.subr.mxu0 0.0
    %5062 = vmatpush1.msra.mxu0 0.0
    %5063 = vmatprep.subr.mxu0 0.0
    %5064 = vmatpush1.msra.mxu0 0.0
    %5065 = vmatprep.subr.mxu0 0.0
    %5066 = vmatpush1.msra.mxu0 0.0
    %5067 = vmatprep.subr.mxu0 0.0
    %5068 = vmatpush1.msra.mxu0 0.0
    %5069 = vmatprep.subr.mxu0 0.0
    %5070 = vmatpush1.msra.mxu0 0.0
    %5071 = vmatprep.subr.mxu0 0.0
    %5072 = vmatpush1.msra.mxu0 0.0
    %5073 = vmatprep.subr.mxu0 0.0
    %5074 = vmatpush1.msra.mxu0 0.0
    %5075 = vmatprep.subr.mxu0 0.0
    %5076 = vmatpush1.msra.mxu0 0.0
    %5077 = vmatprep.subr.mxu0 0.0
    %5078 = vmatpush1.msra.mxu0 0.0
    %5079 = vmatprep.subr.mxu0 0.0
    %5080 = vmatpush1.msra.mxu0 0.0
    %5081 = vmatprep.subr.mxu0 0.0
    %5082 = vmatpush1.msra.mxu0 0.0
    %5083 = vmatprep.subr.mxu0 0.0
    %5084 = vmatpush1.msra.mxu0 0.0
    %5085 = vmatprep.subr.mxu0 0.0
    %5086 = vmatpush1.msra.mxu0 0.0
    %v5087 = vand.u32 %v94, 4294901760
    %5088 = vmatprep.subr.mxu0 %v5087
    %v5089 = vand.u32 %v93, 4294901760
    %5090 = vmatpush1.msra.mxu0 %v5089
    %5091 = vmatprep.subr.mxu0 0.0
    %5092 = vmatpush2.msra.mxu0 0.0
    %5093 = vmatprep.subr.mxu0 0.0
    %5094 = vmatpush2.msra.mxu0 0.0
    %5095 = vmatprep.subr.mxu0 0.0
    %5096 = vmatpush2.msra.mxu0 0.0
    %5097 = vmatprep.subr.mxu0 0.0
    %5098 = vmatpush2.msra.mxu0 0.0
    %5099 = vmatprep.subr.mxu0 0.0
    %5100 = vmatpush2.msra.mxu0 0.0
    %5101 = vmatprep.subr.mxu0 0.0
    %5102 = vmatpush2.msra.mxu0 0.0
    %5103 = vmatprep.subr.mxu0 0.0
    %5104 = vmatpush2.msra.mxu0 0.0
    %5105 = vmatprep.subr.mxu0 0.0
    %5106 = vmatpush2.msra.mxu0 0.0
    %5107 = vmatprep.subr.mxu0 0.0
    %5108 = vmatpush2.msra.mxu0 0.0
    %5109 = vmatprep.subr.mxu0 0.0
    %5110 = vmatpush2.msra.mxu0 0.0
    %5111 = vmatprep.subr.mxu0 0.0
    %5112 = vmatpush2.msra.mxu0 0.0
    %5113 = vmatprep.subr.mxu0 0.0
    %5114 = vmatpush2.msra.mxu0 0.0
    %5115 = vmatprep.subr.mxu0 0.0
    %5116 = vmatpush2.msra.mxu0 0.0
    %5117 = vmatprep.subr.mxu0 0.0
    %5118 = vmatpush2.msra.mxu0 0.0
    %5119 = vmatprep.subr.mxu0 0.0
    %5120 = vmatpush2.msra.mxu0 0.0
    %5121 = vmatprep.subr.mxu0 0.0
    %5122 = vmatpush2.msra.mxu0 0.0
    %5123 = vmatprep.mubr.f32.mxu0 0.0
    %v5124 = vand.u32 %v4818, 4294901760
    %v5125 = vsub.f32 %v4818, %v5124
    %v5126 = vand.u32 %v5125, 4294901760
    %5127 = vmatmul.mubr.f32.gmra.mxu0 %v5126
    %v5128 = vpop.f32.mrf.mxu0
    %v5129 = vadd.f32 %v5053, %v5128
    %v5130 = vpop.f32.mrf.mxu0
    %v5131 = vadd.f32 %v5055, %v5130
    %5132 = vdwg.mxu0
    %5133 = vmatprep.subr.mxu0 0.0
    %5134 = vmatpush1.msra.mxu0 0.0
    %5135 = vmatprep.subr.mxu0 0.0
    %5136 = vmatpush1.msra.mxu0 0.0
    %5137 = vmatprep.subr.mxu0 0.0
    %5138 = vmatpush1.msra.mxu0 0.0
    %5139 = vmatprep.subr.mxu0 0.0
    %5140 = vmatpush1.msra.mxu0 0.0
    %5141 = vmatprep.subr.mxu0 0.0
    %5142 = vmatpush1.msra.mxu0 0.0
    %5143 = vmatprep.subr.mxu0 0.0
    %5144 = vmatpush1.msra.mxu0 0.0
    %5145 = vmatprep.subr.mxu0 0.0
    %5146 = vmatpush1.msra.mxu0 0.0
    %5147 = vmatprep.subr.mxu0 0.0
    %5148 = vmatpush1.msra.mxu0 0.0
    %5149 = vmatprep.subr.mxu0 0.0
    %5150 = vmatpush1.msra.mxu0 0.0
    %5151 = vmatprep.subr.mxu0 0.0
    %5152 = vmatpush1.msra.mxu0 0.0
    %5153 = vmatprep.subr.mxu0 0.0
    %5154 = vmatpush1.msra.mxu0 0.0
    %5155 = vmatprep.subr.mxu0 0.0
    %5156 = vmatpush1.msra.mxu0 0.0
    %5157 = vmatprep.subr.mxu0 0.0
    %5158 = vmatpush1.msra.mxu0 0.0
    %5159 = vmatprep.subr.mxu0 0.0
    %5160 = vmatpush1.msra.mxu0 0.0
    %5161 = vmatprep.subr.mxu0 0.0
    %5162 = vmatpush1.msra.mxu0 0.0
    %v5163 = vand.u32 %v94, 4294901760
    %v5164 = vsub.f32 %v94, %v5163
    %v5165 = vand.u32 %v5164, 4294901760
    %5166 = vmatprep.subr.mxu0 %v5165
    %v5167 = vand.u32 %v93, 4294901760
    %v5168 = vsub.f32 %v93, %v5167
    %v5169 = vand.u32 %v5168, 4294901760
    %5170 = vmatpush1.msra.mxu0 %v5169
    %5171 = vmatprep.subr.mxu0 0.0
    %5172 = vmatpush2.msra.mxu0 0.0
    %5173 = vmatprep.subr.mxu0 0.0
    %5174 = vmatpush2.msra.mxu0 0.0
    %5175 = vmatprep.subr.mxu0 0.0
    %5176 = vmatpush2.msra.mxu0 0.0
    %5177 = vmatprep.subr.mxu0 0.0
    %5178 = vmatpush2.msra.mxu0 0.0
    %5179 = vmatprep.subr.mxu0 0.0
    %5180 = vmatpush2.msra.mxu0 0.0
    %5181 = vmatprep.subr.mxu0 0.0
    %5182 = vmatpush2.msra.mxu0 0.0
    %5183 = vmatprep.subr.mxu0 0.0
    %5184 = vmatpush2.msra.mxu0 0.0
    %5185 = vmatprep.subr.mxu0 0.0
    %5186 = vmatpush2.msra.mxu0 0.0
    %5187 = vmatprep.subr.mxu0 0.0
    %5188 = vmatpush2.msra.mxu0 0.0
    %5189 = vmatprep.subr.mxu0 0.0
    %5190 = vmatpush2.msra.mxu0 0.0
    %5191 = vmatprep.subr.mxu0 0.0
    %5192 = vmatpush2.msra.mxu0 0.0
    %5193 = vmatprep.subr.mxu0 0.0
    %5194 = vmatpush2.msra.mxu0 0.0
    %5195 = vmatprep.subr.mxu0 0.0
    %5196 = vmatpush2.msra.mxu0 0.0
    %5197 = vmatprep.subr.mxu0 0.0
    %5198 = vmatpush2.msra.mxu0 0.0
    %5199 = vmatprep.subr.mxu0 0.0
    %5200 = vmatpush2.msra.mxu0 0.0
    %5201 = vmatprep.subr.mxu0 0.0
    %5202 = vmatpush2.msra.mxu0 0.0
    %5203 = vmatprep.mubr.f32.mxu0 0.0
    %v5204 = vand.u32 %v4818, 4294901760
    %5205 = vmatmul.mubr.f32.gmra.mxu0 %v5204
    %v5206 = vpop.f32.mrf.mxu0
    %v5207 = vadd.f32 %v5129, %v5206
    %v5208 = vpop.f32.mrf.mxu0
    %v5209 = vadd.f32 %v5131, %v5208
    %5210 = vdwg.mxu0
    %5211 = vmatprep.subr.mxu0 0.0
    %5212 = vmatpush1.msra.mxu0 0.0
    %5213 = vmatprep.subr.mxu0 0.0
    %5214 = vmatpush1.msra.mxu0 0.0
    %5215 = vmatprep.subr.mxu0 0.0
    %5216 = vmatpush1.msra.mxu0 0.0
    %5217 = vmatprep.subr.mxu0 0.0
    %5218 = vmatpush1.msra.mxu0 0.0
    %5219 = vmatprep.subr.mxu0 0.0
    %5220 = vmatpush1.msra.mxu0 0.0
    %5221 = vmatprep.subr.mxu0 0.0
    %5222 = vmatpush1.msra.mxu0 0.0
    %5223 = vmatprep.subr.mxu0 0.0
    %5224 = vmatpush1.msra.mxu0 0.0
    %5225 = vmatprep.subr.mxu0 0.0
    %5226 = vmatpush1.msra.mxu0 0.0
    %5227 = vmatprep.subr.mxu0 0.0
    %5228 = vmatpush1.msra.mxu0 0.0
    %5229 = vmatprep.subr.mxu0 0.0
    %5230 = vmatpush1.msra.mxu0 0.0
    %5231 = vmatprep.subr.mxu0 0.0
    %5232 = vmatpush1.msra.mxu0 0.0
    %5233 = vmatprep.subr.mxu0 0.0
    %5234 = vmatpush1.msra.mxu0 0.0
    %5235 = vmatprep.subr.mxu0 0.0
    %5236 = vmatpush1.msra.mxu0 0.0
    %5237 = vmatprep.subr.mxu0 0.0
    %5238 = vmatpush1.msra.mxu0 0.0
    %5239 = vmatprep.subr.mxu0 0.0
    %5240 = vmatpush1.msra.mxu0 0.0
    %v5241 = vand.u32 %v94, 4294901760
    %5242 = vmatprep.subr.mxu0 %v5241
    %v5243 = vand.u32 %v93, 4294901760
    %5244 = vmatpush1.msra.mxu0 %v5243
    %5245 = vmatprep.subr.mxu0 0.0
    %5246 = vmatpush2.msra.mxu0 0.0
    %5247 = vmatprep.subr.mxu0 0.0
    %5248 = vmatpush2.msra.mxu0 0.0
    %5249 = vmatprep.subr.mxu0 0.0
    %5250 = vmatpush2.msra.mxu0 0.0
    %5251 = vmatprep.subr.mxu0 0.0
    %5252 = vmatpush2.msra.mxu0 0.0
    %5253 = vmatprep.subr.mxu0 0.0
    %5254 = vmatpush2.msra.mxu0 0.0
    %5255 = vmatprep.subr.mxu0 0.0
    %5256 = vmatpush2.msra.mxu0 0.0
    %5257 = vmatprep.subr.mxu0 0.0
    %5258 = vmatpush2.msra.mxu0 0.0
    %5259 = vmatprep.subr.mxu0 0.0
    %5260 = vmatpush2.msra.mxu0 0.0
    %5261 = vmatprep.subr.mxu0 0.0
    %5262 = vmatpush2.msra.mxu0 0.0
    %5263 = vmatprep.subr.mxu0 0.0
    %5264 = vmatpush2.msra.mxu0 0.0
    %5265 = vmatprep.subr.mxu0 0.0
    %5266 = vmatpush2.msra.mxu0 0.0
    %5267 = vmatprep.subr.mxu0 0.0
    %5268 = vmatpush2.msra.mxu0 0.0
    %5269 = vmatprep.subr.mxu0 0.0
    %5270 = vmatpush2.msra.mxu0 0.0
    %5271 = vmatprep.subr.mxu0 0.0
    %5272 = vmatpush2.msra.mxu0 0.0
    %5273 = vmatprep.subr.mxu0 0.0
    %5274 = vmatpush2.msra.mxu0 0.0
    %5275 = vmatprep.subr.mxu0 0.0
    %5276 = vmatpush2.msra.mxu0 0.0
    %5277 = vmatprep.mubr.f32.mxu0 0.0
    %v5278 = vand.u32 %v4818, 4294901760
    %5279 = vmatmul.mubr.f32.gmra.mxu0 %v5278
    %v5280 = vpop.f32.mrf.mxu0
    %v5281 = vadd.f32 %v5207, %v5280
    %v5282 = vpop.f32.mrf.mxu0
    %v5283 = vadd.f32 %v5209, %v5282
    %5284 = vdwg.mxu0
    %v5286 = vsel %vm3880, %v83, 0
    %5288 = vmatprep.subr.mxu0 0.0
    %5289 = vmatpush1.msra.mxu0 0.0
    %5290 = vmatprep.subr.mxu0 0.0
    %5291 = vmatpush1.msra.mxu0 0.0
    %5292 = vmatprep.subr.mxu0 0.0
    %5293 = vmatpush1.msra.mxu0 0.0
    %5294 = vmatprep.subr.mxu0 0.0
    %5295 = vmatpush1.msra.mxu0 0.0
    %5296 = vmatprep.subr.mxu0 0.0
    %5297 = vmatpush1.msra.mxu0 0.0
    %5298 = vmatprep.subr.mxu0 0.0
    %5299 = vmatpush1.msra.mxu0 0.0
    %5300 = vmatprep.subr.mxu0 0.0
    %5301 = vmatpush1.msra.mxu0 0.0
    %5302 = vmatprep.subr.mxu0 0.0
    %5303 = vmatpush1.msra.mxu0 0.0
    %5304 = vmatprep.subr.mxu0 0.0
    %5305 = vmatpush1.msra.mxu0 0.0
    %5306 = vmatprep.subr.mxu0 0.0
    %5307 = vmatpush1.msra.mxu0 0.0
    %5308 = vmatprep.subr.mxu0 0.0
    %5309 = vmatpush1.msra.mxu0 0.0
    %5310 = vmatprep.subr.mxu0 0.0
    %5311 = vmatpush1.msra.mxu0 0.0
    %5312 = vmatprep.subr.mxu0 0.0
    %5313 = vmatpush1.msra.mxu0 0.0
    %5314 = vmatprep.subr.mxu0 0.0
    %5315 = vmatpush1.msra.mxu0 0.0
    %5316 = vmatprep.subr.mxu0 0.0
    %5317 = vmatpush1.msra.mxu0 0.0
    %v5318 = vand.u32 %v92, 4294901760
    %5319 = vmatprep.subr.mxu0 %v5318
    %v5320 = vand.u32 %v91, 4294901760
    %5321 = vmatpush1.msra.mxu0 %v5320
    %5322 = vmatprep.subr.mxu0 0.0
    %5323 = vmatpush2.msra.mxu0 0.0
    %5324 = vmatprep.subr.mxu0 0.0
    %5325 = vmatpush2.msra.mxu0 0.0
    %5326 = vmatprep.subr.mxu0 0.0
    %5327 = vmatpush2.msra.mxu0 0.0
    %5328 = vmatprep.subr.mxu0 0.0
    %5329 = vmatpush2.msra.mxu0 0.0
    %5330 = vmatprep.subr.mxu0 0.0
    %5331 = vmatpush2.msra.mxu0 0.0
    %5332 = vmatprep.subr.mxu0 0.0
    %5333 = vmatpush2.msra.mxu0 0.0
    %5334 = vmatprep.subr.mxu0 0.0
    %5335 = vmatpush2.msra.mxu0 0.0
    %5336 = vmatprep.subr.mxu0 0.0
    %5337 = vmatpush2.msra.mxu0 0.0
    %5338 = vmatprep.subr.mxu0 0.0
    %5339 = vmatpush2.msra.mxu0 0.0
    %5340 = vmatprep.subr.mxu0 0.0
    %5341 = vmatpush2.msra.mxu0 0.0
    %5342 = vmatprep.subr.mxu0 0.0
    %5343 = vmatpush2.msra.mxu0 0.0
    %5344 = vmatprep.subr.mxu0 0.0
    %5345 = vmatpush2.msra.mxu0 0.0
    %5346 = vmatprep.subr.mxu0 0.0
    %5347 = vmatpush2.msra.mxu0 0.0
    %5348 = vmatprep.subr.mxu0 0.0
    %5349 = vmatpush2.msra.mxu0 0.0
    %5350 = vmatprep.subr.mxu0 0.0
    %5351 = vmatpush2.msra.mxu0 0.0
    %5352 = vmatprep.subr.mxu0 0.0
    %5353 = vmatpush2.msra.mxu0 0.0
    %5354 = vmatprep.mubr.f32.mxu0 0.0
    %v5355 = vand.u32 %v5286, 4294901760
    %v5356 = vsub.f32 %v5286, %v5355
    %v5357 = vand.u32 %v5356, 4294901760
    %v5358 = vsub.f32 %v5356, %v5357
    %v5359 = vand.u32 %v5358, 4294901760
    %5360 = vmatmul.mubr.f32.gmra.mxu0 %v5359
    %v5361 = vpop.f32.mrf.mxu0
    %v5362 = vadd.f32 %v5281, %v5361
    %v5363 = vpop.f32.mrf.mxu0
    %v5364 = vadd.f32 %v5283, %v5363
    %5365 = vdwg.mxu0
    %5366 = vmatprep.subr.mxu0 0.0
    %5367 = vmatpush1.msra.mxu0 0.0
    %5368 = vmatprep.subr.mxu0 0.0
    %5369 = vmatpush1.msra.mxu0 0.0
    %5370 = vmatprep.subr.mxu0 0.0
    %5371 = vmatpush1.msra.mxu0 0.0
    %5372 = vmatprep.subr.mxu0 0.0
    %5373 = vmatpush1.msra.mxu0 0.0
    %5374 = vmatprep.subr.mxu0 0.0
    %5375 = vmatpush1.msra.mxu0 0.0
    %5376 = vmatprep.subr.mxu0 0.0
    %5377 = vmatpush1.msra.mxu0 0.0
    %5378 = vmatprep.subr.mxu0 0.0
    %5379 = vmatpush1.msra.mxu0 0.0
    %5380 = vmatprep.subr.mxu0 0.0
    %5381 = vmatpush1.msra.mxu0 0.0
    %5382 = vmatprep.subr.mxu0 0.0
    %5383 = vmatpush1.msra.mxu0 0.0
    %5384 = vmatprep.subr.mxu0 0.0
    %5385 = vmatpush1.msra.mxu0 0.0
    %5386 = vmatprep.subr.mxu0 0.0
    %5387 = vmatpush1.msra.mxu0 0.0
    %5388 = vmatprep.subr.mxu0 0.0
    %5389 = vmatpush1.msra.mxu0 0.0
    %5390 = vmatprep.subr.mxu0 0.0
    %5391 = vmatpush1.msra.mxu0 0.0
    %5392 = vmatprep.subr.mxu0 0.0
    %5393 = vmatpush1.msra.mxu0 0.0
    %5394 = vmatprep.subr.mxu0 0.0
    %5395 = vmatpush1.msra.mxu0 0.0
    %v5396 = vand.u32 %v92, 4294901760
    %v5397 = vsub.f32 %v92, %v5396
    %v5398 = vand.u32 %v5397, 4294901760
    %v5399 = vsub.f32 %v5397, %v5398
    %v5400 = vand.u32 %v5399, 4294901760
    %5401 = vmatprep.subr.mxu0 %v5400
    %v5402 = vand.u32 %v91, 4294901760
    %v5403 = vsub.f32 %v91, %v5402
    %v5404 = vand.u32 %v5403, 4294901760
    %v5405 = vsub.f32 %v5403, %v5404
    %v5406 = vand.u32 %v5405, 4294901760
    %5407 = vmatpush1.msra.mxu0 %v5406
    %5408 = vmatprep.subr.mxu0 0.0
    %5409 = vmatpush2.msra.mxu0 0.0
    %5410 = vmatprep.subr.mxu0 0.0
    %5411 = vmatpush2.msra.mxu0 0.0
    %5412 = vmatprep.subr.mxu0 0.0
    %5413 = vmatpush2.msra.mxu0 0.0
    %5414 = vmatprep.subr.mxu0 0.0
    %5415 = vmatpush2.msra.mxu0 0.0
    %5416 = vmatprep.subr.mxu0 0.0
    %5417 = vmatpush2.msra.mxu0 0.0
    %5418 = vmatprep.subr.mxu0 0.0
    %5419 = vmatpush2.msra.mxu0 0.0
    %5420 = vmatprep.subr.mxu0 0.0
    %5421 = vmatpush2.msra.mxu0 0.0
    %5422 = vmatprep.subr.mxu0 0.0
    %5423 = vmatpush2.msra.mxu0 0.0
    %5424 = vmatprep.subr.mxu0 0.0
    %5425 = vmatpush2.msra.mxu0 0.0
    %5426 = vmatprep.subr.mxu0 0.0
    %5427 = vmatpush2.msra.mxu0 0.0
    %5428 = vmatprep.subr.mxu0 0.0
    %5429 = vmatpush2.msra.mxu0 0.0
    %5430 = vmatprep.subr.mxu0 0.0
    %5431 = vmatpush2.msra.mxu0 0.0
    %5432 = vmatprep.subr.mxu0 0.0
    %5433 = vmatpush2.msra.mxu0 0.0
    %5434 = vmatprep.subr.mxu0 0.0
    %5435 = vmatpush2.msra.mxu0 0.0
    %5436 = vmatprep.subr.mxu0 0.0
    %5437 = vmatpush2.msra.mxu0 0.0
    %5438 = vmatprep.subr.mxu0 0.0
    %5439 = vmatpush2.msra.mxu0 0.0
    %5440 = vmatprep.mubr.f32.mxu0 0.0
    %v5441 = vand.u32 %v5286, 4294901760
    %5442 = vmatmul.mubr.f32.gmra.mxu0 %v5441
    %v5443 = vpop.f32.mrf.mxu0
    %v5444 = vadd.f32 %v5362, %v5443
    %v5445 = vpop.f32.mrf.mxu0
    %v5446 = vadd.f32 %v5364, %v5445
    %5447 = vdwg.mxu0
    %5448 = vmatprep.subr.mxu0 0.0
    %5449 = vmatpush1.msra.mxu0 0.0
    %5450 = vmatprep.subr.mxu0 0.0
    %5451 = vmatpush1.msra.mxu0 0.0
    %5452 = vmatprep.subr.mxu0 0.0
    %5453 = vmatpush1.msra.mxu0 0.0
    %5454 = vmatprep.subr.mxu0 0.0
    %5455 = vmatpush1.msra.mxu0 0.0
    %5456 = vmatprep.subr.mxu0 0.0
    %5457 = vmatpush1.msra.mxu0 0.0
    %5458 = vmatprep.subr.mxu0 0.0
    %5459 = vmatpush1.msra.mxu0 0.0
    %5460 = vmatprep.subr.mxu0 0.0
    %5461 = vmatpush1.msra.mxu0 0.0
    %5462 = vmatprep.subr.mxu0 0.0
    %5463 = vmatpush1.msra.mxu0 0.0
    %5464 = vmatprep.subr.mxu0 0.0
    %5465 = vmatpush1.msra.mxu0 0.0
    %5466 = vmatprep.subr.mxu0 0.0
    %5467 = vmatpush1.msra.mxu0 0.0
    %5468 = vmatprep.subr.mxu0 0.0
    %5469 = vmatpush1.msra.mxu0 0.0
    %5470 = vmatprep.subr.mxu0 0.0
    %5471 = vmatpush1.msra.mxu0 0.0
    %5472 = vmatprep.subr.mxu0 0.0
    %5473 = vmatpush1.msra.mxu0 0.0
    %5474 = vmatprep.subr.mxu0 0.0
    %5475 = vmatpush1.msra.mxu0 0.0
    %5476 = vmatprep.subr.mxu0 0.0
    %5477 = vmatpush1.msra.mxu0 0.0
    %v5478 = vand.u32 %v92, 4294901760
    %v5479 = vsub.f32 %v92, %v5478
    %5480 = vmatprep.subr.mxu0 %v5479
    %v5481 = vand.u32 %v91, 4294901760
    %v5482 = vsub.f32 %v91, %v5481
    %5483 = vmatpush1.msra.mxu0 %v5482
    %5484 = vmatprep.subr.mxu0 0.0
    %5485 = vmatpush2.msra.mxu0 0.0
    %5486 = vmatprep.subr.mxu0 0.0
    %5487 = vmatpush2.msra.mxu0 0.0
    %5488 = vmatprep.subr.mxu0 0.0
    %5489 = vmatpush2.msra.mxu0 0.0
    %5490 = vmatprep.subr.mxu0 0.0
    %5491 = vmatpush2.msra.mxu0 0.0
    %5492 = vmatprep.subr.mxu0 0.0
    %5493 = vmatpush2.msra.mxu0 0.0
    %5494 = vmatprep.subr.mxu0 0.0
    %5495 = vmatpush2.msra.mxu0 0.0
    %5496 = vmatprep.subr.mxu0 0.0
    %5497 = vmatpush2.msra.mxu0 0.0
    %5498 = vmatprep.subr.mxu0 0.0
    %5499 = vmatpush2.msra.mxu0 0.0
    %5500 = vmatprep.subr.mxu0 0.0
    %5501 = vmatpush2.msra.mxu0 0.0
    %5502 = vmatprep.subr.mxu0 0.0
    %5503 = vmatpush2.msra.mxu0 0.0
    %5504 = vmatprep.subr.mxu0 0.0
    %5505 = vmatpush2.msra.mxu0 0.0
    %5506 = vmatprep.subr.mxu0 0.0
    %5507 = vmatpush2.msra.mxu0 0.0
    %5508 = vmatprep.subr.mxu0 0.0
    %5509 = vmatpush2.msra.mxu0 0.0
    %5510 = vmatprep.subr.mxu0 0.0
    %5511 = vmatpush2.msra.mxu0 0.0
    %5512 = vmatprep.subr.mxu0 0.0
    %5513 = vmatpush2.msra.mxu0 0.0
    %5514 = vmatprep.subr.mxu0 0.0
    %5515 = vmatpush2.msra.mxu0 0.0
    %5516 = vmatprep.mubr.f32.mxu0 0.0
    %v5517 = vand.u32 %v5286, 4294901760
    %v5518 = vsub.f32 %v5286, %v5517
    %5519 = vmatmul.mubr.f32.gmra.mxu0 %v5518
    %v5520 = vpop.f32.mrf.mxu0
    %v5521 = vadd.f32 %v5444, %v5520
    %v5522 = vpop.f32.mrf.mxu0
    %v5523 = vadd.f32 %v5446, %v5522
    %5524 = vdwg.mxu0
    %5525 = vmatprep.subr.mxu0 0.0
    %5526 = vmatpush1.msra.mxu0 0.0
    %5527 = vmatprep.subr.mxu0 0.0
    %5528 = vmatpush1.msra.mxu0 0.0
    %5529 = vmatprep.subr.mxu0 0.0
    %5530 = vmatpush1.msra.mxu0 0.0
    %5531 = vmatprep.subr.mxu0 0.0
    %5532 = vmatpush1.msra.mxu0 0.0
    %5533 = vmatprep.subr.mxu0 0.0
    %5534 = vmatpush1.msra.mxu0 0.0
    %5535 = vmatprep.subr.mxu0 0.0
    %5536 = vmatpush1.msra.mxu0 0.0
    %5537 = vmatprep.subr.mxu0 0.0
    %5538 = vmatpush1.msra.mxu0 0.0
    %5539 = vmatprep.subr.mxu0 0.0
    %5540 = vmatpush1.msra.mxu0 0.0
    %5541 = vmatprep.subr.mxu0 0.0
    %5542 = vmatpush1.msra.mxu0 0.0
    %5543 = vmatprep.subr.mxu0 0.0
    %5544 = vmatpush1.msra.mxu0 0.0
    %5545 = vmatprep.subr.mxu0 0.0
    %5546 = vmatpush1.msra.mxu0 0.0
    %5547 = vmatprep.subr.mxu0 0.0
    %5548 = vmatpush1.msra.mxu0 0.0
    %5549 = vmatprep.subr.mxu0 0.0
    %5550 = vmatpush1.msra.mxu0 0.0
    %5551 = vmatprep.subr.mxu0 0.0
    %5552 = vmatpush1.msra.mxu0 0.0
    %5553 = vmatprep.subr.mxu0 0.0
    %5554 = vmatpush1.msra.mxu0 0.0
    %v5555 = vand.u32 %v92, 4294901760
    %5556 = vmatprep.subr.mxu0 %v5555
    %v5557 = vand.u32 %v91, 4294901760
    %5558 = vmatpush1.msra.mxu0 %v5557
    %5559 = vmatprep.subr.mxu0 0.0
    %5560 = vmatpush2.msra.mxu0 0.0
    %5561 = vmatprep.subr.mxu0 0.0
    %5562 = vmatpush2.msra.mxu0 0.0
    %5563 = vmatprep.subr.mxu0 0.0
    %5564 = vmatpush2.msra.mxu0 0.0
    %5565 = vmatprep.subr.mxu0 0.0
    %5566 = vmatpush2.msra.mxu0 0.0
    %5567 = vmatprep.subr.mxu0 0.0
    %5568 = vmatpush2.msra.mxu0 0.0
    %5569 = vmatprep.subr.mxu0 0.0
    %5570 = vmatpush2.msra.mxu0 0.0
    %5571 = vmatprep.subr.mxu0 0.0
    %5572 = vmatpush2.msra.mxu0 0.0
    %5573 = vmatprep.subr.mxu0 0.0
    %5574 = vmatpush2.msra.mxu0 0.0
    %5575 = vmatprep.subr.mxu0 0.0
    %5576 = vmatpush2.msra.mxu0 0.0
    %5577 = vmatprep.subr.mxu0 0.0
    %5578 = vmatpush2.msra.mxu0 0.0
    %5579 = vmatprep.subr.mxu0 0.0
    %5580 = vmatpush2.msra.mxu0 0.0
    %5581 = vmatprep.subr.mxu0 0.0
    %5582 = vmatpush2.msra.mxu0 0.0
    %5583 = vmatprep.subr.mxu0 0.0
    %5584 = vmatpush2.msra.mxu0 0.0
    %5585 = vmatprep.subr.mxu0 0.0
    %5586 = vmatpush2.msra.mxu0 0.0
    %5587 = vmatprep.subr.mxu0 0.0
    %5588 = vmatpush2.msra.mxu0 0.0
    %5589 = vmatprep.subr.mxu0 0.0
    %5590 = vmatpush2.msra.mxu0 0.0
    %5591 = vmatprep.mubr.f32.mxu0 0.0
    %v5592 = vand.u32 %v5286, 4294901760
    %v5593 = vsub.f32 %v5286, %v5592
    %v5594 = vand.u32 %v5593, 4294901760
    %5595 = vmatmul.mubr.f32.gmra.mxu0 %v5594
    %v5596 = vpop.f32.mrf.mxu0
    %v5597 = vadd.f32 %v5521, %v5596
    %v5598 = vpop.f32.mrf.mxu0
    %v5599 = vadd.f32 %v5523, %v5598
    %5600 = vdwg.mxu0
    %5601 = vmatprep.subr.mxu0 0.0
    %5602 = vmatpush1.msra.mxu0 0.0
    %5603 = vmatprep.subr.mxu0 0.0
    %5604 = vmatpush1.msra.mxu0 0.0
    %5605 = vmatprep.subr.mxu0 0.0
    %5606 = vmatpush1.msra.mxu0 0.0
    %5607 = vmatprep.subr.mxu0 0.0
    %5608 = vmatpush1.msra.mxu0 0.0
    %5609 = vmatprep.subr.mxu0 0.0
    %5610 = vmatpush1.msra.mxu0 0.0
    %5611 = vmatprep.subr.mxu0 0.0
    %5612 = vmatpush1.msra.mxu0 0.0
    %5613 = vmatprep.subr.mxu0 0.0
    %5614 = vmatpush1.msra.mxu0 0.0
    %5615 = vmatprep.subr.mxu0 0.0
    %5616 = vmatpush1.msra.mxu0 0.0
    %5617 = vmatprep.subr.mxu0 0.0
    %5618 = vmatpush1.msra.mxu0 0.0
    %5619 = vmatprep.subr.mxu0 0.0
    %5620 = vmatpush1.msra.mxu0 0.0
    %5621 = vmatprep.subr.mxu0 0.0
    %5622 = vmatpush1.msra.mxu0 0.0
    %5623 = vmatprep.subr.mxu0 0.0
    %5624 = vmatpush1.msra.mxu0 0.0
    %5625 = vmatprep.subr.mxu0 0.0
    %5626 = vmatpush1.msra.mxu0 0.0
    %5627 = vmatprep.subr.mxu0 0.0
    %5628 = vmatpush1.msra.mxu0 0.0
    %5629 = vmatprep.subr.mxu0 0.0
    %5630 = vmatpush1.msra.mxu0 0.0
    %v5631 = vand.u32 %v92, 4294901760
    %v5632 = vsub.f32 %v92, %v5631
    %v5633 = vand.u32 %v5632, 4294901760
    %5634 = vmatprep.subr.mxu0 %v5633
    %v5635 = vand.u32 %v91, 4294901760
    %v5636 = vsub.f32 %v91, %v5635
    %v5637 = vand.u32 %v5636, 4294901760
    %5638 = vmatpush1.msra.mxu0 %v5637
    %5639 = vmatprep.subr.mxu0 0.0
    %5640 = vmatpush2.msra.mxu0 0.0
    %5641 = vmatprep.subr.mxu0 0.0
    %5642 = vmatpush2.msra.mxu0 0.0
    %5643 = vmatprep.subr.mxu0 0.0
    %5644 = vmatpush2.msra.mxu0 0.0
    %5645 = vmatprep.subr.mxu0 0.0
    %5646 = vmatpush2.msra.mxu0 0.0
    %5647 = vmatprep.subr.mxu0 0.0
    %5648 = vmatpush2.msra.mxu0 0.0
    %5649 = vmatprep.subr.mxu0 0.0
    %5650 = vmatpush2.msra.mxu0 0.0
    %5651 = vmatprep.subr.mxu0 0.0
    %5652 = vmatpush2.msra.mxu0 0.0
    %5653 = vmatprep.subr.mxu0 0.0
    %5654 = vmatpush2.msra.mxu0 0.0
    %5655 = vmatprep.subr.mxu0 0.0
    %5656 = vmatpush2.msra.mxu0 0.0
    %5657 = vmatprep.subr.mxu0 0.0
    %5658 = vmatpush2.msra.mxu0 0.0
    %5659 = vmatprep.subr.mxu0 0.0
    %5660 = vmatpush2.msra.mxu0 0.0
    %5661 = vmatprep.subr.mxu0 0.0
    %5662 = vmatpush2.msra.mxu0 0.0
    %5663 = vmatprep.subr.mxu0 0.0
    %5664 = vmatpush2.msra.mxu0 0.0
    %5665 = vmatprep.subr.mxu0 0.0
    %5666 = vmatpush2.msra.mxu0 0.0
    %5667 = vmatprep.subr.mxu0 0.0
    %5668 = vmatpush2.msra.mxu0 0.0
    %5669 = vmatprep.subr.mxu0 0.0
    %5670 = vmatpush2.msra.mxu0 0.0
    %5671 = vmatprep.mubr.f32.mxu0 0.0
    %v5672 = vand.u32 %v5286, 4294901760
    %5673 = vmatmul.mubr.f32.gmra.mxu0 %v5672
    %v5674 = vpop.f32.mrf.mxu0
    %v5675 = vadd.f32 %v5597, %v5674
    %v5676 = vpop.f32.mrf.mxu0
    %v5677 = vadd.f32 %v5599, %v5676
    %5678 = vdwg.mxu0
    %5679 = vmatprep.subr.mxu0 0.0
    %5680 = vmatpush1.msra.mxu0 0.0
    %5681 = vmatprep.subr.mxu0 0.0
    %5682 = vmatpush1.msra.mxu0 0.0
    %5683 = vmatprep.subr.mxu0 0.0
    %5684 = vmatpush1.msra.mxu0 0.0
    %5685 = vmatprep.subr.mxu0 0.0
    %5686 = vmatpush1.msra.mxu0 0.0
    %5687 = vmatprep.subr.mxu0 0.0
    %5688 = vmatpush1.msra.mxu0 0.0
    %5689 = vmatprep.subr.mxu0 0.0
    %5690 = vmatpush1.msra.mxu0 0.0
    %5691 = vmatprep.subr.mxu0 0.0
    %5692 = vmatpush1.msra.mxu0 0.0
    %5693 = vmatprep.subr.mxu0 0.0
    %5694 = vmatpush1.msra.mxu0 0.0
    %5695 = vmatprep.subr.mxu0 0.0
    %5696 = vmatpush1.msra.mxu0 0.0
    %5697 = vmatprep.subr.mxu0 0.0
    %5698 = vmatpush1.msra.mxu0 0.0
    %5699 = vmatprep.subr.mxu0 0.0
    %5700 = vmatpush1.msra.mxu0 0.0
    %5701 = vmatprep.subr.mxu0 0.0
    %5702 = vmatpush1.msra.mxu0 0.0
    %5703 = vmatprep.subr.mxu0 0.0
    %5704 = vmatpush1.msra.mxu0 0.0
    %5705 = vmatprep.subr.mxu0 0.0
    %5706 = vmatpush1.msra.mxu0 0.0
    %5707 = vmatprep.subr.mxu0 0.0
    %5708 = vmatpush1.msra.mxu0 0.0
    %v5709 = vand.u32 %v92, 4294901760
    %5710 = vmatprep.subr.mxu0 %v5709
    %v5711 = vand.u32 %v91, 4294901760
    %5712 = vmatpush1.msra.mxu0 %v5711
    %5713 = vmatprep.subr.mxu0 0.0
    %5714 = vmatpush2.msra.mxu0 0.0
    %5715 = vmatprep.subr.mxu0 0.0
    %5716 = vmatpush2.msra.mxu0 0.0
    %5717 = vmatprep.subr.mxu0 0.0
    %5718 = vmatpush2.msra.mxu0 0.0
    %5719 = vmatprep.subr.mxu0 0.0
    %5720 = vmatpush2.msra.mxu0 0.0
    %5721 = vmatprep.subr.mxu0 0.0
    %5722 = vmatpush2.msra.mxu0 0.0
    %5723 = vmatprep.subr.mxu0 0.0
    %5724 = vmatpush2.msra.mxu0 0.0
    %5725 = vmatprep.subr.mxu0 0.0
    %5726 = vmatpush2.msra.mxu0 0.0
    %5727 = vmatprep.subr.mxu0 0.0
    %5728 = vmatpush2.msra.mxu0 0.0
    %5729 = vmatprep.subr.mxu0 0.0
    %5730 = vmatpush2.msra.mxu0 0.0
    %5731 = vmatprep.subr.mxu0 0.0
    %5732 = vmatpush2.msra.mxu0 0.0
    %5733 = vmatprep.subr.mxu0 0.0
    %5734 = vmatpush2.msra.mxu0 0.0
    %5735 = vmatprep.subr.mxu0 0.0
    %5736 = vmatpush2.msra.mxu0 0.0
    %5737 = vmatprep.subr.mxu0 0.0
    %5738 = vmatpush2.msra.mxu0 0.0
    %5739 = vmatprep.subr.mxu0 0.0
    %5740 = vmatpush2.msra.mxu0 0.0
    %5741 = vmatprep.subr.mxu0 0.0
    %5742 = vmatpush2.msra.mxu0 0.0
    %5743 = vmatprep.subr.mxu0 0.0
    %5744 = vmatpush2.msra.mxu0 0.0
    %5745 = vmatprep.mubr.f32.mxu0 0.0
    %v5746 = vand.u32 %v5286, 4294901760
    %5747 = vmatmul.mubr.f32.gmra.mxu0 %v5746
    %v5748 = vpop.f32.mrf.mxu0
    %v5749 = vadd.f32 %v5675, %v5748
    %v5750 = vpop.f32.mrf.mxu0
    %v5751 = vadd.f32 %v5677, %v5750
    %5752 = vdwg.mxu0
    %v5753 = vsub.f32 %v79, %v4813
    %v5754 = vsub.f32 %v80, %v4815
    %v5755 = vadd.f32 %v5753, %v95
    %v5756 = vadd.f32 %v5754, %v96
    %v5757 = vadd.f32 %v5749, %v97
    %v5758 = vadd.f32 %v5751, %v98
    %v5759 = vmax.f32 %v5755, -2.0
    %v5760 = vmax.f32 %v5756, -2.0
    %v5761 = vmin.f32 %v5759, 2.0
    %v5762 = vmin.f32 %v5760, 2.0
    %v5763 = vmax.f32 %v5757, -20.0
    %v5764 = vmax.f32 %v5758, -20.0
    %v5765 = vmin.f32 %v5763, 20.0
    %v5766 = vmin.f32 %v5764, 20.0
    %v5767 = vsub.f32 %v4813, %v95
    %v5768 = vsub.f32 %v4815, %v96
    %v5769 = vadd.f32 %v5761, %v5761
    %v5770 = vadd.f32 %v5762, %v5762
    %v5771 = vadd.f32 %v5767, %v5769
    %v5772 = vadd.f32 %v5768, %v5770
    %v5773 = vadd.f32 %v5765, %v5765
    %v5774 = vadd.f32 %v5766, %v5766
    %v5775 = vsub.f32 %v5757, %v5773
    %v5776 = vsub.f32 %v5758, %v5774
    %5777 = vmatprep.subr.mxu0 0.0
    %5778 = vmatpush1.msra.mxu0 0.0
    %5779 = vmatprep.subr.mxu0 0.0
    %5780 = vmatpush1.msra.mxu0 0.0
    %5781 = vmatprep.subr.mxu0 0.0
    %5782 = vmatpush1.msra.mxu0 0.0
    %5783 = vmatprep.subr.mxu0 0.0
    %5784 = vmatpush1.msra.mxu0 0.0
    %5785 = vmatprep.subr.mxu0 0.0
    %5786 = vmatpush1.msra.mxu0 0.0
    %5787 = vmatprep.subr.mxu0 0.0
    %5788 = vmatpush1.msra.mxu0 0.0
    %5789 = vmatprep.subr.mxu0 0.0
    %5790 = vmatpush1.msra.mxu0 0.0
    %5791 = vmatprep.subr.mxu0 0.0
    %5792 = vmatpush1.msra.mxu0 0.0
    %5793 = vmatprep.subr.mxu0 0.0
    %5794 = vmatpush1.msra.mxu0 0.0
    %5795 = vmatprep.subr.mxu0 0.0
    %5796 = vmatpush1.msra.mxu0 0.0
    %5797 = vmatprep.subr.mxu0 0.0
    %5798 = vmatpush1.msra.mxu0 0.0
    %5799 = vmatprep.subr.mxu0 0.0
    %5800 = vmatpush1.msra.mxu0 0.0
    %5801 = vmatprep.subr.mxu0 0.0
    %5802 = vmatpush1.msra.mxu0 0.0
    %5803 = vmatprep.subr.mxu0 0.0
    %5804 = vmatpush1.msra.mxu0 0.0
    %5805 = vmatprep.subr.mxu0 0.0
    %5806 = vmatpush1.msra.mxu0 0.0
    %v5807 = vand.u32 %v5776, 4294901760
    %5808 = vmatprep.subr.mxu0 %v5807
    %v5809 = vand.u32 %v5775, 4294901760
    %5810 = vmatpush1.msra.mxu0 %v5809
    %5811 = vmatprep.subr.mxu0 0.0
    %5812 = vmatpush2.msra.mxu0 0.0
    %5813 = vmatprep.subr.mxu0 0.0
    %5814 = vmatpush2.msra.mxu0 0.0
    %5815 = vmatprep.subr.mxu0 0.0
    %5816 = vmatpush2.msra.mxu0 0.0
    %5817 = vmatprep.subr.mxu0 0.0
    %5818 = vmatpush2.msra.mxu0 0.0
    %5819 = vmatprep.subr.mxu0 0.0
    %5820 = vmatpush2.msra.mxu0 0.0
    %5821 = vmatprep.subr.mxu0 0.0
    %5822 = vmatpush2.msra.mxu0 0.0
    %5823 = vmatprep.subr.mxu0 0.0
    %5824 = vmatpush2.msra.mxu0 0.0
    %5825 = vmatprep.subr.mxu0 0.0
    %5826 = vmatpush2.msra.mxu0 0.0
    %5827 = vmatprep.subr.mxu0 0.0
    %5828 = vmatpush2.msra.mxu0 0.0
    %5829 = vmatprep.subr.mxu0 0.0
    %5830 = vmatpush2.msra.mxu0 0.0
    %5831 = vmatprep.subr.mxu0 0.0
    %5832 = vmatpush2.msra.mxu0 0.0
    %5833 = vmatprep.subr.mxu0 0.0
    %5834 = vmatpush2.msra.mxu0 0.0
    %5835 = vmatprep.subr.mxu0 0.0
    %5836 = vmatpush2.msra.mxu0 0.0
    %5837 = vmatprep.subr.mxu0 0.0
    %5838 = vmatpush2.msra.mxu0 0.0
    %5839 = vmatprep.subr.mxu0 0.0
    %5840 = vmatpush2.msra.mxu0 0.0
    %5841 = vmatprep.subr.mxu0 0.0
    %5842 = vmatpush2.msra.mxu0 0.0
    %5843 = vmatprep.mubr.f32.mxu0 0.0
    %v5844 = vand.u32 %v3882, 4294901760
    %v5845 = vsub.f32 %v3882, %v5844
    %v5846 = vand.u32 %v5845, 4294901760
    %v5847 = vsub.f32 %v5845, %v5846
    %v5848 = vand.u32 %v5847, 4294901760
    %5849 = vmatmul.mubr.f32.gmra.mxu0 %v5848
    %v5850 = vpop.f32.mrf.mxu0
    %v5851 = vadd.f32 0.0, %v5850
    %v5852 = vpop.f32.mrf.mxu0
    %v5853 = vadd.f32 0.0, %v5852
    %5854 = vdwg.mxu0
    %5855 = vmatprep.subr.mxu0 0.0
    %5856 = vmatpush1.msra.mxu0 0.0
    %5857 = vmatprep.subr.mxu0 0.0
    %5858 = vmatpush1.msra.mxu0 0.0
    %5859 = vmatprep.subr.mxu0 0.0
    %5860 = vmatpush1.msra.mxu0 0.0
    %5861 = vmatprep.subr.mxu0 0.0
    %5862 = vmatpush1.msra.mxu0 0.0
    %5863 = vmatprep.subr.mxu0 0.0
    %5864 = vmatpush1.msra.mxu0 0.0
    %5865 = vmatprep.subr.mxu0 0.0
    %5866 = vmatpush1.msra.mxu0 0.0
    %5867 = vmatprep.subr.mxu0 0.0
    %5868 = vmatpush1.msra.mxu0 0.0
    %5869 = vmatprep.subr.mxu0 0.0
    %5870 = vmatpush1.msra.mxu0 0.0
    %5871 = vmatprep.subr.mxu0 0.0
    %5872 = vmatpush1.msra.mxu0 0.0
    %5873 = vmatprep.subr.mxu0 0.0
    %5874 = vmatpush1.msra.mxu0 0.0
    %5875 = vmatprep.subr.mxu0 0.0
    %5876 = vmatpush1.msra.mxu0 0.0
    %5877 = vmatprep.subr.mxu0 0.0
    %5878 = vmatpush1.msra.mxu0 0.0
    %5879 = vmatprep.subr.mxu0 0.0
    %5880 = vmatpush1.msra.mxu0 0.0
    %5881 = vmatprep.subr.mxu0 0.0
    %5882 = vmatpush1.msra.mxu0 0.0
    %5883 = vmatprep.subr.mxu0 0.0
    %5884 = vmatpush1.msra.mxu0 0.0
    %v5885 = vand.u32 %v5776, 4294901760
    %v5886 = vsub.f32 %v5776, %v5885
    %v5887 = vand.u32 %v5886, 4294901760
    %v5888 = vsub.f32 %v5886, %v5887
    %v5889 = vand.u32 %v5888, 4294901760
    %5890 = vmatprep.subr.mxu0 %v5889
    %v5891 = vand.u32 %v5775, 4294901760
    %v5892 = vsub.f32 %v5775, %v5891
    %v5893 = vand.u32 %v5892, 4294901760
    %v5894 = vsub.f32 %v5892, %v5893
    %v5895 = vand.u32 %v5894, 4294901760
    %5896 = vmatpush1.msra.mxu0 %v5895
    %5897 = vmatprep.subr.mxu0 0.0
    %5898 = vmatpush2.msra.mxu0 0.0
    %5899 = vmatprep.subr.mxu0 0.0
    %5900 = vmatpush2.msra.mxu0 0.0
    %5901 = vmatprep.subr.mxu0 0.0
    %5902 = vmatpush2.msra.mxu0 0.0
    %5903 = vmatprep.subr.mxu0 0.0
    %5904 = vmatpush2.msra.mxu0 0.0
    %5905 = vmatprep.subr.mxu0 0.0
    %5906 = vmatpush2.msra.mxu0 0.0
    %5907 = vmatprep.subr.mxu0 0.0
    %5908 = vmatpush2.msra.mxu0 0.0
    %5909 = vmatprep.subr.mxu0 0.0
    %5910 = vmatpush2.msra.mxu0 0.0
    %5911 = vmatprep.subr.mxu0 0.0
    %5912 = vmatpush2.msra.mxu0 0.0
    %5913 = vmatprep.subr.mxu0 0.0
    %5914 = vmatpush2.msra.mxu0 0.0
    %5915 = vmatprep.subr.mxu0 0.0
    %5916 = vmatpush2.msra.mxu0 0.0
    %5917 = vmatprep.subr.mxu0 0.0
    %5918 = vmatpush2.msra.mxu0 0.0
    %5919 = vmatprep.subr.mxu0 0.0
    %5920 = vmatpush2.msra.mxu0 0.0
    %5921 = vmatprep.subr.mxu0 0.0
    %5922 = vmatpush2.msra.mxu0 0.0
    %5923 = vmatprep.subr.mxu0 0.0
    %5924 = vmatpush2.msra.mxu0 0.0
    %5925 = vmatprep.subr.mxu0 0.0
    %5926 = vmatpush2.msra.mxu0 0.0
    %5927 = vmatprep.subr.mxu0 0.0
    %5928 = vmatpush2.msra.mxu0 0.0
    %5929 = vmatprep.mubr.f32.mxu0 0.0
    %v5930 = vand.u32 %v3882, 4294901760
    %5931 = vmatmul.mubr.f32.gmra.mxu0 %v5930
    %v5932 = vpop.f32.mrf.mxu0
    %v5933 = vadd.f32 %v5851, %v5932
    %v5934 = vpop.f32.mrf.mxu0
    %v5935 = vadd.f32 %v5853, %v5934
    %5936 = vdwg.mxu0
    %5937 = vmatprep.subr.mxu0 0.0
    %5938 = vmatpush1.msra.mxu0 0.0
    %5939 = vmatprep.subr.mxu0 0.0
    %5940 = vmatpush1.msra.mxu0 0.0
    %5941 = vmatprep.subr.mxu0 0.0
    %5942 = vmatpush1.msra.mxu0 0.0
    %5943 = vmatprep.subr.mxu0 0.0
    %5944 = vmatpush1.msra.mxu0 0.0
    %5945 = vmatprep.subr.mxu0 0.0
    %5946 = vmatpush1.msra.mxu0 0.0
    %5947 = vmatprep.subr.mxu0 0.0
    %5948 = vmatpush1.msra.mxu0 0.0
    %5949 = vmatprep.subr.mxu0 0.0
    %5950 = vmatpush1.msra.mxu0 0.0
    %5951 = vmatprep.subr.mxu0 0.0
    %5952 = vmatpush1.msra.mxu0 0.0
    %5953 = vmatprep.subr.mxu0 0.0
    %5954 = vmatpush1.msra.mxu0 0.0
    %5955 = vmatprep.subr.mxu0 0.0
    %5956 = vmatpush1.msra.mxu0 0.0
    %5957 = vmatprep.subr.mxu0 0.0
    %5958 = vmatpush1.msra.mxu0 0.0
    %5959 = vmatprep.subr.mxu0 0.0
    %5960 = vmatpush1.msra.mxu0 0.0
    %5961 = vmatprep.subr.mxu0 0.0
    %5962 = vmatpush1.msra.mxu0 0.0
    %5963 = vmatprep.subr.mxu0 0.0
    %5964 = vmatpush1.msra.mxu0 0.0
    %5965 = vmatprep.subr.mxu0 0.0
    %5966 = vmatpush1.msra.mxu0 0.0
    %v5967 = vand.u32 %v5776, 4294901760
    %v5968 = vsub.f32 %v5776, %v5967
    %5969 = vmatprep.subr.mxu0 %v5968
    %v5970 = vand.u32 %v5775, 4294901760
    %v5971 = vsub.f32 %v5775, %v5970
    %5972 = vmatpush1.msra.mxu0 %v5971
    %5973 = vmatprep.subr.mxu0 0.0
    %5974 = vmatpush2.msra.mxu0 0.0
    %5975 = vmatprep.subr.mxu0 0.0
    %5976 = vmatpush2.msra.mxu0 0.0
    %5977 = vmatprep.subr.mxu0 0.0
    %5978 = vmatpush2.msra.mxu0 0.0
    %5979 = vmatprep.subr.mxu0 0.0
    %5980 = vmatpush2.msra.mxu0 0.0
    %5981 = vmatprep.subr.mxu0 0.0
    %5982 = vmatpush2.msra.mxu0 0.0
    %5983 = vmatprep.subr.mxu0 0.0
    %5984 = vmatpush2.msra.mxu0 0.0
    %5985 = vmatprep.subr.mxu0 0.0
    %5986 = vmatpush2.msra.mxu0 0.0
    %5987 = vmatprep.subr.mxu0 0.0
    %5988 = vmatpush2.msra.mxu0 0.0
    %5989 = vmatprep.subr.mxu0 0.0
    %5990 = vmatpush2.msra.mxu0 0.0
    %5991 = vmatprep.subr.mxu0 0.0
    %5992 = vmatpush2.msra.mxu0 0.0
    %5993 = vmatprep.subr.mxu0 0.0
    %5994 = vmatpush2.msra.mxu0 0.0
    %5995 = vmatprep.subr.mxu0 0.0
    %5996 = vmatpush2.msra.mxu0 0.0
    %5997 = vmatprep.subr.mxu0 0.0
    %5998 = vmatpush2.msra.mxu0 0.0
    %5999 = vmatprep.subr.mxu0 0.0
    %6000 = vmatpush2.msra.mxu0 0.0
    %6001 = vmatprep.subr.mxu0 0.0
    %6002 = vmatpush2.msra.mxu0 0.0
    %6003 = vmatprep.subr.mxu0 0.0
    %6004 = vmatpush2.msra.mxu0 0.0
    %6005 = vmatprep.mubr.f32.mxu0 0.0
    %v6006 = vand.u32 %v3882, 4294901760
    %v6007 = vsub.f32 %v3882, %v6006
    %6008 = vmatmul.mubr.f32.gmra.mxu0 %v6007
    %v6009 = vpop.f32.mrf.mxu0
    %v6010 = vadd.f32 %v5933, %v6009
    %v6011 = vpop.f32.mrf.mxu0
    %v6012 = vadd.f32 %v5935, %v6011
    %6013 = vdwg.mxu0
    %6014 = vmatprep.subr.mxu0 0.0
    %6015 = vmatpush1.msra.mxu0 0.0
    %6016 = vmatprep.subr.mxu0 0.0
    %6017 = vmatpush1.msra.mxu0 0.0
    %6018 = vmatprep.subr.mxu0 0.0
    %6019 = vmatpush1.msra.mxu0 0.0
    %6020 = vmatprep.subr.mxu0 0.0
    %6021 = vmatpush1.msra.mxu0 0.0
    %6022 = vmatprep.subr.mxu0 0.0
    %6023 = vmatpush1.msra.mxu0 0.0
    %6024 = vmatprep.subr.mxu0 0.0
    %6025 = vmatpush1.msra.mxu0 0.0
    %6026 = vmatprep.subr.mxu0 0.0
    %6027 = vmatpush1.msra.mxu0 0.0
    %6028 = vmatprep.subr.mxu0 0.0
    %6029 = vmatpush1.msra.mxu0 0.0
    %6030 = vmatprep.subr.mxu0 0.0
    %6031 = vmatpush1.msra.mxu0 0.0
    %6032 = vmatprep.subr.mxu0 0.0
    %6033 = vmatpush1.msra.mxu0 0.0
    %6034 = vmatprep.subr.mxu0 0.0
    %6035 = vmatpush1.msra.mxu0 0.0
    %6036 = vmatprep.subr.mxu0 0.0
    %6037 = vmatpush1.msra.mxu0 0.0
    %6038 = vmatprep.subr.mxu0 0.0
    %6039 = vmatpush1.msra.mxu0 0.0
    %6040 = vmatprep.subr.mxu0 0.0
    %6041 = vmatpush1.msra.mxu0 0.0
    %6042 = vmatprep.subr.mxu0 0.0
    %6043 = vmatpush1.msra.mxu0 0.0
    %v6044 = vand.u32 %v5776, 4294901760
    %6045 = vmatprep.subr.mxu0 %v6044
    %v6046 = vand.u32 %v5775, 4294901760
    %6047 = vmatpush1.msra.mxu0 %v6046
    %6048 = vmatprep.subr.mxu0 0.0
    %6049 = vmatpush2.msra.mxu0 0.0
    %6050 = vmatprep.subr.mxu0 0.0
    %6051 = vmatpush2.msra.mxu0 0.0
    %6052 = vmatprep.subr.mxu0 0.0
    %6053 = vmatpush2.msra.mxu0 0.0
    %6054 = vmatprep.subr.mxu0 0.0
    %6055 = vmatpush2.msra.mxu0 0.0
    %6056 = vmatprep.subr.mxu0 0.0
    %6057 = vmatpush2.msra.mxu0 0.0
    %6058 = vmatprep.subr.mxu0 0.0
    %6059 = vmatpush2.msra.mxu0 0.0
    %6060 = vmatprep.subr.mxu0 0.0
    %6061 = vmatpush2.msra.mxu0 0.0
    %6062 = vmatprep.subr.mxu0 0.0
    %6063 = vmatpush2.msra.mxu0 0.0
    %6064 = vmatprep.subr.mxu0 0.0
    %6065 = vmatpush2.msra.mxu0 0.0
    %6066 = vmatprep.subr.mxu0 0.0
    %6067 = vmatpush2.msra.mxu0 0.0
    %6068 = vmatprep.subr.mxu0 0.0
    %6069 = vmatpush2.msra.mxu0 0.0
    %6070 = vmatprep.subr.mxu0 0.0
    %6071 = vmatpush2.msra.mxu0 0.0
    %6072 = vmatprep.subr.mxu0 0.0
    %6073 = vmatpush2.msra.mxu0 0.0
    %6074 = vmatprep.subr.mxu0 0.0
    %6075 = vmatpush2.msra.mxu0 0.0
    %6076 = vmatprep.subr.mxu0 0.0
    %6077 = vmatpush2.msra.mxu0 0.0
    %6078 = vmatprep.subr.mxu0 0.0
    %6079 = vmatpush2.msra.mxu0 0.0
    %6080 = vmatprep.mubr.f32.mxu0 0.0
    %v6081 = vand.u32 %v3882, 4294901760
    %v6082 = vsub.f32 %v3882, %v6081
    %v6083 = vand.u32 %v6082, 4294901760
    %6084 = vmatmul.mubr.f32.gmra.mxu0 %v6083
    %v6085 = vpop.f32.mrf.mxu0
    %v6086 = vadd.f32 %v6010, %v6085
    %v6087 = vpop.f32.mrf.mxu0
    %v6088 = vadd.f32 %v6012, %v6087
    %6089 = vdwg.mxu0
    %6090 = vmatprep.subr.mxu0 0.0
    %6091 = vmatpush1.msra.mxu0 0.0
    %6092 = vmatprep.subr.mxu0 0.0
    %6093 = vmatpush1.msra.mxu0 0.0
    %6094 = vmatprep.subr.mxu0 0.0
    %6095 = vmatpush1.msra.mxu0 0.0
    %6096 = vmatprep.subr.mxu0 0.0
    %6097 = vmatpush1.msra.mxu0 0.0
    %6098 = vmatprep.subr.mxu0 0.0
    %6099 = vmatpush1.msra.mxu0 0.0
    %6100 = vmatprep.subr.mxu0 0.0
    %6101 = vmatpush1.msra.mxu0 0.0
    %6102 = vmatprep.subr.mxu0 0.0
    %6103 = vmatpush1.msra.mxu0 0.0
    %6104 = vmatprep.subr.mxu0 0.0
    %6105 = vmatpush1.msra.mxu0 0.0
    %6106 = vmatprep.subr.mxu0 0.0
    %6107 = vmatpush1.msra.mxu0 0.0
    %6108 = vmatprep.subr.mxu0 0.0
    %6109 = vmatpush1.msra.mxu0 0.0
    %6110 = vmatprep.subr.mxu0 0.0
    %6111 = vmatpush1.msra.mxu0 0.0
    %6112 = vmatprep.subr.mxu0 0.0
    %6113 = vmatpush1.msra.mxu0 0.0
    %6114 = vmatprep.subr.mxu0 0.0
    %6115 = vmatpush1.msra.mxu0 0.0
    %6116 = vmatprep.subr.mxu0 0.0
    %6117 = vmatpush1.msra.mxu0 0.0
    %6118 = vmatprep.subr.mxu0 0.0
    %6119 = vmatpush1.msra.mxu0 0.0
    %v6120 = vand.u32 %v5776, 4294901760
    %v6121 = vsub.f32 %v5776, %v6120
    %v6122 = vand.u32 %v6121, 4294901760
    %6123 = vmatprep.subr.mxu0 %v6122
    %v6124 = vand.u32 %v5775, 4294901760
    %v6125 = vsub.f32 %v5775, %v6124
    %v6126 = vand.u32 %v6125, 4294901760
    %6127 = vmatpush1.msra.mxu0 %v6126
    %6128 = vmatprep.subr.mxu0 0.0
    %6129 = vmatpush2.msra.mxu0 0.0
    %6130 = vmatprep.subr.mxu0 0.0
    %6131 = vmatpush2.msra.mxu0 0.0
    %6132 = vmatprep.subr.mxu0 0.0
    %6133 = vmatpush2.msra.mxu0 0.0
    %6134 = vmatprep.subr.mxu0 0.0
    %6135 = vmatpush2.msra.mxu0 0.0
    %6136 = vmatprep.subr.mxu0 0.0
    %6137 = vmatpush2.msra.mxu0 0.0
    %6138 = vmatprep.subr.mxu0 0.0
    %6139 = vmatpush2.msra.mxu0 0.0
    %6140 = vmatprep.subr.mxu0 0.0
    %6141 = vmatpush2.msra.mxu0 0.0
    %6142 = vmatprep.subr.mxu0 0.0
    %6143 = vmatpush2.msra.mxu0 0.0
    %6144 = vmatprep.subr.mxu0 0.0
    %6145 = vmatpush2.msra.mxu0 0.0
    %6146 = vmatprep.subr.mxu0 0.0
    %6147 = vmatpush2.msra.mxu0 0.0
    %6148 = vmatprep.subr.mxu0 0.0
    %6149 = vmatpush2.msra.mxu0 0.0
    %6150 = vmatprep.subr.mxu0 0.0
    %6151 = vmatpush2.msra.mxu0 0.0
    %6152 = vmatprep.subr.mxu0 0.0
    %6153 = vmatpush2.msra.mxu0 0.0
    %6154 = vmatprep.subr.mxu0 0.0
    %6155 = vmatpush2.msra.mxu0 0.0
    %6156 = vmatprep.subr.mxu0 0.0
    %6157 = vmatpush2.msra.mxu0 0.0
    %6158 = vmatprep.subr.mxu0 0.0
    %6159 = vmatpush2.msra.mxu0 0.0
    %6160 = vmatprep.mubr.f32.mxu0 0.0
    %v6161 = vand.u32 %v3882, 4294901760
    %6162 = vmatmul.mubr.f32.gmra.mxu0 %v6161
    %v6163 = vpop.f32.mrf.mxu0
    %v6164 = vadd.f32 %v6086, %v6163
    %v6165 = vpop.f32.mrf.mxu0
    %v6166 = vadd.f32 %v6088, %v6165
    %6167 = vdwg.mxu0
    %6168 = vmatprep.subr.mxu0 0.0
    %6169 = vmatpush1.msra.mxu0 0.0
    %6170 = vmatprep.subr.mxu0 0.0
    %6171 = vmatpush1.msra.mxu0 0.0
    %6172 = vmatprep.subr.mxu0 0.0
    %6173 = vmatpush1.msra.mxu0 0.0
    %6174 = vmatprep.subr.mxu0 0.0
    %6175 = vmatpush1.msra.mxu0 0.0
    %6176 = vmatprep.subr.mxu0 0.0
    %6177 = vmatpush1.msra.mxu0 0.0
    %6178 = vmatprep.subr.mxu0 0.0
    %6179 = vmatpush1.msra.mxu0 0.0
    %6180 = vmatprep.subr.mxu0 0.0
    %6181 = vmatpush1.msra.mxu0 0.0
    %6182 = vmatprep.subr.mxu0 0.0
    %6183 = vmatpush1.msra.mxu0 0.0
    %6184 = vmatprep.subr.mxu0 0.0
    %6185 = vmatpush1.msra.mxu0 0.0
    %6186 = vmatprep.subr.mxu0 0.0
    %6187 = vmatpush1.msra.mxu0 0.0
    %6188 = vmatprep.subr.mxu0 0.0
    %6189 = vmatpush1.msra.mxu0 0.0
    %6190 = vmatprep.subr.mxu0 0.0
    %6191 = vmatpush1.msra.mxu0 0.0
    %6192 = vmatprep.subr.mxu0 0.0
    %6193 = vmatpush1.msra.mxu0 0.0
    %6194 = vmatprep.subr.mxu0 0.0
    %6195 = vmatpush1.msra.mxu0 0.0
    %6196 = vmatprep.subr.mxu0 0.0
    %6197 = vmatpush1.msra.mxu0 0.0
    %v6198 = vand.u32 %v5776, 4294901760
    %6199 = vmatprep.subr.mxu0 %v6198
    %v6200 = vand.u32 %v5775, 4294901760
    %6201 = vmatpush1.msra.mxu0 %v6200
    %6202 = vmatprep.subr.mxu0 0.0
    %6203 = vmatpush2.msra.mxu0 0.0
    %6204 = vmatprep.subr.mxu0 0.0
    %6205 = vmatpush2.msra.mxu0 0.0
    %6206 = vmatprep.subr.mxu0 0.0
    %6207 = vmatpush2.msra.mxu0 0.0
    %6208 = vmatprep.subr.mxu0 0.0
    %6209 = vmatpush2.msra.mxu0 0.0
    %6210 = vmatprep.subr.mxu0 0.0
    %6211 = vmatpush2.msra.mxu0 0.0
    %6212 = vmatprep.subr.mxu0 0.0
    %6213 = vmatpush2.msra.mxu0 0.0
    %6214 = vmatprep.subr.mxu0 0.0
    %6215 = vmatpush2.msra.mxu0 0.0
    %6216 = vmatprep.subr.mxu0 0.0
    %6217 = vmatpush2.msra.mxu0 0.0
    %6218 = vmatprep.subr.mxu0 0.0
    %6219 = vmatpush2.msra.mxu0 0.0
    %6220 = vmatprep.subr.mxu0 0.0
    %6221 = vmatpush2.msra.mxu0 0.0
    %6222 = vmatprep.subr.mxu0 0.0
    %6223 = vmatpush2.msra.mxu0 0.0
    %6224 = vmatprep.subr.mxu0 0.0
    %6225 = vmatpush2.msra.mxu0 0.0
    %6226 = vmatprep.subr.mxu0 0.0
    %6227 = vmatpush2.msra.mxu0 0.0
    %6228 = vmatprep.subr.mxu0 0.0
    %6229 = vmatpush2.msra.mxu0 0.0
    %6230 = vmatprep.subr.mxu0 0.0
    %6231 = vmatpush2.msra.mxu0 0.0
    %6232 = vmatprep.subr.mxu0 0.0
    %6233 = vmatpush2.msra.mxu0 0.0
    %6234 = vmatprep.mubr.f32.mxu0 0.0
    %v6235 = vand.u32 %v3882, 4294901760
    %6236 = vmatmul.mubr.f32.gmra.mxu0 %v6235
    %v6237 = vpop.f32.mrf.mxu0
    %v6238 = vadd.f32 %v6164, %v6237
    %v6239 = vpop.f32.mrf.mxu0
    %v6240 = vadd.f32 %v6166, %v6239
    %6241 = vdwg.mxu0
    %6242 = vmatprep.subr.mxu0 0.0
    %6243 = vmatpush1.msra.mxu0 0.0
    %6244 = vmatprep.subr.mxu0 0.0
    %6245 = vmatpush1.msra.mxu0 0.0
    %6246 = vmatprep.subr.mxu0 0.0
    %6247 = vmatpush1.msra.mxu0 0.0
    %6248 = vmatprep.subr.mxu0 0.0
    %6249 = vmatpush1.msra.mxu0 0.0
    %6250 = vmatprep.subr.mxu0 0.0
    %6251 = vmatpush1.msra.mxu0 0.0
    %6252 = vmatprep.subr.mxu0 0.0
    %6253 = vmatpush1.msra.mxu0 0.0
    %6254 = vmatprep.subr.mxu0 0.0
    %6255 = vmatpush1.msra.mxu0 0.0
    %6256 = vmatprep.subr.mxu0 0.0
    %6257 = vmatpush1.msra.mxu0 0.0
    %6258 = vmatprep.subr.mxu0 0.0
    %6259 = vmatpush1.msra.mxu0 0.0
    %6260 = vmatprep.subr.mxu0 0.0
    %6261 = vmatpush1.msra.mxu0 0.0
    %6262 = vmatprep.subr.mxu0 0.0
    %6263 = vmatpush1.msra.mxu0 0.0
    %6264 = vmatprep.subr.mxu0 0.0
    %6265 = vmatpush1.msra.mxu0 0.0
    %6266 = vmatprep.subr.mxu0 0.0
    %6267 = vmatpush1.msra.mxu0 0.0
    %6268 = vmatprep.subr.mxu0 0.0
    %6269 = vmatpush1.msra.mxu0 0.0
    %6270 = vmatprep.subr.mxu0 0.0
    %6271 = vmatpush1.msra.mxu0 0.0
    %v6272 = vand.u32 %v5772, 4294901760
    %6273 = vmatprep.subr.mxu0 %v6272
    %v6274 = vand.u32 %v5771, 4294901760
    %6275 = vmatpush1.msra.mxu0 %v6274
    %6276 = vmatprep.subr.mxu0 0.0
    %6277 = vmatpush2.msra.mxu0 0.0
    %6278 = vmatprep.subr.mxu0 0.0
    %6279 = vmatpush2.msra.mxu0 0.0
    %6280 = vmatprep.subr.mxu0 0.0
    %6281 = vmatpush2.msra.mxu0 0.0
    %6282 = vmatprep.subr.mxu0 0.0
    %6283 = vmatpush2.msra.mxu0 0.0
    %6284 = vmatprep.subr.mxu0 0.0
    %6285 = vmatpush2.msra.mxu0 0.0
    %6286 = vmatprep.subr.mxu0 0.0
    %6287 = vmatpush2.msra.mxu0 0.0
    %6288 = vmatprep.subr.mxu0 0.0
    %6289 = vmatpush2.msra.mxu0 0.0
    %6290 = vmatprep.subr.mxu0 0.0
    %6291 = vmatpush2.msra.mxu0 0.0
    %6292 = vmatprep.subr.mxu0 0.0
    %6293 = vmatpush2.msra.mxu0 0.0
    %6294 = vmatprep.subr.mxu0 0.0
    %6295 = vmatpush2.msra.mxu0 0.0
    %6296 = vmatprep.subr.mxu0 0.0
    %6297 = vmatpush2.msra.mxu0 0.0
    %6298 = vmatprep.subr.mxu0 0.0
    %6299 = vmatpush2.msra.mxu0 0.0
    %6300 = vmatprep.subr.mxu0 0.0
    %6301 = vmatpush2.msra.mxu0 0.0
    %6302 = vmatprep.subr.mxu0 0.0
    %6303 = vmatpush2.msra.mxu0 0.0
    %6304 = vmatprep.subr.mxu0 0.0
    %6305 = vmatpush2.msra.mxu0 0.0
    %6306 = vmatprep.subr.mxu0 0.0
    %6307 = vmatpush2.msra.mxu0 0.0
    %6308 = vmatprep.mubr.f32.mxu0 0.0
    %v6309 = vand.u32 %v4350, 4294901760
    %v6310 = vsub.f32 %v4350, %v6309
    %v6311 = vand.u32 %v6310, 4294901760
    %v6312 = vsub.f32 %v6310, %v6311
    %v6313 = vand.u32 %v6312, 4294901760
    %6314 = vmatmul.mubr.f32.gmra.mxu0 %v6313
    %v6315 = vpop.f32.mrf.mxu0
    %v6316 = vadd.f32 %v6238, %v6315
    %v6317 = vpop.f32.mrf.mxu0
    %v6318 = vadd.f32 %v6240, %v6317
    %6319 = vdwg.mxu0
    %6320 = vmatprep.subr.mxu0 0.0
    %6321 = vmatpush1.msra.mxu0 0.0
    %6322 = vmatprep.subr.mxu0 0.0
    %6323 = vmatpush1.msra.mxu0 0.0
    %6324 = vmatprep.subr.mxu0 0.0
    %6325 = vmatpush1.msra.mxu0 0.0
    %6326 = vmatprep.subr.mxu0 0.0
    %6327 = vmatpush1.msra.mxu0 0.0
    %6328 = vmatprep.subr.mxu0 0.0
    %6329 = vmatpush1.msra.mxu0 0.0
    %6330 = vmatprep.subr.mxu0 0.0
    %6331 = vmatpush1.msra.mxu0 0.0
    %6332 = vmatprep.subr.mxu0 0.0
    %6333 = vmatpush1.msra.mxu0 0.0
    %6334 = vmatprep.subr.mxu0 0.0
    %6335 = vmatpush1.msra.mxu0 0.0
    %6336 = vmatprep.subr.mxu0 0.0
    %6337 = vmatpush1.msra.mxu0 0.0
    %6338 = vmatprep.subr.mxu0 0.0
    %6339 = vmatpush1.msra.mxu0 0.0
    %6340 = vmatprep.subr.mxu0 0.0
    %6341 = vmatpush1.msra.mxu0 0.0
    %6342 = vmatprep.subr.mxu0 0.0
    %6343 = vmatpush1.msra.mxu0 0.0
    %6344 = vmatprep.subr.mxu0 0.0
    %6345 = vmatpush1.msra.mxu0 0.0
    %6346 = vmatprep.subr.mxu0 0.0
    %6347 = vmatpush1.msra.mxu0 0.0
    %6348 = vmatprep.subr.mxu0 0.0
    %6349 = vmatpush1.msra.mxu0 0.0
    %v6350 = vand.u32 %v5772, 4294901760
    %v6351 = vsub.f32 %v5772, %v6350
    %v6352 = vand.u32 %v6351, 4294901760
    %v6353 = vsub.f32 %v6351, %v6352
    %v6354 = vand.u32 %v6353, 4294901760
    %6355 = vmatprep.subr.mxu0 %v6354
    %v6356 = vand.u32 %v5771, 4294901760
    %v6357 = vsub.f32 %v5771, %v6356
    %v6358 = vand.u32 %v6357, 4294901760
    %v6359 = vsub.f32 %v6357, %v6358
    %v6360 = vand.u32 %v6359, 4294901760
    %6361 = vmatpush1.msra.mxu0 %v6360
    %6362 = vmatprep.subr.mxu0 0.0
    %6363 = vmatpush2.msra.mxu0 0.0
    %6364 = vmatprep.subr.mxu0 0.0
    %6365 = vmatpush2.msra.mxu0 0.0
    %6366 = vmatprep.subr.mxu0 0.0
    %6367 = vmatpush2.msra.mxu0 0.0
    %6368 = vmatprep.subr.mxu0 0.0
    %6369 = vmatpush2.msra.mxu0 0.0
    %6370 = vmatprep.subr.mxu0 0.0
    %6371 = vmatpush2.msra.mxu0 0.0
    %6372 = vmatprep.subr.mxu0 0.0
    %6373 = vmatpush2.msra.mxu0 0.0
    %6374 = vmatprep.subr.mxu0 0.0
    %6375 = vmatpush2.msra.mxu0 0.0
    %6376 = vmatprep.subr.mxu0 0.0
    %6377 = vmatpush2.msra.mxu0 0.0
    %6378 = vmatprep.subr.mxu0 0.0
    %6379 = vmatpush2.msra.mxu0 0.0
    %6380 = vmatprep.subr.mxu0 0.0
    %6381 = vmatpush2.msra.mxu0 0.0
    %6382 = vmatprep.subr.mxu0 0.0
    %6383 = vmatpush2.msra.mxu0 0.0
    %6384 = vmatprep.subr.mxu0 0.0
    %6385 = vmatpush2.msra.mxu0 0.0
    %6386 = vmatprep.subr.mxu0 0.0
    %6387 = vmatpush2.msra.mxu0 0.0
    %6388 = vmatprep.subr.mxu0 0.0
    %6389 = vmatpush2.msra.mxu0 0.0
    %6390 = vmatprep.subr.mxu0 0.0
    %6391 = vmatpush2.msra.mxu0 0.0
    %6392 = vmatprep.subr.mxu0 0.0
    %6393 = vmatpush2.msra.mxu0 0.0
    %6394 = vmatprep.mubr.f32.mxu0 0.0
    %v6395 = vand.u32 %v4350, 4294901760
    %6396 = vmatmul.mubr.f32.gmra.mxu0 %v6395
    %v6397 = vpop.f32.mrf.mxu0
    %v6398 = vadd.f32 %v6316, %v6397
    %v6399 = vpop.f32.mrf.mxu0
    %v6400 = vadd.f32 %v6318, %v6399
    %6401 = vdwg.mxu0
    %6402 = vmatprep.subr.mxu0 0.0
    %6403 = vmatpush1.msra.mxu0 0.0
    %6404 = vmatprep.subr.mxu0 0.0
    %6405 = vmatpush1.msra.mxu0 0.0
    %6406 = vmatprep.subr.mxu0 0.0
    %6407 = vmatpush1.msra.mxu0 0.0
    %6408 = vmatprep.subr.mxu0 0.0
    %6409 = vmatpush1.msra.mxu0 0.0
    %6410 = vmatprep.subr.mxu0 0.0
    %6411 = vmatpush1.msra.mxu0 0.0
    %6412 = vmatprep.subr.mxu0 0.0
    %6413 = vmatpush1.msra.mxu0 0.0
    %6414 = vmatprep.subr.mxu0 0.0
    %6415 = vmatpush1.msra.mxu0 0.0
    %6416 = vmatprep.subr.mxu0 0.0
    %6417 = vmatpush1.msra.mxu0 0.0
    %6418 = vmatprep.subr.mxu0 0.0
    %6419 = vmatpush1.msra.mxu0 0.0
    %6420 = vmatprep.subr.mxu0 0.0
    %6421 = vmatpush1.msra.mxu0 0.0
    %6422 = vmatprep.subr.mxu0 0.0
    %6423 = vmatpush1.msra.mxu0 0.0
    %6424 = vmatprep.subr.mxu0 0.0
    %6425 = vmatpush1.msra.mxu0 0.0
    %6426 = vmatprep.subr.mxu0 0.0
    %6427 = vmatpush1.msra.mxu0 0.0
    %6428 = vmatprep.subr.mxu0 0.0
    %6429 = vmatpush1.msra.mxu0 0.0
    %6430 = vmatprep.subr.mxu0 0.0
    %6431 = vmatpush1.msra.mxu0 0.0
    %v6432 = vand.u32 %v5772, 4294901760
    %v6433 = vsub.f32 %v5772, %v6432
    %6434 = vmatprep.subr.mxu0 %v6433
    %v6435 = vand.u32 %v5771, 4294901760
    %v6436 = vsub.f32 %v5771, %v6435
    %6437 = vmatpush1.msra.mxu0 %v6436
    %6438 = vmatprep.subr.mxu0 0.0
    %6439 = vmatpush2.msra.mxu0 0.0
    %6440 = vmatprep.subr.mxu0 0.0
    %6441 = vmatpush2.msra.mxu0 0.0
    %6442 = vmatprep.subr.mxu0 0.0
    %6443 = vmatpush2.msra.mxu0 0.0
    %6444 = vmatprep.subr.mxu0 0.0
    %6445 = vmatpush2.msra.mxu0 0.0
    %6446 = vmatprep.subr.mxu0 0.0
    %6447 = vmatpush2.msra.mxu0 0.0
    %6448 = vmatprep.subr.mxu0 0.0
    %6449 = vmatpush2.msra.mxu0 0.0
    %6450 = vmatprep.subr.mxu0 0.0
    %6451 = vmatpush2.msra.mxu0 0.0
    %6452 = vmatprep.subr.mxu0 0.0
    %6453 = vmatpush2.msra.mxu0 0.0
    %6454 = vmatprep.subr.mxu0 0.0
    %6455 = vmatpush2.msra.mxu0 0.0
    %6456 = vmatprep.subr.mxu0 0.0
    %6457 = vmatpush2.msra.mxu0 0.0
    %6458 = vmatprep.subr.mxu0 0.0
    %6459 = vmatpush2.msra.mxu0 0.0
    %6460 = vmatprep.subr.mxu0 0.0
    %6461 = vmatpush2.msra.mxu0 0.0
    %6462 = vmatprep.subr.mxu0 0.0
    %6463 = vmatpush2.msra.mxu0 0.0
    %6464 = vmatprep.subr.mxu0 0.0
    %6465 = vmatpush2.msra.mxu0 0.0
    %6466 = vmatprep.subr.mxu0 0.0
    %6467 = vmatpush2.msra.mxu0 0.0
    %6468 = vmatprep.subr.mxu0 0.0
    %6469 = vmatpush2.msra.mxu0 0.0
    %6470 = vmatprep.mubr.f32.mxu0 0.0
    %v6471 = vand.u32 %v4350, 4294901760
    %v6472 = vsub.f32 %v4350, %v6471
    %6473 = vmatmul.mubr.f32.gmra.mxu0 %v6472
    %v6474 = vpop.f32.mrf.mxu0
    %v6475 = vadd.f32 %v6398, %v6474
    %v6476 = vpop.f32.mrf.mxu0
    %v6477 = vadd.f32 %v6400, %v6476
    %6478 = vdwg.mxu0
    %6479 = vmatprep.subr.mxu0 0.0
    %6480 = vmatpush1.msra.mxu0 0.0
    %6481 = vmatprep.subr.mxu0 0.0
    %6482 = vmatpush1.msra.mxu0 0.0
    %6483 = vmatprep.subr.mxu0 0.0
    %6484 = vmatpush1.msra.mxu0 0.0
    %6485 = vmatprep.subr.mxu0 0.0
    %6486 = vmatpush1.msra.mxu0 0.0
    %6487 = vmatprep.subr.mxu0 0.0
    %6488 = vmatpush1.msra.mxu0 0.0
    %6489 = vmatprep.subr.mxu0 0.0
    %6490 = vmatpush1.msra.mxu0 0.0
    %6491 = vmatprep.subr.mxu0 0.0
    %6492 = vmatpush1.msra.mxu0 0.0
    %6493 = vmatprep.subr.mxu0 0.0
    %6494 = vmatpush1.msra.mxu0 0.0
    %6495 = vmatprep.subr.mxu0 0.0
    %6496 = vmatpush1.msra.mxu0 0.0
    %6497 = vmatprep.subr.mxu0 0.0
    %6498 = vmatpush1.msra.mxu0 0.0
    %6499 = vmatprep.subr.mxu0 0.0
    %6500 = vmatpush1.msra.mxu0 0.0
    %6501 = vmatprep.subr.mxu0 0.0
    %6502 = vmatpush1.msra.mxu0 0.0
    %6503 = vmatprep.subr.mxu0 0.0
    %6504 = vmatpush1.msra.mxu0 0.0
    %6505 = vmatprep.subr.mxu0 0.0
    %6506 = vmatpush1.msra.mxu0 0.0
    %6507 = vmatprep.subr.mxu0 0.0
    %6508 = vmatpush1.msra.mxu0 0.0
    %v6509 = vand.u32 %v5772, 4294901760
    %6510 = vmatprep.subr.mxu0 %v6509
    %v6511 = vand.u32 %v5771, 4294901760
    %6512 = vmatpush1.msra.mxu0 %v6511
    %6513 = vmatprep.subr.mxu0 0.0
    %6514 = vmatpush2.msra.mxu0 0.0
    %6515 = vmatprep.subr.mxu0 0.0
    %6516 = vmatpush2.msra.mxu0 0.0
    %6517 = vmatprep.subr.mxu0 0.0
    %6518 = vmatpush2.msra.mxu0 0.0
    %6519 = vmatprep.subr.mxu0 0.0
    %6520 = vmatpush2.msra.mxu0 0.0
    %6521 = vmatprep.subr.mxu0 0.0
    %6522 = vmatpush2.msra.mxu0 0.0
    %6523 = vmatprep.subr.mxu0 0.0
    %6524 = vmatpush2.msra.mxu0 0.0
    %6525 = vmatprep.subr.mxu0 0.0
    %6526 = vmatpush2.msra.mxu0 0.0
    %6527 = vmatprep.subr.mxu0 0.0
    %6528 = vmatpush2.msra.mxu0 0.0
    %6529 = vmatprep.subr.mxu0 0.0
    %6530 = vmatpush2.msra.mxu0 0.0
    %6531 = vmatprep.subr.mxu0 0.0
    %6532 = vmatpush2.msra.mxu0 0.0
    %6533 = vmatprep.subr.mxu0 0.0
    %6534 = vmatpush2.msra.mxu0 0.0
    %6535 = vmatprep.subr.mxu0 0.0
    %6536 = vmatpush2.msra.mxu0 0.0
    %6537 = vmatprep.subr.mxu0 0.0
    %6538 = vmatpush2.msra.mxu0 0.0
    %6539 = vmatprep.subr.mxu0 0.0
    %6540 = vmatpush2.msra.mxu0 0.0
    %6541 = vmatprep.subr.mxu0 0.0
    %6542 = vmatpush2.msra.mxu0 0.0
    %6543 = vmatprep.subr.mxu0 0.0
    %6544 = vmatpush2.msra.mxu0 0.0
    %6545 = vmatprep.mubr.f32.mxu0 0.0
    %v6546 = vand.u32 %v4350, 4294901760
    %v6547 = vsub.f32 %v4350, %v6546
    %v6548 = vand.u32 %v6547, 4294901760
    %6549 = vmatmul.mubr.f32.gmra.mxu0 %v6548
    %v6550 = vpop.f32.mrf.mxu0
    %v6551 = vadd.f32 %v6475, %v6550
    %v6552 = vpop.f32.mrf.mxu0
    %v6553 = vadd.f32 %v6477, %v6552
    %6554 = vdwg.mxu0
    %6555 = vmatprep.subr.mxu0 0.0
    %6556 = vmatpush1.msra.mxu0 0.0
    %6557 = vmatprep.subr.mxu0 0.0
    %6558 = vmatpush1.msra.mxu0 0.0
    %6559 = vmatprep.subr.mxu0 0.0
    %6560 = vmatpush1.msra.mxu0 0.0
    %6561 = vmatprep.subr.mxu0 0.0
    %6562 = vmatpush1.msra.mxu0 0.0
    %6563 = vmatprep.subr.mxu0 0.0
    %6564 = vmatpush1.msra.mxu0 0.0
    %6565 = vmatprep.subr.mxu0 0.0
    %6566 = vmatpush1.msra.mxu0 0.0
    %6567 = vmatprep.subr.mxu0 0.0
    %6568 = vmatpush1.msra.mxu0 0.0
    %6569 = vmatprep.subr.mxu0 0.0
    %6570 = vmatpush1.msra.mxu0 0.0
    %6571 = vmatprep.subr.mxu0 0.0
    %6572 = vmatpush1.msra.mxu0 0.0
    %6573 = vmatprep.subr.mxu0 0.0
    %6574 = vmatpush1.msra.mxu0 0.0
    %6575 = vmatprep.subr.mxu0 0.0
    %6576 = vmatpush1.msra.mxu0 0.0
    %6577 = vmatprep.subr.mxu0 0.0
    %6578 = vmatpush1.msra.mxu0 0.0
    %6579 = vmatprep.subr.mxu0 0.0
    %6580 = vmatpush1.msra.mxu0 0.0
    %6581 = vmatprep.subr.mxu0 0.0
    %6582 = vmatpush1.msra.mxu0 0.0
    %6583 = vmatprep.subr.mxu0 0.0
    %6584 = vmatpush1.msra.mxu0 0.0
    %v6585 = vand.u32 %v5772, 4294901760
    %v6586 = vsub.f32 %v5772, %v6585
    %v6587 = vand.u32 %v6586, 4294901760
    %6588 = vmatprep.subr.mxu0 %v6587
    %v6589 = vand.u32 %v5771, 4294901760
    %v6590 = vsub.f32 %v5771, %v6589
    %v6591 = vand.u32 %v6590, 4294901760
    %6592 = vmatpush1.msra.mxu0 %v6591
    %6593 = vmatprep.subr.mxu0 0.0
    %6594 = vmatpush2.msra.mxu0 0.0
    %6595 = vmatprep.subr.mxu0 0.0
    %6596 = vmatpush2.msra.mxu0 0.0
    %6597 = vmatprep.subr.mxu0 0.0
    %6598 = vmatpush2.msra.mxu0 0.0
    %6599 = vmatprep.subr.mxu0 0.0
    %6600 = vmatpush2.msra.mxu0 0.0
    %6601 = vmatprep.subr.mxu0 0.0
    %6602 = vmatpush2.msra.mxu0 0.0
    %6603 = vmatprep.subr.mxu0 0.0
    %6604 = vmatpush2.msra.mxu0 0.0
    %6605 = vmatprep.subr.mxu0 0.0
    %6606 = vmatpush2.msra.mxu0 0.0
    %6607 = vmatprep.subr.mxu0 0.0
    %6608 = vmatpush2.msra.mxu0 0.0
    %6609 = vmatprep.subr.mxu0 0.0
    %6610 = vmatpush2.msra.mxu0 0.0
    %6611 = vmatprep.subr.mxu0 0.0
    %6612 = vmatpush2.msra.mxu0 0.0
    %6613 = vmatprep.subr.mxu0 0.0
    %6614 = vmatpush2.msra.mxu0 0.0
    %6615 = vmatprep.subr.mxu0 0.0
    %6616 = vmatpush2.msra.mxu0 0.0
    %6617 = vmatprep.subr.mxu0 0.0
    %6618 = vmatpush2.msra.mxu0 0.0
    %6619 = vmatprep.subr.mxu0 0.0
    %6620 = vmatpush2.msra.mxu0 0.0
    %6621 = vmatprep.subr.mxu0 0.0
    %6622 = vmatpush2.msra.mxu0 0.0
    %6623 = vmatprep.subr.mxu0 0.0
    %6624 = vmatpush2.msra.mxu0 0.0
    %6625 = vmatprep.mubr.f32.mxu0 0.0
    %v6626 = vand.u32 %v4350, 4294901760
    %6627 = vmatmul.mubr.f32.gmra.mxu0 %v6626
    %v6628 = vpop.f32.mrf.mxu0
    %v6629 = vadd.f32 %v6551, %v6628
    %v6630 = vpop.f32.mrf.mxu0
    %v6631 = vadd.f32 %v6553, %v6630
    %6632 = vdwg.mxu0
    %6633 = vmatprep.subr.mxu0 0.0
    %6634 = vmatpush1.msra.mxu0 0.0
    %6635 = vmatprep.subr.mxu0 0.0
    %6636 = vmatpush1.msra.mxu0 0.0
    %6637 = vmatprep.subr.mxu0 0.0
    %6638 = vmatpush1.msra.mxu0 0.0
    %6639 = vmatprep.subr.mxu0 0.0
    %6640 = vmatpush1.msra.mxu0 0.0
    %6641 = vmatprep.subr.mxu0 0.0
    %6642 = vmatpush1.msra.mxu0 0.0
    %6643 = vmatprep.subr.mxu0 0.0
    %6644 = vmatpush1.msra.mxu0 0.0
    %6645 = vmatprep.subr.mxu0 0.0
    %6646 = vmatpush1.msra.mxu0 0.0
    %6647 = vmatprep.subr.mxu0 0.0
    %6648 = vmatpush1.msra.mxu0 0.0
    %6649 = vmatprep.subr.mxu0 0.0
    %6650 = vmatpush1.msra.mxu0 0.0
    %6651 = vmatprep.subr.mxu0 0.0
    %6652 = vmatpush1.msra.mxu0 0.0
    %6653 = vmatprep.subr.mxu0 0.0
    %6654 = vmatpush1.msra.mxu0 0.0
    %6655 = vmatprep.subr.mxu0 0.0
    %6656 = vmatpush1.msra.mxu0 0.0
    %6657 = vmatprep.subr.mxu0 0.0
    %6658 = vmatpush1.msra.mxu0 0.0
    %6659 = vmatprep.subr.mxu0 0.0
    %6660 = vmatpush1.msra.mxu0 0.0
    %6661 = vmatprep.subr.mxu0 0.0
    %6662 = vmatpush1.msra.mxu0 0.0
    %v6663 = vand.u32 %v5772, 4294901760
    %6664 = vmatprep.subr.mxu0 %v6663
    %v6665 = vand.u32 %v5771, 4294901760
    %6666 = vmatpush1.msra.mxu0 %v6665
    %6667 = vmatprep.subr.mxu0 0.0
    %6668 = vmatpush2.msra.mxu0 0.0
    %6669 = vmatprep.subr.mxu0 0.0
    %6670 = vmatpush2.msra.mxu0 0.0
    %6671 = vmatprep.subr.mxu0 0.0
    %6672 = vmatpush2.msra.mxu0 0.0
    %6673 = vmatprep.subr.mxu0 0.0
    %6674 = vmatpush2.msra.mxu0 0.0
    %6675 = vmatprep.subr.mxu0 0.0
    %6676 = vmatpush2.msra.mxu0 0.0
    %6677 = vmatprep.subr.mxu0 0.0
    %6678 = vmatpush2.msra.mxu0 0.0
    %6679 = vmatprep.subr.mxu0 0.0
    %6680 = vmatpush2.msra.mxu0 0.0
    %6681 = vmatprep.subr.mxu0 0.0
    %6682 = vmatpush2.msra.mxu0 0.0
    %6683 = vmatprep.subr.mxu0 0.0
    %6684 = vmatpush2.msra.mxu0 0.0
    %6685 = vmatprep.subr.mxu0 0.0
    %6686 = vmatpush2.msra.mxu0 0.0
    %6687 = vmatprep.subr.mxu0 0.0
    %6688 = vmatpush2.msra.mxu0 0.0
    %6689 = vmatprep.subr.mxu0 0.0
    %6690 = vmatpush2.msra.mxu0 0.0
    %6691 = vmatprep.subr.mxu0 0.0
    %6692 = vmatpush2.msra.mxu0 0.0
    %6693 = vmatprep.subr.mxu0 0.0
    %6694 = vmatpush2.msra.mxu0 0.0
    %6695 = vmatprep.subr.mxu0 0.0
    %6696 = vmatpush2.msra.mxu0 0.0
    %6697 = vmatprep.subr.mxu0 0.0
    %6698 = vmatpush2.msra.mxu0 0.0
    %6699 = vmatprep.mubr.f32.mxu0 0.0
    %v6700 = vand.u32 %v4350, 4294901760
    %6701 = vmatmul.mubr.f32.gmra.mxu0 %v6700
    %v6702 = vpop.f32.mrf.mxu0
    %v6703 = vadd.f32 %v6629, %v6702
    %v6704 = vpop.f32.mrf.mxu0
    %v6705 = vadd.f32 %v6631, %v6704
    %6706 = vdwg.mxu0
    %6707 = vst [vmem:[#allocation11] sm:$0xff] %v6703
    %6708 = vst [vmem:[#allocation11 + $0x8] sm:$0xff] %v6705
    // Predicated region
    $region49: #{tpu_custom_call.1} parent=1 // pred_check
      _
    $region50: #{tpu_custom_call.1} parent=1 // pred_check_branch
      %6710 = sbr.rel (0) target = $region52
    $region51: #{tpu_custom_call.1} parent=1 // pred_region
      %s6712 = ssub.s32 256, 256
      %6713 = vsyncadd [#allocation4], %s6712
      %s6715 = sshll.u32 [#allocation11], 4
      %s6716 = int_to_ptr.vmem [resolvable:$true] %s6715
      %6718 = dma.vmem_to_hbm [thread:$0]  %s6716, 256, %s5, [#allocation4]
    $region52: #{tpu_custom_call.1} parent=1 // pred_fallthru
      _
    // Predicated region
    $region53: #{tpu_custom_call.1} parent=1 // pred_check
      _
    $region54: #{tpu_custom_call.1} parent=1 // pred_check_branch
      %6720 = sbr.rel (0) target = $region56
    $region55: #{tpu_custom_call.1} parent=1 // pred_region
      %6721 = dma.done [#allocation4], 256
    $region56: #{tpu_custom_call.1} parent=1 // pred_fallthru
      _
    %6722 = vsyncpa [#allocation3], 1
    %6723 = vsyncpa [#allocation6], 1
    %6724 = vsyncpa [#allocation9], 1
    %6725 = vsyncpa [#allocation4], 1

</llo_original>
